<compile_context>
chip_gen: v7x
topology: tpu7x:2x2x1
jax: 0.10.0
libtpu: 0.0.40
codegen_flags: <defaults>
</compile_context>

<pallas_src>
import functools

import jax
import jax.numpy as jnp
from jax.experimental import pallas as pl
from jax.experimental.pallas import tpu as pltpu

# ----------------------------- small config ---------------------------------
VOCAB = 128
MAX_POS = 32
HIDDEN = 32          # DistilBERT uses 768; scaled down for the synthetic demo
N_HEADS = 4
D_HEAD = HIDDEN // N_HEADS
FFN = 64
N_LAYERS = 2         # DistilBERT uses 6; scaled down
N_LABELS = 4
PAD_C = 128          # lane-dense classifier output width (slice to N_LABELS outside)
EPS = 1e-12
SCALE = 1.0 / (D_HEAD ** 0.5)


# ------------------------------ kernel helpers --------------------------------
def _layernorm(x, g, b):
    mu = jnp.mean(x, axis=-1, keepdims=True)
    var = jnp.mean((x - mu) ** 2, axis=-1, keepdims=True)
    return (x - mu) * jax.lax.rsqrt(var + EPS) * g + b


def _erf(x):
    # Abramowitz & Stegun 7.1.26 rational approximation, |err| < 1.5e-7 (f32-exact).
    # Uses only exp/mul/add/where, which always lower in Mosaic.
    a1, a2, a3, a4, a5 = (0.254829592, -0.284496736, 1.421413741,
                          -1.453152027, 1.061405429)
    p = 0.3275911
    ax = jnp.abs(x)
    t = 1.0 / (1.0 + p * ax)
    poly = ((((a5 * t + a4) * t + a3) * t + a2) * t + a1) * t
    y = 1.0 - poly * jnp.exp(-ax * ax)
    return jnp.where(x >= 0, y, -y)


def _gelu_exact(x):
    # DistilBERT uses exact erf-GELU (not the tanh approximation).
    return 0.5 * x * (1.0 + _erf(x * 0.7071067811865476))


# --------------------------------- kernel -------------------------------------
def fused_forward_kernel(
        x_ref, mbias_ref, eg_ref, eb_ref,
        wq_ref, bq_ref, wk_ref, bk_ref, wv_ref, bv_ref,
        wo_ref, bo_ref, ln1g_ref, ln1b_ref,
        w1_ref, b1_ref, w2_ref, b2_ref, ln2g_ref, ln2b_ref,
        cw_ref, cb_ref,
        out_ref, attn_scr, *, batch, seq):
    # Embedding LayerNorm over the whole (B*S, H) slab.
    x = _layernorm(x_ref[...], eg_ref[...], eb_ref[...])            # (B*S, H)

    for l in range(N_LAYERS):                                        # static unroll
        wq, wk, wv = wq_ref[l], wk_ref[l], wv_ref[l]                 # (NH, H, D)
        bq, bk, bv = bq_ref[l], bk_ref[l], bv_ref[l]                 # (NH, 1, D)
        wo = wo_ref[l]                                               # (NH, D, H)
        bo = bo_ref[l]                                               # (1, H)

        # ---- multi-head self-attention (head axis = dot_general batch axis) ----
        for b in range(batch):                                       # static, B=2
            xb = x[b * seq:(b + 1) * seq, :]                         # (S, H)
            xh = jnp.broadcast_to(xb, (N_HEADS, seq, HIDDEN))        # (NH, S, H)
            q = jnp.einsum('nsh,nhd->nsd', xh, wq,
                           preferred_element_type=jnp.float32) + bq  # (NH, S, D)
            k = jnp.einsum('nsh,nhd->nsd', xh, wk,
                           preferred_element_type=jnp.float32) + bk
            v = jnp.einsum('nsh,nhd->nsd', xh, wv,
                           preferred_element_type=jnp.float32) + bv
            s = jnp.einsum('nsd,ntd->nst', q, k,
                           preferred_element_type=jnp.float32) * SCALE
            s = s + mbias_ref[b]                                     # key mask, (1, S)
            s = s - jnp.max(s, axis=-1, keepdims=True)
            p = jnp.exp(s)
            p = p * pl.reciprocal(jnp.sum(p, axis=-1, keepdims=True), approx=True)
            ctx = jnp.einsum('nst,ntd->nsd', p, v,
                             preferred_element_type=jnp.float32)     # (NH, S, D)
            # Fold heads directly through the output projection (no lane concat).
            ao = jnp.dot(ctx[0], wo[0], preferred_element_type=jnp.float32)
            for h in range(1, N_HEADS):
                ao = ao + jnp.dot(ctx[h], wo[h], preferred_element_type=jnp.float32)
            attn_scr[b * seq:(b + 1) * seq, :] = ao + bo             # (S, H)

        x = _layernorm(x + attn_scr[...], ln1g_ref[l], ln1b_ref[l])  # Add & LN

        # ---- feed-forward: GELU(x W1 + b1) W2 + b2, Add & LN ----
        h1 = jnp.dot(x, w1_ref[l], preferred_element_type=jnp.float32) + b1_ref[l]
        h1 = _gelu_exact(h1)
        y = jnp.dot(h1, w2_ref[l], preferred_element_type=jnp.float32) + b2_ref[l]
        x = _layernorm(x + y, ln2g_ref[l], ln2b_ref[l])

    # ---- classifier, lane-dense (B*S, 128); CLS rows / first 4 cols sliced outside
    out_ref[...] = (jnp.dot(x, cw_ref[...], preferred_element_type=jnp.float32)
                    + cb_ref[...])


# ------------------------------ parameters -----------------------------------
def init_params(key):
    def dense(k, fan_in, fan_out):
        return jax.random.normal(k, (fan_in, fan_out), jnp.float32) * 0.02

    keys = jax.random.split(key, 3 + 6 * N_LAYERS)
    ki = iter(keys)
    params = {
        "word_emb": jax.random.normal(next(ki), (VOCAB, HIDDEN), jnp.float32) * 0.02,
        "pos_emb": jax.random.normal(next(ki), (MAX_POS, HIDDEN), jnp.float32) * 0.02,
        "emb_ln_g": jnp.ones((1, HIDDEN), jnp.float32),
        "emb_ln_b": jnp.zeros((1, HIDDEN), jnp.float32),
        "layers": [],
        "cls_w": dense(next(ki), HIDDEN, N_LABELS),
        "cls_b": jnp.zeros((1, N_LABELS), jnp.float32),
    }
    for _l in range(N_LAYERS):
        layer = {
            "wq": dense(next(ki), HIDDEN, HIDDEN), "bq": jnp.zeros((1, HIDDEN), jnp.float32),
            "wk": dense(next(ki), HIDDEN, HIDDEN), "bk": jnp.zeros((1, HIDDEN), jnp.float32),
            "wv": dense(next(ki), HIDDEN, HIDDEN), "bv": jnp.zeros((1, HIDDEN), jnp.float32),
            "wo": dense(next(ki), HIDDEN, HIDDEN), "bo": jnp.zeros((1, HIDDEN), jnp.float32),
            "ln1_g": jnp.ones((1, HIDDEN), jnp.float32), "ln1_b": jnp.zeros((1, HIDDEN), jnp.float32),
            "w1": dense(next(ki), HIDDEN, FFN), "b1": jnp.zeros((1, FFN), jnp.float32),
            "w2": dense(next(ki), FFN, HIDDEN), "b2": jnp.zeros((1, HIDDEN), jnp.float32),
            "ln2_g": jnp.ones((1, HIDDEN), jnp.float32), "ln2_b": jnp.zeros((1, HIDDEN), jnp.float32),
        }
        params["layers"].append(layer)
    return params


def pack_params(p):
    """Stack per-layer weights along a leading layer axis and split heads."""
    layers = p["layers"]

    def stack(name):
        return jnp.stack([lyr[name] for lyr in layers], axis=0)

    def split_out_heads(w):    # (L, H, H) -> (L, NH, H, D): per-head output columns
        return w.reshape(N_LAYERS, HIDDEN, N_HEADS, D_HEAD).transpose(0, 2, 1, 3)

    def split_bias_heads(b):   # (L, 1, H) -> (L, NH, 1, D)
        return b.reshape(N_LAYERS, 1, N_HEADS, D_HEAD).transpose(0, 2, 1, 3)

    wq, bq = split_out_heads(stack("wq")), split_bias_heads(stack("bq"))
    wk, bk = split_out_heads(stack("wk")), split_bias_heads(stack("bk"))
    wv, bv = split_out_heads(stack("wv")), split_bias_heads(stack("bv"))
    wo = stack("wo").reshape(N_LAYERS, N_HEADS, D_HEAD, HIDDEN)   # per-head input rows
    bo = stack("bo")

    cw_pad = jnp.zeros((HIDDEN, PAD_C), jnp.float32).at[:, :N_LABELS].set(p["cls_w"])
    cb_pad = jnp.zeros((1, PAD_C), jnp.float32).at[:, :N_LABELS].set(p["cls_b"])

    return (p["emb_ln_g"], p["emb_ln_b"],
            wq, bq, wk, bk, wv, bv, wo, bo,
            stack("ln1_g"), stack("ln1_b"),
            stack("w1"), stack("b1"), stack("w2"), stack("b2"),
            stack("ln2_g"), stack("ln2_b"),
            cw_pad, cb_pad)


# ------------------------------ forward pass ----------------------------------
@jax.jit
def distilbert_class_forward(params, input_ids, attention_mask):
    B, S = input_ids.shape
    # Embedding gather (no clean Pallas equivalent at this scale) kept in plain JAX.
    x = params["word_emb"][input_ids] + params["pos_emb"][:S][None, :, :]     # (B, S, H)
    x = x.reshape(B * S, HIDDEN).astype(jnp.float32)
    mask_bias = ((1.0 - attention_mask.astype(jnp.float32)) * -1e9).reshape(B, 1, S)

    packed = pack_params(params)
    vmem = pl.BlockSpec(memory_space=pltpu.MemorySpace.VMEM)      # full-array VMEM block
    kernel = functools.partial(fused_forward_kernel, batch=B, seq=S)

    logits_pad = pl.pallas_call(
        kernel,
        out_shape=jax.ShapeDtypeStruct((B * S, PAD_C), jnp.float32),
        in_specs=[vmem] * (2 + len(packed)),
        out_specs=vmem,
        scratch_shapes=[pltpu.VMEM((B * S, HIDDEN), jnp.float32)],
    )(x, mask_bias, *packed)

    # CLS-token rows, real label columns.
    return logits_pad.reshape(B, S, PAD_C)[:, 0, :N_LABELS]


# ------------------------- pure-JAX reference (checking) -----------------------
def forward_reference(params, input_ids, attention_mask):
    B, S = input_ids.shape
    x = params["word_emb"][input_ids] + params["pos_emb"][:S][None, :, :]

    def ln(y, g, b):
        mu = jnp.mean(y, -1, keepdims=True)
        var = jnp.mean((y - mu) ** 2, -1, keepdims=True)
        return (y - mu) * jax.lax.rsqrt(var + EPS) * g + b

    x = ln(x, params["emb_ln_g"], params["emb_ln_b"])
    mbias = (1.0 - attention_mask.astype(jnp.float32))[:, None, None, :] * -1e9
    for lyr in params["layers"]:
        q = x @ lyr["wq"] + lyr["bq"]
        k = x @ lyr["wk"] + lyr["bk"]
        v = x @ lyr["wv"] + lyr["bv"]

        def split(t):
            return t.reshape(B, S, N_HEADS, D_HEAD).transpose(0, 2, 1, 3)

        qh, kh, vh = split(q), split(k), split(v)
        s = jnp.einsum('bnsd,bntd->bnst', qh, kh) * SCALE + mbias
        p = jax.nn.softmax(s, axis=-1)
        ctx = jnp.einsum('bnst,bntd->bnsd', p, vh).transpose(0, 2, 1, 3).reshape(B, S, HIDDEN)
        x = ln(x + ctx @ lyr["wo"] + lyr["bo"], lyr["ln1_g"], lyr["ln1_b"])
        h = jax.nn.gelu(x @ lyr["w1"] + lyr["b1"], approximate=False)
        x = ln(x + h @ lyr["w2"] + lyr["b2"], lyr["ln2_g"], lyr["ln2_b"])
    return x[:, 0, :] @ params["cls_w"] + params["cls_b"]


# ---------------------------------- main --------------------------------------
if __name__ == "__main__":
    key = jax.random.PRNGKey(0)
    pkey, ikey = jax.random.split(key)
    params = init_params(pkey)

    B, S = 2, 8
    input_ids = jax.random.randint(ikey, (B, S), 0, VOCAB, dtype=jnp.int32)
    attention_mask = jnp.array(
        [[1, 1, 1, 1, 1, 1, 1, 1],
         [1, 1, 1, 1, 1, 0, 0, 0]], dtype=jnp.int32)   # second sequence padded

    logits = distilbert_class_forward(params, input_ids, attention_mask)
    jax.block_until_ready(logits)
    assert logits.shape == (B, N_LABELS)

    ref = forward_reference(params, input_ids, attention_mask)
    assert bool(jnp.all(jnp.isfinite(logits)))
    assert bool(jnp.allclose(logits, ref, atol=1e-2, rtol=1e-2))
    print("KERNEL_OK")
</pallas_src>

<mosaic_0001>
module attributes {stable_mosaic.version = 11 : i64} {
  func.func @fused_forward_kernel(%arg0: memref<16x32xf32, #tpu.memory_space<vmem>>, %arg1: memref<2x1x8xf32, #tpu.memory_space<vmem>>, %arg2: memref<1x32xf32, #tpu.memory_space<vmem>>, %arg3: memref<1x32xf32, #tpu.memory_space<vmem>>, %arg4: memref<2x4x32x8xf32, #tpu.memory_space<vmem>>, %arg5: memref<2x4x1x8xf32, #tpu.memory_space<vmem>>, %arg6: memref<2x4x32x8xf32, #tpu.memory_space<vmem>>, %arg7: memref<2x4x1x8xf32, #tpu.memory_space<vmem>>, %arg8: memref<2x4x32x8xf32, #tpu.memory_space<vmem>>, %arg9: memref<2x4x1x8xf32, #tpu.memory_space<vmem>>, %arg10: memref<2x4x8x32xf32, #tpu.memory_space<vmem>>, %arg11: memref<2x1x32xf32, #tpu.memory_space<vmem>>, %arg12: memref<2x1x32xf32, #tpu.memory_space<vmem>>, %arg13: memref<2x1x32xf32, #tpu.memory_space<vmem>>, %arg14: memref<2x32x64xf32, #tpu.memory_space<vmem>>, %arg15: memref<2x1x64xf32, #tpu.memory_space<vmem>>, %arg16: memref<2x64x32xf32, #tpu.memory_space<vmem>>, %arg17: memref<2x1x32xf32, #tpu.memory_space<vmem>>, %arg18: memref<2x1x32xf32, #tpu.memory_space<vmem>>, %arg19: memref<2x1x32xf32, #tpu.memory_space<vmem>>, %arg20: memref<32x128xf32, #tpu.memory_space<vmem>>, %arg21: memref<1x128xf32, #tpu.memory_space<vmem>>, %arg22: memref<16x128xf32, #tpu.memory_space<vmem>>, %arg23: memref<16x32xf32, #tpu.memory_space<vmem>>) attributes {dimension_semantics = [], scalar_prefetch = 0 : i64, scratch_operands = 1 : i64, tpu.core_type = #tpu.core_type<tc>} {
    %c0 = arith.constant 0 : index
    %c0_0 = arith.constant 0 : index
    %0 = vector.load %arg0[%c0, %c0_0] : memref<16x32xf32, #tpu.memory_space<vmem>>, vector<16x32xf32>
    %c0_1 = arith.constant 0 : index
    %c0_2 = arith.constant 0 : index
    %1 = vector.load %arg2[%c0_1, %c0_2] : memref<1x32xf32, #tpu.memory_space<vmem>>, vector<1x32xf32>
    %c0_3 = arith.constant 0 : index
    %c0_4 = arith.constant 0 : index
    %2 = vector.load %arg3[%c0_3, %c0_4] : memref<1x32xf32, #tpu.memory_space<vmem>>, vector<1x32xf32>
    %cst = arith.constant dense<0.000000e+00> : vector<16xf32>
    %3 = vector.multi_reduction <add>, %0, %cst [1] : vector<16x32xf32> to vector<16xf32>
    %4 = vector.shape_cast %3 : vector<16xf32> to vector<16x1xf32>
    %cst_5 = arith.constant 3.200000e+01 : f32
    %5 = vector.broadcast %cst_5 : f32 to vector<16x1xf32>
    %6 = arith.divf %4, %5 : vector<16x1xf32>
    %7 = vector.broadcast %6 : vector<16x1xf32> to vector<16x32xf32>
    %8 = arith.subf %0, %7 : vector<16x32xf32>
    %9 = arith.mulf %8, %8 : vector<16x32xf32>
    %cst_6 = arith.constant dense<0.000000e+00> : vector<16xf32>
    %10 = vector.multi_reduction <add>, %9, %cst_6 [1] : vector<16x32xf32> to vector<16xf32>
    %11 = vector.shape_cast %10 : vector<16xf32> to vector<16x1xf32>
    %cst_7 = arith.constant 3.200000e+01 : f32
    %12 = vector.broadcast %cst_7 : f32 to vector<16x1xf32>
    %13 = arith.divf %11, %12 : vector<16x1xf32>
    %14 = vector.broadcast %6 : vector<16x1xf32> to vector<16x32xf32>
    %15 = arith.subf %0, %14 : vector<16x32xf32>
    %cst_8 = arith.constant 9.99999996E-13 : f32
    %16 = vector.broadcast %cst_8 : f32 to vector<16x1xf32>
    %17 = arith.addf %13, %16 : vector<16x1xf32>
    %18 = math.rsqrt %17 : vector<16x1xf32>
    %19 = vector.broadcast %18 : vector<16x1xf32> to vector<16x32xf32>
    %20 = arith.mulf %15, %19 : vector<16x32xf32>
    %21 = vector.broadcast %1 : vector<1x32xf32> to vector<16x32xf32>
    %22 = arith.mulf %20, %21 : vector<16x32xf32>
    %23 = vector.broadcast %2 : vector<1x32xf32> to vector<16x32xf32>
    %24 = arith.addf %22, %23 : vector<16x32xf32>
    %c0_9 = arith.constant 0 : index
    %c0_10 = arith.constant 0 : index
    %c0_11 = arith.constant 0 : index
    %c0_12 = arith.constant 0 : index
    %25 = vector.load %arg4[%c0_9, %c0_10, %c0_11, %c0_12] : memref<2x4x32x8xf32, #tpu.memory_space<vmem>>, vector<1x4x32x8xf32>
    %26 = vector.shape_cast %25 : vector<1x4x32x8xf32> to vector<4x32x8xf32>
    %c0_13 = arith.constant 0 : index
    %c0_14 = arith.constant 0 : index
    %c0_15 = arith.constant 0 : index
    %c0_16 = arith.constant 0 : index
    %27 = vector.load %arg6[%c0_13, %c0_14, %c0_15, %c0_16] : memref<2x4x32x8xf32, #tpu.memory_space<vmem>>, vector<1x4x32x8xf32>
    %28 = vector.shape_cast %27 : vector<1x4x32x8xf32> to vector<4x32x8xf32>
    %c0_17 = arith.constant 0 : index
    %c0_18 = arith.constant 0 : index
    %c0_19 = arith.constant 0 : index
    %c0_20 = arith.constant 0 : index
    %29 = vector.load %arg8[%c0_17, %c0_18, %c0_19, %c0_20] : memref<2x4x32x8xf32, #tpu.memory_space<vmem>>, vector<1x4x32x8xf32>
    %30 = vector.shape_cast %29 : vector<1x4x32x8xf32> to vector<4x32x8xf32>
    %c0_21 = arith.constant 0 : index
    %c0_22 = arith.constant 0 : index
    %c0_23 = arith.constant 0 : index
    %c0_24 = arith.constant 0 : index
    %31 = vector.load %arg5[%c0_21, %c0_22, %c0_23, %c0_24] : memref<2x4x1x8xf32, #tpu.memory_space<vmem>>, vector<1x4x1x8xf32>
    %32 = vector.shape_cast %31 : vector<1x4x1x8xf32> to vector<4x1x8xf32>
    %c0_25 = arith.constant 0 : index
    %c0_26 = arith.constant 0 : index
    %c0_27 = arith.constant 0 : index
    %c0_28 = arith.constant 0 : index
    %33 = vector.load %arg7[%c0_25, %c0_26, %c0_27, %c0_28] : memref<2x4x1x8xf32, #tpu.memory_space<vmem>>, vector<1x4x1x8xf32>
    %34 = vector.shape_cast %33 : vector<1x4x1x8xf32> to vector<4x1x8xf32>
    %c0_29 = arith.constant 0 : index
    %c0_30 = arith.constant 0 : index
    %c0_31 = arith.constant 0 : index
    %c0_32 = arith.constant 0 : index
    %35 = vector.load %arg9[%c0_29, %c0_30, %c0_31, %c0_32] : memref<2x4x1x8xf32, #tpu.memory_space<vmem>>, vector<1x4x1x8xf32>
    %36 = vector.shape_cast %35 : vector<1x4x1x8xf32> to vector<4x1x8xf32>
    %c0_33 = arith.constant 0 : index
    %c0_34 = arith.constant 0 : index
    %c0_35 = arith.constant 0 : index
    %c0_36 = arith.constant 0 : index
    %37 = vector.load %arg10[%c0_33, %c0_34, %c0_35, %c0_36] : memref<2x4x8x32xf32, #tpu.memory_space<vmem>>, vector<1x4x8x32xf32>
    %38 = vector.shape_cast %37 : vector<1x4x8x32xf32> to vector<4x8x32xf32>
    %c0_37 = arith.constant 0 : index
    %c0_38 = arith.constant 0 : index
    %c0_39 = arith.constant 0 : index
    %39 = vector.load %arg11[%c0_37, %c0_38, %c0_39] : memref<2x1x32xf32, #tpu.memory_space<vmem>>, vector<1x1x32xf32>
    %40 = vector.shape_cast %39 : vector<1x1x32xf32> to vector<1x32xf32>
    %41 = vector.extract_strided_slice %24 {offsets = [0, 0], sizes = [8, 32], strides = [1, 1]} : vector<16x32xf32> to vector<8x32xf32>
    %42 = vector.shape_cast %41 : vector<8x32xf32> to vector<1x8x32xf32>
    %43 = vector.broadcast %42 : vector<1x8x32xf32> to vector<4x8x32xf32>
    "tpu.trace_start"() <{level = 10 : i32, message = "nsh,nhd->nsd"}> : () -> ()
    %cst_40 = arith.constant dense<0.000000e+00> : vector<4x8x8xf32>
    %44 = tpu.matmul %43, %26, %cst_40 {dimension_numbers = #tpu.dot_dimension_numbers<[2], [1], [1], [2], [0, 0, 0, 1, 1, 2], [0], [0]>} : vector<4x8x32xf32>, vector<4x32x8xf32>, vector<4x8x8xf32> -> vector<4x8x8xf32>
    "tpu.trace_stop"() : () -> ()
    %45 = vector.broadcast %32 : vector<4x1x8xf32> to vector<4x8x8xf32>
    %46 = arith.addf %44, %45 : vector<4x8x8xf32>
    "tpu.trace_start"() <{level = 10 : i32, message = "nsh,nhd->nsd"}> : () -> ()
    %cst_41 = arith.constant dense<0.000000e+00> : vector<4x8x8xf32>
    %47 = tpu.matmul %43, %28, %cst_41 {dimension_numbers = #tpu.dot_dimension_numbers<[2], [1], [1], [2], [0, 0, 0, 1, 1, 2], [0], [0]>} : vector<4x8x32xf32>, vector<4x32x8xf32>, vector<4x8x8xf32> -> vector<4x8x8xf32>
    "tpu.trace_stop"() : () -> ()
    %48 = vector.broadcast %34 : vector<4x1x8xf32> to vector<4x8x8xf32>
    %49 = arith.addf %47, %48 : vector<4x8x8xf32>
    "tpu.trace_start"() <{level = 10 : i32, message = "nsh,nhd->nsd"}> : () -> ()
    %cst_42 = arith.constant dense<0.000000e+00> : vector<4x8x8xf32>
    %50 = tpu.matmul %43, %30, %cst_42 {dimension_numbers = #tpu.dot_dimension_numbers<[2], [1], [1], [2], [0, 0, 0, 1, 1, 2], [0], [0]>} : vector<4x8x32xf32>, vector<4x32x8xf32>, vector<4x8x8xf32> -> vector<4x8x8xf32>
    "tpu.trace_stop"() : () -> ()
    %51 = vector.broadcast %36 : vector<4x1x8xf32> to vector<4x8x8xf32>
    %52 = arith.addf %50, %51 : vector<4x8x8xf32>
    "tpu.trace_start"() <{level = 10 : i32, message = "nsd,ntd->nst"}> : () -> ()
    %cst_43 = arith.constant dense<0.000000e+00> : vector<4x8x8xf32>
    %53 = tpu.matmul %46, %49, %cst_43 {dimension_numbers = #tpu.dot_dimension_numbers<[2], [2], [1], [1], [0, 0, 0, 1, 1, 1], [0], [0]>} : vector<4x8x8xf32>, vector<4x8x8xf32>, vector<4x8x8xf32> -> vector<4x8x8xf32>
    "tpu.trace_stop"() : () -> ()
    %cst_44 = arith.constant 0.353553385 : f32
    %54 = vector.broadcast %cst_44 : f32 to vector<4x8x8xf32>
    %55 = arith.mulf %53, %54 : vector<4x8x8xf32>
    %c0_45 = arith.constant 0 : index
    %c0_46 = arith.constant 0 : index
    %c0_47 = arith.constant 0 : index
    %56 = vector.load %arg1[%c0_45, %c0_46, %c0_47] : memref<2x1x8xf32, #tpu.memory_space<vmem>>, vector<1x1x8xf32>
    %57 = vector.shape_cast %56 : vector<1x1x8xf32> to vector<1x8xf32>
    %58 = vector.shape_cast %57 : vector<1x8xf32> to vector<1x1x8xf32>
    %59 = vector.broadcast %58 : vector<1x1x8xf32> to vector<4x8x8xf32>
    %60 = arith.addf %55, %59 : vector<4x8x8xf32>
    %cst_48 = arith.constant dense<0xFF800000> : vector<4x8xf32>
    %61 = vector.multi_reduction <maximumf>, %60, %cst_48 [2] : vector<4x8x8xf32> to vector<4x8xf32>
    %62 = vector.shape_cast %61 : vector<4x8xf32> to vector<4x8x1xf32>
    %63 = vector.broadcast %62 : vector<4x8x1xf32> to vector<4x8x8xf32>
    %64 = arith.subf %60, %63 : vector<4x8x8xf32>
    %65 = math.exp %64 : vector<4x8x8xf32>
    %cst_49 = arith.constant dense<0.000000e+00> : vector<4x8xf32>
    %66 = vector.multi_reduction <add>, %65, %cst_49 [2] : vector<4x8x8xf32> to vector<4x8xf32>
    %67 = vector.shape_cast %66 : vector<4x8xf32> to vector<4x8x1xf32>
    %68 = tpu.reciprocal %67 {approx = true} : vector<4x8x1xf32> -> vector<4x8x1xf32>
    %69 = vector.broadcast %68 : vector<4x8x1xf32> to vector<4x8x8xf32>
    %70 = arith.mulf %65, %69 : vector<4x8x8xf32>
    "tpu.trace_start"() <{level = 10 : i32, message = "nst,ntd->nsd"}> : () -> ()
    %cst_50 = arith.constant dense<0.000000e+00> : vector<4x8x8xf32>
    %71 = tpu.matmul %70, %52, %cst_50 {dimension_numbers = #tpu.dot_dimension_numbers<[2], [1], [1], [2], [0, 0, 0, 1, 1, 2], [0], [0]>} : vector<4x8x8xf32>, vector<4x8x8xf32>, vector<4x8x8xf32> -> vector<4x8x8xf32>
    "tpu.trace_stop"() : () -> ()
    %72 = vector.extract_strided_slice %71 {offsets = [0, 0, 0], sizes = [1, 8, 8], strides = [1, 1, 1]} : vector<4x8x8xf32> to vector<1x8x8xf32>
    %73 = vector.shape_cast %72 : vector<1x8x8xf32> to vector<8x8xf32>
    %74 = vector.extract_strided_slice %38 {offsets = [0, 0, 0], sizes = [1, 8, 32], strides = [1, 1, 1]} : vector<4x8x32xf32> to vector<1x8x32xf32>
    %75 = vector.shape_cast %74 : vector<1x8x32xf32> to vector<8x32xf32>
    %cst_51 = arith.constant dense<0.000000e+00> : vector<8x32xf32>
    %76 = tpu.matmul %73, %75, %cst_51 {dimension_numbers = #tpu.dot_dimension_numbers<[1], [0], [0], [1], [0, 0, 1, 1], [], []>} : vector<8x8xf32>, vector<8x32xf32>, vector<8x32xf32> -> vector<8x32xf32>
    %77 = vector.extract_strided_slice %71 {offsets = [1, 0, 0], sizes = [1, 8, 8], strides = [1, 1, 1]} : vector<4x8x8xf32> to vector<1x8x8xf32>
    %78 = vector.shape_cast %77 : vector<1x8x8xf32> to vector<8x8xf32>
    %79 = vector.extract_strided_slice %38 {offsets = [1, 0, 0], sizes = [1, 8, 32], strides = [1, 1, 1]} : vector<4x8x32xf32> to vector<1x8x32xf32>
    %80 = vector.shape_cast %79 : vector<1x8x32xf32> to vector<8x32xf32>
    %cst_52 = arith.constant dense<0.000000e+00> : vector<8x32xf32>
    %81 = tpu.matmul %78, %80, %cst_52 {dimension_numbers = #tpu.dot_dimension_numbers<[1], [0], [0], [1], [0, 0, 1, 1], [], []>} : vector<8x8xf32>, vector<8x32xf32>, vector<8x32xf32> -> vector<8x32xf32>
    %82 = arith.addf %76, %81 : vector<8x32xf32>
    %83 = vector.extract_strided_slice %71 {offsets = [2, 0, 0], sizes = [1, 8, 8], strides = [1, 1, 1]} : vector<4x8x8xf32> to vector<1x8x8xf32>
    %84 = vector.shape_cast %83 : vector<1x8x8xf32> to vector<8x8xf32>
    %85 = vector.extract_strided_slice %38 {offsets = [2, 0, 0], sizes = [1, 8, 32], strides = [1, 1, 1]} : vector<4x8x32xf32> to vector<1x8x32xf32>
    %86 = vector.shape_cast %85 : vector<1x8x32xf32> to vector<8x32xf32>
    %cst_53 = arith.constant dense<0.000000e+00> : vector<8x32xf32>
    %87 = tpu.matmul %84, %86, %cst_53 {dimension_numbers = #tpu.dot_dimension_numbers<[1], [0], [0], [1], [0, 0, 1, 1], [], []>} : vector<8x8xf32>, vector<8x32xf32>, vector<8x32xf32> -> vector<8x32xf32>
    %88 = arith.addf %82, %87 : vector<8x32xf32>
    %89 = vector.extract_strided_slice %71 {offsets = [3, 0, 0], sizes = [1, 8, 8], strides = [1, 1, 1]} : vector<4x8x8xf32> to vector<1x8x8xf32>
    %90 = vector.shape_cast %89 : vector<1x8x8xf32> to vector<8x8xf32>
    %91 = vector.extract_strided_slice %38 {offsets = [3, 0, 0], sizes = [1, 8, 32], strides = [1, 1, 1]} : vector<4x8x32xf32> to vector<1x8x32xf32>
    %92 = vector.shape_cast %91 : vector<1x8x32xf32> to vector<8x32xf32>
    %cst_54 = arith.constant dense<0.000000e+00> : vector<8x32xf32>
    %93 = tpu.matmul %90, %92, %cst_54 {dimension_numbers = #tpu.dot_dimension_numbers<[1], [0], [0], [1], [0, 0, 1, 1], [], []>} : vector<8x8xf32>, vector<8x32xf32>, vector<8x32xf32> -> vector<8x32xf32>
    %94 = arith.addf %88, %93 : vector<8x32xf32>
    %95 = vector.broadcast %40 : vector<1x32xf32> to vector<8x32xf32>
    %96 = arith.addf %94, %95 : vector<8x32xf32>
    %c0_55 = arith.constant 0 : index
    %c0_56 = arith.constant 0 : index
    %97 = vector.load %arg23[%c0_55, %c0_56] : memref<16x32xf32, #tpu.memory_space<vmem>>, vector<8x32xf32>
    tpu.vector_store %arg23[%c0_55, %c0_56], %96 {strides = array<i32>} : memref<16x32xf32, #tpu.memory_space<vmem>>, vector<8x32xf32>,
    %98 = vector.extract_strided_slice %24 {offsets = [8, 0], sizes = [8, 32], strides = [1, 1]} : vector<16x32xf32> to vector<8x32xf32>
    %99 = vector.shape_cast %98 : vector<8x32xf32> to vector<1x8x32xf32>
    %100 = vector.broadcast %99 : vector<1x8x32xf32> to vector<4x8x32xf32>
    "tpu.trace_start"() <{level = 10 : i32, message = "nsh,nhd->nsd"}> : () -> ()
    %cst_57 = arith.constant dense<0.000000e+00> : vector<4x8x8xf32>
    %101 = tpu.matmul %100, %26, %cst_57 {dimension_numbers = #tpu.dot_dimension_numbers<[2], [1], [1], [2], [0, 0, 0, 1, 1, 2], [0], [0]>} : vector<4x8x32xf32>, vector<4x32x8xf32>, vector<4x8x8xf32> -> vector<4x8x8xf32>
    "tpu.trace_stop"() : () -> ()
    %102 = vector.broadcast %32 : vector<4x1x8xf32> to vector<4x8x8xf32>
    %103 = arith.addf %101, %102 : vector<4x8x8xf32>
    "tpu.trace_start"() <{level = 10 : i32, message = "nsh,nhd->nsd"}> : () -> ()
    %cst_58 = arith.constant dense<0.000000e+00> : vector<4x8x8xf32>
    %104 = tpu.matmul %100, %28, %cst_58 {dimension_numbers = #tpu.dot_dimension_numbers<[2], [1], [1], [2], [0, 0, 0, 1, 1, 2], [0], [0]>} : vector<4x8x32xf32>, vector<4x32x8xf32>, vector<4x8x8xf32> -> vector<4x8x8xf32>
    "tpu.trace_stop"() : () -> ()
    %105 = vector.broadcast %34 : vector<4x1x8xf32> to vector<4x8x8xf32>
    %106 = arith.addf %104, %105 : vector<4x8x8xf32>
    "tpu.trace_start"() <{level = 10 : i32, message = "nsh,nhd->nsd"}> : () -> ()
    %cst_59 = arith.constant dense<0.000000e+00> : vector<4x8x8xf32>
    %107 = tpu.matmul %100, %30, %cst_59 {dimension_numbers = #tpu.dot_dimension_numbers<[2], [1], [1], [2], [0, 0, 0, 1, 1, 2], [0], [0]>} : vector<4x8x32xf32>, vector<4x32x8xf32>, vector<4x8x8xf32> -> vector<4x8x8xf32>
    "tpu.trace_stop"() : () -> ()
    %108 = vector.broadcast %36 : vector<4x1x8xf32> to vector<4x8x8xf32>
    %109 = arith.addf %107, %108 : vector<4x8x8xf32>
    "tpu.trace_start"() <{level = 10 : i32, message = "nsd,ntd->nst"}> : () -> ()
    %cst_60 = arith.constant dense<0.000000e+00> : vector<4x8x8xf32>
    %110 = tpu.matmul %103, %106, %cst_60 {dimension_numbers = #tpu.dot_dimension_numbers<[2], [2], [1], [1], [0, 0, 0, 1, 1, 1], [0], [0]>} : vector<4x8x8xf32>, vector<4x8x8xf32>, vector<4x8x8xf32> -> vector<4x8x8xf32>
    "tpu.trace_stop"() : () -> ()
    %cst_61 = arith.constant 0.353553385 : f32
    %111 = vector.broadcast %cst_61 : f32 to vector<4x8x8xf32>
    %112 = arith.mulf %110, %111 : vector<4x8x8xf32>
    %c1 = arith.constant 1 : index
    %c0_62 = arith.constant 0 : index
    %c0_63 = arith.constant 0 : index
    %113 = vector.load %arg1[%c1, %c0_62, %c0_63] : memref<2x1x8xf32, #tpu.memory_space<vmem>>, vector<1x1x8xf32>
    %114 = vector.shape_cast %113 : vector<1x1x8xf32> to vector<1x8xf32>
    %115 = vector.shape_cast %114 : vector<1x8xf32> to vector<1x1x8xf32>
    %116 = vector.broadcast %115 : vector<1x1x8xf32> to vector<4x8x8xf32>
    %117 = arith.addf %112, %116 : vector<4x8x8xf32>
    %cst_64 = arith.constant dense<0xFF800000> : vector<4x8xf32>
    %118 = vector.multi_reduction <maximumf>, %117, %cst_64 [2] : vector<4x8x8xf32> to vector<4x8xf32>
    %119 = vector.shape_cast %118 : vector<4x8xf32> to vector<4x8x1xf32>
    %120 = vector.broadcast %119 : vector<4x8x1xf32> to vector<4x8x8xf32>
    %121 = arith.subf %117, %120 : vector<4x8x8xf32>
    %122 = math.exp %121 : vector<4x8x8xf32>
    %cst_65 = arith.constant dense<0.000000e+00> : vector<4x8xf32>
    %123 = vector.multi_reduction <add>, %122, %cst_65 [2] : vector<4x8x8xf32> to vector<4x8xf32>
    %124 = vector.shape_cast %123 : vector<4x8xf32> to vector<4x8x1xf32>
    %125 = tpu.reciprocal %124 {approx = true} : vector<4x8x1xf32> -> vector<4x8x1xf32>
    %126 = vector.broadcast %125 : vector<4x8x1xf32> to vector<4x8x8xf32>
    %127 = arith.mulf %122, %126 : vector<4x8x8xf32>
    "tpu.trace_start"() <{level = 10 : i32, message = "nst,ntd->nsd"}> : () -> ()
    %cst_66 = arith.constant dense<0.000000e+00> : vector<4x8x8xf32>
    %128 = tpu.matmul %127, %109, %cst_66 {dimension_numbers = #tpu.dot_dimension_numbers<[2], [1], [1], [2], [0, 0, 0, 1, 1, 2], [0], [0]>} : vector<4x8x8xf32>, vector<4x8x8xf32>, vector<4x8x8xf32> -> vector<4x8x8xf32>
    "tpu.trace_stop"() : () -> ()
    %129 = vector.extract_strided_slice %128 {offsets = [0, 0, 0], sizes = [1, 8, 8], strides = [1, 1, 1]} : vector<4x8x8xf32> to vector<1x8x8xf32>
    %130 = vector.shape_cast %129 : vector<1x8x8xf32> to vector<8x8xf32>
    %131 = vector.extract_strided_slice %38 {offsets = [0, 0, 0], sizes = [1, 8, 32], strides = [1, 1, 1]} : vector<4x8x32xf32> to vector<1x8x32xf32>
    %132 = vector.shape_cast %131 : vector<1x8x32xf32> to vector<8x32xf32>
    %cst_67 = arith.constant dense<0.000000e+00> : vector<8x32xf32>
    %133 = tpu.matmul %130, %132, %cst_67 {dimension_numbers = #tpu.dot_dimension_numbers<[1], [0], [0], [1], [0, 0, 1, 1], [], []>} : vector<8x8xf32>, vector<8x32xf32>, vector<8x32xf32> -> vector<8x32xf32>
    %134 = vector.extract_strided_slice %128 {offsets = [1, 0, 0], sizes = [1, 8, 8], strides = [1, 1, 1]} : vector<4x8x8xf32> to vector<1x8x8xf32>
    %135 = vector.shape_cast %134 : vector<1x8x8xf32> to vector<8x8xf32>
    %136 = vector.extract_strided_slice %38 {offsets = [1, 0, 0], sizes = [1, 8, 32], strides = [1, 1, 1]} : vector<4x8x32xf32> to vector<1x8x32xf32>
    %137 = vector.shape_cast %136 : vector<1x8x32xf32> to vector<8x32xf32>
    %cst_68 = arith.constant dense<0.000000e+00> : vector<8x32xf32>
    %138 = tpu.matmul %135, %137, %cst_68 {dimension_numbers = #tpu.dot_dimension_numbers<[1], [0], [0], [1], [0, 0, 1, 1], [], []>} : vector<8x8xf32>, vector<8x32xf32>, vector<8x32xf32> -> vector<8x32xf32>
    %139 = arith.addf %133, %138 : vector<8x32xf32>
    %140 = vector.extract_strided_slice %128 {offsets = [2, 0, 0], sizes = [1, 8, 8], strides = [1, 1, 1]} : vector<4x8x8xf32> to vector<1x8x8xf32>
    %141 = vector.shape_cast %140 : vector<1x8x8xf32> to vector<8x8xf32>
    %142 = vector.extract_strided_slice %38 {offsets = [2, 0, 0], sizes = [1, 8, 32], strides = [1, 1, 1]} : vector<4x8x32xf32> to vector<1x8x32xf32>
    %143 = vector.shape_cast %142 : vector<1x8x32xf32> to vector<8x32xf32>
    %cst_69 = arith.constant dense<0.000000e+00> : vector<8x32xf32>
    %144 = tpu.matmul %141, %143, %cst_69 {dimension_numbers = #tpu.dot_dimension_numbers<[1], [0], [0], [1], [0, 0, 1, 1], [], []>} : vector<8x8xf32>, vector<8x32xf32>, vector<8x32xf32> -> vector<8x32xf32>
    %145 = arith.addf %139, %144 : vector<8x32xf32>
    %146 = vector.extract_strided_slice %128 {offsets = [3, 0, 0], sizes = [1, 8, 8], strides = [1, 1, 1]} : vector<4x8x8xf32> to vector<1x8x8xf32>
    %147 = vector.shape_cast %146 : vector<1x8x8xf32> to vector<8x8xf32>
    %148 = vector.extract_strided_slice %38 {offsets = [3, 0, 0], sizes = [1, 8, 32], strides = [1, 1, 1]} : vector<4x8x32xf32> to vector<1x8x32xf32>
    %149 = vector.shape_cast %148 : vector<1x8x32xf32> to vector<8x32xf32>
    %cst_70 = arith.constant dense<0.000000e+00> : vector<8x32xf32>
    %150 = tpu.matmul %147, %149, %cst_70 {dimension_numbers = #tpu.dot_dimension_numbers<[1], [0], [0], [1], [0, 0, 1, 1], [], []>} : vector<8x8xf32>, vector<8x32xf32>, vector<8x32xf32> -> vector<8x32xf32>
    %151 = arith.addf %145, %150 : vector<8x32xf32>
    %152 = vector.broadcast %40 : vector<1x32xf32> to vector<8x32xf32>
    %153 = arith.addf %151, %152 : vector<8x32xf32>
    %c8 = arith.constant 8 : index
    %c0_71 = arith.constant 0 : index
    %154 = vector.load %arg23[%c8, %c0_71] : memref<16x32xf32, #tpu.memory_space<vmem>>, vector<8x32xf32>
    tpu.vector_store %arg23[%c8, %c0_71], %153 {strides = array<i32>} : memref<16x32xf32, #tpu.memory_space<vmem>>, vector<8x32xf32>,
    %c0_72 = arith.constant 0 : index
    %c0_73 = arith.constant 0 : index
    %155 = vector.load %arg23[%c0_72, %c0_73] : memref<16x32xf32, #tpu.memory_space<vmem>>, vector<16x32xf32>
    %156 = arith.addf %24, %155 : vector<16x32xf32>
    %c0_74 = arith.constant 0 : index
    %c0_75 = arith.constant 0 : index
    %c0_76 = arith.constant 0 : index
    %157 = vector.load %arg12[%c0_74, %c0_75, %c0_76] : memref<2x1x32xf32, #tpu.memory_space<vmem>>, vector<1x1x32xf32>
    %158 = vector.shape_cast %157 : vector<1x1x32xf32> to vector<1x32xf32>
    %c0_77 = arith.constant 0 : index
    %c0_78 = arith.constant 0 : index
    %c0_79 = arith.constant 0 : index
    %159 = vector.load %arg13[%c0_77, %c0_78, %c0_79] : memref<2x1x32xf32, #tpu.memory_space<vmem>>, vector<1x1x32xf32>
    %160 = vector.shape_cast %159 : vector<1x1x32xf32> to vector<1x32xf32>
    %cst_80 = arith.constant dense<0.000000e+00> : vector<16xf32>
    %161 = vector.multi_reduction <add>, %156, %cst_80 [1] : vector<16x32xf32> to vector<16xf32>
    %162 = vector.shape_cast %161 : vector<16xf32> to vector<16x1xf32>
    %cst_81 = arith.constant 3.200000e+01 : f32
    %163 = vector.broadcast %cst_81 : f32 to vector<16x1xf32>
    %164 = arith.divf %162, %163 : vector<16x1xf32>
    %165 = vector.broadcast %164 : vector<16x1xf32> to vector<16x32xf32>
    %166 = arith.subf %156, %165 : vector<16x32xf32>
    %167 = arith.mulf %166, %166 : vector<16x32xf32>
    %cst_82 = arith.constant dense<0.000000e+00> : vector<16xf32>
    %168 = vector.multi_reduction <add>, %167, %cst_82 [1] : vector<16x32xf32> to vector<16xf32>
    %169 = vector.shape_cast %168 : vector<16xf32> to vector<16x1xf32>
    %cst_83 = arith.constant 3.200000e+01 : f32
    %170 = vector.broadcast %cst_83 : f32 to vector<16x1xf32>
    %171 = arith.divf %169, %170 : vector<16x1xf32>
    %172 = vector.broadcast %164 : vector<16x1xf32> to vector<16x32xf32>
    %173 = arith.subf %156, %172 : vector<16x32xf32>
    %cst_84 = arith.constant 9.99999996E-13 : f32
    %174 = vector.broadcast %cst_84 : f32 to vector<16x1xf32>
    %175 = arith.addf %171, %174 : vector<16x1xf32>
    %176 = math.rsqrt %175 : vector<16x1xf32>
    %177 = vector.broadcast %176 : vector<16x1xf32> to vector<16x32xf32>
    %178 = arith.mulf %173, %177 : vector<16x32xf32>
    %179 = vector.broadcast %158 : vector<1x32xf32> to vector<16x32xf32>
    %180 = arith.mulf %178, %179 : vector<16x32xf32>
    %181 = vector.broadcast %160 : vector<1x32xf32> to vector<16x32xf32>
    %182 = arith.addf %180, %181 : vector<16x32xf32>
    %c0_85 = arith.constant 0 : index
    %c0_86 = arith.constant 0 : index
    %c0_87 = arith.constant 0 : index
    %183 = vector.load %arg14[%c0_85, %c0_86, %c0_87] : memref<2x32x64xf32, #tpu.memory_space<vmem>>, vector<1x32x64xf32>
    %184 = vector.shape_cast %183 : vector<1x32x64xf32> to vector<32x64xf32>
    %cst_88 = arith.constant dense<0.000000e+00> : vector<16x64xf32>
    %185 = tpu.matmul %182, %184, %cst_88 {dimension_numbers = #tpu.dot_dimension_numbers<[1], [0], [0], [1], [0, 0, 1, 1], [], []>} : vector<16x32xf32>, vector<32x64xf32>, vector<16x64xf32> -> vector<16x64xf32>
    %c0_89 = arith.constant 0 : index
    %c0_90 = arith.constant 0 : index
    %c0_91 = arith.constant 0 : index
    %186 = vector.load %arg15[%c0_89, %c0_90, %c0_91] : memref<2x1x64xf32, #tpu.memory_space<vmem>>, vector<1x1x64xf32>
    %187 = vector.shape_cast %186 : vector<1x1x64xf32> to vector<1x64xf32>
    %188 = vector.broadcast %187 : vector<1x64xf32> to vector<16x64xf32>
    %189 = arith.addf %185, %188 : vector<16x64xf32>
    %cst_92 = arith.constant 5.000000e-01 : f32
    %190 = vector.broadcast %cst_92 : f32 to vector<16x64xf32>
    %191 = arith.mulf %190, %189 : vector<16x64xf32>
    %cst_93 = arith.constant 0.707106769 : f32
    %192 = vector.broadcast %cst_93 : f32 to vector<16x64xf32>
    %193 = arith.mulf %189, %192 : vector<16x64xf32>
    %194 = math.absf %193 : vector<16x64xf32>
    %cst_94 = arith.constant 0.327591091 : f32
    %195 = vector.broadcast %cst_94 : f32 to vector<16x64xf32>
    %196 = arith.mulf %195, %194 : vector<16x64xf32>
    %cst_95 = arith.constant 1.000000e+00 : f32
    %197 = vector.broadcast %cst_95 : f32 to vector<16x64xf32>
    %198 = arith.addf %197, %196 : vector<16x64xf32>
    %cst_96 = arith.constant 1.000000e+00 : f32
    %199 = vector.broadcast %cst_96 : f32 to vector<16x64xf32>
    %200 = arith.divf %199, %198 : vector<16x64xf32>
    %cst_97 = arith.constant 1.06140542 : f32
    %201 = vector.broadcast %cst_97 : f32 to vector<16x64xf32>
    %202 = arith.mulf %201, %200 : vector<16x64xf32>
    %cst_98 = arith.constant -1.45315206 : f32
    %203 = vector.broadcast %cst_98 : f32 to vector<16x64xf32>
    %204 = arith.addf %202, %203 : vector<16x64xf32>
    %205 = arith.mulf %204, %200 : vector<16x64xf32>
    %cst_99 = arith.constant 1.42141378 : f32
    %206 = vector.broadcast %cst_99 : f32 to vector<16x64xf32>
    %207 = arith.addf %205, %206 : vector<16x64xf32>
    %208 = arith.mulf %207, %200 : vector<16x64xf32>
    %cst_100 = arith.constant -0.284496725 : f32
    %209 = vector.broadcast %cst_100 : f32 to vector<16x64xf32>
    %210 = arith.addf %208, %209 : vector<16x64xf32>
    %211 = arith.mulf %210, %200 : vector<16x64xf32>
    %cst_101 = arith.constant 0.254829586 : f32
    %212 = vector.broadcast %cst_101 : f32 to vector<16x64xf32>
    %213 = arith.addf %211, %212 : vector<16x64xf32>
    %214 = arith.mulf %213, %200 : vector<16x64xf32>
    %cst_102 = arith.constant 0.000000e+00 : f32
    %215 = vector.broadcast %cst_102 : f32 to vector<16x64xf32>
    %216 = arith.subf %215, %194 : vector<16x64xf32>
    %217 = arith.mulf %216, %194 : vector<16x64xf32>
    %218 = math.exp %217 : vector<16x64xf32>
    %219 = arith.mulf %214, %218 : vector<16x64xf32>
    %cst_103 = arith.constant 1.000000e+00 : f32
    %220 = vector.broadcast %cst_103 : f32 to vector<16x64xf32>
    %221 = arith.subf %220, %219 : vector<16x64xf32>
    %cst_104 = arith.constant 0.000000e+00 : f32
    %222 = vector.broadcast %cst_104 : f32 to vector<16x64xf32>
    %223 = arith.cmpf oge, %193, %222 : vector<16x64xf32>
    %cst_105 = arith.constant 0.000000e+00 : f32
    %224 = vector.broadcast %cst_105 : f32 to vector<16x64xf32>
    %225 = arith.subf %224, %221 : vector<16x64xf32>
    %226 = arith.select %223, %221, %225 : vector<16x64xi1>, vector<16x64xf32>
    %cst_106 = arith.constant 1.000000e+00 : f32
    %227 = vector.broadcast %cst_106 : f32 to vector<16x64xf32>
    %228 = arith.addf %227, %226 : vector<16x64xf32>
    %229 = arith.mulf %191, %228 : vector<16x64xf32>
    %c0_107 = arith.constant 0 : index
    %c0_108 = arith.constant 0 : index
    %c0_109 = arith.constant 0 : index
    %230 = vector.load %arg16[%c0_107, %c0_108, %c0_109] : memref<2x64x32xf32, #tpu.memory_space<vmem>>, vector<1x64x32xf32>
    %231 = vector.shape_cast %230 : vector<1x64x32xf32> to vector<64x32xf32>
    %cst_110 = arith.constant dense<0.000000e+00> : vector<16x32xf32>
    %232 = tpu.matmul %229, %231, %cst_110 {dimension_numbers = #tpu.dot_dimension_numbers<[1], [0], [0], [1], [0, 0, 1, 1], [], []>} : vector<16x64xf32>, vector<64x32xf32>, vector<16x32xf32> -> vector<16x32xf32>
    %c0_111 = arith.constant 0 : index
    %c0_112 = arith.constant 0 : index
    %c0_113 = arith.constant 0 : index
    %233 = vector.load %arg17[%c0_111, %c0_112, %c0_113] : memref<2x1x32xf32, #tpu.memory_space<vmem>>, vector<1x1x32xf32>
    %234 = vector.shape_cast %233 : vector<1x1x32xf32> to vector<1x32xf32>
    %235 = vector.broadcast %234 : vector<1x32xf32> to vector<16x32xf32>
    %236 = arith.addf %232, %235 : vector<16x32xf32>
    %237 = arith.addf %182, %236 : vector<16x32xf32>
    %c0_114 = arith.constant 0 : index
    %c0_115 = arith.constant 0 : index
    %c0_116 = arith.constant 0 : index
    %238 = vector.load %arg18[%c0_114, %c0_115, %c0_116] : memref<2x1x32xf32, #tpu.memory_space<vmem>>, vector<1x1x32xf32>
    %239 = vector.shape_cast %238 : vector<1x1x32xf32> to vector<1x32xf32>
    %c0_117 = arith.constant 0 : index
    %c0_118 = arith.constant 0 : index
    %c0_119 = arith.constant 0 : index
    %240 = vector.load %arg19[%c0_117, %c0_118, %c0_119] : memref<2x1x32xf32, #tpu.memory_space<vmem>>, vector<1x1x32xf32>
    %241 = vector.shape_cast %240 : vector<1x1x32xf32> to vector<1x32xf32>
    %cst_120 = arith.constant dense<0.000000e+00> : vector<16xf32>
    %242 = vector.multi_reduction <add>, %237, %cst_120 [1] : vector<16x32xf32> to vector<16xf32>
    %243 = vector.shape_cast %242 : vector<16xf32> to vector<16x1xf32>
    %cst_121 = arith.constant 3.200000e+01 : f32
    %244 = vector.broadcast %cst_121 : f32 to vector<16x1xf32>
    %245 = arith.divf %243, %244 : vector<16x1xf32>
    %246 = vector.broadcast %245 : vector<16x1xf32> to vector<16x32xf32>
    %247 = arith.subf %237, %246 : vector<16x32xf32>
    %248 = arith.mulf %247, %247 : vector<16x32xf32>
    %cst_122 = arith.constant dense<0.000000e+00> : vector<16xf32>
    %249 = vector.multi_reduction <add>, %248, %cst_122 [1] : vector<16x32xf32> to vector<16xf32>
    %250 = vector.shape_cast %249 : vector<16xf32> to vector<16x1xf32>
    %cst_123 = arith.constant 3.200000e+01 : f32
    %251 = vector.broadcast %cst_123 : f32 to vector<16x1xf32>
    %252 = arith.divf %250, %251 : vector<16x1xf32>
    %253 = vector.broadcast %245 : vector<16x1xf32> to vector<16x32xf32>
    %254 = arith.subf %237, %253 : vector<16x32xf32>
    %cst_124 = arith.constant 9.99999996E-13 : f32
    %255 = vector.broadcast %cst_124 : f32 to vector<16x1xf32>
    %256 = arith.addf %252, %255 : vector<16x1xf32>
    %257 = math.rsqrt %256 : vector<16x1xf32>
    %258 = vector.broadcast %257 : vector<16x1xf32> to vector<16x32xf32>
    %259 = arith.mulf %254, %258 : vector<16x32xf32>
    %260 = vector.broadcast %239 : vector<1x32xf32> to vector<16x32xf32>
    %261 = arith.mulf %259, %260 : vector<16x32xf32>
    %262 = vector.broadcast %241 : vector<1x32xf32> to vector<16x32xf32>
    %263 = arith.addf %261, %262 : vector<16x32xf32>
    %c1_125 = arith.constant 1 : index
    %c0_126 = arith.constant 0 : index
    %c0_127 = arith.constant 0 : index
    %c0_128 = arith.constant 0 : index
    %264 = vector.load %arg4[%c1_125, %c0_126, %c0_127, %c0_128] : memref<2x4x32x8xf32, #tpu.memory_space<vmem>>, vector<1x4x32x8xf32>
    %265 = vector.shape_cast %264 : vector<1x4x32x8xf32> to vector<4x32x8xf32>
    %c1_129 = arith.constant 1 : index
    %c0_130 = arith.constant 0 : index
    %c0_131 = arith.constant 0 : index
    %c0_132 = arith.constant 0 : index
    %266 = vector.load %arg6[%c1_129, %c0_130, %c0_131, %c0_132] : memref<2x4x32x8xf32, #tpu.memory_space<vmem>>, vector<1x4x32x8xf32>
    %267 = vector.shape_cast %266 : vector<1x4x32x8xf32> to vector<4x32x8xf32>
    %c1_133 = arith.constant 1 : index
    %c0_134 = arith.constant 0 : index
    %c0_135 = arith.constant 0 : index
    %c0_136 = arith.constant 0 : index
    %268 = vector.load %arg8[%c1_133, %c0_134, %c0_135, %c0_136] : memref<2x4x32x8xf32, #tpu.memory_space<vmem>>, vector<1x4x32x8xf32>
    %269 = vector.shape_cast %268 : vector<1x4x32x8xf32> to vector<4x32x8xf32>
    %c1_137 = arith.constant 1 : index
    %c0_138 = arith.constant 0 : index
    %c0_139 = arith.constant 0 : index
    %c0_140 = arith.constant 0 : index
    %270 = vector.load %arg5[%c1_137, %c0_138, %c0_139, %c0_140] : memref<2x4x1x8xf32, #tpu.memory_space<vmem>>, vector<1x4x1x8xf32>
    %271 = vector.shape_cast %270 : vector<1x4x1x8xf32> to vector<4x1x8xf32>
    %c1_141 = arith.constant 1 : index
    %c0_142 = arith.constant 0 : index
    %c0_143 = arith.constant 0 : index
    %c0_144 = arith.constant 0 : index
    %272 = vector.load %arg7[%c1_141, %c0_142, %c0_143, %c0_144] : memref<2x4x1x8xf32, #tpu.memory_space<vmem>>, vector<1x4x1x8xf32>
    %273 = vector.shape_cast %272 : vector<1x4x1x8xf32> to vector<4x1x8xf32>
    %c1_145 = arith.constant 1 : index
    %c0_146 = arith.constant 0 : index
    %c0_147 = arith.constant 0 : index
    %c0_148 = arith.constant 0 : index
    %274 = vector.load %arg9[%c1_145, %c0_146, %c0_147, %c0_148] : memref<2x4x1x8xf32, #tpu.memory_space<vmem>>, vector<1x4x1x8xf32>
    %275 = vector.shape_cast %274 : vector<1x4x1x8xf32> to vector<4x1x8xf32>
    %c1_149 = arith.constant 1 : index
    %c0_150 = arith.constant 0 : index
    %c0_151 = arith.constant 0 : index
    %c0_152 = arith.constant 0 : index
    %276 = vector.load %arg10[%c1_149, %c0_150, %c0_151, %c0_152] : memref<2x4x8x32xf32, #tpu.memory_space<vmem>>, vector<1x4x8x32xf32>
    %277 = vector.shape_cast %276 : vector<1x4x8x32xf32> to vector<4x8x32xf32>
    %c1_153 = arith.constant 1 : index
    %c0_154 = arith.constant 0 : index
    %c0_155 = arith.constant 0 : index
    %278 = vector.load %arg11[%c1_153, %c0_154, %c0_155] : memref<2x1x32xf32, #tpu.memory_space<vmem>>, vector<1x1x32xf32>
    %279 = vector.shape_cast %278 : vector<1x1x32xf32> to vector<1x32xf32>
    %280 = vector.extract_strided_slice %263 {offsets = [0, 0], sizes = [8, 32], strides = [1, 1]} : vector<16x32xf32> to vector<8x32xf32>
    %281 = vector.shape_cast %280 : vector<8x32xf32> to vector<1x8x32xf32>
    %282 = vector.broadcast %281 : vector<1x8x32xf32> to vector<4x8x32xf32>
    "tpu.trace_start"() <{level = 10 : i32, message = "nsh,nhd->nsd"}> : () -> ()
    %cst_156 = arith.constant dense<0.000000e+00> : vector<4x8x8xf32>
    %283 = tpu.matmul %282, %265, %cst_156 {dimension_numbers = #tpu.dot_dimension_numbers<[2], [1], [1], [2], [0, 0, 0, 1, 1, 2], [0], [0]>} : vector<4x8x32xf32>, vector<4x32x8xf32>, vector<4x8x8xf32> -> vector<4x8x8xf32>
    "tpu.trace_stop"() : () -> ()
    %284 = vector.broadcast %271 : vector<4x1x8xf32> to vector<4x8x8xf32>
    %285 = arith.addf %283, %284 : vector<4x8x8xf32>
    "tpu.trace_start"() <{level = 10 : i32, message = "nsh,nhd->nsd"}> : () -> ()
    %cst_157 = arith.constant dense<0.000000e+00> : vector<4x8x8xf32>
    %286 = tpu.matmul %282, %267, %cst_157 {dimension_numbers = #tpu.dot_dimension_numbers<[2], [1], [1], [2], [0, 0, 0, 1, 1, 2], [0], [0]>} : vector<4x8x32xf32>, vector<4x32x8xf32>, vector<4x8x8xf32> -> vector<4x8x8xf32>
    "tpu.trace_stop"() : () -> ()
    %287 = vector.broadcast %273 : vector<4x1x8xf32> to vector<4x8x8xf32>
    %288 = arith.addf %286, %287 : vector<4x8x8xf32>
    "tpu.trace_start"() <{level = 10 : i32, message = "nsh,nhd->nsd"}> : () -> ()
    %cst_158 = arith.constant dense<0.000000e+00> : vector<4x8x8xf32>
    %289 = tpu.matmul %282, %269, %cst_158 {dimension_numbers = #tpu.dot_dimension_numbers<[2], [1], [1], [2], [0, 0, 0, 1, 1, 2], [0], [0]>} : vector<4x8x32xf32>, vector<4x32x8xf32>, vector<4x8x8xf32> -> vector<4x8x8xf32>
    "tpu.trace_stop"() : () -> ()
    %290 = vector.broadcast %275 : vector<4x1x8xf32> to vector<4x8x8xf32>
    %291 = arith.addf %289, %290 : vector<4x8x8xf32>
    "tpu.trace_start"() <{level = 10 : i32, message = "nsd,ntd->nst"}> : () -> ()
    %cst_159 = arith.constant dense<0.000000e+00> : vector<4x8x8xf32>
    %292 = tpu.matmul %285, %288, %cst_159 {dimension_numbers = #tpu.dot_dimension_numbers<[2], [2], [1], [1], [0, 0, 0, 1, 1, 1], [0], [0]>} : vector<4x8x8xf32>, vector<4x8x8xf32>, vector<4x8x8xf32> -> vector<4x8x8xf32>
    "tpu.trace_stop"() : () -> ()
    %cst_160 = arith.constant 0.353553385 : f32
    %293 = vector.broadcast %cst_160 : f32 to vector<4x8x8xf32>
    %294 = arith.mulf %292, %293 : vector<4x8x8xf32>
    %c0_161 = arith.constant 0 : index
    %c0_162 = arith.constant 0 : index
    %c0_163 = arith.constant 0 : index
    %295 = vector.load %arg1[%c0_161, %c0_162, %c0_163] : memref<2x1x8xf32, #tpu.memory_space<vmem>>, vector<1x1x8xf32>
    %296 = vector.shape_cast %295 : vector<1x1x8xf32> to vector<1x8xf32>
    %297 = vector.shape_cast %296 : vector<1x8xf32> to vector<1x1x8xf32>
    %298 = vector.broadcast %297 : vector<1x1x8xf32> to vector<4x8x8xf32>
    %299 = arith.addf %294, %298 : vector<4x8x8xf32>
    %cst_164 = arith.constant dense<0xFF800000> : vector<4x8xf32>
    %300 = vector.multi_reduction <maximumf>, %299, %cst_164 [2] : vector<4x8x8xf32> to vector<4x8xf32>
    %301 = vector.shape_cast %300 : vector<4x8xf32> to vector<4x8x1xf32>
    %302 = vector.broadcast %301 : vector<4x8x1xf32> to vector<4x8x8xf32>
    %303 = arith.subf %299, %302 : vector<4x8x8xf32>
    %304 = math.exp %303 : vector<4x8x8xf32>
    %cst_165 = arith.constant dense<0.000000e+00> : vector<4x8xf32>
    %305 = vector.multi_reduction <add>, %304, %cst_165 [2] : vector<4x8x8xf32> to vector<4x8xf32>
    %306 = vector.shape_cast %305 : vector<4x8xf32> to vector<4x8x1xf32>
    %307 = tpu.reciprocal %306 {approx = true} : vector<4x8x1xf32> -> vector<4x8x1xf32>
    %308 = vector.broadcast %307 : vector<4x8x1xf32> to vector<4x8x8xf32>
    %309 = arith.mulf %304, %308 : vector<4x8x8xf32>
    "tpu.trace_start"() <{level = 10 : i32, message = "nst,ntd->nsd"}> : () -> ()
    %cst_166 = arith.constant dense<0.000000e+00> : vector<4x8x8xf32>
    %310 = tpu.matmul %309, %291, %cst_166 {dimension_numbers = #tpu.dot_dimension_numbers<[2], [1], [1], [2], [0, 0, 0, 1, 1, 2], [0], [0]>} : vector<4x8x8xf32>, vector<4x8x8xf32>, vector<4x8x8xf32> -> vector<4x8x8xf32>
    "tpu.trace_stop"() : () -> ()
    %311 = vector.extract_strided_slice %310 {offsets = [0, 0, 0], sizes = [1, 8, 8], strides = [1, 1, 1]} : vector<4x8x8xf32> to vector<1x8x8xf32>
    %312 = vector.shape_cast %311 : vector<1x8x8xf32> to vector<8x8xf32>
    %313 = vector.extract_strided_slice %277 {offsets = [0, 0, 0], sizes = [1, 8, 32], strides = [1, 1, 1]} : vector<4x8x32xf32> to vector<1x8x32xf32>
    %314 = vector.shape_cast %313 : vector<1x8x32xf32> to vector<8x32xf32>
    %cst_167 = arith.constant dense<0.000000e+00> : vector<8x32xf32>
    %315 = tpu.matmul %312, %314, %cst_167 {dimension_numbers = #tpu.dot_dimension_numbers<[1], [0], [0], [1], [0, 0, 1, 1], [], []>} : vector<8x8xf32>, vector<8x32xf32>, vector<8x32xf32> -> vector<8x32xf32>
    %316 = vector.extract_strided_slice %310 {offsets = [1, 0, 0], sizes = [1, 8, 8], strides = [1, 1, 1]} : vector<4x8x8xf32> to vector<1x8x8xf32>
    %317 = vector.shape_cast %316 : vector<1x8x8xf32> to vector<8x8xf32>
    %318 = vector.extract_strided_slice %277 {offsets = [1, 0, 0], sizes = [1, 8, 32], strides = [1, 1, 1]} : vector<4x8x32xf32> to vector<1x8x32xf32>
    %319 = vector.shape_cast %318 : vector<1x8x32xf32> to vector<8x32xf32>
    %cst_168 = arith.constant dense<0.000000e+00> : vector<8x32xf32>
    %320 = tpu.matmul %317, %319, %cst_168 {dimension_numbers = #tpu.dot_dimension_numbers<[1], [0], [0], [1], [0, 0, 1, 1], [], []>} : vector<8x8xf32>, vector<8x32xf32>, vector<8x32xf32> -> vector<8x32xf32>
    %321 = arith.addf %315, %320 : vector<8x32xf32>
    %322 = vector.extract_strided_slice %310 {offsets = [2, 0, 0], sizes = [1, 8, 8], strides = [1, 1, 1]} : vector<4x8x8xf32> to vector<1x8x8xf32>
    %323 = vector.shape_cast %322 : vector<1x8x8xf32> to vector<8x8xf32>
    %324 = vector.extract_strided_slice %277 {offsets = [2, 0, 0], sizes = [1, 8, 32], strides = [1, 1, 1]} : vector<4x8x32xf32> to vector<1x8x32xf32>
    %325 = vector.shape_cast %324 : vector<1x8x32xf32> to vector<8x32xf32>
    %cst_169 = arith.constant dense<0.000000e+00> : vector<8x32xf32>
    %326 = tpu.matmul %323, %325, %cst_169 {dimension_numbers = #tpu.dot_dimension_numbers<[1], [0], [0], [1], [0, 0, 1, 1], [], []>} : vector<8x8xf32>, vector<8x32xf32>, vector<8x32xf32> -> vector<8x32xf32>
    %327 = arith.addf %321, %326 : vector<8x32xf32>
    %328 = vector.extract_strided_slice %310 {offsets = [3, 0, 0], sizes = [1, 8, 8], strides = [1, 1, 1]} : vector<4x8x8xf32> to vector<1x8x8xf32>
    %329 = vector.shape_cast %328 : vector<1x8x8xf32> to vector<8x8xf32>
    %330 = vector.extract_strided_slice %277 {offsets = [3, 0, 0], sizes = [1, 8, 32], strides = [1, 1, 1]} : vector<4x8x32xf32> to vector<1x8x32xf32>
    %331 = vector.shape_cast %330 : vector<1x8x32xf32> to vector<8x32xf32>
    %cst_170 = arith.constant dense<0.000000e+00> : vector<8x32xf32>
    %332 = tpu.matmul %329, %331, %cst_170 {dimension_numbers = #tpu.dot_dimension_numbers<[1], [0], [0], [1], [0, 0, 1, 1], [], []>} : vector<8x8xf32>, vector<8x32xf32>, vector<8x32xf32> -> vector<8x32xf32>
    %333 = arith.addf %327, %332 : vector<8x32xf32>
    %334 = vector.broadcast %279 : vector<1x32xf32> to vector<8x32xf32>
    %335 = arith.addf %333, %334 : vector<8x32xf32>
    %c0_171 = arith.constant 0 : index
    %c0_172 = arith.constant 0 : index
    %336 = vector.load %arg23[%c0_171, %c0_172] : memref<16x32xf32, #tpu.memory_space<vmem>>, vector<8x32xf32>
    tpu.vector_store %arg23[%c0_171, %c0_172], %335 {strides = array<i32>} : memref<16x32xf32, #tpu.memory_space<vmem>>, vector<8x32xf32>,
    %337 = vector.extract_strided_slice %263 {offsets = [8, 0], sizes = [8, 32], strides = [1, 1]} : vector<16x32xf32> to vector<8x32xf32>
    %338 = vector.shape_cast %337 : vector<8x32xf32> to vector<1x8x32xf32>
    %339 = vector.broadcast %338 : vector<1x8x32xf32> to vector<4x8x32xf32>
    "tpu.trace_start"() <{level = 10 : i32, message = "nsh,nhd->nsd"}> : () -> ()
    %cst_173 = arith.constant dense<0.000000e+00> : vector<4x8x8xf32>
    %340 = tpu.matmul %339, %265, %cst_173 {dimension_numbers = #tpu.dot_dimension_numbers<[2], [1], [1], [2], [0, 0, 0, 1, 1, 2], [0], [0]>} : vector<4x8x32xf32>, vector<4x32x8xf32>, vector<4x8x8xf32> -> vector<4x8x8xf32>
    "tpu.trace_stop"() : () -> ()
    %341 = vector.broadcast %271 : vector<4x1x8xf32> to vector<4x8x8xf32>
    %342 = arith.addf %340, %341 : vector<4x8x8xf32>
    "tpu.trace_start"() <{level = 10 : i32, message = "nsh,nhd->nsd"}> : () -> ()
    %cst_174 = arith.constant dense<0.000000e+00> : vector<4x8x8xf32>
    %343 = tpu.matmul %339, %267, %cst_174 {dimension_numbers = #tpu.dot_dimension_numbers<[2], [1], [1], [2], [0, 0, 0, 1, 1, 2], [0], [0]>} : vector<4x8x32xf32>, vector<4x32x8xf32>, vector<4x8x8xf32> -> vector<4x8x8xf32>
    "tpu.trace_stop"() : () -> ()
    %344 = vector.broadcast %273 : vector<4x1x8xf32> to vector<4x8x8xf32>
    %345 = arith.addf %343, %344 : vector<4x8x8xf32>
    "tpu.trace_start"() <{level = 10 : i32, message = "nsh,nhd->nsd"}> : () -> ()
    %cst_175 = arith.constant dense<0.000000e+00> : vector<4x8x8xf32>
    %346 = tpu.matmul %339, %269, %cst_175 {dimension_numbers = #tpu.dot_dimension_numbers<[2], [1], [1], [2], [0, 0, 0, 1, 1, 2], [0], [0]>} : vector<4x8x32xf32>, vector<4x32x8xf32>, vector<4x8x8xf32> -> vector<4x8x8xf32>
    "tpu.trace_stop"() : () -> ()
    %347 = vector.broadcast %275 : vector<4x1x8xf32> to vector<4x8x8xf32>
    %348 = arith.addf %346, %347 : vector<4x8x8xf32>
    "tpu.trace_start"() <{level = 10 : i32, message = "nsd,ntd->nst"}> : () -> ()
    %cst_176 = arith.constant dense<0.000000e+00> : vector<4x8x8xf32>
    %349 = tpu.matmul %342, %345, %cst_176 {dimension_numbers = #tpu.dot_dimension_numbers<[2], [2], [1], [1], [0, 0, 0, 1, 1, 1], [0], [0]>} : vector<4x8x8xf32>, vector<4x8x8xf32>, vector<4x8x8xf32> -> vector<4x8x8xf32>
    "tpu.trace_stop"() : () -> ()
    %cst_177 = arith.constant 0.353553385 : f32
    %350 = vector.broadcast %cst_177 : f32 to vector<4x8x8xf32>
    %351 = arith.mulf %349, %350 : vector<4x8x8xf32>
    %c1_178 = arith.constant 1 : index
    %c0_179 = arith.constant 0 : index
    %c0_180 = arith.constant 0 : index
    %352 = vector.load %arg1[%c1_178, %c0_179, %c0_180] : memref<2x1x8xf32, #tpu.memory_space<vmem>>, vector<1x1x8xf32>
    %353 = vector.shape_cast %352 : vector<1x1x8xf32> to vector<1x8xf32>
    %354 = vector.shape_cast %353 : vector<1x8xf32> to vector<1x1x8xf32>
    %355 = vector.broadcast %354 : vector<1x1x8xf32> to vector<4x8x8xf32>
    %356 = arith.addf %351, %355 : vector<4x8x8xf32>
    %cst_181 = arith.constant dense<0xFF800000> : vector<4x8xf32>
    %357 = vector.multi_reduction <maximumf>, %356, %cst_181 [2] : vector<4x8x8xf32> to vector<4x8xf32>
    %358 = vector.shape_cast %357 : vector<4x8xf32> to vector<4x8x1xf32>
    %359 = vector.broadcast %358 : vector<4x8x1xf32> to vector<4x8x8xf32>
    %360 = arith.subf %356, %359 : vector<4x8x8xf32>
    %361 = math.exp %360 : vector<4x8x8xf32>
    %cst_182 = arith.constant dense<0.000000e+00> : vector<4x8xf32>
    %362 = vector.multi_reduction <add>, %361, %cst_182 [2] : vector<4x8x8xf32> to vector<4x8xf32>
    %363 = vector.shape_cast %362 : vector<4x8xf32> to vector<4x8x1xf32>
    %364 = tpu.reciprocal %363 {approx = true} : vector<4x8x1xf32> -> vector<4x8x1xf32>
    %365 = vector.broadcast %364 : vector<4x8x1xf32> to vector<4x8x8xf32>
    %366 = arith.mulf %361, %365 : vector<4x8x8xf32>
    "tpu.trace_start"() <{level = 10 : i32, message = "nst,ntd->nsd"}> : () -> ()
    %cst_183 = arith.constant dense<0.000000e+00> : vector<4x8x8xf32>
    %367 = tpu.matmul %366, %348, %cst_183 {dimension_numbers = #tpu.dot_dimension_numbers<[2], [1], [1], [2], [0, 0, 0, 1, 1, 2], [0], [0]>} : vector<4x8x8xf32>, vector<4x8x8xf32>, vector<4x8x8xf32> -> vector<4x8x8xf32>
    "tpu.trace_stop"() : () -> ()
    %368 = vector.extract_strided_slice %367 {offsets = [0, 0, 0], sizes = [1, 8, 8], strides = [1, 1, 1]} : vector<4x8x8xf32> to vector<1x8x8xf32>
    %369 = vector.shape_cast %368 : vector<1x8x8xf32> to vector<8x8xf32>
    %370 = vector.extract_strided_slice %277 {offsets = [0, 0, 0], sizes = [1, 8, 32], strides = [1, 1, 1]} : vector<4x8x32xf32> to vector<1x8x32xf32>
    %371 = vector.shape_cast %370 : vector<1x8x32xf32> to vector<8x32xf32>
    %cst_184 = arith.constant dense<0.000000e+00> : vector<8x32xf32>
    %372 = tpu.matmul %369, %371, %cst_184 {dimension_numbers = #tpu.dot_dimension_numbers<[1], [0], [0], [1], [0, 0, 1, 1], [], []>} : vector<8x8xf32>, vector<8x32xf32>, vector<8x32xf32> -> vector<8x32xf32>
    %373 = vector.extract_strided_slice %367 {offsets = [1, 0, 0], sizes = [1, 8, 8], strides = [1, 1, 1]} : vector<4x8x8xf32> to vector<1x8x8xf32>
    %374 = vector.shape_cast %373 : vector<1x8x8xf32> to vector<8x8xf32>
    %375 = vector.extract_strided_slice %277 {offsets = [1, 0, 0], sizes = [1, 8, 32], strides = [1, 1, 1]} : vector<4x8x32xf32> to vector<1x8x32xf32>
    %376 = vector.shape_cast %375 : vector<1x8x32xf32> to vector<8x32xf32>
    %cst_185 = arith.constant dense<0.000000e+00> : vector<8x32xf32>
    %377 = tpu.matmul %374, %376, %cst_185 {dimension_numbers = #tpu.dot_dimension_numbers<[1], [0], [0], [1], [0, 0, 1, 1], [], []>} : vector<8x8xf32>, vector<8x32xf32>, vector<8x32xf32> -> vector<8x32xf32>
    %378 = arith.addf %372, %377 : vector<8x32xf32>
    %379 = vector.extract_strided_slice %367 {offsets = [2, 0, 0], sizes = [1, 8, 8], strides = [1, 1, 1]} : vector<4x8x8xf32> to vector<1x8x8xf32>
    %380 = vector.shape_cast %379 : vector<1x8x8xf32> to vector<8x8xf32>
    %381 = vector.extract_strided_slice %277 {offsets = [2, 0, 0], sizes = [1, 8, 32], strides = [1, 1, 1]} : vector<4x8x32xf32> to vector<1x8x32xf32>
    %382 = vector.shape_cast %381 : vector<1x8x32xf32> to vector<8x32xf32>
    %cst_186 = arith.constant dense<0.000000e+00> : vector<8x32xf32>
    %383 = tpu.matmul %380, %382, %cst_186 {dimension_numbers = #tpu.dot_dimension_numbers<[1], [0], [0], [1], [0, 0, 1, 1], [], []>} : vector<8x8xf32>, vector<8x32xf32>, vector<8x32xf32> -> vector<8x32xf32>
    %384 = arith.addf %378, %383 : vector<8x32xf32>
    %385 = vector.extract_strided_slice %367 {offsets = [3, 0, 0], sizes = [1, 8, 8], strides = [1, 1, 1]} : vector<4x8x8xf32> to vector<1x8x8xf32>
    %386 = vector.shape_cast %385 : vector<1x8x8xf32> to vector<8x8xf32>
    %387 = vector.extract_strided_slice %277 {offsets = [3, 0, 0], sizes = [1, 8, 32], strides = [1, 1, 1]} : vector<4x8x32xf32> to vector<1x8x32xf32>
    %388 = vector.shape_cast %387 : vector<1x8x32xf32> to vector<8x32xf32>
    %cst_187 = arith.constant dense<0.000000e+00> : vector<8x32xf32>
    %389 = tpu.matmul %386, %388, %cst_187 {dimension_numbers = #tpu.dot_dimension_numbers<[1], [0], [0], [1], [0, 0, 1, 1], [], []>} : vector<8x8xf32>, vector<8x32xf32>, vector<8x32xf32> -> vector<8x32xf32>
    %390 = arith.addf %384, %389 : vector<8x32xf32>
    %391 = vector.broadcast %279 : vector<1x32xf32> to vector<8x32xf32>
    %392 = arith.addf %390, %391 : vector<8x32xf32>
    %c8_188 = arith.constant 8 : index
    %c0_189 = arith.constant 0 : index
    %393 = vector.load %arg23[%c8_188, %c0_189] : memref<16x32xf32, #tpu.memory_space<vmem>>, vector<8x32xf32>
    tpu.vector_store %arg23[%c8_188, %c0_189], %392 {strides = array<i32>} : memref<16x32xf32, #tpu.memory_space<vmem>>, vector<8x32xf32>,
    %c0_190 = arith.constant 0 : index
    %c0_191 = arith.constant 0 : index
    %394 = vector.load %arg23[%c0_190, %c0_191] : memref<16x32xf32, #tpu.memory_space<vmem>>, vector<16x32xf32>
    %395 = arith.addf %263, %394 : vector<16x32xf32>
    %c1_192 = arith.constant 1 : index
    %c0_193 = arith.constant 0 : index
    %c0_194 = arith.constant 0 : index
    %396 = vector.load %arg12[%c1_192, %c0_193, %c0_194] : memref<2x1x32xf32, #tpu.memory_space<vmem>>, vector<1x1x32xf32>
    %397 = vector.shape_cast %396 : vector<1x1x32xf32> to vector<1x32xf32>
    %c1_195 = arith.constant 1 : index
    %c0_196 = arith.constant 0 : index
    %c0_197 = arith.constant 0 : index
    %398 = vector.load %arg13[%c1_195, %c0_196, %c0_197] : memref<2x1x32xf32, #tpu.memory_space<vmem>>, vector<1x1x32xf32>
    %399 = vector.shape_cast %398 : vector<1x1x32xf32> to vector<1x32xf32>
    %cst_198 = arith.constant dense<0.000000e+00> : vector<16xf32>
    %400 = vector.multi_reduction <add>, %395, %cst_198 [1] : vector<16x32xf32> to vector<16xf32>
    %401 = vector.shape_cast %400 : vector<16xf32> to vector<16x1xf32>
    %cst_199 = arith.constant 3.200000e+01 : f32
    %402 = vector.broadcast %cst_199 : f32 to vector<16x1xf32>
    %403 = arith.divf %401, %402 : vector<16x1xf32>
    %404 = vector.broadcast %403 : vector<16x1xf32> to vector<16x32xf32>
    %405 = arith.subf %395, %404 : vector<16x32xf32>
    %406 = arith.mulf %405, %405 : vector<16x32xf32>
    %cst_200 = arith.constant dense<0.000000e+00> : vector<16xf32>
    %407 = vector.multi_reduction <add>, %406, %cst_200 [1] : vector<16x32xf32> to vector<16xf32>
    %408 = vector.shape_cast %407 : vector<16xf32> to vector<16x1xf32>
    %cst_201 = arith.constant 3.200000e+01 : f32
    %409 = vector.broadcast %cst_201 : f32 to vector<16x1xf32>
    %410 = arith.divf %408, %409 : vector<16x1xf32>
    %411 = vector.broadcast %403 : vector<16x1xf32> to vector<16x32xf32>
    %412 = arith.subf %395, %411 : vector<16x32xf32>
    %cst_202 = arith.constant 9.99999996E-13 : f32
    %413 = vector.broadcast %cst_202 : f32 to vector<16x1xf32>
    %414 = arith.addf %410, %413 : vector<16x1xf32>
    %415 = math.rsqrt %414 : vector<16x1xf32>
    %416 = vector.broadcast %415 : vector<16x1xf32> to vector<16x32xf32>
    %417 = arith.mulf %412, %416 : vector<16x32xf32>
    %418 = vector.broadcast %397 : vector<1x32xf32> to vector<16x32xf32>
    %419 = arith.mulf %417, %418 : vector<16x32xf32>
    %420 = vector.broadcast %399 : vector<1x32xf32> to vector<16x32xf32>
    %421 = arith.addf %419, %420 : vector<16x32xf32>
    %c1_203 = arith.constant 1 : index
    %c0_204 = arith.constant 0 : index
    %c0_205 = arith.constant 0 : index
    %422 = vector.load %arg14[%c1_203, %c0_204, %c0_205] : memref<2x32x64xf32, #tpu.memory_space<vmem>>, vector<1x32x64xf32>
    %423 = vector.shape_cast %422 : vector<1x32x64xf32> to vector<32x64xf32>
    %cst_206 = arith.constant dense<0.000000e+00> : vector<16x64xf32>
    %424 = tpu.matmul %421, %423, %cst_206 {dimension_numbers = #tpu.dot_dimension_numbers<[1], [0], [0], [1], [0, 0, 1, 1], [], []>} : vector<16x32xf32>, vector<32x64xf32>, vector<16x64xf32> -> vector<16x64xf32>
    %c1_207 = arith.constant 1 : index
    %c0_208 = arith.constant 0 : index
    %c0_209 = arith.constant 0 : index
    %425 = vector.load %arg15[%c1_207, %c0_208, %c0_209] : memref<2x1x64xf32, #tpu.memory_space<vmem>>, vector<1x1x64xf32>
    %426 = vector.shape_cast %425 : vector<1x1x64xf32> to vector<1x64xf32>
    %427 = vector.broadcast %426 : vector<1x64xf32> to vector<16x64xf32>
    %428 = arith.addf %424, %427 : vector<16x64xf32>
    %cst_210 = arith.constant 5.000000e-01 : f32
    %429 = vector.broadcast %cst_210 : f32 to vector<16x64xf32>
    %430 = arith.mulf %429, %428 : vector<16x64xf32>
    %cst_211 = arith.constant 0.707106769 : f32
    %431 = vector.broadcast %cst_211 : f32 to vector<16x64xf32>
    %432 = arith.mulf %428, %431 : vector<16x64xf32>
    %433 = math.absf %432 : vector<16x64xf32>
    %cst_212 = arith.constant 0.327591091 : f32
    %434 = vector.broadcast %cst_212 : f32 to vector<16x64xf32>
    %435 = arith.mulf %434, %433 : vector<16x64xf32>
    %cst_213 = arith.constant 1.000000e+00 : f32
    %436 = vector.broadcast %cst_213 : f32 to vector<16x64xf32>
    %437 = arith.addf %436, %435 : vector<16x64xf32>
    %cst_214 = arith.constant 1.000000e+00 : f32
    %438 = vector.broadcast %cst_214 : f32 to vector<16x64xf32>
    %439 = arith.divf %438, %437 : vector<16x64xf32>
    %cst_215 = arith.constant 1.06140542 : f32
    %440 = vector.broadcast %cst_215 : f32 to vector<16x64xf32>
    %441 = arith.mulf %440, %439 : vector<16x64xf32>
    %cst_216 = arith.constant -1.45315206 : f32
    %442 = vector.broadcast %cst_216 : f32 to vector<16x64xf32>
    %443 = arith.addf %441, %442 : vector<16x64xf32>
    %444 = arith.mulf %443, %439 : vector<16x64xf32>
    %cst_217 = arith.constant 1.42141378 : f32
    %445 = vector.broadcast %cst_217 : f32 to vector<16x64xf32>
    %446 = arith.addf %444, %445 : vector<16x64xf32>
    %447 = arith.mulf %446, %439 : vector<16x64xf32>
    %cst_218 = arith.constant -0.284496725 : f32
    %448 = vector.broadcast %cst_218 : f32 to vector<16x64xf32>
    %449 = arith.addf %447, %448 : vector<16x64xf32>
    %450 = arith.mulf %449, %439 : vector<16x64xf32>
    %cst_219 = arith.constant 0.254829586 : f32
    %451 = vector.broadcast %cst_219 : f32 to vector<16x64xf32>
    %452 = arith.addf %450, %451 : vector<16x64xf32>
    %453 = arith.mulf %452, %439 : vector<16x64xf32>
    %cst_220 = arith.constant 0.000000e+00 : f32
    %454 = vector.broadcast %cst_220 : f32 to vector<16x64xf32>
    %455 = arith.subf %454, %433 : vector<16x64xf32>
    %456 = arith.mulf %455, %433 : vector<16x64xf32>
    %457 = math.exp %456 : vector<16x64xf32>
    %458 = arith.mulf %453, %457 : vector<16x64xf32>
    %cst_221 = arith.constant 1.000000e+00 : f32
    %459 = vector.broadcast %cst_221 : f32 to vector<16x64xf32>
    %460 = arith.subf %459, %458 : vector<16x64xf32>
    %cst_222 = arith.constant 0.000000e+00 : f32
    %461 = vector.broadcast %cst_222 : f32 to vector<16x64xf32>
    %462 = arith.cmpf oge, %432, %461 : vector<16x64xf32>
    %cst_223 = arith.constant 0.000000e+00 : f32
    %463 = vector.broadcast %cst_223 : f32 to vector<16x64xf32>
    %464 = arith.subf %463, %460 : vector<16x64xf32>
    %465 = arith.select %462, %460, %464 : vector<16x64xi1>, vector<16x64xf32>
    %cst_224 = arith.constant 1.000000e+00 : f32
    %466 = vector.broadcast %cst_224 : f32 to vector<16x64xf32>
    %467 = arith.addf %466, %465 : vector<16x64xf32>
    %468 = arith.mulf %430, %467 : vector<16x64xf32>
    %c1_225 = arith.constant 1 : index
    %c0_226 = arith.constant 0 : index
    %c0_227 = arith.constant 0 : index
    %469 = vector.load %arg16[%c1_225, %c0_226, %c0_227] : memref<2x64x32xf32, #tpu.memory_space<vmem>>, vector<1x64x32xf32>
    %470 = vector.shape_cast %469 : vector<1x64x32xf32> to vector<64x32xf32>
    %cst_228 = arith.constant dense<0.000000e+00> : vector<16x32xf32>
    %471 = tpu.matmul %468, %470, %cst_228 {dimension_numbers = #tpu.dot_dimension_numbers<[1], [0], [0], [1], [0, 0, 1, 1], [], []>} : vector<16x64xf32>, vector<64x32xf32>, vector<16x32xf32> -> vector<16x32xf32>
    %c1_229 = arith.constant 1 : index
    %c0_230 = arith.constant 0 : index
    %c0_231 = arith.constant 0 : index
    %472 = vector.load %arg17[%c1_229, %c0_230, %c0_231] : memref<2x1x32xf32, #tpu.memory_space<vmem>>, vector<1x1x32xf32>
    %473 = vector.shape_cast %472 : vector<1x1x32xf32> to vector<1x32xf32>
    %474 = vector.broadcast %473 : vector<1x32xf32> to vector<16x32xf32>
    %475 = arith.addf %471, %474 : vector<16x32xf32>
    %476 = arith.addf %421, %475 : vector<16x32xf32>
    %c1_232 = arith.constant 1 : index
    %c0_233 = arith.constant 0 : index
    %c0_234 = arith.constant 0 : index
    %477 = vector.load %arg18[%c1_232, %c0_233, %c0_234] : memref<2x1x32xf32, #tpu.memory_space<vmem>>, vector<1x1x32xf32>
    %478 = vector.shape_cast %477 : vector<1x1x32xf32> to vector<1x32xf32>
    %c1_235 = arith.constant 1 : index
    %c0_236 = arith.constant 0 : index
    %c0_237 = arith.constant 0 : index
    %479 = vector.load %arg19[%c1_235, %c0_236, %c0_237] : memref<2x1x32xf32, #tpu.memory_space<vmem>>, vector<1x1x32xf32>
    %480 = vector.shape_cast %479 : vector<1x1x32xf32> to vector<1x32xf32>
    %cst_238 = arith.constant dense<0.000000e+00> : vector<16xf32>
    %481 = vector.multi_reduction <add>, %476, %cst_238 [1] : vector<16x32xf32> to vector<16xf32>
    %482 = vector.shape_cast %481 : vector<16xf32> to vector<16x1xf32>
    %cst_239 = arith.constant 3.200000e+01 : f32
    %483 = vector.broadcast %cst_239 : f32 to vector<16x1xf32>
    %484 = arith.divf %482, %483 : vector<16x1xf32>
    %485 = vector.broadcast %484 : vector<16x1xf32> to vector<16x32xf32>
    %486 = arith.subf %476, %485 : vector<16x32xf32>
    %487 = arith.mulf %486, %486 : vector<16x32xf32>
    %cst_240 = arith.constant dense<0.000000e+00> : vector<16xf32>
    %488 = vector.multi_reduction <add>, %487, %cst_240 [1] : vector<16x32xf32> to vector<16xf32>
    %489 = vector.shape_cast %488 : vector<16xf32> to vector<16x1xf32>
    %cst_241 = arith.constant 3.200000e+01 : f32
    %490 = vector.broadcast %cst_241 : f32 to vector<16x1xf32>
    %491 = arith.divf %489, %490 : vector<16x1xf32>
    %492 = vector.broadcast %484 : vector<16x1xf32> to vector<16x32xf32>
    %493 = arith.subf %476, %492 : vector<16x32xf32>
    %cst_242 = arith.constant 9.99999996E-13 : f32
    %494 = vector.broadcast %cst_242 : f32 to vector<16x1xf32>
    %495 = arith.addf %491, %494 : vector<16x1xf32>
    %496 = math.rsqrt %495 : vector<16x1xf32>
    %497 = vector.broadcast %496 : vector<16x1xf32> to vector<16x32xf32>
    %498 = arith.mulf %493, %497 : vector<16x32xf32>
    %499 = vector.broadcast %478 : vector<1x32xf32> to vector<16x32xf32>
    %500 = arith.mulf %498, %499 : vector<16x32xf32>
    %501 = vector.broadcast %480 : vector<1x32xf32> to vector<16x32xf32>
    %502 = arith.addf %500, %501 : vector<16x32xf32>
    %c0_243 = arith.constant 0 : index
    %c0_244 = arith.constant 0 : index
    %503 = vector.load %arg20[%c0_243, %c0_244] : memref<32x128xf32, #tpu.memory_space<vmem>>, vector<32x128xf32>
    %cst_245 = arith.constant dense<0.000000e+00> : vector<16x128xf32>
    %504 = tpu.matmul %502, %503, %cst_245 {dimension_numbers = #tpu.dot_dimension_numbers<[1], [0], [0], [1], [0, 0, 1, 1], [], []>} : vector<16x32xf32>, vector<32x128xf32>, vector<16x128xf32> -> vector<16x128xf32>
    %c0_246 = arith.constant 0 : index
    %c0_247 = arith.constant 0 : index
    %505 = vector.load %arg21[%c0_246, %c0_247] : memref<1x128xf32, #tpu.memory_space<vmem>>, vector<1x128xf32>
    %506 = vector.broadcast %505 : vector<1x128xf32> to vector<16x128xf32>
    %507 = arith.addf %504, %506 : vector<16x128xf32>
    %c0_248 = arith.constant 0 : index
    %c0_249 = arith.constant 0 : index
    %508 = vector.load %arg22[%c0_248, %c0_249] : memref<16x128xf32, #tpu.memory_space<vmem>>, vector<16x128xf32>
    tpu.vector_store %arg22[%c0_248, %c0_249], %507 {strides = array<i32>} : memref<16x128xf32, #tpu.memory_space<vmem>>, vector<16x128xf32>,
    return
  }
}

</mosaic_0001>

<llo_original>
// kernel: distilbert_class_forward.1
$region0: #{distilbert_class_forward.1}
  #allocation0 [shape = 'u32[]', space=smem, size = 0x4, offset = 0x4, fixed_abs, tag = 'smem constant byte address 0x4 - core index']
  #allocation1 [shape = 'u32[144,128]{1,0:T(1,128)}', space=vmem, size = 0x12000, scoped, tag = 'internal scratch']
  #allocation2 [shape = 'f32[16,32]{1,0:T(8,128)}', space=vmem, size = 0x2000, scoped, tag = 'scratch operand']
  %s0 = inlined_call_operand.vmem [shape: f32[16,32], index: 0, kind: input, shape index: {}]
  %s1 = inlined_call_operand.vmem [shape: f32[2,1,8], index: 1, kind: input, shape index: {}]
  %s2 = inlined_call_operand.vmem [shape: f32[1,32], index: 2, kind: input, shape index: {}]
  %s3 = inlined_call_operand.vmem [shape: f32[1,32], index: 3, kind: input, shape index: {}]
  %s4 = inlined_call_operand.vmem [shape: f32[2,4,32,8], index: 4, kind: input, shape index: {}]
  %s5 = inlined_call_operand.vmem [shape: f32[2,4,1,8], index: 5, kind: input, shape index: {}]
  %s6 = inlined_call_operand.vmem [shape: f32[2,4,32,8], index: 6, kind: input, shape index: {}]
  %s7 = inlined_call_operand.vmem [shape: f32[2,4,1,8], index: 7, kind: input, shape index: {}]
  %s8 = inlined_call_operand.vmem [shape: f32[2,4,32,8], index: 8, kind: input, shape index: {}]
  %s9 = inlined_call_operand.vmem [shape: f32[2,4,1,8], index: 9, kind: input, shape index: {}]
  %s10 = inlined_call_operand.vmem [shape: f32[2,4,8,32], index: 10, kind: input, shape index: {}]
  %s11 = inlined_call_operand.vmem [shape: f32[2,1,32], index: 11, kind: input, shape index: {}]
  %s12 = inlined_call_operand.vmem [shape: f32[2,1,32], index: 12, kind: input, shape index: {}]
  %s13 = inlined_call_operand.vmem [shape: f32[2,1,32], index: 13, kind: input, shape index: {}]
  %s14 = inlined_call_operand.vmem [shape: f32[2,32,64], index: 14, kind: input, shape index: {}]
  %s15 = inlined_call_operand.vmem [shape: f32[2,1,64], index: 15, kind: input, shape index: {}]
  %s16 = inlined_call_operand.vmem [shape: f32[2,64,32], index: 16, kind: input, shape index: {}]
  %s17 = inlined_call_operand.vmem [shape: f32[2,1,32], index: 17, kind: input, shape index: {}]
  %s18 = inlined_call_operand.vmem [shape: f32[2,1,32], index: 18, kind: input, shape index: {}]
  %s19 = inlined_call_operand.vmem [shape: f32[2,1,32], index: 19, kind: input, shape index: {}]
  %s20 = inlined_call_operand.vmem [shape: f32[32,128], index: 20, kind: input, shape index: {}]
  %s21 = inlined_call_operand.vmem [shape: f32[1,128], index: 21, kind: input, shape index: {}]
  %s22 = inlined_call_operand.vmem [shape: f32[16,128], index: 22, kind: output, shape index: {}]
  %s23 = sld [smem:[#allocation0]]
  $region98: #{distilbert_class_forward.1} parent=0
    _
  %s25 = ssub.s32 1, %s23
  %s26 = scalar_select 0, %s25, %s23
  // Predicated region
  $region2: #{distilbert_class_forward.1} parent=0 // pred_check
    _
  $region3: #{distilbert_class_forward.1} parent=0 // pred_check_branch
    %28 = sbr.rel (0) target = $region5
  $region4: #{distilbert_class_forward.1} parent=0 // pred_region
    _
  $region5: #{distilbert_class_forward.1} parent=0 // pred_fallthru
    _
  // Predicated region
  $region6: #{distilbert_class_forward.1} parent=0 // pred_check
    _
  $region7: #{distilbert_class_forward.1} parent=0 // pred_check_branch
    %30 = sbr.rel (0) target = $region9
  $region8: #{distilbert_class_forward.1} parent=0 // pred_region
    _
  $region9: #{distilbert_class_forward.1} parent=0 // pred_fallthru
    _
  // Predicated region
  $region10: #{distilbert_class_forward.1} parent=0 // pred_check
    _
  $region11: #{distilbert_class_forward.1} parent=0 // pred_check_branch
    %32 = sbr.rel (0) target = $region13
  $region12: #{distilbert_class_forward.1} parent=0 // pred_region
    _
  $region13: #{distilbert_class_forward.1} parent=0 // pred_fallthru
    _
  // Predicated region
  $region14: #{distilbert_class_forward.1} parent=0 // pred_check
    _
  $region15: #{distilbert_class_forward.1} parent=0 // pred_check_branch
    %34 = sbr.rel (0) target = $region17
  $region16: #{distilbert_class_forward.1} parent=0 // pred_region
    _
  $region17: #{distilbert_class_forward.1} parent=0 // pred_fallthru
    _
  // Predicated region
  $region18: #{distilbert_class_forward.1} parent=0 // pred_check
    _
  $region19: #{distilbert_class_forward.1} parent=0 // pred_check_branch
    %36 = sbr.rel (0) target = $region21
  $region20: #{distilbert_class_forward.1} parent=0 // pred_region
    _
  $region21: #{distilbert_class_forward.1} parent=0 // pred_fallthru
    _
  // Predicated region
  $region22: #{distilbert_class_forward.1} parent=0 // pred_check
    _
  $region23: #{distilbert_class_forward.1} parent=0 // pred_check_branch
    %38 = sbr.rel (0) target = $region25
  $region24: #{distilbert_class_forward.1} parent=0 // pred_region
    _
  $region25: #{distilbert_class_forward.1} parent=0 // pred_fallthru
    _
  // Predicated region
  $region26: #{distilbert_class_forward.1} parent=0 // pred_check
    _
  $region27: #{distilbert_class_forward.1} parent=0 // pred_check_branch
    %40 = sbr.rel (0) target = $region29
  $region28: #{distilbert_class_forward.1} parent=0 // pred_region
    _
  $region29: #{distilbert_class_forward.1} parent=0 // pred_fallthru
    _
  // Predicated region
  $region30: #{distilbert_class_forward.1} parent=0 // pred_check
    _
  $region31: #{distilbert_class_forward.1} parent=0 // pred_check_branch
    %42 = sbr.rel (0) target = $region33
  $region32: #{distilbert_class_forward.1} parent=0 // pred_region
    _
  $region33: #{distilbert_class_forward.1} parent=0 // pred_fallthru
    _
  // Predicated region
  $region34: #{distilbert_class_forward.1} parent=0 // pred_check
    _
  $region35: #{distilbert_class_forward.1} parent=0 // pred_check_branch
    %44 = sbr.rel (0) target = $region37
  $region36: #{distilbert_class_forward.1} parent=0 // pred_region
    _
  $region37: #{distilbert_class_forward.1} parent=0 // pred_fallthru
    _
  // Predicated region
  $region38: #{distilbert_class_forward.1} parent=0 // pred_check
    _
  $region39: #{distilbert_class_forward.1} parent=0 // pred_check_branch
    %46 = sbr.rel (0) target = $region41
  $region40: #{distilbert_class_forward.1} parent=0 // pred_region
    _
  $region41: #{distilbert_class_forward.1} parent=0 // pred_fallthru
    _
  // Predicated region
  $region42: #{distilbert_class_forward.1} parent=0 // pred_check
    _
  $region43: #{distilbert_class_forward.1} parent=0 // pred_check_branch
    %48 = sbr.rel (0) target = $region45
  $region44: #{distilbert_class_forward.1} parent=0 // pred_region
    _
  $region45: #{distilbert_class_forward.1} parent=0 // pred_fallthru
    _
  // Predicated region
  $region46: #{distilbert_class_forward.1} parent=0 // pred_check
    _
  $region47: #{distilbert_class_forward.1} parent=0 // pred_check_branch
    %50 = sbr.rel (0) target = $region49
  $region48: #{distilbert_class_forward.1} parent=0 // pred_region
    _
  $region49: #{distilbert_class_forward.1} parent=0 // pred_fallthru
    _
  // Predicated region
  $region50: #{distilbert_class_forward.1} parent=0 // pred_check
    _
  $region51: #{distilbert_class_forward.1} parent=0 // pred_check_branch
    %52 = sbr.rel (0) target = $region53
  $region52: #{distilbert_class_forward.1} parent=0 // pred_region
    _
  $region53: #{distilbert_class_forward.1} parent=0 // pred_fallthru
    _
  // Predicated region
  $region54: #{distilbert_class_forward.1} parent=0 // pred_check
    _
  $region55: #{distilbert_class_forward.1} parent=0 // pred_check_branch
    %54 = sbr.rel (0) target = $region57
  $region56: #{distilbert_class_forward.1} parent=0 // pred_region
    _
  $region57: #{distilbert_class_forward.1} parent=0 // pred_fallthru
    _
  // Predicated region
  $region58: #{distilbert_class_forward.1} parent=0 // pred_check
    _
  $region59: #{distilbert_class_forward.1} parent=0 // pred_check_branch
    %56 = sbr.rel (0) target = $region61
  $region60: #{distilbert_class_forward.1} parent=0 // pred_region
    _
  $region61: #{distilbert_class_forward.1} parent=0 // pred_fallthru
    _
  // Predicated region
  $region62: #{distilbert_class_forward.1} parent=0 // pred_check
    _
  $region63: #{distilbert_class_forward.1} parent=0 // pred_check_branch
    %58 = sbr.rel (0) target = $region65
  $region64: #{distilbert_class_forward.1} parent=0 // pred_region
    _
  $region65: #{distilbert_class_forward.1} parent=0 // pred_fallthru
    _
  // Predicated region
  $region66: #{distilbert_class_forward.1} parent=0 // pred_check
    _
  $region67: #{distilbert_class_forward.1} parent=0 // pred_check_branch
    %60 = sbr.rel (0) target = $region69
  $region68: #{distilbert_class_forward.1} parent=0 // pred_region
    _
  $region69: #{distilbert_class_forward.1} parent=0 // pred_fallthru
    _
  // Predicated region
  $region70: #{distilbert_class_forward.1} parent=0 // pred_check
    _
  $region71: #{distilbert_class_forward.1} parent=0 // pred_check_branch
    %62 = sbr.rel (0) target = $region73
  $region72: #{distilbert_class_forward.1} parent=0 // pred_region
    _
  $region73: #{distilbert_class_forward.1} parent=0 // pred_fallthru
    _
  // Predicated region
  $region74: #{distilbert_class_forward.1} parent=0 // pred_check
    _
  $region75: #{distilbert_class_forward.1} parent=0 // pred_check_branch
    %64 = sbr.rel (0) target = $region77
  $region76: #{distilbert_class_forward.1} parent=0 // pred_region
    _
  $region77: #{distilbert_class_forward.1} parent=0 // pred_fallthru
    _
  // Predicated region
  $region78: #{distilbert_class_forward.1} parent=0 // pred_check
    _
  $region79: #{distilbert_class_forward.1} parent=0 // pred_check_branch
    %66 = sbr.rel (0) target = $region81
  $region80: #{distilbert_class_forward.1} parent=0 // pred_region
    _
  $region81: #{distilbert_class_forward.1} parent=0 // pred_fallthru
    _
  // Predicated region
  $region82: #{distilbert_class_forward.1} parent=0 // pred_check
    _
  $region83: #{distilbert_class_forward.1} parent=0 // pred_check_branch
    %68 = sbr.rel (0) target = $region85
  $region84: #{distilbert_class_forward.1} parent=0 // pred_region
    _
  $region85: #{distilbert_class_forward.1} parent=0 // pred_fallthru
    _
  // Predicated region
  $region86: #{distilbert_class_forward.1} parent=0 // pred_check
    _
  $region87: #{distilbert_class_forward.1} parent=0 // pred_check_branch
    %70 = sbr.rel (0) target = $region89
  $region88: #{distilbert_class_forward.1} parent=0 // pred_region
    _
  $region89: #{distilbert_class_forward.1} parent=0 // pred_fallthru
    _
  %v71 = vld [vmem:[%s0] sm:$0xff]
  %v72 = vld [vmem:[%s0 + $0x8] sm:$0xff]
  %v73 = vld [vmem:[%s2] sm:$0x1]
  %v74 = vld [vmem:[%s3] sm:$0x1]
  %vm75 = vcmask 261120
  %v76 = vsel %vm75, %v71, 0.0
  %77 = vadd.xlane.f32.xlu0 %v76
  %v78 = vpop.xlane.xlu0 %77
  %v79 = vsel %vm75, %v72, 0.0
  %80 = vadd.xlane.f32.xlu0 %v79
  %v81 = vpop.xlane.xlu0 %80
  %v82 = vrcp.pop 32.0
  %v83 = vmul.f32 %v78, %v82
  %v84 = vmul.f32 %v81, %v82
  %v85 = vsub.f32 %v71, %v83
  %v86 = vsub.f32 %v72, %v84
  %v87 = vmul.f32 %v85, %v85
  %v88 = vmul.f32 %v86, %v86
  %v89 = vsel %vm75, %v87, 0.0
  %90 = vadd.xlane.f32.xlu0 %v89
  %v91 = vpop.xlane.xlu0 %90
  %v92 = vsel %vm75, %v88, 0.0
  %93 = vadd.xlane.f32.xlu0 %v92
  %v94 = vpop.xlane.xlu0 %93
  %v95 = vmul.f32 %v91, %v82
  %v96 = vmul.f32 %v94, %v82
  %v97 = vadd.f32 %v95, 1e-12
  %v98 = vadd.f32 %v96, 1e-12
  %v99 = vrsqrt.pop %v97
  %v100 = vrsqrt.pop %v98
  %v101 = vmul.f32 %v85, %v99
  %v102 = vmul.f32 %v86, %v100
  %v104 = vlaneseq
  %v105 = vshrl.u32 %v104, 7
  %v106 = vsub.s32 0, %v105
  %v107 = vrot.slane %v73, %v106
  %v109 = vmul.f32 %v101, %v107
  %v110 = vmul.f32 %v102, %v107
  %v112 = vlaneseq
  %v113 = vshrl.u32 %v112, 7
  %v114 = vsub.s32 0, %v113
  %v115 = vrot.slane %v74, %v114
  %v117 = vadd.f32 %v109, %v115
  %v118 = vadd.f32 %v110, %v115
  %v119 = vld [vmem:[%s4] sm:$0xff]
  %v120 = vld [vmem:[%s4 + $0x8] sm:$0xff]
  %v121 = vld [vmem:[%s4 + $0x10] sm:$0xff]
  %v122 = vld [vmem:[%s4 + $0x18] sm:$0xff]
  %v123 = vld [vmem:[%s4 + $0x20] sm:$0xff]
  %v124 = vld [vmem:[%s4 + $0x28] sm:$0xff]
  %v125 = vld [vmem:[%s4 + $0x30] sm:$0xff]
  %v126 = vld [vmem:[%s4 + $0x38] sm:$0xff]
  %v127 = vld [vmem:[%s4 + $0x40] sm:$0xff]
  %v128 = vld [vmem:[%s4 + $0x48] sm:$0xff]
  %v129 = vld [vmem:[%s4 + $0x50] sm:$0xff]
  %v130 = vld [vmem:[%s4 + $0x58] sm:$0xff]
  %v131 = vld [vmem:[%s4 + $0x60] sm:$0xff]
  %v132 = vld [vmem:[%s4 + $0x68] sm:$0xff]
  %v133 = vld [vmem:[%s4 + $0x70] sm:$0xff]
  %v134 = vld [vmem:[%s4 + $0x78] sm:$0xff]
  %v135 = vld [vmem:[%s6] sm:$0xff]
  %v136 = vld [vmem:[%s6 + $0x8] sm:$0xff]
  %v137 = vld [vmem:[%s6 + $0x10] sm:$0xff]
  %v138 = vld [vmem:[%s6 + $0x18] sm:$0xff]
  %v139 = vld [vmem:[%s6 + $0x20] sm:$0xff]
  %v140 = vld [vmem:[%s6 + $0x28] sm:$0xff]
  %v141 = vld [vmem:[%s6 + $0x30] sm:$0xff]
  %v142 = vld [vmem:[%s6 + $0x38] sm:$0xff]
  %v143 = vld [vmem:[%s6 + $0x40] sm:$0xff]
  %v144 = vld [vmem:[%s6 + $0x48] sm:$0xff]
  %v145 = vld [vmem:[%s6 + $0x50] sm:$0xff]
  %v146 = vld [vmem:[%s6 + $0x58] sm:$0xff]
  %v147 = vld [vmem:[%s6 + $0x60] sm:$0xff]
  %v148 = vld [vmem:[%s6 + $0x68] sm:$0xff]
  %v149 = vld [vmem:[%s6 + $0x70] sm:$0xff]
  %v150 = vld [vmem:[%s6 + $0x78] sm:$0xff]
  %v151 = vld [vmem:[%s8] sm:$0xff]
  %v152 = vld [vmem:[%s8 + $0x8] sm:$0xff]
  %v153 = vld [vmem:[%s8 + $0x10] sm:$0xff]
  %v154 = vld [vmem:[%s8 + $0x18] sm:$0xff]
  %v155 = vld [vmem:[%s8 + $0x20] sm:$0xff]
  %v156 = vld [vmem:[%s8 + $0x28] sm:$0xff]
  %v157 = vld [vmem:[%s8 + $0x30] sm:$0xff]
  %v158 = vld [vmem:[%s8 + $0x38] sm:$0xff]
  %v159 = vld [vmem:[%s8 + $0x40] sm:$0xff]
  %v160 = vld [vmem:[%s8 + $0x48] sm:$0xff]
  %v161 = vld [vmem:[%s8 + $0x50] sm:$0xff]
  %v162 = vld [vmem:[%s8 + $0x58] sm:$0xff]
  %v163 = vld [vmem:[%s8 + $0x60] sm:$0xff]
  %v164 = vld [vmem:[%s8 + $0x68] sm:$0xff]
  %v165 = vld [vmem:[%s8 + $0x70] sm:$0xff]
  %v166 = vld [vmem:[%s8 + $0x78] sm:$0xff]
  %v167 = vld [vmem:[%s5] sm:$0x1]
  %v168 = vld [vmem:[%s5 + $0x1] sm:$0x1]
  %v169 = vld [vmem:[%s5 + $0x2] sm:$0x1]
  %v170 = vld [vmem:[%s5 + $0x3] sm:$0x1]
  %v171 = vld [vmem:[%s7] sm:$0x1]
  %v172 = vld [vmem:[%s7 + $0x1] sm:$0x1]
  %v173 = vld [vmem:[%s7 + $0x2] sm:$0x1]
  %v174 = vld [vmem:[%s7 + $0x3] sm:$0x1]
  %v175 = vld [vmem:[%s9] sm:$0x1]
  %v176 = vld [vmem:[%s9 + $0x1] sm:$0x1]
  %v177 = vld [vmem:[%s9 + $0x2] sm:$0x1]
  %v178 = vld [vmem:[%s9 + $0x3] sm:$0x1]
  %v179 = vld [vmem:[%s10] sm:$0xff]
  %v180 = vld [vmem:[%s10 + $0x8] sm:$0xff]
  %v181 = vld [vmem:[%s10 + $0x10] sm:$0xff]
  %v182 = vld [vmem:[%s10 + $0x18] sm:$0xff]
  %v183 = vld [vmem:[%s11] sm:$0x1]
  %v188 = vlaneseq
  %v189 = vshrl.u32 %v188, 7
  %v190 = vsub.s32 0, %v189
  %v191 = vrot.slane %v167, %v190
  %v192 = vlaneseq
  %v193 = vshrl.u32 %v192, 7
  %v194 = vsub.s32 0, %v193
  %v195 = vrot.slane %v168, %v194
  %v196 = vlaneseq
  %v197 = vshrl.u32 %v196, 7
  %v198 = vsub.s32 0, %v197
  %v199 = vrot.slane %v169, %v198
  %v200 = vlaneseq
  %v201 = vshrl.u32 %v200, 7
  %v202 = vsub.s32 0, %v201
  %v203 = vrot.slane %v170, %v202
  %v209 = vsel %vm75, %v117, 0
  %211 = vmatprep.subr.mxu0 0.0
  %212 = vmatpush1.msra.mxu0 %v119
  %213 = vmatprep.subr.mxu0 0.0
  %214 = vmatpush1.msra.mxu0 %v120
  %215 = vmatprep.subr.mxu0 0.0
  %216 = vmatpush1.msra.mxu0 %v121
  %217 = vmatprep.subr.mxu0 0.0
  %218 = vmatpush1.msra.mxu0 %v122
  %219 = vmatprep.subr.mxu0 0.0
  %220 = vmatpush1.msra.mxu0 0.0
  %221 = vmatprep.subr.mxu0 0.0
  %222 = vmatpush1.msra.mxu0 0.0
  %223 = vmatprep.subr.mxu0 0.0
  %224 = vmatpush1.msra.mxu0 0.0
  %225 = vmatprep.subr.mxu0 0.0
  %226 = vmatpush1.msra.mxu0 0.0
  %227 = vmatprep.subr.mxu0 0.0
  %228 = vmatpush1.msra.mxu0 0.0
  %229 = vmatprep.subr.mxu0 0.0
  %230 = vmatpush1.msra.mxu0 0.0
  %231 = vmatprep.subr.mxu0 0.0
  %232 = vmatpush1.msra.mxu0 0.0
  %233 = vmatprep.subr.mxu0 0.0
  %234 = vmatpush1.msra.mxu0 0.0
  %235 = vmatprep.subr.mxu0 0.0
  %236 = vmatpush1.msra.mxu0 0.0
  %237 = vmatprep.subr.mxu0 0.0
  %238 = vmatpush1.msra.mxu0 0.0
  %239 = vmatprep.subr.mxu0 0.0
  %240 = vmatpush1.msra.mxu0 0.0
  %241 = vmatprep.subr.mxu0 0.0
  %242 = vmatpush1.msra.mxu0 0.0
  %243 = vmatprep.subr.mxu0 0.0
  %244 = vmatpush1.msra.mxu0 0.0
  %245 = vmatprep.subr.mxu0 0.0
  %246 = vmatpush1.msra.mxu0 0.0
  %247 = vmatprep.subr.mxu0 0.0
  %248 = vmatpush1.msra.mxu0 0.0
  %249 = vmatprep.subr.mxu0 0.0
  %250 = vmatpush1.msra.mxu0 0.0
  %251 = vmatprep.subr.mxu0 0.0
  %252 = vmatpush1.msra.mxu0 0.0
  %253 = vmatprep.subr.mxu0 0.0
  %254 = vmatpush1.msra.mxu0 0.0
  %255 = vmatprep.subr.mxu0 0.0
  %256 = vmatpush1.msra.mxu0 0.0
  %257 = vmatprep.subr.mxu0 0.0
  %258 = vmatpush1.msra.mxu0 0.0
  %259 = vmatprep.subr.mxu0 0.0
  %260 = vmatpush1.msra.mxu0 0.0
  %261 = vmatprep.subr.mxu0 0.0
  %262 = vmatpush1.msra.mxu0 0.0
  %263 = vmatprep.subr.mxu0 0.0
  %264 = vmatpush1.msra.mxu0 0.0
  %265 = vmatprep.subr.mxu0 0.0
  %266 = vmatpush1.msra.mxu0 0.0
  %267 = vmatprep.subr.mxu0 0.0
  %268 = vmatpush1.msra.mxu0 0.0
  %269 = vmatprep.subr.mxu0 0.0
  %270 = vmatpush1.msra.mxu0 0.0
  %271 = vmatprep.subr.mxu0 0.0
  %272 = vmatpush1.msra.mxu0 0.0
  %273 = vmatprep.subr.mxu0 0.0
  %274 = vmatpush1.msra.mxu0 0.0
  %275 = vmatprep.mubr.f32.mxu0 0.0
  %276 = vmatmul.mubr.f32.gmra.mrb[0].mxu0 %v209
  %v277 = vpop.f32.mrb[0].mxu0
  %v278 = vadd.f32 %v191, %v277
  %v279 = vpop.f32.mrb[0].mxu0
  %280 = vdwg.mxu0
  %281 = vmatprep.subr.mxu0 0.0
  %282 = vmatpush1.msra.mxu0 %v123
  %283 = vmatprep.subr.mxu0 0.0
  %284 = vmatpush1.msra.mxu0 %v124
  %285 = vmatprep.subr.mxu0 0.0
  %286 = vmatpush1.msra.mxu0 %v125
  %287 = vmatprep.subr.mxu0 0.0
  %288 = vmatpush1.msra.mxu0 %v126
  %289 = vmatprep.subr.mxu0 0.0
  %290 = vmatpush1.msra.mxu0 0.0
  %291 = vmatprep.subr.mxu0 0.0
  %292 = vmatpush1.msra.mxu0 0.0
  %293 = vmatprep.subr.mxu0 0.0
  %294 = vmatpush1.msra.mxu0 0.0
  %295 = vmatprep.subr.mxu0 0.0
  %296 = vmatpush1.msra.mxu0 0.0
  %297 = vmatprep.subr.mxu0 0.0
  %298 = vmatpush1.msra.mxu0 0.0
  %299 = vmatprep.subr.mxu0 0.0
  %300 = vmatpush1.msra.mxu0 0.0
  %301 = vmatprep.subr.mxu0 0.0
  %302 = vmatpush1.msra.mxu0 0.0
  %303 = vmatprep.subr.mxu0 0.0
  %304 = vmatpush1.msra.mxu0 0.0
  %305 = vmatprep.subr.mxu0 0.0
  %306 = vmatpush1.msra.mxu0 0.0
  %307 = vmatprep.subr.mxu0 0.0
  %308 = vmatpush1.msra.mxu0 0.0
  %309 = vmatprep.subr.mxu0 0.0
  %310 = vmatpush1.msra.mxu0 0.0
  %311 = vmatprep.subr.mxu0 0.0
  %312 = vmatpush1.msra.mxu0 0.0
  %313 = vmatprep.subr.mxu0 0.0
  %314 = vmatpush1.msra.mxu0 0.0
  %315 = vmatprep.subr.mxu0 0.0
  %316 = vmatpush1.msra.mxu0 0.0
  %317 = vmatprep.subr.mxu0 0.0
  %318 = vmatpush1.msra.mxu0 0.0
  %319 = vmatprep.subr.mxu0 0.0
  %320 = vmatpush1.msra.mxu0 0.0
  %321 = vmatprep.subr.mxu0 0.0
  %322 = vmatpush1.msra.mxu0 0.0
  %323 = vmatprep.subr.mxu0 0.0
  %324 = vmatpush1.msra.mxu0 0.0
  %325 = vmatprep.subr.mxu0 0.0
  %326 = vmatpush1.msra.mxu0 0.0
  %327 = vmatprep.subr.mxu0 0.0
  %328 = vmatpush1.msra.mxu0 0.0
  %329 = vmatprep.subr.mxu0 0.0
  %330 = vmatpush1.msra.mxu0 0.0
  %331 = vmatprep.subr.mxu0 0.0
  %332 = vmatpush1.msra.mxu0 0.0
  %333 = vmatprep.subr.mxu0 0.0
  %334 = vmatpush1.msra.mxu0 0.0
  %335 = vmatprep.subr.mxu0 0.0
  %336 = vmatpush1.msra.mxu0 0.0
  %337 = vmatprep.subr.mxu0 0.0
  %338 = vmatpush1.msra.mxu0 0.0
  %339 = vmatprep.subr.mxu0 0.0
  %340 = vmatpush1.msra.mxu0 0.0
  %341 = vmatprep.subr.mxu0 0.0
  %342 = vmatpush1.msra.mxu0 0.0
  %343 = vmatprep.subr.mxu0 0.0
  %344 = vmatpush1.msra.mxu0 0.0
  %345 = vmatprep.mubr.f32.mxu0 0.0
  %346 = vmatmul.mubr.f32.gmra.mrb[0].mxu0 %v209
  %v347 = vpop.f32.mrb[0].mxu0
  %v348 = vadd.f32 %v195, %v347
  %v349 = vpop.f32.mrb[0].mxu0
  %350 = vdwg.mxu0
  %351 = vmatprep.subr.mxu0 0.0
  %352 = vmatpush1.msra.mxu0 %v127
  %353 = vmatprep.subr.mxu0 0.0
  %354 = vmatpush1.msra.mxu0 %v128
  %355 = vmatprep.subr.mxu0 0.0
  %356 = vmatpush1.msra.mxu0 %v129
  %357 = vmatprep.subr.mxu0 0.0
  %358 = vmatpush1.msra.mxu0 %v130
  %359 = vmatprep.subr.mxu0 0.0
  %360 = vmatpush1.msra.mxu0 0.0
  %361 = vmatprep.subr.mxu0 0.0
  %362 = vmatpush1.msra.mxu0 0.0
  %363 = vmatprep.subr.mxu0 0.0
  %364 = vmatpush1.msra.mxu0 0.0
  %365 = vmatprep.subr.mxu0 0.0
  %366 = vmatpush1.msra.mxu0 0.0
  %367 = vmatprep.subr.mxu0 0.0
  %368 = vmatpush1.msra.mxu0 0.0
  %369 = vmatprep.subr.mxu0 0.0
  %370 = vmatpush1.msra.mxu0 0.0
  %371 = vmatprep.subr.mxu0 0.0
  %372 = vmatpush1.msra.mxu0 0.0
  %373 = vmatprep.subr.mxu0 0.0
  %374 = vmatpush1.msra.mxu0 0.0
  %375 = vmatprep.subr.mxu0 0.0
  %376 = vmatpush1.msra.mxu0 0.0
  %377 = vmatprep.subr.mxu0 0.0
  %378 = vmatpush1.msra.mxu0 0.0
  %379 = vmatprep.subr.mxu0 0.0
  %380 = vmatpush1.msra.mxu0 0.0
  %381 = vmatprep.subr.mxu0 0.0
  %382 = vmatpush1.msra.mxu0 0.0
  %383 = vmatprep.subr.mxu0 0.0
  %384 = vmatpush1.msra.mxu0 0.0
  %385 = vmatprep.subr.mxu0 0.0
  %386 = vmatpush1.msra.mxu0 0.0
  %387 = vmatprep.subr.mxu0 0.0
  %388 = vmatpush1.msra.mxu0 0.0
  %389 = vmatprep.subr.mxu0 0.0
  %390 = vmatpush1.msra.mxu0 0.0
  %391 = vmatprep.subr.mxu0 0.0
  %392 = vmatpush1.msra.mxu0 0.0
  %393 = vmatprep.subr.mxu0 0.0
  %394 = vmatpush1.msra.mxu0 0.0
  %395 = vmatprep.subr.mxu0 0.0
  %396 = vmatpush1.msra.mxu0 0.0
  %397 = vmatprep.subr.mxu0 0.0
  %398 = vmatpush1.msra.mxu0 0.0
  %399 = vmatprep.subr.mxu0 0.0
  %400 = vmatpush1.msra.mxu0 0.0
  %401 = vmatprep.subr.mxu0 0.0
  %402 = vmatpush1.msra.mxu0 0.0
  %403 = vmatprep.subr.mxu0 0.0
  %404 = vmatpush1.msra.mxu0 0.0
  %405 = vmatprep.subr.mxu0 0.0
  %406 = vmatpush1.msra.mxu0 0.0
  %407 = vmatprep.subr.mxu0 0.0
  %408 = vmatpush1.msra.mxu0 0.0
  %409 = vmatprep.subr.mxu0 0.0
  %410 = vmatpush1.msra.mxu0 0.0
  %411 = vmatprep.subr.mxu0 0.0
  %412 = vmatpush1.msra.mxu0 0.0
  %413 = vmatprep.subr.mxu0 0.0
  %414 = vmatpush1.msra.mxu0 0.0
  %415 = vmatprep.mubr.f32.mxu0 0.0
  %416 = vmatmul.mubr.f32.gmra.mrb[0].mxu0 %v209
  %v417 = vpop.f32.mrb[0].mxu0
  %v418 = vadd.f32 %v199, %v417
  %v419 = vpop.f32.mrb[0].mxu0
  %420 = vdwg.mxu0
  %421 = vmatprep.subr.mxu0 0.0
  %422 = vmatpush1.msra.mxu0 %v131
  %423 = vmatprep.subr.mxu0 0.0
  %424 = vmatpush1.msra.mxu0 %v132
  %425 = vmatprep.subr.mxu0 0.0
  %426 = vmatpush1.msra.mxu0 %v133
  %427 = vmatprep.subr.mxu0 0.0
  %428 = vmatpush1.msra.mxu0 %v134
  %429 = vmatprep.subr.mxu0 0.0
  %430 = vmatpush1.msra.mxu0 0.0
  %431 = vmatprep.subr.mxu0 0.0
  %432 = vmatpush1.msra.mxu0 0.0
  %433 = vmatprep.subr.mxu0 0.0
  %434 = vmatpush1.msra.mxu0 0.0
  %435 = vmatprep.subr.mxu0 0.0
  %436 = vmatpush1.msra.mxu0 0.0
  %437 = vmatprep.subr.mxu0 0.0
  %438 = vmatpush1.msra.mxu0 0.0
  %439 = vmatprep.subr.mxu0 0.0
  %440 = vmatpush1.msra.mxu0 0.0
  %441 = vmatprep.subr.mxu0 0.0
  %442 = vmatpush1.msra.mxu0 0.0
  %443 = vmatprep.subr.mxu0 0.0
  %444 = vmatpush1.msra.mxu0 0.0
  %445 = vmatprep.subr.mxu0 0.0
  %446 = vmatpush1.msra.mxu0 0.0
  %447 = vmatprep.subr.mxu0 0.0
  %448 = vmatpush1.msra.mxu0 0.0
  %449 = vmatprep.subr.mxu0 0.0
  %450 = vmatpush1.msra.mxu0 0.0
  %451 = vmatprep.subr.mxu0 0.0
  %452 = vmatpush1.msra.mxu0 0.0
  %453 = vmatprep.subr.mxu0 0.0
  %454 = vmatpush1.msra.mxu0 0.0
  %455 = vmatprep.subr.mxu0 0.0
  %456 = vmatpush1.msra.mxu0 0.0
  %457 = vmatprep.subr.mxu0 0.0
  %458 = vmatpush1.msra.mxu0 0.0
  %459 = vmatprep.subr.mxu0 0.0
  %460 = vmatpush1.msra.mxu0 0.0
  %461 = vmatprep.subr.mxu0 0.0
  %462 = vmatpush1.msra.mxu0 0.0
  %463 = vmatprep.subr.mxu0 0.0
  %464 = vmatpush1.msra.mxu0 0.0
  %465 = vmatprep.subr.mxu0 0.0
  %466 = vmatpush1.msra.mxu0 0.0
  %467 = vmatprep.subr.mxu0 0.0
  %468 = vmatpush1.msra.mxu0 0.0
  %469 = vmatprep.subr.mxu0 0.0
  %470 = vmatpush1.msra.mxu0 0.0
  %471 = vmatprep.subr.mxu0 0.0
  %472 = vmatpush1.msra.mxu0 0.0
  %473 = vmatprep.subr.mxu0 0.0
  %474 = vmatpush1.msra.mxu0 0.0
  %475 = vmatprep.subr.mxu0 0.0
  %476 = vmatpush1.msra.mxu0 0.0
  %477 = vmatprep.subr.mxu0 0.0
  %478 = vmatpush1.msra.mxu0 0.0
  %479 = vmatprep.subr.mxu0 0.0
  %480 = vmatpush1.msra.mxu0 0.0
  %481 = vmatprep.subr.mxu0 0.0
  %482 = vmatpush1.msra.mxu0 0.0
  %483 = vmatprep.subr.mxu0 0.0
  %484 = vmatpush1.msra.mxu0 0.0
  %485 = vmatprep.mubr.f32.mxu0 0.0
  %486 = vmatmul.mubr.f32.gmra.mrb[0].mxu0 %v209
  %v487 = vpop.f32.mrb[0].mxu0
  %v488 = vadd.f32 %v203, %v487
  %v489 = vpop.f32.mrb[0].mxu0
  %490 = vdwg.mxu0
  %v495 = vlaneseq
  %v496 = vshrl.u32 %v495, 7
  %v497 = vsub.s32 0, %v496
  %v498 = vrot.slane %v171, %v497
  %v499 = vlaneseq
  %v500 = vshrl.u32 %v499, 7
  %v501 = vsub.s32 0, %v500
  %v502 = vrot.slane %v172, %v501
  %v503 = vlaneseq
  %v504 = vshrl.u32 %v503, 7
  %v505 = vsub.s32 0, %v504
  %v506 = vrot.slane %v173, %v505
  %v507 = vlaneseq
  %v508 = vshrl.u32 %v507, 7
  %v509 = vsub.s32 0, %v508
  %v510 = vrot.slane %v174, %v509
  %515 = vmatprep.subr.mxu0 0.0
  %516 = vmatpush1.msra.mxu0 %v135
  %517 = vmatprep.subr.mxu0 0.0
  %518 = vmatpush1.msra.mxu0 %v136
  %519 = vmatprep.subr.mxu0 0.0
  %520 = vmatpush1.msra.mxu0 %v137
  %521 = vmatprep.subr.mxu0 0.0
  %522 = vmatpush1.msra.mxu0 %v138
  %523 = vmatprep.subr.mxu0 0.0
  %524 = vmatpush1.msra.mxu0 0.0
  %525 = vmatprep.subr.mxu0 0.0
  %526 = vmatpush1.msra.mxu0 0.0
  %527 = vmatprep.subr.mxu0 0.0
  %528 = vmatpush1.msra.mxu0 0.0
  %529 = vmatprep.subr.mxu0 0.0
  %530 = vmatpush1.msra.mxu0 0.0
  %531 = vmatprep.subr.mxu0 0.0
  %532 = vmatpush1.msra.mxu0 0.0
  %533 = vmatprep.subr.mxu0 0.0
  %534 = vmatpush1.msra.mxu0 0.0
  %535 = vmatprep.subr.mxu0 0.0
  %536 = vmatpush1.msra.mxu0 0.0
  %537 = vmatprep.subr.mxu0 0.0
  %538 = vmatpush1.msra.mxu0 0.0
  %539 = vmatprep.subr.mxu0 0.0
  %540 = vmatpush1.msra.mxu0 0.0
  %541 = vmatprep.subr.mxu0 0.0
  %542 = vmatpush1.msra.mxu0 0.0
  %543 = vmatprep.subr.mxu0 0.0
  %544 = vmatpush1.msra.mxu0 0.0
  %545 = vmatprep.subr.mxu0 0.0
  %546 = vmatpush1.msra.mxu0 0.0
  %547 = vmatprep.subr.mxu0 0.0
  %548 = vmatpush1.msra.mxu0 0.0
  %549 = vmatprep.subr.mxu0 0.0
  %550 = vmatpush1.msra.mxu0 0.0
  %551 = vmatprep.subr.mxu0 0.0
  %552 = vmatpush1.msra.mxu0 0.0
  %553 = vmatprep.subr.mxu0 0.0
  %554 = vmatpush1.msra.mxu0 0.0
  %555 = vmatprep.subr.mxu0 0.0
  %556 = vmatpush1.msra.mxu0 0.0
  %557 = vmatprep.subr.mxu0 0.0
  %558 = vmatpush1.msra.mxu0 0.0
  %559 = vmatprep.subr.mxu0 0.0
  %560 = vmatpush1.msra.mxu0 0.0
  %561 = vmatprep.subr.mxu0 0.0
  %562 = vmatpush1.msra.mxu0 0.0
  %563 = vmatprep.subr.mxu0 0.0
  %564 = vmatpush1.msra.mxu0 0.0
  %565 = vmatprep.subr.mxu0 0.0
  %566 = vmatpush1.msra.mxu0 0.0
  %567 = vmatprep.subr.mxu0 0.0
  %568 = vmatpush1.msra.mxu0 0.0
  %569 = vmatprep.subr.mxu0 0.0
  %570 = vmatpush1.msra.mxu0 0.0
  %571 = vmatprep.subr.mxu0 0.0
  %572 = vmatpush1.msra.mxu0 0.0
  %573 = vmatprep.subr.mxu0 0.0
  %574 = vmatpush1.msra.mxu0 0.0
  %575 = vmatprep.subr.mxu0 0.0
  %576 = vmatpush1.msra.mxu0 0.0
  %577 = vmatprep.subr.mxu0 0.0
  %578 = vmatpush1.msra.mxu0 0.0
  %579 = vmatprep.mubr.f32.mxu0 0.0
  %580 = vmatmul.mubr.f32.gmra.mrb[0].mxu0 %v209
  %v581 = vpop.f32.mrb[0].mxu0
  %v582 = vadd.f32 %v498, %v581
  %v583 = vpop.f32.mrb[0].mxu0
  %584 = vdwg.mxu0
  %585 = vmatprep.subr.mxu0 0.0
  %586 = vmatpush1.msra.mxu0 %v139
  %587 = vmatprep.subr.mxu0 0.0
  %588 = vmatpush1.msra.mxu0 %v140
  %589 = vmatprep.subr.mxu0 0.0
  %590 = vmatpush1.msra.mxu0 %v141
  %591 = vmatprep.subr.mxu0 0.0
  %592 = vmatpush1.msra.mxu0 %v142
  %593 = vmatprep.subr.mxu0 0.0
  %594 = vmatpush1.msra.mxu0 0.0
  %595 = vmatprep.subr.mxu0 0.0
  %596 = vmatpush1.msra.mxu0 0.0
  %597 = vmatprep.subr.mxu0 0.0
  %598 = vmatpush1.msra.mxu0 0.0
  %599 = vmatprep.subr.mxu0 0.0
  %600 = vmatpush1.msra.mxu0 0.0
  %601 = vmatprep.subr.mxu0 0.0
  %602 = vmatpush1.msra.mxu0 0.0
  %603 = vmatprep.subr.mxu0 0.0
  %604 = vmatpush1.msra.mxu0 0.0
  %605 = vmatprep.subr.mxu0 0.0
  %606 = vmatpush1.msra.mxu0 0.0
  %607 = vmatprep.subr.mxu0 0.0
  %608 = vmatpush1.msra.mxu0 0.0
  %609 = vmatprep.subr.mxu0 0.0
  %610 = vmatpush1.msra.mxu0 0.0
  %611 = vmatprep.subr.mxu0 0.0
  %612 = vmatpush1.msra.mxu0 0.0
  %613 = vmatprep.subr.mxu0 0.0
  %614 = vmatpush1.msra.mxu0 0.0
  %615 = vmatprep.subr.mxu0 0.0
  %616 = vmatpush1.msra.mxu0 0.0
  %617 = vmatprep.subr.mxu0 0.0
  %618 = vmatpush1.msra.mxu0 0.0
  %619 = vmatprep.subr.mxu0 0.0
  %620 = vmatpush1.msra.mxu0 0.0
  %621 = vmatprep.subr.mxu0 0.0
  %622 = vmatpush1.msra.mxu0 0.0
  %623 = vmatprep.subr.mxu0 0.0
  %624 = vmatpush1.msra.mxu0 0.0
  %625 = vmatprep.subr.mxu0 0.0
  %626 = vmatpush1.msra.mxu0 0.0
  %627 = vmatprep.subr.mxu0 0.0
  %628 = vmatpush1.msra.mxu0 0.0
  %629 = vmatprep.subr.mxu0 0.0
  %630 = vmatpush1.msra.mxu0 0.0
  %631 = vmatprep.subr.mxu0 0.0
  %632 = vmatpush1.msra.mxu0 0.0
  %633 = vmatprep.subr.mxu0 0.0
  %634 = vmatpush1.msra.mxu0 0.0
  %635 = vmatprep.subr.mxu0 0.0
  %636 = vmatpush1.msra.mxu0 0.0
  %637 = vmatprep.subr.mxu0 0.0
  %638 = vmatpush1.msra.mxu0 0.0
  %639 = vmatprep.subr.mxu0 0.0
  %640 = vmatpush1.msra.mxu0 0.0
  %641 = vmatprep.subr.mxu0 0.0
  %642 = vmatpush1.msra.mxu0 0.0
  %643 = vmatprep.subr.mxu0 0.0
  %644 = vmatpush1.msra.mxu0 0.0
  %645 = vmatprep.subr.mxu0 0.0
  %646 = vmatpush1.msra.mxu0 0.0
  %647 = vmatprep.subr.mxu0 0.0
  %648 = vmatpush1.msra.mxu0 0.0
  %649 = vmatprep.mubr.f32.mxu0 0.0
  %650 = vmatmul.mubr.f32.gmra.mrb[0].mxu0 %v209
  %v651 = vpop.f32.mrb[0].mxu0
  %v652 = vadd.f32 %v502, %v651
  %v653 = vpop.f32.mrb[0].mxu0
  %654 = vdwg.mxu0
  %655 = vmatprep.subr.mxu0 0.0
  %656 = vmatpush1.msra.mxu0 %v143
  %657 = vmatprep.subr.mxu0 0.0
  %658 = vmatpush1.msra.mxu0 %v144
  %659 = vmatprep.subr.mxu0 0.0
  %660 = vmatpush1.msra.mxu0 %v145
  %661 = vmatprep.subr.mxu0 0.0
  %662 = vmatpush1.msra.mxu0 %v146
  %663 = vmatprep.subr.mxu0 0.0
  %664 = vmatpush1.msra.mxu0 0.0
  %665 = vmatprep.subr.mxu0 0.0
  %666 = vmatpush1.msra.mxu0 0.0
  %667 = vmatprep.subr.mxu0 0.0
  %668 = vmatpush1.msra.mxu0 0.0
  %669 = vmatprep.subr.mxu0 0.0
  %670 = vmatpush1.msra.mxu0 0.0
  %671 = vmatprep.subr.mxu0 0.0
  %672 = vmatpush1.msra.mxu0 0.0
  %673 = vmatprep.subr.mxu0 0.0
  %674 = vmatpush1.msra.mxu0 0.0
  %675 = vmatprep.subr.mxu0 0.0
  %676 = vmatpush1.msra.mxu0 0.0
  %677 = vmatprep.subr.mxu0 0.0
  %678 = vmatpush1.msra.mxu0 0.0
  %679 = vmatprep.subr.mxu0 0.0
  %680 = vmatpush1.msra.mxu0 0.0
  %681 = vmatprep.subr.mxu0 0.0
  %682 = vmatpush1.msra.mxu0 0.0
  %683 = vmatprep.subr.mxu0 0.0
  %684 = vmatpush1.msra.mxu0 0.0
  %685 = vmatprep.subr.mxu0 0.0
  %686 = vmatpush1.msra.mxu0 0.0
  %687 = vmatprep.subr.mxu0 0.0
  %688 = vmatpush1.msra.mxu0 0.0
  %689 = vmatprep.subr.mxu0 0.0
  %690 = vmatpush1.msra.mxu0 0.0
  %691 = vmatprep.subr.mxu0 0.0
  %692 = vmatpush1.msra.mxu0 0.0
  %693 = vmatprep.subr.mxu0 0.0
  %694 = vmatpush1.msra.mxu0 0.0
  %695 = vmatprep.subr.mxu0 0.0
  %696 = vmatpush1.msra.mxu0 0.0
  %697 = vmatprep.subr.mxu0 0.0
  %698 = vmatpush1.msra.mxu0 0.0
  %699 = vmatprep.subr.mxu0 0.0
  %700 = vmatpush1.msra.mxu0 0.0
  %701 = vmatprep.subr.mxu0 0.0
  %702 = vmatpush1.msra.mxu0 0.0
  %703 = vmatprep.subr.mxu0 0.0
  %704 = vmatpush1.msra.mxu0 0.0
  %705 = vmatprep.subr.mxu0 0.0
  %706 = vmatpush1.msra.mxu0 0.0
  %707 = vmatprep.subr.mxu0 0.0
  %708 = vmatpush1.msra.mxu0 0.0
  %709 = vmatprep.subr.mxu0 0.0
  %710 = vmatpush1.msra.mxu0 0.0
  %711 = vmatprep.subr.mxu0 0.0
  %712 = vmatpush1.msra.mxu0 0.0
  %713 = vmatprep.subr.mxu0 0.0
  %714 = vmatpush1.msra.mxu0 0.0
  %715 = vmatprep.subr.mxu0 0.0
  %716 = vmatpush1.msra.mxu0 0.0
  %717 = vmatprep.subr.mxu0 0.0
  %718 = vmatpush1.msra.mxu0 0.0
  %719 = vmatprep.mubr.f32.mxu0 0.0
  %720 = vmatmul.mubr.f32.gmra.mrb[0].mxu0 %v209
  %v721 = vpop.f32.mrb[0].mxu0
  %v722 = vadd.f32 %v506, %v721
  %v723 = vpop.f32.mrb[0].mxu0
  %724 = vdwg.mxu0
  %725 = vmatprep.subr.mxu0 0.0
  %726 = vmatpush1.msra.mxu0 %v147
  %727 = vmatprep.subr.mxu0 0.0
  %728 = vmatpush1.msra.mxu0 %v148
  %729 = vmatprep.subr.mxu0 0.0
  %730 = vmatpush1.msra.mxu0 %v149
  %731 = vmatprep.subr.mxu0 0.0
  %732 = vmatpush1.msra.mxu0 %v150
  %733 = vmatprep.subr.mxu0 0.0
  %734 = vmatpush1.msra.mxu0 0.0
  %735 = vmatprep.subr.mxu0 0.0
  %736 = vmatpush1.msra.mxu0 0.0
  %737 = vmatprep.subr.mxu0 0.0
  %738 = vmatpush1.msra.mxu0 0.0
  %739 = vmatprep.subr.mxu0 0.0
  %740 = vmatpush1.msra.mxu0 0.0
  %741 = vmatprep.subr.mxu0 0.0
  %742 = vmatpush1.msra.mxu0 0.0
  %743 = vmatprep.subr.mxu0 0.0
  %744 = vmatpush1.msra.mxu0 0.0
  %745 = vmatprep.subr.mxu0 0.0
  %746 = vmatpush1.msra.mxu0 0.0
  %747 = vmatprep.subr.mxu0 0.0
  %748 = vmatpush1.msra.mxu0 0.0
  %749 = vmatprep.subr.mxu0 0.0
  %750 = vmatpush1.msra.mxu0 0.0
  %751 = vmatprep.subr.mxu0 0.0
  %752 = vmatpush1.msra.mxu0 0.0
  %753 = vmatprep.subr.mxu0 0.0
  %754 = vmatpush1.msra.mxu0 0.0
  %755 = vmatprep.subr.mxu0 0.0
  %756 = vmatpush1.msra.mxu0 0.0
  %757 = vmatprep.subr.mxu0 0.0
  %758 = vmatpush1.msra.mxu0 0.0
  %759 = vmatprep.subr.mxu0 0.0
  %760 = vmatpush1.msra.mxu0 0.0
  %761 = vmatprep.subr.mxu0 0.0
  %762 = vmatpush1.msra.mxu0 0.0
  %763 = vmatprep.subr.mxu0 0.0
  %764 = vmatpush1.msra.mxu0 0.0
  %765 = vmatprep.subr.mxu0 0.0
  %766 = vmatpush1.msra.mxu0 0.0
  %767 = vmatprep.subr.mxu0 0.0
  %768 = vmatpush1.msra.mxu0 0.0
  %769 = vmatprep.subr.mxu0 0.0
  %770 = vmatpush1.msra.mxu0 0.0
  %771 = vmatprep.subr.mxu0 0.0
  %772 = vmatpush1.msra.mxu0 0.0
  %773 = vmatprep.subr.mxu0 0.0
  %774 = vmatpush1.msra.mxu0 0.0
  %775 = vmatprep.subr.mxu0 0.0
  %776 = vmatpush1.msra.mxu0 0.0
  %777 = vmatprep.subr.mxu0 0.0
  %778 = vmatpush1.msra.mxu0 0.0
  %779 = vmatprep.subr.mxu0 0.0
  %780 = vmatpush1.msra.mxu0 0.0
  %781 = vmatprep.subr.mxu0 0.0
  %782 = vmatpush1.msra.mxu0 0.0
  %783 = vmatprep.subr.mxu0 0.0
  %784 = vmatpush1.msra.mxu0 0.0
  %785 = vmatprep.subr.mxu0 0.0
  %786 = vmatpush1.msra.mxu0 0.0
  %787 = vmatprep.subr.mxu0 0.0
  %788 = vmatpush1.msra.mxu0 0.0
  %789 = vmatprep.mubr.f32.mxu0 0.0
  %790 = vmatmul.mubr.f32.gmra.mrb[0].mxu0 %v209
  %v791 = vpop.f32.mrb[0].mxu0
  %v792 = vadd.f32 %v510, %v791
  %v793 = vpop.f32.mrb[0].mxu0
  %794 = vdwg.mxu0
  %v799 = vlaneseq
  %v800 = vshrl.u32 %v799, 7
  %v801 = vsub.s32 0, %v800
  %v802 = vrot.slane %v175, %v801
  %v803 = vlaneseq
  %v804 = vshrl.u32 %v803, 7
  %v805 = vsub.s32 0, %v804
  %v806 = vrot.slane %v176, %v805
  %v807 = vlaneseq
  %v808 = vshrl.u32 %v807, 7
  %v809 = vsub.s32 0, %v808
  %v810 = vrot.slane %v177, %v809
  %v811 = vlaneseq
  %v812 = vshrl.u32 %v811, 7
  %v813 = vsub.s32 0, %v812
  %v814 = vrot.slane %v178, %v813
  %819 = vmatprep.subr.mxu0 0.0
  %820 = vmatpush1.msra.mxu0 %v151
  %821 = vmatprep.subr.mxu0 0.0
  %822 = vmatpush1.msra.mxu0 %v152
  %823 = vmatprep.subr.mxu0 0.0
  %824 = vmatpush1.msra.mxu0 %v153
  %825 = vmatprep.subr.mxu0 0.0
  %826 = vmatpush1.msra.mxu0 %v154
  %827 = vmatprep.subr.mxu0 0.0
  %828 = vmatpush1.msra.mxu0 0.0
  %829 = vmatprep.subr.mxu0 0.0
  %830 = vmatpush1.msra.mxu0 0.0
  %831 = vmatprep.subr.mxu0 0.0
  %832 = vmatpush1.msra.mxu0 0.0
  %833 = vmatprep.subr.mxu0 0.0
  %834 = vmatpush1.msra.mxu0 0.0
  %835 = vmatprep.subr.mxu0 0.0
  %836 = vmatpush1.msra.mxu0 0.0
  %837 = vmatprep.subr.mxu0 0.0
  %838 = vmatpush1.msra.mxu0 0.0
  %839 = vmatprep.subr.mxu0 0.0
  %840 = vmatpush1.msra.mxu0 0.0
  %841 = vmatprep.subr.mxu0 0.0
  %842 = vmatpush1.msra.mxu0 0.0
  %843 = vmatprep.subr.mxu0 0.0
  %844 = vmatpush1.msra.mxu0 0.0
  %845 = vmatprep.subr.mxu0 0.0
  %846 = vmatpush1.msra.mxu0 0.0
  %847 = vmatprep.subr.mxu0 0.0
  %848 = vmatpush1.msra.mxu0 0.0
  %849 = vmatprep.subr.mxu0 0.0
  %850 = vmatpush1.msra.mxu0 0.0
  %851 = vmatprep.subr.mxu0 0.0
  %852 = vmatpush1.msra.mxu0 0.0
  %853 = vmatprep.subr.mxu0 0.0
  %854 = vmatpush1.msra.mxu0 0.0
  %855 = vmatprep.subr.mxu0 0.0
  %856 = vmatpush1.msra.mxu0 0.0
  %857 = vmatprep.subr.mxu0 0.0
  %858 = vmatpush1.msra.mxu0 0.0
  %859 = vmatprep.subr.mxu0 0.0
  %860 = vmatpush1.msra.mxu0 0.0
  %861 = vmatprep.subr.mxu0 0.0
  %862 = vmatpush1.msra.mxu0 0.0
  %863 = vmatprep.subr.mxu0 0.0
  %864 = vmatpush1.msra.mxu0 0.0
  %865 = vmatprep.subr.mxu0 0.0
  %866 = vmatpush1.msra.mxu0 0.0
  %867 = vmatprep.subr.mxu0 0.0
  %868 = vmatpush1.msra.mxu0 0.0
  %869 = vmatprep.subr.mxu0 0.0
  %870 = vmatpush1.msra.mxu0 0.0
  %871 = vmatprep.subr.mxu0 0.0
  %872 = vmatpush1.msra.mxu0 0.0
  %873 = vmatprep.subr.mxu0 0.0
  %874 = vmatpush1.msra.mxu0 0.0
  %875 = vmatprep.subr.mxu0 0.0
  %876 = vmatpush1.msra.mxu0 0.0
  %877 = vmatprep.subr.mxu0 0.0
  %878 = vmatpush1.msra.mxu0 0.0
  %879 = vmatprep.subr.mxu0 0.0
  %880 = vmatpush1.msra.mxu0 0.0
  %881 = vmatprep.subr.mxu0 0.0
  %882 = vmatpush1.msra.mxu0 0.0
  %883 = vmatprep.mubr.f32.mxu0 0.0
  %884 = vmatmul.mubr.f32.gmra.mrb[0].mxu0 %v209
  %v885 = vpop.f32.mrb[0].mxu0
  %v886 = vadd.f32 %v802, %v885
  %v887 = vpop.f32.mrb[0].mxu0
  %888 = vdwg.mxu0
  %889 = vmatprep.subr.mxu0 0.0
  %890 = vmatpush1.msra.mxu0 %v155
  %891 = vmatprep.subr.mxu0 0.0
  %892 = vmatpush1.msra.mxu0 %v156
  %893 = vmatprep.subr.mxu0 0.0
  %894 = vmatpush1.msra.mxu0 %v157
  %895 = vmatprep.subr.mxu0 0.0
  %896 = vmatpush1.msra.mxu0 %v158
  %897 = vmatprep.subr.mxu0 0.0
  %898 = vmatpush1.msra.mxu0 0.0
  %899 = vmatprep.subr.mxu0 0.0
  %900 = vmatpush1.msra.mxu0 0.0
  %901 = vmatprep.subr.mxu0 0.0
  %902 = vmatpush1.msra.mxu0 0.0
  %903 = vmatprep.subr.mxu0 0.0
  %904 = vmatpush1.msra.mxu0 0.0
  %905 = vmatprep.subr.mxu0 0.0
  %906 = vmatpush1.msra.mxu0 0.0
  %907 = vmatprep.subr.mxu0 0.0
  %908 = vmatpush1.msra.mxu0 0.0
  %909 = vmatprep.subr.mxu0 0.0
  %910 = vmatpush1.msra.mxu0 0.0
  %911 = vmatprep.subr.mxu0 0.0
  %912 = vmatpush1.msra.mxu0 0.0
  %913 = vmatprep.subr.mxu0 0.0
  %914 = vmatpush1.msra.mxu0 0.0
  %915 = vmatprep.subr.mxu0 0.0
  %916 = vmatpush1.msra.mxu0 0.0
  %917 = vmatprep.subr.mxu0 0.0
  %918 = vmatpush1.msra.mxu0 0.0
  %919 = vmatprep.subr.mxu0 0.0
  %920 = vmatpush1.msra.mxu0 0.0
  %921 = vmatprep.subr.mxu0 0.0
  %922 = vmatpush1.msra.mxu0 0.0
  %923 = vmatprep.subr.mxu0 0.0
  %924 = vmatpush1.msra.mxu0 0.0
  %925 = vmatprep.subr.mxu0 0.0
  %926 = vmatpush1.msra.mxu0 0.0
  %927 = vmatprep.subr.mxu0 0.0
  %928 = vmatpush1.msra.mxu0 0.0
  %929 = vmatprep.subr.mxu0 0.0
  %930 = vmatpush1.msra.mxu0 0.0
  %931 = vmatprep.subr.mxu0 0.0
  %932 = vmatpush1.msra.mxu0 0.0
  %933 = vmatprep.subr.mxu0 0.0
  %934 = vmatpush1.msra.mxu0 0.0
  %935 = vmatprep.subr.mxu0 0.0
  %936 = vmatpush1.msra.mxu0 0.0
  %937 = vmatprep.subr.mxu0 0.0
  %938 = vmatpush1.msra.mxu0 0.0
  %939 = vmatprep.subr.mxu0 0.0
  %940 = vmatpush1.msra.mxu0 0.0
  %941 = vmatprep.subr.mxu0 0.0
  %942 = vmatpush1.msra.mxu0 0.0
  %943 = vmatprep.subr.mxu0 0.0
  %944 = vmatpush1.msra.mxu0 0.0
  %945 = vmatprep.subr.mxu0 0.0
  %946 = vmatpush1.msra.mxu0 0.0
  %947 = vmatprep.subr.mxu0 0.0
  %948 = vmatpush1.msra.mxu0 0.0
  %949 = vmatprep.subr.mxu0 0.0
  %950 = vmatpush1.msra.mxu0 0.0
  %951 = vmatprep.subr.mxu0 0.0
  %952 = vmatpush1.msra.mxu0 0.0
  %953 = vmatprep.mubr.f32.mxu0 0.0
  %954 = vmatmul.mubr.f32.gmra.mrb[0].mxu0 %v209
  %v955 = vpop.f32.mrb[0].mxu0
  %v956 = vadd.f32 %v806, %v955
  %v957 = vpop.f32.mrb[0].mxu0
  %958 = vdwg.mxu0
  %959 = vmatprep.subr.mxu0 0.0
  %960 = vmatpush1.msra.mxu0 %v159
  %961 = vmatprep.subr.mxu0 0.0
  %962 = vmatpush1.msra.mxu0 %v160
  %963 = vmatprep.subr.mxu0 0.0
  %964 = vmatpush1.msra.mxu0 %v161
  %965 = vmatprep.subr.mxu0 0.0
  %966 = vmatpush1.msra.mxu0 %v162
  %967 = vmatprep.subr.mxu0 0.0
  %968 = vmatpush1.msra.mxu0 0.0
  %969 = vmatprep.subr.mxu0 0.0
  %970 = vmatpush1.msra.mxu0 0.0
  %971 = vmatprep.subr.mxu0 0.0
  %972 = vmatpush1.msra.mxu0 0.0
  %973 = vmatprep.subr.mxu0 0.0
  %974 = vmatpush1.msra.mxu0 0.0
  %975 = vmatprep.subr.mxu0 0.0
  %976 = vmatpush1.msra.mxu0 0.0
  %977 = vmatprep.subr.mxu0 0.0
  %978 = vmatpush1.msra.mxu0 0.0
  %979 = vmatprep.subr.mxu0 0.0
  %980 = vmatpush1.msra.mxu0 0.0
  %981 = vmatprep.subr.mxu0 0.0
  %982 = vmatpush1.msra.mxu0 0.0
  %983 = vmatprep.subr.mxu0 0.0
  %984 = vmatpush1.msra.mxu0 0.0
  %985 = vmatprep.subr.mxu0 0.0
  %986 = vmatpush1.msra.mxu0 0.0
  %987 = vmatprep.subr.mxu0 0.0
  %988 = vmatpush1.msra.mxu0 0.0
  %989 = vmatprep.subr.mxu0 0.0
  %990 = vmatpush1.msra.mxu0 0.0
  %991 = vmatprep.subr.mxu0 0.0
  %992 = vmatpush1.msra.mxu0 0.0
  %993 = vmatprep.subr.mxu0 0.0
  %994 = vmatpush1.msra.mxu0 0.0
  %995 = vmatprep.subr.mxu0 0.0
  %996 = vmatpush1.msra.mxu0 0.0
  %997 = vmatprep.subr.mxu0 0.0
  %998 = vmatpush1.msra.mxu0 0.0
  %999 = vmatprep.subr.mxu0 0.0
  %1000 = vmatpush1.msra.mxu0 0.0
  %1001 = vmatprep.subr.mxu0 0.0
  %1002 = vmatpush1.msra.mxu0 0.0
  %1003 = vmatprep.subr.mxu0 0.0
  %1004 = vmatpush1.msra.mxu0 0.0
  %1005 = vmatprep.subr.mxu0 0.0
  %1006 = vmatpush1.msra.mxu0 0.0
  %1007 = vmatprep.subr.mxu0 0.0
  %1008 = vmatpush1.msra.mxu0 0.0
  %1009 = vmatprep.subr.mxu0 0.0
  %1010 = vmatpush1.msra.mxu0 0.0
  %1011 = vmatprep.subr.mxu0 0.0
  %1012 = vmatpush1.msra.mxu0 0.0
  %1013 = vmatprep.subr.mxu0 0.0
  %1014 = vmatpush1.msra.mxu0 0.0
  %1015 = vmatprep.subr.mxu0 0.0
  %1016 = vmatpush1.msra.mxu0 0.0
  %1017 = vmatprep.subr.mxu0 0.0
  %1018 = vmatpush1.msra.mxu0 0.0
  %1019 = vmatprep.subr.mxu0 0.0
  %1020 = vmatpush1.msra.mxu0 0.0
  %1021 = vmatprep.subr.mxu0 0.0
  %1022 = vmatpush1.msra.mxu0 0.0
  %1023 = vmatprep.mubr.f32.mxu0 0.0
  %1024 = vmatmul.mubr.f32.gmra.mrb[0].mxu0 %v209
  %v1025 = vpop.f32.mrb[0].mxu0
  %v1026 = vadd.f32 %v810, %v1025
  %v1027 = vpop.f32.mrb[0].mxu0
  %1028 = vdwg.mxu0
  %1029 = vmatprep.subr.mxu0 0.0
  %1030 = vmatpush1.msra.mxu0 %v163
  %1031 = vmatprep.subr.mxu0 0.0
  %1032 = vmatpush1.msra.mxu0 %v164
  %1033 = vmatprep.subr.mxu0 0.0
  %1034 = vmatpush1.msra.mxu0 %v165
  %1035 = vmatprep.subr.mxu0 0.0
  %1036 = vmatpush1.msra.mxu0 %v166
  %1037 = vmatprep.subr.mxu0 0.0
  %1038 = vmatpush1.msra.mxu0 0.0
  %1039 = vmatprep.subr.mxu0 0.0
  %1040 = vmatpush1.msra.mxu0 0.0
  %1041 = vmatprep.subr.mxu0 0.0
  %1042 = vmatpush1.msra.mxu0 0.0
  %1043 = vmatprep.subr.mxu0 0.0
  %1044 = vmatpush1.msra.mxu0 0.0
  %1045 = vmatprep.subr.mxu0 0.0
  %1046 = vmatpush1.msra.mxu0 0.0
  %1047 = vmatprep.subr.mxu0 0.0
  %1048 = vmatpush1.msra.mxu0 0.0
  %1049 = vmatprep.subr.mxu0 0.0
  %1050 = vmatpush1.msra.mxu0 0.0
  %1051 = vmatprep.subr.mxu0 0.0
  %1052 = vmatpush1.msra.mxu0 0.0
  %1053 = vmatprep.subr.mxu0 0.0
  %1054 = vmatpush1.msra.mxu0 0.0
  %1055 = vmatprep.subr.mxu0 0.0
  %1056 = vmatpush1.msra.mxu0 0.0
  %1057 = vmatprep.subr.mxu0 0.0
  %1058 = vmatpush1.msra.mxu0 0.0
  %1059 = vmatprep.subr.mxu0 0.0
  %1060 = vmatpush1.msra.mxu0 0.0
  %1061 = vmatprep.subr.mxu0 0.0
  %1062 = vmatpush1.msra.mxu0 0.0
  %1063 = vmatprep.subr.mxu0 0.0
  %1064 = vmatpush1.msra.mxu0 0.0
  %1065 = vmatprep.subr.mxu0 0.0
  %1066 = vmatpush1.msra.mxu0 0.0
  %1067 = vmatprep.subr.mxu0 0.0
  %1068 = vmatpush1.msra.mxu0 0.0
  %1069 = vmatprep.subr.mxu0 0.0
  %1070 = vmatpush1.msra.mxu0 0.0
  %1071 = vmatprep.subr.mxu0 0.0
  %1072 = vmatpush1.msra.mxu0 0.0
  %1073 = vmatprep.subr.mxu0 0.0
  %1074 = vmatpush1.msra.mxu0 0.0
  %1075 = vmatprep.subr.mxu0 0.0
  %1076 = vmatpush1.msra.mxu0 0.0
  %1077 = vmatprep.subr.mxu0 0.0
  %1078 = vmatpush1.msra.mxu0 0.0
  %1079 = vmatprep.subr.mxu0 0.0
  %1080 = vmatpush1.msra.mxu0 0.0
  %1081 = vmatprep.subr.mxu0 0.0
  %1082 = vmatpush1.msra.mxu0 0.0
  %1083 = vmatprep.subr.mxu0 0.0
  %1084 = vmatpush1.msra.mxu0 0.0
  %1085 = vmatprep.subr.mxu0 0.0
  %1086 = vmatpush1.msra.mxu0 0.0
  %1087 = vmatprep.subr.mxu0 0.0
  %1088 = vmatpush1.msra.mxu0 0.0
  %1089 = vmatprep.subr.mxu0 0.0
  %1090 = vmatpush1.msra.mxu0 0.0
  %1091 = vmatprep.subr.mxu0 0.0
  %1092 = vmatpush1.msra.mxu0 0.0
  %1093 = vmatprep.mubr.f32.mxu0 0.0
  %1094 = vmatmul.mubr.f32.gmra.mrb[0].mxu0 %v209
  %v1095 = vpop.f32.mrb[0].mxu0
  %v1096 = vadd.f32 %v814, %v1095
  %v1097 = vpop.f32.mrb[0].mxu0
  %1098 = vdwg.mxu0
  %vm1099 = vcmask 64512
  %v1101 = vsel %vm1099, %v278, 0
  %v1104 = vsel %vm1099, %v582, 0
  %1106 = vmatprep.subr.mxu0 0.0
  %1107 = vmatpush1.xpose.msra.mxu0 %v1104
  %1108 = vmatprep.subr.mxu0 0.0
  %1109 = vmatpush1.xpose.msra.mxu0 0.0
  %1110 = vmatprep.subr.mxu0 0.0
  %1111 = vmatpush1.xpose.msra.mxu0 0.0
  %1112 = vmatprep.subr.mxu0 0.0
  %1113 = vmatpush1.xpose.msra.mxu0 0.0
  %1114 = vmatprep.subr.mxu0 0.0
  %1115 = vmatpush1.xpose.msra.mxu0 0.0
  %1116 = vmatprep.subr.mxu0 0.0
  %1117 = vmatpush1.xpose.msra.mxu0 0.0
  %1118 = vmatprep.subr.mxu0 0.0
  %1119 = vmatpush1.xpose.msra.mxu0 0.0
  %1120 = vmatprep.subr.mxu0 0.0
  %1121 = vmatpush1.xpose.msra.mxu0 0.0
  %1122 = vmatprep.subr.mxu0 0.0
  %1123 = vmatpush1.xpose.msra.mxu0 0.0
  %1124 = vmatprep.subr.mxu0 0.0
  %1125 = vmatpush1.xpose.msra.mxu0 0.0
  %1126 = vmatprep.subr.mxu0 0.0
  %1127 = vmatpush1.xpose.msra.mxu0 0.0
  %1128 = vmatprep.subr.mxu0 0.0
  %1129 = vmatpush1.xpose.msra.mxu0 0.0
  %1130 = vmatprep.subr.mxu0 0.0
  %1131 = vmatpush1.xpose.msra.mxu0 0.0
  %1132 = vmatprep.subr.mxu0 0.0
  %1133 = vmatpush1.xpose.msra.mxu0 0.0
  %1134 = vmatprep.subr.mxu0 0.0
  %1135 = vmatpush1.xpose.msra.mxu0 0.0
  %1136 = vmatprep.subr.mxu0 0.0
  %1137 = vmatpush1.xpose.msra.mxu0 0.0
  %1138 = vmatprep.subr.mxu0 0.0
  %1139 = vmatpush1.xpose.msra.mxu0 0.0
  %1140 = vmatprep.subr.mxu0 0.0
  %1141 = vmatpush1.xpose.msra.mxu0 0.0
  %1142 = vmatprep.subr.mxu0 0.0
  %1143 = vmatpush1.xpose.msra.mxu0 0.0
  %1144 = vmatprep.subr.mxu0 0.0
  %1145 = vmatpush1.xpose.msra.mxu0 0.0
  %1146 = vmatprep.subr.mxu0 0.0
  %1147 = vmatpush1.xpose.msra.mxu0 0.0
  %1148 = vmatprep.subr.mxu0 0.0
  %1149 = vmatpush1.xpose.msra.mxu0 0.0
  %1150 = vmatprep.subr.mxu0 0.0
  %1151 = vmatpush1.xpose.msra.mxu0 0.0
  %1152 = vmatprep.subr.mxu0 0.0
  %1153 = vmatpush1.xpose.msra.mxu0 0.0
  %1154 = vmatprep.subr.mxu0 0.0
  %1155 = vmatpush1.xpose.msra.mxu0 0.0
  %1156 = vmatprep.subr.mxu0 0.0
  %1157 = vmatpush1.xpose.msra.mxu0 0.0
  %1158 = vmatprep.subr.mxu0 0.0
  %1159 = vmatpush1.xpose.msra.mxu0 0.0
  %1160 = vmatprep.subr.mxu0 0.0
  %1161 = vmatpush1.xpose.msra.mxu0 0.0
  %1162 = vmatprep.subr.mxu0 0.0
  %1163 = vmatpush1.xpose.msra.mxu0 0.0
  %1164 = vmatprep.subr.mxu0 0.0
  %1165 = vmatpush1.xpose.msra.mxu0 0.0
  %1166 = vmatprep.subr.mxu0 0.0
  %1167 = vmatpush1.xpose.msra.mxu0 0.0
  %1168 = vmatprep.subr.mxu0 0.0
  %1169 = vmatpush1.xpose.msra.mxu0 0.0
  %1170 = vmatprep.mubr.f32.mxu0 0.0
  %1171 = vmatmul.mubr.f32.gmra.mrb[0].mxu0 %v1101
  %v1172 = vpop.f32.mrb[0].mxu0
  %v1173 = vadd.f32 0.0, %v1172
  %v1174 = vpop.f32.mrb[0].mxu0
  %1175 = vdwg.mxu0
  %v1177 = vsel %vm1099, %v348, 0
  %v1180 = vsel %vm1099, %v652, 0
  %1182 = vmatprep.subr.mxu0 0.0
  %1183 = vmatpush1.xpose.msra.mxu0 %v1180
  %1184 = vmatprep.subr.mxu0 0.0
  %1185 = vmatpush1.xpose.msra.mxu0 0.0
  %1186 = vmatprep.subr.mxu0 0.0
  %1187 = vmatpush1.xpose.msra.mxu0 0.0
  %1188 = vmatprep.subr.mxu0 0.0
  %1189 = vmatpush1.xpose.msra.mxu0 0.0
  %1190 = vmatprep.subr.mxu0 0.0
  %1191 = vmatpush1.xpose.msra.mxu0 0.0
  %1192 = vmatprep.subr.mxu0 0.0
  %1193 = vmatpush1.xpose.msra.mxu0 0.0
  %1194 = vmatprep.subr.mxu0 0.0
  %1195 = vmatpush1.xpose.msra.mxu0 0.0
  %1196 = vmatprep.subr.mxu0 0.0
  %1197 = vmatpush1.xpose.msra.mxu0 0.0
  %1198 = vmatprep.subr.mxu0 0.0
  %1199 = vmatpush1.xpose.msra.mxu0 0.0
  %1200 = vmatprep.subr.mxu0 0.0
  %1201 = vmatpush1.xpose.msra.mxu0 0.0
  %1202 = vmatprep.subr.mxu0 0.0
  %1203 = vmatpush1.xpose.msra.mxu0 0.0
  %1204 = vmatprep.subr.mxu0 0.0
  %1205 = vmatpush1.xpose.msra.mxu0 0.0
  %1206 = vmatprep.subr.mxu0 0.0
  %1207 = vmatpush1.xpose.msra.mxu0 0.0
  %1208 = vmatprep.subr.mxu0 0.0
  %1209 = vmatpush1.xpose.msra.mxu0 0.0
  %1210 = vmatprep.subr.mxu0 0.0
  %1211 = vmatpush1.xpose.msra.mxu0 0.0
  %1212 = vmatprep.subr.mxu0 0.0
  %1213 = vmatpush1.xpose.msra.mxu0 0.0
  %1214 = vmatprep.subr.mxu0 0.0
  %1215 = vmatpush1.xpose.msra.mxu0 0.0
  %1216 = vmatprep.subr.mxu0 0.0
  %1217 = vmatpush1.xpose.msra.mxu0 0.0
  %1218 = vmatprep.subr.mxu0 0.0
  %1219 = vmatpush1.xpose.msra.mxu0 0.0
  %1220 = vmatprep.subr.mxu0 0.0
  %1221 = vmatpush1.xpose.msra.mxu0 0.0
  %1222 = vmatprep.subr.mxu0 0.0
  %1223 = vmatpush1.xpose.msra.mxu0 0.0
  %1224 = vmatprep.subr.mxu0 0.0
  %1225 = vmatpush1.xpose.msra.mxu0 0.0
  %1226 = vmatprep.subr.mxu0 0.0
  %1227 = vmatpush1.xpose.msra.mxu0 0.0
  %1228 = vmatprep.subr.mxu0 0.0
  %1229 = vmatpush1.xpose.msra.mxu0 0.0
  %1230 = vmatprep.subr.mxu0 0.0
  %1231 = vmatpush1.xpose.msra.mxu0 0.0
  %1232 = vmatprep.subr.mxu0 0.0
  %1233 = vmatpush1.xpose.msra.mxu0 0.0
  %1234 = vmatprep.subr.mxu0 0.0
  %1235 = vmatpush1.xpose.msra.mxu0 0.0
  %1236 = vmatprep.subr.mxu0 0.0
  %1237 = vmatpush1.xpose.msra.mxu0 0.0
  %1238 = vmatprep.subr.mxu0 0.0
  %1239 = vmatpush1.xpose.msra.mxu0 0.0
  %1240 = vmatprep.subr.mxu0 0.0
  %1241 = vmatpush1.xpose.msra.mxu0 0.0
  %1242 = vmatprep.subr.mxu0 0.0
  %1243 = vmatpush1.xpose.msra.mxu0 0.0
  %1244 = vmatprep.subr.mxu0 0.0
  %1245 = vmatpush1.xpose.msra.mxu0 0.0
  %1246 = vmatprep.mubr.f32.mxu0 0.0
  %1247 = vmatmul.mubr.f32.gmra.mrb[0].mxu0 %v1177
  %v1248 = vpop.f32.mrb[0].mxu0
  %v1249 = vadd.f32 0.0, %v1248
  %v1250 = vpop.f32.mrb[0].mxu0
  %1251 = vdwg.mxu0
  %v1253 = vsel %vm1099, %v418, 0
  %v1256 = vsel %vm1099, %v722, 0
  %1258 = vmatprep.subr.mxu0 0.0
  %1259 = vmatpush1.xpose.msra.mxu0 %v1256
  %1260 = vmatprep.subr.mxu0 0.0
  %1261 = vmatpush1.xpose.msra.mxu0 0.0
  %1262 = vmatprep.subr.mxu0 0.0
  %1263 = vmatpush1.xpose.msra.mxu0 0.0
  %1264 = vmatprep.subr.mxu0 0.0
  %1265 = vmatpush1.xpose.msra.mxu0 0.0
  %1266 = vmatprep.subr.mxu0 0.0
  %1267 = vmatpush1.xpose.msra.mxu0 0.0
  %1268 = vmatprep.subr.mxu0 0.0
  %1269 = vmatpush1.xpose.msra.mxu0 0.0
  %1270 = vmatprep.subr.mxu0 0.0
  %1271 = vmatpush1.xpose.msra.mxu0 0.0
  %1272 = vmatprep.subr.mxu0 0.0
  %1273 = vmatpush1.xpose.msra.mxu0 0.0
  %1274 = vmatprep.subr.mxu0 0.0
  %1275 = vmatpush1.xpose.msra.mxu0 0.0
  %1276 = vmatprep.subr.mxu0 0.0
  %1277 = vmatpush1.xpose.msra.mxu0 0.0
  %1278 = vmatprep.subr.mxu0 0.0
  %1279 = vmatpush1.xpose.msra.mxu0 0.0
  %1280 = vmatprep.subr.mxu0 0.0
  %1281 = vmatpush1.xpose.msra.mxu0 0.0
  %1282 = vmatprep.subr.mxu0 0.0
  %1283 = vmatpush1.xpose.msra.mxu0 0.0
  %1284 = vmatprep.subr.mxu0 0.0
  %1285 = vmatpush1.xpose.msra.mxu0 0.0
  %1286 = vmatprep.subr.mxu0 0.0
  %1287 = vmatpush1.xpose.msra.mxu0 0.0
  %1288 = vmatprep.subr.mxu0 0.0
  %1289 = vmatpush1.xpose.msra.mxu0 0.0
  %1290 = vmatprep.subr.mxu0 0.0
  %1291 = vmatpush1.xpose.msra.mxu0 0.0
  %1292 = vmatprep.subr.mxu0 0.0
  %1293 = vmatpush1.xpose.msra.mxu0 0.0
  %1294 = vmatprep.subr.mxu0 0.0
  %1295 = vmatpush1.xpose.msra.mxu0 0.0
  %1296 = vmatprep.subr.mxu0 0.0
  %1297 = vmatpush1.xpose.msra.mxu0 0.0
  %1298 = vmatprep.subr.mxu0 0.0
  %1299 = vmatpush1.xpose.msra.mxu0 0.0
  %1300 = vmatprep.subr.mxu0 0.0
  %1301 = vmatpush1.xpose.msra.mxu0 0.0
  %1302 = vmatprep.subr.mxu0 0.0
  %1303 = vmatpush1.xpose.msra.mxu0 0.0
  %1304 = vmatprep.subr.mxu0 0.0
  %1305 = vmatpush1.xpose.msra.mxu0 0.0
  %1306 = vmatprep.subr.mxu0 0.0
  %1307 = vmatpush1.xpose.msra.mxu0 0.0
  %1308 = vmatprep.subr.mxu0 0.0
  %1309 = vmatpush1.xpose.msra.mxu0 0.0
  %1310 = vmatprep.subr.mxu0 0.0
  %1311 = vmatpush1.xpose.msra.mxu0 0.0
  %1312 = vmatprep.subr.mxu0 0.0
  %1313 = vmatpush1.xpose.msra.mxu0 0.0
  %1314 = vmatprep.subr.mxu0 0.0
  %1315 = vmatpush1.xpose.msra.mxu0 0.0
  %1316 = vmatprep.subr.mxu0 0.0
  %1317 = vmatpush1.xpose.msra.mxu0 0.0
  %1318 = vmatprep.subr.mxu0 0.0
  %1319 = vmatpush1.xpose.msra.mxu0 0.0
  %1320 = vmatprep.subr.mxu0 0.0
  %1321 = vmatpush1.xpose.msra.mxu0 0.0
  %1322 = vmatprep.mubr.f32.mxu0 0.0
  %1323 = vmatmul.mubr.f32.gmra.mrb[0].mxu0 %v1253
  %v1324 = vpop.f32.mrb[0].mxu0
  %v1325 = vadd.f32 0.0, %v1324
  %v1326 = vpop.f32.mrb[0].mxu0
  %1327 = vdwg.mxu0
  %v1329 = vsel %vm1099, %v488, 0
  %v1332 = vsel %vm1099, %v792, 0
  %1334 = vmatprep.subr.mxu0 0.0
  %1335 = vmatpush1.xpose.msra.mxu0 %v1332
  %1336 = vmatprep.subr.mxu0 0.0
  %1337 = vmatpush1.xpose.msra.mxu0 0.0
  %1338 = vmatprep.subr.mxu0 0.0
  %1339 = vmatpush1.xpose.msra.mxu0 0.0
  %1340 = vmatprep.subr.mxu0 0.0
  %1341 = vmatpush1.xpose.msra.mxu0 0.0
  %1342 = vmatprep.subr.mxu0 0.0
  %1343 = vmatpush1.xpose.msra.mxu0 0.0
  %1344 = vmatprep.subr.mxu0 0.0
  %1345 = vmatpush1.xpose.msra.mxu0 0.0
  %1346 = vmatprep.subr.mxu0 0.0
  %1347 = vmatpush1.xpose.msra.mxu0 0.0
  %1348 = vmatprep.subr.mxu0 0.0
  %1349 = vmatpush1.xpose.msra.mxu0 0.0
  %1350 = vmatprep.subr.mxu0 0.0
  %1351 = vmatpush1.xpose.msra.mxu0 0.0
  %1352 = vmatprep.subr.mxu0 0.0
  %1353 = vmatpush1.xpose.msra.mxu0 0.0
  %1354 = vmatprep.subr.mxu0 0.0
  %1355 = vmatpush1.xpose.msra.mxu0 0.0
  %1356 = vmatprep.subr.mxu0 0.0
  %1357 = vmatpush1.xpose.msra.mxu0 0.0
  %1358 = vmatprep.subr.mxu0 0.0
  %1359 = vmatpush1.xpose.msra.mxu0 0.0
  %1360 = vmatprep.subr.mxu0 0.0
  %1361 = vmatpush1.xpose.msra.mxu0 0.0
  %1362 = vmatprep.subr.mxu0 0.0
  %1363 = vmatpush1.xpose.msra.mxu0 0.0
  %1364 = vmatprep.subr.mxu0 0.0
  %1365 = vmatpush1.xpose.msra.mxu0 0.0
  %1366 = vmatprep.subr.mxu0 0.0
  %1367 = vmatpush1.xpose.msra.mxu0 0.0
  %1368 = vmatprep.subr.mxu0 0.0
  %1369 = vmatpush1.xpose.msra.mxu0 0.0
  %1370 = vmatprep.subr.mxu0 0.0
  %1371 = vmatpush1.xpose.msra.mxu0 0.0
  %1372 = vmatprep.subr.mxu0 0.0
  %1373 = vmatpush1.xpose.msra.mxu0 0.0
  %1374 = vmatprep.subr.mxu0 0.0
  %1375 = vmatpush1.xpose.msra.mxu0 0.0
  %1376 = vmatprep.subr.mxu0 0.0
  %1377 = vmatpush1.xpose.msra.mxu0 0.0
  %1378 = vmatprep.subr.mxu0 0.0
  %1379 = vmatpush1.xpose.msra.mxu0 0.0
  %1380 = vmatprep.subr.mxu0 0.0
  %1381 = vmatpush1.xpose.msra.mxu0 0.0
  %1382 = vmatprep.subr.mxu0 0.0
  %1383 = vmatpush1.xpose.msra.mxu0 0.0
  %1384 = vmatprep.subr.mxu0 0.0
  %1385 = vmatpush1.xpose.msra.mxu0 0.0
  %1386 = vmatprep.subr.mxu0 0.0
  %1387 = vmatpush1.xpose.msra.mxu0 0.0
  %1388 = vmatprep.subr.mxu0 0.0
  %1389 = vmatpush1.xpose.msra.mxu0 0.0
  %1390 = vmatprep.subr.mxu0 0.0
  %1391 = vmatpush1.xpose.msra.mxu0 0.0
  %1392 = vmatprep.subr.mxu0 0.0
  %1393 = vmatpush1.xpose.msra.mxu0 0.0
  %1394 = vmatprep.subr.mxu0 0.0
  %1395 = vmatpush1.xpose.msra.mxu0 0.0
  %1396 = vmatprep.subr.mxu0 0.0
  %1397 = vmatpush1.xpose.msra.mxu0 0.0
  %1398 = vmatprep.mubr.f32.mxu0 0.0
  %1399 = vmatmul.mubr.f32.gmra.mrb[0].mxu0 %v1329
  %v1400 = vpop.f32.mrb[0].mxu0
  %v1401 = vadd.f32 0.0, %v1400
  %v1402 = vpop.f32.mrb[0].mxu0
  %1403 = vdwg.mxu0
  %v1404 = vmul.f32 %v1173, 0.35355338
  %v1405 = vmul.f32 %v1249, 0.35355338
  %v1406 = vmul.f32 %v1325, 0.35355338
  %v1407 = vmul.f32 %v1401, 0.35355338
  %v1408 = vld [vmem:[%s1] sm:$0x1]
  %v1410 = vlaneseq
  %v1411 = vshrl.u32 %v1410, 7
  %v1412 = vsub.s32 0, %v1411
  %v1413 = vrot.slane %v1408, %v1412
  %v1415 = vadd.f32 %v1404, %v1413
  %v1416 = vadd.f32 %v1405, %v1413
  %v1417 = vadd.f32 %v1406, %v1413
  %v1418 = vadd.f32 %v1407, %v1413
  %v1419 = vsel %vm1099, %v1415, -inf
  %1420 = vmax.xlane.f32.xlu0 %v1419
  %v1421 = vpop.xlane.xlu0 %1420
  %v1422 = vsel %vm1099, %v1416, -inf
  %1423 = vmax.xlane.f32.xlu0 %v1422
  %v1424 = vpop.xlane.xlu0 %1423
  %v1425 = vsel %vm1099, %v1417, -inf
  %1426 = vmax.xlane.f32.xlu0 %v1425
  %v1427 = vpop.xlane.xlu0 %1426
  %v1428 = vsel %vm1099, %v1418, -inf
  %1429 = vmax.xlane.f32.xlu0 %v1428
  %v1430 = vpop.xlane.xlu0 %1429
  %v1431 = vsub.f32 %v1415, %v1421
  %v1432 = vsub.f32 %v1416, %v1424
  %v1433 = vsub.f32 %v1417, %v1427
  %v1434 = vsub.f32 %v1418, %v1430
  %v1435 = vmul.f32 %v1431, 1.442695
  %v1436 = vpow.pop %v1435
  %v1437 = vmul.f32 %v1432, 1.442695
  %v1438 = vpow.pop %v1437
  %v1439 = vmul.f32 %v1433, 1.442695
  %v1440 = vpow.pop %v1439
  %v1441 = vmul.f32 %v1434, 1.442695
  %v1442 = vpow.pop %v1441
  %v1443 = vsel %vm1099, %v1436, 0.0
  %1444 = vadd.xlane.f32.xlu0 %v1443
  %v1445 = vpop.xlane.xlu0 %1444
  %v1446 = vsel %vm1099, %v1438, 0.0
  %1447 = vadd.xlane.f32.xlu0 %v1446
  %v1448 = vpop.xlane.xlu0 %1447
  %v1449 = vsel %vm1099, %v1440, 0.0
  %1450 = vadd.xlane.f32.xlu0 %v1449
  %v1451 = vpop.xlane.xlu0 %1450
  %v1452 = vsel %vm1099, %v1442, 0.0
  %1453 = vadd.xlane.f32.xlu0 %v1452
  %v1454 = vpop.xlane.xlu0 %1453
  %v1455 = vrcp.pop %v1445
  %v1456 = vrcp.pop %v1448
  %v1457 = vrcp.pop %v1451
  %v1458 = vrcp.pop %v1454
  %v1459 = vmul.f32 %v1436, %v1455
  %v1460 = vmul.f32 %v1438, %v1456
  %v1461 = vmul.f32 %v1440, %v1457
  %v1462 = vmul.f32 %v1442, %v1458
  %v1464 = vsel %vm1099, %v1459, 0
  %1466 = vmatprep.subr.mxu0 0.0
  %1467 = vmatpush1.msra.mxu0 %v886
  %1468 = vmatprep.subr.mxu0 0.0
  %1469 = vmatpush1.msra.mxu0 0.0
  %1470 = vmatprep.subr.mxu0 0.0
  %1471 = vmatpush1.msra.mxu0 0.0
  %1472 = vmatprep.subr.mxu0 0.0
  %1473 = vmatpush1.msra.mxu0 0.0
  %1474 = vmatprep.subr.mxu0 0.0
  %1475 = vmatpush1.msra.mxu0 0.0
  %1476 = vmatprep.subr.mxu0 0.0
  %1477 = vmatpush1.msra.mxu0 0.0
  %1478 = vmatprep.subr.mxu0 0.0
  %1479 = vmatpush1.msra.mxu0 0.0
  %1480 = vmatprep.subr.mxu0 0.0
  %1481 = vmatpush1.msra.mxu0 0.0
  %1482 = vmatprep.subr.mxu0 0.0
  %1483 = vmatpush1.msra.mxu0 0.0
  %1484 = vmatprep.subr.mxu0 0.0
  %1485 = vmatpush1.msra.mxu0 0.0
  %1486 = vmatprep.subr.mxu0 0.0
  %1487 = vmatpush1.msra.mxu0 0.0
  %1488 = vmatprep.subr.mxu0 0.0
  %1489 = vmatpush1.msra.mxu0 0.0
  %1490 = vmatprep.subr.mxu0 0.0
  %1491 = vmatpush1.msra.mxu0 0.0
  %1492 = vmatprep.subr.mxu0 0.0
  %1493 = vmatpush1.msra.mxu0 0.0
  %1494 = vmatprep.subr.mxu0 0.0
  %1495 = vmatpush1.msra.mxu0 0.0
  %1496 = vmatprep.subr.mxu0 0.0
  %1497 = vmatpush1.msra.mxu0 0.0
  %1498 = vmatprep.subr.mxu0 0.0
  %1499 = vmatpush1.msra.mxu0 0.0
  %1500 = vmatprep.subr.mxu0 0.0
  %1501 = vmatpush1.msra.mxu0 0.0
  %1502 = vmatprep.subr.mxu0 0.0
  %1503 = vmatpush1.msra.mxu0 0.0
  %1504 = vmatprep.subr.mxu0 0.0
  %1505 = vmatpush1.msra.mxu0 0.0
  %1506 = vmatprep.subr.mxu0 0.0
  %1507 = vmatpush1.msra.mxu0 0.0
  %1508 = vmatprep.subr.mxu0 0.0
  %1509 = vmatpush1.msra.mxu0 0.0
  %1510 = vmatprep.subr.mxu0 0.0
  %1511 = vmatpush1.msra.mxu0 0.0
  %1512 = vmatprep.subr.mxu0 0.0
  %1513 = vmatpush1.msra.mxu0 0.0
  %1514 = vmatprep.subr.mxu0 0.0
  %1515 = vmatpush1.msra.mxu0 0.0
  %1516 = vmatprep.subr.mxu0 0.0
  %1517 = vmatpush1.msra.mxu0 0.0
  %1518 = vmatprep.subr.mxu0 0.0
  %1519 = vmatpush1.msra.mxu0 0.0
  %1520 = vmatprep.subr.mxu0 0.0
  %1521 = vmatpush1.msra.mxu0 0.0
  %1522 = vmatprep.subr.mxu0 0.0
  %1523 = vmatpush1.msra.mxu0 0.0
  %1524 = vmatprep.subr.mxu0 0.0
  %1525 = vmatpush1.msra.mxu0 0.0
  %1526 = vmatprep.subr.mxu0 0.0
  %1527 = vmatpush1.msra.mxu0 0.0
  %1528 = vmatprep.subr.mxu0 0.0
  %1529 = vmatpush1.msra.mxu0 0.0
  %1530 = vmatprep.mubr.f32.mxu0 0.0
  %1531 = vmatmul.mubr.f32.gmra.mrb[0].mxu0 %v1464
  %v1532 = vpop.f32.mrb[0].mxu0
  %v1533 = vadd.f32 0.0, %v1532
  %v1534 = vpop.f32.mrb[0].mxu0
  %1535 = vdwg.mxu0
  %v1537 = vsel %vm1099, %v1460, 0
  %1539 = vmatprep.subr.mxu0 0.0
  %1540 = vmatpush1.msra.mxu0 %v956
  %1541 = vmatprep.subr.mxu0 0.0
  %1542 = vmatpush1.msra.mxu0 0.0
  %1543 = vmatprep.subr.mxu0 0.0
  %1544 = vmatpush1.msra.mxu0 0.0
  %1545 = vmatprep.subr.mxu0 0.0
  %1546 = vmatpush1.msra.mxu0 0.0
  %1547 = vmatprep.subr.mxu0 0.0
  %1548 = vmatpush1.msra.mxu0 0.0
  %1549 = vmatprep.subr.mxu0 0.0
  %1550 = vmatpush1.msra.mxu0 0.0
  %1551 = vmatprep.subr.mxu0 0.0
  %1552 = vmatpush1.msra.mxu0 0.0
  %1553 = vmatprep.subr.mxu0 0.0
  %1554 = vmatpush1.msra.mxu0 0.0
  %1555 = vmatprep.subr.mxu0 0.0
  %1556 = vmatpush1.msra.mxu0 0.0
  %1557 = vmatprep.subr.mxu0 0.0
  %1558 = vmatpush1.msra.mxu0 0.0
  %1559 = vmatprep.subr.mxu0 0.0
  %1560 = vmatpush1.msra.mxu0 0.0
  %1561 = vmatprep.subr.mxu0 0.0
  %1562 = vmatpush1.msra.mxu0 0.0
  %1563 = vmatprep.subr.mxu0 0.0
  %1564 = vmatpush1.msra.mxu0 0.0
  %1565 = vmatprep.subr.mxu0 0.0
  %1566 = vmatpush1.msra.mxu0 0.0
  %1567 = vmatprep.subr.mxu0 0.0
  %1568 = vmatpush1.msra.mxu0 0.0
  %1569 = vmatprep.subr.mxu0 0.0
  %1570 = vmatpush1.msra.mxu0 0.0
  %1571 = vmatprep.subr.mxu0 0.0
  %1572 = vmatpush1.msra.mxu0 0.0
  %1573 = vmatprep.subr.mxu0 0.0
  %1574 = vmatpush1.msra.mxu0 0.0
  %1575 = vmatprep.subr.mxu0 0.0
  %1576 = vmatpush1.msra.mxu0 0.0
  %1577 = vmatprep.subr.mxu0 0.0
  %1578 = vmatpush1.msra.mxu0 0.0
  %1579 = vmatprep.subr.mxu0 0.0
  %1580 = vmatpush1.msra.mxu0 0.0
  %1581 = vmatprep.subr.mxu0 0.0
  %1582 = vmatpush1.msra.mxu0 0.0
  %1583 = vmatprep.subr.mxu0 0.0
  %1584 = vmatpush1.msra.mxu0 0.0
  %1585 = vmatprep.subr.mxu0 0.0
  %1586 = vmatpush1.msra.mxu0 0.0
  %1587 = vmatprep.subr.mxu0 0.0
  %1588 = vmatpush1.msra.mxu0 0.0
  %1589 = vmatprep.subr.mxu0 0.0
  %1590 = vmatpush1.msra.mxu0 0.0
  %1591 = vmatprep.subr.mxu0 0.0
  %1592 = vmatpush1.msra.mxu0 0.0
  %1593 = vmatprep.subr.mxu0 0.0
  %1594 = vmatpush1.msra.mxu0 0.0
  %1595 = vmatprep.subr.mxu0 0.0
  %1596 = vmatpush1.msra.mxu0 0.0
  %1597 = vmatprep.subr.mxu0 0.0
  %1598 = vmatpush1.msra.mxu0 0.0
  %1599 = vmatprep.subr.mxu0 0.0
  %1600 = vmatpush1.msra.mxu0 0.0
  %1601 = vmatprep.subr.mxu0 0.0
  %1602 = vmatpush1.msra.mxu0 0.0
  %1603 = vmatprep.mubr.f32.mxu0 0.0
  %1604 = vmatmul.mubr.f32.gmra.mrb[0].mxu0 %v1537
  %v1605 = vpop.f32.mrb[0].mxu0
  %v1606 = vadd.f32 0.0, %v1605
  %v1607 = vpop.f32.mrb[0].mxu0
  %1608 = vdwg.mxu0
  %v1610 = vsel %vm1099, %v1461, 0
  %1612 = vmatprep.subr.mxu0 0.0
  %1613 = vmatpush1.msra.mxu0 %v1026
  %1614 = vmatprep.subr.mxu0 0.0
  %1615 = vmatpush1.msra.mxu0 0.0
  %1616 = vmatprep.subr.mxu0 0.0
  %1617 = vmatpush1.msra.mxu0 0.0
  %1618 = vmatprep.subr.mxu0 0.0
  %1619 = vmatpush1.msra.mxu0 0.0
  %1620 = vmatprep.subr.mxu0 0.0
  %1621 = vmatpush1.msra.mxu0 0.0
  %1622 = vmatprep.subr.mxu0 0.0
  %1623 = vmatpush1.msra.mxu0 0.0
  %1624 = vmatprep.subr.mxu0 0.0
  %1625 = vmatpush1.msra.mxu0 0.0
  %1626 = vmatprep.subr.mxu0 0.0
  %1627 = vmatpush1.msra.mxu0 0.0
  %1628 = vmatprep.subr.mxu0 0.0
  %1629 = vmatpush1.msra.mxu0 0.0
  %1630 = vmatprep.subr.mxu0 0.0
  %1631 = vmatpush1.msra.mxu0 0.0
  %1632 = vmatprep.subr.mxu0 0.0
  %1633 = vmatpush1.msra.mxu0 0.0
  %1634 = vmatprep.subr.mxu0 0.0
  %1635 = vmatpush1.msra.mxu0 0.0
  %1636 = vmatprep.subr.mxu0 0.0
  %1637 = vmatpush1.msra.mxu0 0.0
  %1638 = vmatprep.subr.mxu0 0.0
  %1639 = vmatpush1.msra.mxu0 0.0
  %1640 = vmatprep.subr.mxu0 0.0
  %1641 = vmatpush1.msra.mxu0 0.0
  %1642 = vmatprep.subr.mxu0 0.0
  %1643 = vmatpush1.msra.mxu0 0.0
  %1644 = vmatprep.subr.mxu0 0.0
  %1645 = vmatpush1.msra.mxu0 0.0
  %1646 = vmatprep.subr.mxu0 0.0
  %1647 = vmatpush1.msra.mxu0 0.0
  %1648 = vmatprep.subr.mxu0 0.0
  %1649 = vmatpush1.msra.mxu0 0.0
  %1650 = vmatprep.subr.mxu0 0.0
  %1651 = vmatpush1.msra.mxu0 0.0
  %1652 = vmatprep.subr.mxu0 0.0
  %1653 = vmatpush1.msra.mxu0 0.0
  %1654 = vmatprep.subr.mxu0 0.0
  %1655 = vmatpush1.msra.mxu0 0.0
  %1656 = vmatprep.subr.mxu0 0.0
  %1657 = vmatpush1.msra.mxu0 0.0
  %1658 = vmatprep.subr.mxu0 0.0
  %1659 = vmatpush1.msra.mxu0 0.0
  %1660 = vmatprep.subr.mxu0 0.0
  %1661 = vmatpush1.msra.mxu0 0.0
  %1662 = vmatprep.subr.mxu0 0.0
  %1663 = vmatpush1.msra.mxu0 0.0
  %1664 = vmatprep.subr.mxu0 0.0
  %1665 = vmatpush1.msra.mxu0 0.0
  %1666 = vmatprep.subr.mxu0 0.0
  %1667 = vmatpush1.msra.mxu0 0.0
  %1668 = vmatprep.subr.mxu0 0.0
  %1669 = vmatpush1.msra.mxu0 0.0
  %1670 = vmatprep.subr.mxu0 0.0
  %1671 = vmatpush1.msra.mxu0 0.0
  %1672 = vmatprep.subr.mxu0 0.0
  %1673 = vmatpush1.msra.mxu0 0.0
  %1674 = vmatprep.subr.mxu0 0.0
  %1675 = vmatpush1.msra.mxu0 0.0
  %1676 = vmatprep.mubr.f32.mxu0 0.0
  %1677 = vmatmul.mubr.f32.gmra.mrb[0].mxu0 %v1610
  %v1678 = vpop.f32.mrb[0].mxu0
  %v1679 = vadd.f32 0.0, %v1678
  %v1680 = vpop.f32.mrb[0].mxu0
  %1681 = vdwg.mxu0
  %v1683 = vsel %vm1099, %v1462, 0
  %1685 = vmatprep.subr.mxu0 0.0
  %1686 = vmatpush1.msra.mxu0 %v1096
  %1687 = vmatprep.subr.mxu0 0.0
  %1688 = vmatpush1.msra.mxu0 0.0
  %1689 = vmatprep.subr.mxu0 0.0
  %1690 = vmatpush1.msra.mxu0 0.0
  %1691 = vmatprep.subr.mxu0 0.0
  %1692 = vmatpush1.msra.mxu0 0.0
  %1693 = vmatprep.subr.mxu0 0.0
  %1694 = vmatpush1.msra.mxu0 0.0
  %1695 = vmatprep.subr.mxu0 0.0
  %1696 = vmatpush1.msra.mxu0 0.0
  %1697 = vmatprep.subr.mxu0 0.0
  %1698 = vmatpush1.msra.mxu0 0.0
  %1699 = vmatprep.subr.mxu0 0.0
  %1700 = vmatpush1.msra.mxu0 0.0
  %1701 = vmatprep.subr.mxu0 0.0
  %1702 = vmatpush1.msra.mxu0 0.0
  %1703 = vmatprep.subr.mxu0 0.0
  %1704 = vmatpush1.msra.mxu0 0.0
  %1705 = vmatprep.subr.mxu0 0.0
  %1706 = vmatpush1.msra.mxu0 0.0
  %1707 = vmatprep.subr.mxu0 0.0
  %1708 = vmatpush1.msra.mxu0 0.0
  %1709 = vmatprep.subr.mxu0 0.0
  %1710 = vmatpush1.msra.mxu0 0.0
  %1711 = vmatprep.subr.mxu0 0.0
  %1712 = vmatpush1.msra.mxu0 0.0
  %1713 = vmatprep.subr.mxu0 0.0
  %1714 = vmatpush1.msra.mxu0 0.0
  %1715 = vmatprep.subr.mxu0 0.0
  %1716 = vmatpush1.msra.mxu0 0.0
  %1717 = vmatprep.subr.mxu0 0.0
  %1718 = vmatpush1.msra.mxu0 0.0
  %1719 = vmatprep.subr.mxu0 0.0
  %1720 = vmatpush1.msra.mxu0 0.0
  %1721 = vmatprep.subr.mxu0 0.0
  %1722 = vmatpush1.msra.mxu0 0.0
  %1723 = vmatprep.subr.mxu0 0.0
  %1724 = vmatpush1.msra.mxu0 0.0
  %1725 = vmatprep.subr.mxu0 0.0
  %1726 = vmatpush1.msra.mxu0 0.0
  %1727 = vmatprep.subr.mxu0 0.0
  %1728 = vmatpush1.msra.mxu0 0.0
  %1729 = vmatprep.subr.mxu0 0.0
  %1730 = vmatpush1.msra.mxu0 0.0
  %1731 = vmatprep.subr.mxu0 0.0
  %1732 = vmatpush1.msra.mxu0 0.0
  %1733 = vmatprep.subr.mxu0 0.0
  %1734 = vmatpush1.msra.mxu0 0.0
  %1735 = vmatprep.subr.mxu0 0.0
  %1736 = vmatpush1.msra.mxu0 0.0
  %1737 = vmatprep.subr.mxu0 0.0
  %1738 = vmatpush1.msra.mxu0 0.0
  %1739 = vmatprep.subr.mxu0 0.0
  %1740 = vmatpush1.msra.mxu0 0.0
  %1741 = vmatprep.subr.mxu0 0.0
  %1742 = vmatpush1.msra.mxu0 0.0
  %1743 = vmatprep.subr.mxu0 0.0
  %1744 = vmatpush1.msra.mxu0 0.0
  %1745 = vmatprep.subr.mxu0 0.0
  %1746 = vmatpush1.msra.mxu0 0.0
  %1747 = vmatprep.subr.mxu0 0.0
  %1748 = vmatpush1.msra.mxu0 0.0
  %1749 = vmatprep.mubr.f32.mxu0 0.0
  %1750 = vmatmul.mubr.f32.gmra.mrb[0].mxu0 %v1683
  %v1751 = vpop.f32.mrb[0].mxu0
  %v1752 = vadd.f32 0.0, %v1751
  %v1753 = vpop.f32.mrb[0].mxu0
  %1754 = vdwg.mxu0
  %v1756 = vsel %vm1099, %v1606, 0
  %1758 = vmatprep.subr.mxu0 0.0
  %1759 = vmatpush1.msra.mxu0 %v180
  %1760 = vmatprep.subr.mxu0 0.0
  %1761 = vmatpush1.msra.mxu0 0.0
  %1762 = vmatprep.subr.mxu0 0.0
  %1763 = vmatpush1.msra.mxu0 0.0
  %1764 = vmatprep.subr.mxu0 0.0
  %1765 = vmatpush1.msra.mxu0 0.0
  %1766 = vmatprep.subr.mxu0 0.0
  %1767 = vmatpush1.msra.mxu0 0.0
  %1768 = vmatprep.subr.mxu0 0.0
  %1769 = vmatpush1.msra.mxu0 0.0
  %1770 = vmatprep.subr.mxu0 0.0
  %1771 = vmatpush1.msra.mxu0 0.0
  %1772 = vmatprep.subr.mxu0 0.0
  %1773 = vmatpush1.msra.mxu0 0.0
  %1774 = vmatprep.subr.mxu0 0.0
  %1775 = vmatpush1.msra.mxu0 0.0
  %1776 = vmatprep.subr.mxu0 0.0
  %1777 = vmatpush1.msra.mxu0 0.0
  %1778 = vmatprep.subr.mxu0 0.0
  %1779 = vmatpush1.msra.mxu0 0.0
  %1780 = vmatprep.subr.mxu0 0.0
  %1781 = vmatpush1.msra.mxu0 0.0
  %1782 = vmatprep.subr.mxu0 0.0
  %1783 = vmatpush1.msra.mxu0 0.0
  %1784 = vmatprep.subr.mxu0 0.0
  %1785 = vmatpush1.msra.mxu0 0.0
  %1786 = vmatprep.subr.mxu0 0.0
  %1787 = vmatpush1.msra.mxu0 0.0
  %1788 = vmatprep.subr.mxu0 0.0
  %1789 = vmatpush1.msra.mxu0 0.0
  %1790 = vmatprep.subr.mxu0 0.0
  %1791 = vmatpush1.msra.mxu0 0.0
  %1792 = vmatprep.subr.mxu0 0.0
  %1793 = vmatpush1.msra.mxu0 0.0
  %1794 = vmatprep.subr.mxu0 0.0
  %1795 = vmatpush1.msra.mxu0 0.0
  %1796 = vmatprep.subr.mxu0 0.0
  %1797 = vmatpush1.msra.mxu0 0.0
  %1798 = vmatprep.subr.mxu0 0.0
  %1799 = vmatpush1.msra.mxu0 0.0
  %1800 = vmatprep.subr.mxu0 0.0
  %1801 = vmatpush1.msra.mxu0 0.0
  %1802 = vmatprep.subr.mxu0 0.0
  %1803 = vmatpush1.msra.mxu0 0.0
  %1804 = vmatprep.subr.mxu0 0.0
  %1805 = vmatpush1.msra.mxu0 0.0
  %1806 = vmatprep.subr.mxu0 0.0
  %1807 = vmatpush1.msra.mxu0 0.0
  %1808 = vmatprep.subr.mxu0 0.0
  %1809 = vmatpush1.msra.mxu0 0.0
  %1810 = vmatprep.subr.mxu0 0.0
  %1811 = vmatpush1.msra.mxu0 0.0
  %1812 = vmatprep.subr.mxu0 0.0
  %1813 = vmatpush1.msra.mxu0 0.0
  %1814 = vmatprep.subr.mxu0 0.0
  %1815 = vmatpush1.msra.mxu0 0.0
  %1816 = vmatprep.subr.mxu0 0.0
  %1817 = vmatpush1.msra.mxu0 0.0
  %1818 = vmatprep.subr.mxu0 0.0
  %1819 = vmatpush1.msra.mxu0 0.0
  %1820 = vmatprep.subr.mxu0 0.0
  %1821 = vmatpush1.msra.mxu0 0.0
  %1822 = vmatprep.mubr.f32.mxu0 0.0
  %1823 = vmatmul.mubr.f32.gmra.mrb[0].mxu0 %v1756
  %v1824 = vpop.f32.mrb[0].mxu0
  %v1825 = vadd.f32 0.0, %v1824
  %v1826 = vpop.f32.mrb[0].mxu0
  %1827 = vdwg.mxu0
  %v1829 = vsel %vm1099, %v1533, 0
  %1831 = vmatprep.subr.mxu0 0.0
  %1832 = vmatpush1.msra.mxu0 %v179
  %1833 = vmatprep.subr.mxu0 0.0
  %1834 = vmatpush1.msra.mxu0 0.0
  %1835 = vmatprep.subr.mxu0 0.0
  %1836 = vmatpush1.msra.mxu0 0.0
  %1837 = vmatprep.subr.mxu0 0.0
  %1838 = vmatpush1.msra.mxu0 0.0
  %1839 = vmatprep.subr.mxu0 0.0
  %1840 = vmatpush1.msra.mxu0 0.0
  %1841 = vmatprep.subr.mxu0 0.0
  %1842 = vmatpush1.msra.mxu0 0.0
  %1843 = vmatprep.subr.mxu0 0.0
  %1844 = vmatpush1.msra.mxu0 0.0
  %1845 = vmatprep.subr.mxu0 0.0
  %1846 = vmatpush1.msra.mxu0 0.0
  %1847 = vmatprep.subr.mxu0 0.0
  %1848 = vmatpush1.msra.mxu0 0.0
  %1849 = vmatprep.subr.mxu0 0.0
  %1850 = vmatpush1.msra.mxu0 0.0
  %1851 = vmatprep.subr.mxu0 0.0
  %1852 = vmatpush1.msra.mxu0 0.0
  %1853 = vmatprep.subr.mxu0 0.0
  %1854 = vmatpush1.msra.mxu0 0.0
  %1855 = vmatprep.subr.mxu0 0.0
  %1856 = vmatpush1.msra.mxu0 0.0
  %1857 = vmatprep.subr.mxu0 0.0
  %1858 = vmatpush1.msra.mxu0 0.0
  %1859 = vmatprep.subr.mxu0 0.0
  %1860 = vmatpush1.msra.mxu0 0.0
  %1861 = vmatprep.subr.mxu0 0.0
  %1862 = vmatpush1.msra.mxu0 0.0
  %1863 = vmatprep.subr.mxu0 0.0
  %1864 = vmatpush1.msra.mxu0 0.0
  %1865 = vmatprep.subr.mxu0 0.0
  %1866 = vmatpush1.msra.mxu0 0.0
  %1867 = vmatprep.subr.mxu0 0.0
  %1868 = vmatpush1.msra.mxu0 0.0
  %1869 = vmatprep.subr.mxu0 0.0
  %1870 = vmatpush1.msra.mxu0 0.0
  %1871 = vmatprep.subr.mxu0 0.0
  %1872 = vmatpush1.msra.mxu0 0.0
  %1873 = vmatprep.subr.mxu0 0.0
  %1874 = vmatpush1.msra.mxu0 0.0
  %1875 = vmatprep.subr.mxu0 0.0
  %1876 = vmatpush1.msra.mxu0 0.0
  %1877 = vmatprep.subr.mxu0 0.0
  %1878 = vmatpush1.msra.mxu0 0.0
  %1879 = vmatprep.subr.mxu0 0.0
  %1880 = vmatpush1.msra.mxu0 0.0
  %1881 = vmatprep.subr.mxu0 0.0
  %1882 = vmatpush1.msra.mxu0 0.0
  %1883 = vmatprep.subr.mxu0 0.0
  %1884 = vmatpush1.msra.mxu0 0.0
  %1885 = vmatprep.subr.mxu0 0.0
  %1886 = vmatpush1.msra.mxu0 0.0
  %1887 = vmatprep.subr.mxu0 0.0
  %1888 = vmatpush1.msra.mxu0 0.0
  %1889 = vmatprep.subr.mxu0 0.0
  %1890 = vmatpush1.msra.mxu0 0.0
  %1891 = vmatprep.subr.mxu0 0.0
  %1892 = vmatpush1.msra.mxu0 0.0
  %1893 = vmatprep.subr.mxu0 0.0
  %1894 = vmatpush1.msra.mxu0 0.0
  %1895 = vmatprep.mubr.f32.mxu0 0.0
  %1896 = vmatmul.mubr.f32.gmra.mrb[0].mxu0 %v1829
  %v1897 = vpop.f32.mrb[0].mxu0
  %v1898 = vadd.f32 %v1825, %v1897
  %v1899 = vpop.f32.mrb[0].mxu0
  %1900 = vdwg.mxu0
  %v1902 = vsel %vm1099, %v1679, 0
  %1904 = vmatprep.subr.mxu0 0.0
  %1905 = vmatpush1.msra.mxu0 %v181
  %1906 = vmatprep.subr.mxu0 0.0
  %1907 = vmatpush1.msra.mxu0 0.0
  %1908 = vmatprep.subr.mxu0 0.0
  %1909 = vmatpush1.msra.mxu0 0.0
  %1910 = vmatprep.subr.mxu0 0.0
  %1911 = vmatpush1.msra.mxu0 0.0
  %1912 = vmatprep.subr.mxu0 0.0
  %1913 = vmatpush1.msra.mxu0 0.0
  %1914 = vmatprep.subr.mxu0 0.0
  %1915 = vmatpush1.msra.mxu0 0.0
  %1916 = vmatprep.subr.mxu0 0.0
  %1917 = vmatpush1.msra.mxu0 0.0
  %1918 = vmatprep.subr.mxu0 0.0
  %1919 = vmatpush1.msra.mxu0 0.0
  %1920 = vmatprep.subr.mxu0 0.0
  %1921 = vmatpush1.msra.mxu0 0.0
  %1922 = vmatprep.subr.mxu0 0.0
  %1923 = vmatpush1.msra.mxu0 0.0
  %1924 = vmatprep.subr.mxu0 0.0
  %1925 = vmatpush1.msra.mxu0 0.0
  %1926 = vmatprep.subr.mxu0 0.0
  %1927 = vmatpush1.msra.mxu0 0.0
  %1928 = vmatprep.subr.mxu0 0.0
  %1929 = vmatpush1.msra.mxu0 0.0
  %1930 = vmatprep.subr.mxu0 0.0
  %1931 = vmatpush1.msra.mxu0 0.0
  %1932 = vmatprep.subr.mxu0 0.0
  %1933 = vmatpush1.msra.mxu0 0.0
  %1934 = vmatprep.subr.mxu0 0.0
  %1935 = vmatpush1.msra.mxu0 0.0
  %1936 = vmatprep.subr.mxu0 0.0
  %1937 = vmatpush1.msra.mxu0 0.0
  %1938 = vmatprep.subr.mxu0 0.0
  %1939 = vmatpush1.msra.mxu0 0.0
  %1940 = vmatprep.subr.mxu0 0.0
  %1941 = vmatpush1.msra.mxu0 0.0
  %1942 = vmatprep.subr.mxu0 0.0
  %1943 = vmatpush1.msra.mxu0 0.0
  %1944 = vmatprep.subr.mxu0 0.0
  %1945 = vmatpush1.msra.mxu0 0.0
  %1946 = vmatprep.subr.mxu0 0.0
  %1947 = vmatpush1.msra.mxu0 0.0
  %1948 = vmatprep.subr.mxu0 0.0
  %1949 = vmatpush1.msra.mxu0 0.0
  %1950 = vmatprep.subr.mxu0 0.0
  %1951 = vmatpush1.msra.mxu0 0.0
  %1952 = vmatprep.subr.mxu0 0.0
  %1953 = vmatpush1.msra.mxu0 0.0
  %1954 = vmatprep.subr.mxu0 0.0
  %1955 = vmatpush1.msra.mxu0 0.0
  %1956 = vmatprep.subr.mxu0 0.0
  %1957 = vmatpush1.msra.mxu0 0.0
  %1958 = vmatprep.subr.mxu0 0.0
  %1959 = vmatpush1.msra.mxu0 0.0
  %1960 = vmatprep.subr.mxu0 0.0
  %1961 = vmatpush1.msra.mxu0 0.0
  %1962 = vmatprep.subr.mxu0 0.0
  %1963 = vmatpush1.msra.mxu0 0.0
  %1964 = vmatprep.subr.mxu0 0.0
  %1965 = vmatpush1.msra.mxu0 0.0
  %1966 = vmatprep.subr.mxu0 0.0
  %1967 = vmatpush1.msra.mxu0 0.0
  %1968 = vmatprep.mubr.f32.mxu0 0.0
  %1969 = vmatmul.mubr.f32.gmra.mrb[0].mxu0 %v1902
  %v1970 = vpop.f32.mrb[0].mxu0
  %v1971 = vadd.f32 0.0, %v1970
  %v1972 = vpop.f32.mrb[0].mxu0
  %1973 = vdwg.mxu0
  %v1974 = vadd.f32 %v1898, %v1971
  %v1976 = vsel %vm1099, %v1752, 0
  %1978 = vmatprep.subr.mxu0 0.0
  %1979 = vmatpush1.msra.mxu0 %v182
  %1980 = vmatprep.subr.mxu0 0.0
  %1981 = vmatpush1.msra.mxu0 0.0
  %1982 = vmatprep.subr.mxu0 0.0
  %1983 = vmatpush1.msra.mxu0 0.0
  %1984 = vmatprep.subr.mxu0 0.0
  %1985 = vmatpush1.msra.mxu0 0.0
  %1986 = vmatprep.subr.mxu0 0.0
  %1987 = vmatpush1.msra.mxu0 0.0
  %1988 = vmatprep.subr.mxu0 0.0
  %1989 = vmatpush1.msra.mxu0 0.0
  %1990 = vmatprep.subr.mxu0 0.0
  %1991 = vmatpush1.msra.mxu0 0.0
  %1992 = vmatprep.subr.mxu0 0.0
  %1993 = vmatpush1.msra.mxu0 0.0
  %1994 = vmatprep.subr.mxu0 0.0
  %1995 = vmatpush1.msra.mxu0 0.0
  %1996 = vmatprep.subr.mxu0 0.0
  %1997 = vmatpush1.msra.mxu0 0.0
  %1998 = vmatprep.subr.mxu0 0.0
  %1999 = vmatpush1.msra.mxu0 0.0
  %2000 = vmatprep.subr.mxu0 0.0
  %2001 = vmatpush1.msra.mxu0 0.0
  %2002 = vmatprep.subr.mxu0 0.0
  %2003 = vmatpush1.msra.mxu0 0.0
  %2004 = vmatprep.subr.mxu0 0.0
  %2005 = vmatpush1.msra.mxu0 0.0
  %2006 = vmatprep.subr.mxu0 0.0
  %2007 = vmatpush1.msra.mxu0 0.0
  %2008 = vmatprep.subr.mxu0 0.0
  %2009 = vmatpush1.msra.mxu0 0.0
  %2010 = vmatprep.subr.mxu0 0.0
  %2011 = vmatpush1.msra.mxu0 0.0
  %2012 = vmatprep.subr.mxu0 0.0
  %2013 = vmatpush1.msra.mxu0 0.0
  %2014 = vmatprep.subr.mxu0 0.0
  %2015 = vmatpush1.msra.mxu0 0.0
  %2016 = vmatprep.subr.mxu0 0.0
  %2017 = vmatpush1.msra.mxu0 0.0
  %2018 = vmatprep.subr.mxu0 0.0
  %2019 = vmatpush1.msra.mxu0 0.0
  %2020 = vmatprep.subr.mxu0 0.0
  %2021 = vmatpush1.msra.mxu0 0.0
  %2022 = vmatprep.subr.mxu0 0.0
  %2023 = vmatpush1.msra.mxu0 0.0
  %2024 = vmatprep.subr.mxu0 0.0
  %2025 = vmatpush1.msra.mxu0 0.0
  %2026 = vmatprep.subr.mxu0 0.0
  %2027 = vmatpush1.msra.mxu0 0.0
  %2028 = vmatprep.subr.mxu0 0.0
  %2029 = vmatpush1.msra.mxu0 0.0
  %2030 = vmatprep.subr.mxu0 0.0
  %2031 = vmatpush1.msra.mxu0 0.0
  %2032 = vmatprep.subr.mxu0 0.0
  %2033 = vmatpush1.msra.mxu0 0.0
  %2034 = vmatprep.subr.mxu0 0.0
  %2035 = vmatpush1.msra.mxu0 0.0
  %2036 = vmatprep.subr.mxu0 0.0
  %2037 = vmatpush1.msra.mxu0 0.0
  %2038 = vmatprep.subr.mxu0 0.0
  %2039 = vmatpush1.msra.mxu0 0.0
  %2040 = vmatprep.subr.mxu0 0.0
  %2041 = vmatpush1.msra.mxu0 0.0
  %2042 = vmatprep.mubr.f32.mxu0 0.0
  %2043 = vmatmul.mubr.f32.gmra.mrb[0].mxu0 %v1976
  %v2044 = vpop.f32.mrb[0].mxu0
  %v2045 = vadd.f32 0.0, %v2044
  %v2046 = vpop.f32.mrb[0].mxu0
  %2047 = vdwg.mxu0
  %v2048 = vadd.f32 %v1974, %v2045
  %v2050 = vlaneseq
  %v2051 = vshrl.u32 %v2050, 7
  %v2052 = vsub.s32 0, %v2051
  %v2053 = vrot.slane %v183, %v2052
  %v2055 = vadd.f32 %v2048, %v2053
  %2056 = vst.msk [vmem:[#allocation2] sm:$0xff] %vm75, %v2055
  %v2058 = vsel %vm75, %v118, 0
  %2060 = vmatprep.subr.mxu0 0.0
  %2061 = vmatpush1.msra.mxu0 %v119
  %2062 = vmatprep.subr.mxu0 0.0
  %2063 = vmatpush1.msra.mxu0 %v120
  %2064 = vmatprep.subr.mxu0 0.0
  %2065 = vmatpush1.msra.mxu0 %v121
  %2066 = vmatprep.subr.mxu0 0.0
  %2067 = vmatpush1.msra.mxu0 %v122
  %2068 = vmatprep.subr.mxu0 0.0
  %2069 = vmatpush1.msra.mxu0 0.0
  %2070 = vmatprep.subr.mxu0 0.0
  %2071 = vmatpush1.msra.mxu0 0.0
  %2072 = vmatprep.subr.mxu0 0.0
  %2073 = vmatpush1.msra.mxu0 0.0
  %2074 = vmatprep.subr.mxu0 0.0
  %2075 = vmatpush1.msra.mxu0 0.0
  %2076 = vmatprep.subr.mxu0 0.0
  %2077 = vmatpush1.msra.mxu0 0.0
  %2078 = vmatprep.subr.mxu0 0.0
  %2079 = vmatpush1.msra.mxu0 0.0
  %2080 = vmatprep.subr.mxu0 0.0
  %2081 = vmatpush1.msra.mxu0 0.0
  %2082 = vmatprep.subr.mxu0 0.0
  %2083 = vmatpush1.msra.mxu0 0.0
  %2084 = vmatprep.subr.mxu0 0.0
  %2085 = vmatpush1.msra.mxu0 0.0
  %2086 = vmatprep.subr.mxu0 0.0
  %2087 = vmatpush1.msra.mxu0 0.0
  %2088 = vmatprep.subr.mxu0 0.0
  %2089 = vmatpush1.msra.mxu0 0.0
  %2090 = vmatprep.subr.mxu0 0.0
  %2091 = vmatpush1.msra.mxu0 0.0
  %2092 = vmatprep.subr.mxu0 0.0
  %2093 = vmatpush1.msra.mxu0 0.0
  %2094 = vmatprep.subr.mxu0 0.0
  %2095 = vmatpush1.msra.mxu0 0.0
  %2096 = vmatprep.subr.mxu0 0.0
  %2097 = vmatpush1.msra.mxu0 0.0
  %2098 = vmatprep.subr.mxu0 0.0
  %2099 = vmatpush1.msra.mxu0 0.0
  %2100 = vmatprep.subr.mxu0 0.0
  %2101 = vmatpush1.msra.mxu0 0.0
  %2102 = vmatprep.subr.mxu0 0.0
  %2103 = vmatpush1.msra.mxu0 0.0
  %2104 = vmatprep.subr.mxu0 0.0
  %2105 = vmatpush1.msra.mxu0 0.0
  %2106 = vmatprep.subr.mxu0 0.0
  %2107 = vmatpush1.msra.mxu0 0.0
  %2108 = vmatprep.subr.mxu0 0.0
  %2109 = vmatpush1.msra.mxu0 0.0
  %2110 = vmatprep.subr.mxu0 0.0
  %2111 = vmatpush1.msra.mxu0 0.0
  %2112 = vmatprep.subr.mxu0 0.0
  %2113 = vmatpush1.msra.mxu0 0.0
  %2114 = vmatprep.subr.mxu0 0.0
  %2115 = vmatpush1.msra.mxu0 0.0
  %2116 = vmatprep.subr.mxu0 0.0
  %2117 = vmatpush1.msra.mxu0 0.0
  %2118 = vmatprep.subr.mxu0 0.0
  %2119 = vmatpush1.msra.mxu0 0.0
  %2120 = vmatprep.subr.mxu0 0.0
  %2121 = vmatpush1.msra.mxu0 0.0
  %2122 = vmatprep.subr.mxu0 0.0
  %2123 = vmatpush1.msra.mxu0 0.0
  %2124 = vmatprep.mubr.f32.mxu0 0.0
  %2125 = vmatmul.mubr.f32.gmra.mrb[0].mxu0 %v2058
  %v2126 = vpop.f32.mrb[0].mxu0
  %v2127 = vadd.f32 %v191, %v2126
  %v2128 = vpop.f32.mrb[0].mxu0
  %2129 = vdwg.mxu0
  %2130 = vmatprep.subr.mxu0 0.0
  %2131 = vmatpush1.msra.mxu0 %v123
  %2132 = vmatprep.subr.mxu0 0.0
  %2133 = vmatpush1.msra.mxu0 %v124
  %2134 = vmatprep.subr.mxu0 0.0
  %2135 = vmatpush1.msra.mxu0 %v125
  %2136 = vmatprep.subr.mxu0 0.0
  %2137 = vmatpush1.msra.mxu0 %v126
  %2138 = vmatprep.subr.mxu0 0.0
  %2139 = vmatpush1.msra.mxu0 0.0
  %2140 = vmatprep.subr.mxu0 0.0
  %2141 = vmatpush1.msra.mxu0 0.0
  %2142 = vmatprep.subr.mxu0 0.0
  %2143 = vmatpush1.msra.mxu0 0.0
  %2144 = vmatprep.subr.mxu0 0.0
  %2145 = vmatpush1.msra.mxu0 0.0
  %2146 = vmatprep.subr.mxu0 0.0
  %2147 = vmatpush1.msra.mxu0 0.0
  %2148 = vmatprep.subr.mxu0 0.0
  %2149 = vmatpush1.msra.mxu0 0.0
  %2150 = vmatprep.subr.mxu0 0.0
  %2151 = vmatpush1.msra.mxu0 0.0
  %2152 = vmatprep.subr.mxu0 0.0
  %2153 = vmatpush1.msra.mxu0 0.0
  %2154 = vmatprep.subr.mxu0 0.0
  %2155 = vmatpush1.msra.mxu0 0.0
  %2156 = vmatprep.subr.mxu0 0.0
  %2157 = vmatpush1.msra.mxu0 0.0
  %2158 = vmatprep.subr.mxu0 0.0
  %2159 = vmatpush1.msra.mxu0 0.0
  %2160 = vmatprep.subr.mxu0 0.0
  %2161 = vmatpush1.msra.mxu0 0.0
  %2162 = vmatprep.subr.mxu0 0.0
  %2163 = vmatpush1.msra.mxu0 0.0
  %2164 = vmatprep.subr.mxu0 0.0
  %2165 = vmatpush1.msra.mxu0 0.0
  %2166 = vmatprep.subr.mxu0 0.0
  %2167 = vmatpush1.msra.mxu0 0.0
  %2168 = vmatprep.subr.mxu0 0.0
  %2169 = vmatpush1.msra.mxu0 0.0
  %2170 = vmatprep.subr.mxu0 0.0
  %2171 = vmatpush1.msra.mxu0 0.0
  %2172 = vmatprep.subr.mxu0 0.0
  %2173 = vmatpush1.msra.mxu0 0.0
  %2174 = vmatprep.subr.mxu0 0.0
  %2175 = vmatpush1.msra.mxu0 0.0
  %2176 = vmatprep.subr.mxu0 0.0
  %2177 = vmatpush1.msra.mxu0 0.0
  %2178 = vmatprep.subr.mxu0 0.0
  %2179 = vmatpush1.msra.mxu0 0.0
  %2180 = vmatprep.subr.mxu0 0.0
  %2181 = vmatpush1.msra.mxu0 0.0
  %2182 = vmatprep.subr.mxu0 0.0
  %2183 = vmatpush1.msra.mxu0 0.0
  %2184 = vmatprep.subr.mxu0 0.0
  %2185 = vmatpush1.msra.mxu0 0.0
  %2186 = vmatprep.subr.mxu0 0.0
  %2187 = vmatpush1.msra.mxu0 0.0
  %2188 = vmatprep.subr.mxu0 0.0
  %2189 = vmatpush1.msra.mxu0 0.0
  %2190 = vmatprep.subr.mxu0 0.0
  %2191 = vmatpush1.msra.mxu0 0.0
  %2192 = vmatprep.subr.mxu0 0.0
  %2193 = vmatpush1.msra.mxu0 0.0
  %2194 = vmatprep.mubr.f32.mxu0 0.0
  %2195 = vmatmul.mubr.f32.gmra.mrb[0].mxu0 %v2058
  %v2196 = vpop.f32.mrb[0].mxu0
  %v2197 = vadd.f32 %v195, %v2196
  %v2198 = vpop.f32.mrb[0].mxu0
  %2199 = vdwg.mxu0
  %2200 = vmatprep.subr.mxu0 0.0
  %2201 = vmatpush1.msra.mxu0 %v127
  %2202 = vmatprep.subr.mxu0 0.0
  %2203 = vmatpush1.msra.mxu0 %v128
  %2204 = vmatprep.subr.mxu0 0.0
  %2205 = vmatpush1.msra.mxu0 %v129
  %2206 = vmatprep.subr.mxu0 0.0
  %2207 = vmatpush1.msra.mxu0 %v130
  %2208 = vmatprep.subr.mxu0 0.0
  %2209 = vmatpush1.msra.mxu0 0.0
  %2210 = vmatprep.subr.mxu0 0.0
  %2211 = vmatpush1.msra.mxu0 0.0
  %2212 = vmatprep.subr.mxu0 0.0
  %2213 = vmatpush1.msra.mxu0 0.0
  %2214 = vmatprep.subr.mxu0 0.0
  %2215 = vmatpush1.msra.mxu0 0.0
  %2216 = vmatprep.subr.mxu0 0.0
  %2217 = vmatpush1.msra.mxu0 0.0
  %2218 = vmatprep.subr.mxu0 0.0
  %2219 = vmatpush1.msra.mxu0 0.0
  %2220 = vmatprep.subr.mxu0 0.0
  %2221 = vmatpush1.msra.mxu0 0.0
  %2222 = vmatprep.subr.mxu0 0.0
  %2223 = vmatpush1.msra.mxu0 0.0
  %2224 = vmatprep.subr.mxu0 0.0
  %2225 = vmatpush1.msra.mxu0 0.0
  %2226 = vmatprep.subr.mxu0 0.0
  %2227 = vmatpush1.msra.mxu0 0.0
  %2228 = vmatprep.subr.mxu0 0.0
  %2229 = vmatpush1.msra.mxu0 0.0
  %2230 = vmatprep.subr.mxu0 0.0
  %2231 = vmatpush1.msra.mxu0 0.0
  %2232 = vmatprep.subr.mxu0 0.0
  %2233 = vmatpush1.msra.mxu0 0.0
  %2234 = vmatprep.subr.mxu0 0.0
  %2235 = vmatpush1.msra.mxu0 0.0
  %2236 = vmatprep.subr.mxu0 0.0
  %2237 = vmatpush1.msra.mxu0 0.0
  %2238 = vmatprep.subr.mxu0 0.0
  %2239 = vmatpush1.msra.mxu0 0.0
  %2240 = vmatprep.subr.mxu0 0.0
  %2241 = vmatpush1.msra.mxu0 0.0
  %2242 = vmatprep.subr.mxu0 0.0
  %2243 = vmatpush1.msra.mxu0 0.0
  %2244 = vmatprep.subr.mxu0 0.0
  %2245 = vmatpush1.msra.mxu0 0.0
  %2246 = vmatprep.subr.mxu0 0.0
  %2247 = vmatpush1.msra.mxu0 0.0
  %2248 = vmatprep.subr.mxu0 0.0
  %2249 = vmatpush1.msra.mxu0 0.0
  %2250 = vmatprep.subr.mxu0 0.0
  %2251 = vmatpush1.msra.mxu0 0.0
  %2252 = vmatprep.subr.mxu0 0.0
  %2253 = vmatpush1.msra.mxu0 0.0
  %2254 = vmatprep.subr.mxu0 0.0
  %2255 = vmatpush1.msra.mxu0 0.0
  %2256 = vmatprep.subr.mxu0 0.0
  %2257 = vmatpush1.msra.mxu0 0.0
  %2258 = vmatprep.subr.mxu0 0.0
  %2259 = vmatpush1.msra.mxu0 0.0
  %2260 = vmatprep.subr.mxu0 0.0
  %2261 = vmatpush1.msra.mxu0 0.0
  %2262 = vmatprep.subr.mxu0 0.0
  %2263 = vmatpush1.msra.mxu0 0.0
  %2264 = vmatprep.mubr.f32.mxu0 0.0
  %2265 = vmatmul.mubr.f32.gmra.mrb[0].mxu0 %v2058
  %v2266 = vpop.f32.mrb[0].mxu0
  %v2267 = vadd.f32 %v199, %v2266
  %v2268 = vpop.f32.mrb[0].mxu0
  %2269 = vdwg.mxu0
  %2270 = vmatprep.subr.mxu0 0.0
  %2271 = vmatpush1.msra.mxu0 %v131
  %2272 = vmatprep.subr.mxu0 0.0
  %2273 = vmatpush1.msra.mxu0 %v132
  %2274 = vmatprep.subr.mxu0 0.0
  %2275 = vmatpush1.msra.mxu0 %v133
  %2276 = vmatprep.subr.mxu0 0.0
  %2277 = vmatpush1.msra.mxu0 %v134
  %2278 = vmatprep.subr.mxu0 0.0
  %2279 = vmatpush1.msra.mxu0 0.0
  %2280 = vmatprep.subr.mxu0 0.0
  %2281 = vmatpush1.msra.mxu0 0.0
  %2282 = vmatprep.subr.mxu0 0.0
  %2283 = vmatpush1.msra.mxu0 0.0
  %2284 = vmatprep.subr.mxu0 0.0
  %2285 = vmatpush1.msra.mxu0 0.0
  %2286 = vmatprep.subr.mxu0 0.0
  %2287 = vmatpush1.msra.mxu0 0.0
  %2288 = vmatprep.subr.mxu0 0.0
  %2289 = vmatpush1.msra.mxu0 0.0
  %2290 = vmatprep.subr.mxu0 0.0
  %2291 = vmatpush1.msra.mxu0 0.0
  %2292 = vmatprep.subr.mxu0 0.0
  %2293 = vmatpush1.msra.mxu0 0.0
  %2294 = vmatprep.subr.mxu0 0.0
  %2295 = vmatpush1.msra.mxu0 0.0
  %2296 = vmatprep.subr.mxu0 0.0
  %2297 = vmatpush1.msra.mxu0 0.0
  %2298 = vmatprep.subr.mxu0 0.0
  %2299 = vmatpush1.msra.mxu0 0.0
  %2300 = vmatprep.subr.mxu0 0.0
  %2301 = vmatpush1.msra.mxu0 0.0
  %2302 = vmatprep.subr.mxu0 0.0
  %2303 = vmatpush1.msra.mxu0 0.0
  %2304 = vmatprep.subr.mxu0 0.0
  %2305 = vmatpush1.msra.mxu0 0.0
  %2306 = vmatprep.subr.mxu0 0.0
  %2307 = vmatpush1.msra.mxu0 0.0
  %2308 = vmatprep.subr.mxu0 0.0
  %2309 = vmatpush1.msra.mxu0 0.0
  %2310 = vmatprep.subr.mxu0 0.0
  %2311 = vmatpush1.msra.mxu0 0.0
  %2312 = vmatprep.subr.mxu0 0.0
  %2313 = vmatpush1.msra.mxu0 0.0
  %2314 = vmatprep.subr.mxu0 0.0
  %2315 = vmatpush1.msra.mxu0 0.0
  %2316 = vmatprep.subr.mxu0 0.0
  %2317 = vmatpush1.msra.mxu0 0.0
  %2318 = vmatprep.subr.mxu0 0.0
  %2319 = vmatpush1.msra.mxu0 0.0
  %2320 = vmatprep.subr.mxu0 0.0
  %2321 = vmatpush1.msra.mxu0 0.0
  %2322 = vmatprep.subr.mxu0 0.0
  %2323 = vmatpush1.msra.mxu0 0.0
  %2324 = vmatprep.subr.mxu0 0.0
  %2325 = vmatpush1.msra.mxu0 0.0
  %2326 = vmatprep.subr.mxu0 0.0
  %2327 = vmatpush1.msra.mxu0 0.0
  %2328 = vmatprep.subr.mxu0 0.0
  %2329 = vmatpush1.msra.mxu0 0.0
  %2330 = vmatprep.subr.mxu0 0.0
  %2331 = vmatpush1.msra.mxu0 0.0
  %2332 = vmatprep.subr.mxu0 0.0
  %2333 = vmatpush1.msra.mxu0 0.0
  %2334 = vmatprep.mubr.f32.mxu0 0.0
  %2335 = vmatmul.mubr.f32.gmra.mrb[0].mxu0 %v2058
  %v2336 = vpop.f32.mrb[0].mxu0
  %v2337 = vadd.f32 %v203, %v2336
  %v2338 = vpop.f32.mrb[0].mxu0
  %2339 = vdwg.mxu0
  %2340 = vmatprep.subr.mxu0 0.0
  %2341 = vmatpush1.msra.mxu0 %v135
  %2342 = vmatprep.subr.mxu0 0.0
  %2343 = vmatpush1.msra.mxu0 %v136
  %2344 = vmatprep.subr.mxu0 0.0
  %2345 = vmatpush1.msra.mxu0 %v137
  %2346 = vmatprep.subr.mxu0 0.0
  %2347 = vmatpush1.msra.mxu0 %v138
  %2348 = vmatprep.subr.mxu0 0.0
  %2349 = vmatpush1.msra.mxu0 0.0
  %2350 = vmatprep.subr.mxu0 0.0
  %2351 = vmatpush1.msra.mxu0 0.0
  %2352 = vmatprep.subr.mxu0 0.0
  %2353 = vmatpush1.msra.mxu0 0.0
  %2354 = vmatprep.subr.mxu0 0.0
  %2355 = vmatpush1.msra.mxu0 0.0
  %2356 = vmatprep.subr.mxu0 0.0
  %2357 = vmatpush1.msra.mxu0 0.0
  %2358 = vmatprep.subr.mxu0 0.0
  %2359 = vmatpush1.msra.mxu0 0.0
  %2360 = vmatprep.subr.mxu0 0.0
  %2361 = vmatpush1.msra.mxu0 0.0
  %2362 = vmatprep.subr.mxu0 0.0
  %2363 = vmatpush1.msra.mxu0 0.0
  %2364 = vmatprep.subr.mxu0 0.0
  %2365 = vmatpush1.msra.mxu0 0.0
  %2366 = vmatprep.subr.mxu0 0.0
  %2367 = vmatpush1.msra.mxu0 0.0
  %2368 = vmatprep.subr.mxu0 0.0
  %2369 = vmatpush1.msra.mxu0 0.0
  %2370 = vmatprep.subr.mxu0 0.0
  %2371 = vmatpush1.msra.mxu0 0.0
  %2372 = vmatprep.subr.mxu0 0.0
  %2373 = vmatpush1.msra.mxu0 0.0
  %2374 = vmatprep.subr.mxu0 0.0
  %2375 = vmatpush1.msra.mxu0 0.0
  %2376 = vmatprep.subr.mxu0 0.0
  %2377 = vmatpush1.msra.mxu0 0.0
  %2378 = vmatprep.subr.mxu0 0.0
  %2379 = vmatpush1.msra.mxu0 0.0
  %2380 = vmatprep.subr.mxu0 0.0
  %2381 = vmatpush1.msra.mxu0 0.0
  %2382 = vmatprep.subr.mxu0 0.0
  %2383 = vmatpush1.msra.mxu0 0.0
  %2384 = vmatprep.subr.mxu0 0.0
  %2385 = vmatpush1.msra.mxu0 0.0
  %2386 = vmatprep.subr.mxu0 0.0
  %2387 = vmatpush1.msra.mxu0 0.0
  %2388 = vmatprep.subr.mxu0 0.0
  %2389 = vmatpush1.msra.mxu0 0.0
  %2390 = vmatprep.subr.mxu0 0.0
  %2391 = vmatpush1.msra.mxu0 0.0
  %2392 = vmatprep.subr.mxu0 0.0
  %2393 = vmatpush1.msra.mxu0 0.0
  %2394 = vmatprep.subr.mxu0 0.0
  %2395 = vmatpush1.msra.mxu0 0.0
  %2396 = vmatprep.subr.mxu0 0.0
  %2397 = vmatpush1.msra.mxu0 0.0
  %2398 = vmatprep.subr.mxu0 0.0
  %2399 = vmatpush1.msra.mxu0 0.0
  %2400 = vmatprep.subr.mxu0 0.0
  %2401 = vmatpush1.msra.mxu0 0.0
  %2402 = vmatprep.subr.mxu0 0.0
  %2403 = vmatpush1.msra.mxu0 0.0
  %2404 = vmatprep.mubr.f32.mxu0 0.0
  %2405 = vmatmul.mubr.f32.gmra.mrb[0].mxu0 %v2058
  %v2406 = vpop.f32.mrb[0].mxu0
  %v2407 = vadd.f32 %v498, %v2406
  %v2408 = vpop.f32.mrb[0].mxu0
  %2409 = vdwg.mxu0
  %2410 = vmatprep.subr.mxu0 0.0
  %2411 = vmatpush1.msra.mxu0 %v139
  %2412 = vmatprep.subr.mxu0 0.0
  %2413 = vmatpush1.msra.mxu0 %v140
  %2414 = vmatprep.subr.mxu0 0.0
  %2415 = vmatpush1.msra.mxu0 %v141
  %2416 = vmatprep.subr.mxu0 0.0
  %2417 = vmatpush1.msra.mxu0 %v142
  %2418 = vmatprep.subr.mxu0 0.0
  %2419 = vmatpush1.msra.mxu0 0.0
  %2420 = vmatprep.subr.mxu0 0.0
  %2421 = vmatpush1.msra.mxu0 0.0
  %2422 = vmatprep.subr.mxu0 0.0
  %2423 = vmatpush1.msra.mxu0 0.0
  %2424 = vmatprep.subr.mxu0 0.0
  %2425 = vmatpush1.msra.mxu0 0.0
  %2426 = vmatprep.subr.mxu0 0.0
  %2427 = vmatpush1.msra.mxu0 0.0
  %2428 = vmatprep.subr.mxu0 0.0
  %2429 = vmatpush1.msra.mxu0 0.0
  %2430 = vmatprep.subr.mxu0 0.0
  %2431 = vmatpush1.msra.mxu0 0.0
  %2432 = vmatprep.subr.mxu0 0.0
  %2433 = vmatpush1.msra.mxu0 0.0
  %2434 = vmatprep.subr.mxu0 0.0
  %2435 = vmatpush1.msra.mxu0 0.0
  %2436 = vmatprep.subr.mxu0 0.0
  %2437 = vmatpush1.msra.mxu0 0.0
  %2438 = vmatprep.subr.mxu0 0.0
  %2439 = vmatpush1.msra.mxu0 0.0
  %2440 = vmatprep.subr.mxu0 0.0
  %2441 = vmatpush1.msra.mxu0 0.0
  %2442 = vmatprep.subr.mxu0 0.0
  %2443 = vmatpush1.msra.mxu0 0.0
  %2444 = vmatprep.subr.mxu0 0.0
  %2445 = vmatpush1.msra.mxu0 0.0
  %2446 = vmatprep.subr.mxu0 0.0
  %2447 = vmatpush1.msra.mxu0 0.0
  %2448 = vmatprep.subr.mxu0 0.0
  %2449 = vmatpush1.msra.mxu0 0.0
  %2450 = vmatprep.subr.mxu0 0.0
  %2451 = vmatpush1.msra.mxu0 0.0
  %2452 = vmatprep.subr.mxu0 0.0
  %2453 = vmatpush1.msra.mxu0 0.0
  %2454 = vmatprep.subr.mxu0 0.0
  %2455 = vmatpush1.msra.mxu0 0.0
  %2456 = vmatprep.subr.mxu0 0.0
  %2457 = vmatpush1.msra.mxu0 0.0
  %2458 = vmatprep.subr.mxu0 0.0
  %2459 = vmatpush1.msra.mxu0 0.0
  %2460 = vmatprep.subr.mxu0 0.0
  %2461 = vmatpush1.msra.mxu0 0.0
  %2462 = vmatprep.subr.mxu0 0.0
  %2463 = vmatpush1.msra.mxu0 0.0
  %2464 = vmatprep.subr.mxu0 0.0
  %2465 = vmatpush1.msra.mxu0 0.0
  %2466 = vmatprep.subr.mxu0 0.0
  %2467 = vmatpush1.msra.mxu0 0.0
  %2468 = vmatprep.subr.mxu0 0.0
  %2469 = vmatpush1.msra.mxu0 0.0
  %2470 = vmatprep.subr.mxu0 0.0
  %2471 = vmatpush1.msra.mxu0 0.0
  %2472 = vmatprep.subr.mxu0 0.0
  %2473 = vmatpush1.msra.mxu0 0.0
  %2474 = vmatprep.mubr.f32.mxu0 0.0
  %2475 = vmatmul.mubr.f32.gmra.mrb[0].mxu0 %v2058
  %v2476 = vpop.f32.mrb[0].mxu0
  %v2477 = vadd.f32 %v502, %v2476
  %v2478 = vpop.f32.mrb[0].mxu0
  %2479 = vdwg.mxu0
  %2480 = vmatprep.subr.mxu0 0.0
  %2481 = vmatpush1.msra.mxu0 %v143
  %2482 = vmatprep.subr.mxu0 0.0
  %2483 = vmatpush1.msra.mxu0 %v144
  %2484 = vmatprep.subr.mxu0 0.0
  %2485 = vmatpush1.msra.mxu0 %v145
  %2486 = vmatprep.subr.mxu0 0.0
  %2487 = vmatpush1.msra.mxu0 %v146
  %2488 = vmatprep.subr.mxu0 0.0
  %2489 = vmatpush1.msra.mxu0 0.0
  %2490 = vmatprep.subr.mxu0 0.0
  %2491 = vmatpush1.msra.mxu0 0.0
  %2492 = vmatprep.subr.mxu0 0.0
  %2493 = vmatpush1.msra.mxu0 0.0
  %2494 = vmatprep.subr.mxu0 0.0
  %2495 = vmatpush1.msra.mxu0 0.0
  %2496 = vmatprep.subr.mxu0 0.0
  %2497 = vmatpush1.msra.mxu0 0.0
  %2498 = vmatprep.subr.mxu0 0.0
  %2499 = vmatpush1.msra.mxu0 0.0
  %2500 = vmatprep.subr.mxu0 0.0
  %2501 = vmatpush1.msra.mxu0 0.0
  %2502 = vmatprep.subr.mxu0 0.0
  %2503 = vmatpush1.msra.mxu0 0.0
  %2504 = vmatprep.subr.mxu0 0.0
  %2505 = vmatpush1.msra.mxu0 0.0
  %2506 = vmatprep.subr.mxu0 0.0
  %2507 = vmatpush1.msra.mxu0 0.0
  %2508 = vmatprep.subr.mxu0 0.0
  %2509 = vmatpush1.msra.mxu0 0.0
  %2510 = vmatprep.subr.mxu0 0.0
  %2511 = vmatpush1.msra.mxu0 0.0
  %2512 = vmatprep.subr.mxu0 0.0
  %2513 = vmatpush1.msra.mxu0 0.0
  %2514 = vmatprep.subr.mxu0 0.0
  %2515 = vmatpush1.msra.mxu0 0.0
  %2516 = vmatprep.subr.mxu0 0.0
  %2517 = vmatpush1.msra.mxu0 0.0
  %2518 = vmatprep.subr.mxu0 0.0
  %2519 = vmatpush1.msra.mxu0 0.0
  %2520 = vmatprep.subr.mxu0 0.0
  %2521 = vmatpush1.msra.mxu0 0.0
  %2522 = vmatprep.subr.mxu0 0.0
  %2523 = vmatpush1.msra.mxu0 0.0
  %2524 = vmatprep.subr.mxu0 0.0
  %2525 = vmatpush1.msra.mxu0 0.0
  %2526 = vmatprep.subr.mxu0 0.0
  %2527 = vmatpush1.msra.mxu0 0.0
  %2528 = vmatprep.subr.mxu0 0.0
  %2529 = vmatpush1.msra.mxu0 0.0
  %2530 = vmatprep.subr.mxu0 0.0
  %2531 = vmatpush1.msra.mxu0 0.0
  %2532 = vmatprep.subr.mxu0 0.0
  %2533 = vmatpush1.msra.mxu0 0.0
  %2534 = vmatprep.subr.mxu0 0.0
  %2535 = vmatpush1.msra.mxu0 0.0
  %2536 = vmatprep.subr.mxu0 0.0
  %2537 = vmatpush1.msra.mxu0 0.0
  %2538 = vmatprep.subr.mxu0 0.0
  %2539 = vmatpush1.msra.mxu0 0.0
  %2540 = vmatprep.subr.mxu0 0.0
  %2541 = vmatpush1.msra.mxu0 0.0
  %2542 = vmatprep.subr.mxu0 0.0
  %2543 = vmatpush1.msra.mxu0 0.0
  %2544 = vmatprep.mubr.f32.mxu0 0.0
  %2545 = vmatmul.mubr.f32.gmra.mrb[0].mxu0 %v2058
  %v2546 = vpop.f32.mrb[0].mxu0
  %v2547 = vadd.f32 %v506, %v2546
  %v2548 = vpop.f32.mrb[0].mxu0
  %2549 = vdwg.mxu0
  %2550 = vmatprep.subr.mxu0 0.0
  %2551 = vmatpush1.msra.mxu0 %v147
  %2552 = vmatprep.subr.mxu0 0.0
  %2553 = vmatpush1.msra.mxu0 %v148
  %2554 = vmatprep.subr.mxu0 0.0
  %2555 = vmatpush1.msra.mxu0 %v149
  %2556 = vmatprep.subr.mxu0 0.0
  %2557 = vmatpush1.msra.mxu0 %v150
  %2558 = vmatprep.subr.mxu0 0.0
  %2559 = vmatpush1.msra.mxu0 0.0
  %2560 = vmatprep.subr.mxu0 0.0
  %2561 = vmatpush1.msra.mxu0 0.0
  %2562 = vmatprep.subr.mxu0 0.0
  %2563 = vmatpush1.msra.mxu0 0.0
  %2564 = vmatprep.subr.mxu0 0.0
  %2565 = vmatpush1.msra.mxu0 0.0
  %2566 = vmatprep.subr.mxu0 0.0
  %2567 = vmatpush1.msra.mxu0 0.0
  %2568 = vmatprep.subr.mxu0 0.0
  %2569 = vmatpush1.msra.mxu0 0.0
  %2570 = vmatprep.subr.mxu0 0.0
  %2571 = vmatpush1.msra.mxu0 0.0
  %2572 = vmatprep.subr.mxu0 0.0
  %2573 = vmatpush1.msra.mxu0 0.0
  %2574 = vmatprep.subr.mxu0 0.0
  %2575 = vmatpush1.msra.mxu0 0.0
  %2576 = vmatprep.subr.mxu0 0.0
  %2577 = vmatpush1.msra.mxu0 0.0
  %2578 = vmatprep.subr.mxu0 0.0
  %2579 = vmatpush1.msra.mxu0 0.0
  %2580 = vmatprep.subr.mxu0 0.0
  %2581 = vmatpush1.msra.mxu0 0.0
  %2582 = vmatprep.subr.mxu0 0.0
  %2583 = vmatpush1.msra.mxu0 0.0
  %2584 = vmatprep.subr.mxu0 0.0
  %2585 = vmatpush1.msra.mxu0 0.0
  %2586 = vmatprep.subr.mxu0 0.0
  %2587 = vmatpush1.msra.mxu0 0.0
  %2588 = vmatprep.subr.mxu0 0.0
  %2589 = vmatpush1.msra.mxu0 0.0
  %2590 = vmatprep.subr.mxu0 0.0
  %2591 = vmatpush1.msra.mxu0 0.0
  %2592 = vmatprep.subr.mxu0 0.0
  %2593 = vmatpush1.msra.mxu0 0.0
  %2594 = vmatprep.subr.mxu0 0.0
  %2595 = vmatpush1.msra.mxu0 0.0
  %2596 = vmatprep.subr.mxu0 0.0
  %2597 = vmatpush1.msra.mxu0 0.0
  %2598 = vmatprep.subr.mxu0 0.0
  %2599 = vmatpush1.msra.mxu0 0.0
  %2600 = vmatprep.subr.mxu0 0.0
  %2601 = vmatpush1.msra.mxu0 0.0
  %2602 = vmatprep.subr.mxu0 0.0
  %2603 = vmatpush1.msra.mxu0 0.0
  %2604 = vmatprep.subr.mxu0 0.0
  %2605 = vmatpush1.msra.mxu0 0.0
  %2606 = vmatprep.subr.mxu0 0.0
  %2607 = vmatpush1.msra.mxu0 0.0
  %2608 = vmatprep.subr.mxu0 0.0
  %2609 = vmatpush1.msra.mxu0 0.0
  %2610 = vmatprep.subr.mxu0 0.0
  %2611 = vmatpush1.msra.mxu0 0.0
  %2612 = vmatprep.subr.mxu0 0.0
  %2613 = vmatpush1.msra.mxu0 0.0
  %2614 = vmatprep.mubr.f32.mxu0 0.0
  %2615 = vmatmul.mubr.f32.gmra.mrb[0].mxu0 %v2058
  %v2616 = vpop.f32.mrb[0].mxu0
  %v2617 = vadd.f32 %v510, %v2616
  %v2618 = vpop.f32.mrb[0].mxu0
  %2619 = vdwg.mxu0
  %2620 = vmatprep.subr.mxu0 0.0
  %2621 = vmatpush1.msra.mxu0 %v151
  %2622 = vmatprep.subr.mxu0 0.0
  %2623 = vmatpush1.msra.mxu0 %v152
  %2624 = vmatprep.subr.mxu0 0.0
  %2625 = vmatpush1.msra.mxu0 %v153
  %2626 = vmatprep.subr.mxu0 0.0
  %2627 = vmatpush1.msra.mxu0 %v154
  %2628 = vmatprep.subr.mxu0 0.0
  %2629 = vmatpush1.msra.mxu0 0.0
  %2630 = vmatprep.subr.mxu0 0.0
  %2631 = vmatpush1.msra.mxu0 0.0
  %2632 = vmatprep.subr.mxu0 0.0
  %2633 = vmatpush1.msra.mxu0 0.0
  %2634 = vmatprep.subr.mxu0 0.0
  %2635 = vmatpush1.msra.mxu0 0.0
  %2636 = vmatprep.subr.mxu0 0.0
  %2637 = vmatpush1.msra.mxu0 0.0
  %2638 = vmatprep.subr.mxu0 0.0
  %2639 = vmatpush1.msra.mxu0 0.0
  %2640 = vmatprep.subr.mxu0 0.0
  %2641 = vmatpush1.msra.mxu0 0.0
  %2642 = vmatprep.subr.mxu0 0.0
  %2643 = vmatpush1.msra.mxu0 0.0
  %2644 = vmatprep.subr.mxu0 0.0
  %2645 = vmatpush1.msra.mxu0 0.0
  %2646 = vmatprep.subr.mxu0 0.0
  %2647 = vmatpush1.msra.mxu0 0.0
  %2648 = vmatprep.subr.mxu0 0.0
  %2649 = vmatpush1.msra.mxu0 0.0
  %2650 = vmatprep.subr.mxu0 0.0
  %2651 = vmatpush1.msra.mxu0 0.0
  %2652 = vmatprep.subr.mxu0 0.0
  %2653 = vmatpush1.msra.mxu0 0.0
  %2654 = vmatprep.subr.mxu0 0.0
  %2655 = vmatpush1.msra.mxu0 0.0
  %2656 = vmatprep.subr.mxu0 0.0
  %2657 = vmatpush1.msra.mxu0 0.0
  %2658 = vmatprep.subr.mxu0 0.0
  %2659 = vmatpush1.msra.mxu0 0.0
  %2660 = vmatprep.subr.mxu0 0.0
  %2661 = vmatpush1.msra.mxu0 0.0
  %2662 = vmatprep.subr.mxu0 0.0
  %2663 = vmatpush1.msra.mxu0 0.0
  %2664 = vmatprep.subr.mxu0 0.0
  %2665 = vmatpush1.msra.mxu0 0.0
  %2666 = vmatprep.subr.mxu0 0.0
  %2667 = vmatpush1.msra.mxu0 0.0
  %2668 = vmatprep.subr.mxu0 0.0
  %2669 = vmatpush1.msra.mxu0 0.0
  %2670 = vmatprep.subr.mxu0 0.0
  %2671 = vmatpush1.msra.mxu0 0.0
  %2672 = vmatprep.subr.mxu0 0.0
  %2673 = vmatpush1.msra.mxu0 0.0
  %2674 = vmatprep.subr.mxu0 0.0
  %2675 = vmatpush1.msra.mxu0 0.0
  %2676 = vmatprep.subr.mxu0 0.0
  %2677 = vmatpush1.msra.mxu0 0.0
  %2678 = vmatprep.subr.mxu0 0.0
  %2679 = vmatpush1.msra.mxu0 0.0
  %2680 = vmatprep.subr.mxu0 0.0
  %2681 = vmatpush1.msra.mxu0 0.0
  %2682 = vmatprep.subr.mxu0 0.0
  %2683 = vmatpush1.msra.mxu0 0.0
  %2684 = vmatprep.mubr.f32.mxu0 0.0
  %2685 = vmatmul.mubr.f32.gmra.mrb[0].mxu0 %v2058
  %v2686 = vpop.f32.mrb[0].mxu0
  %v2687 = vadd.f32 %v802, %v2686
  %v2688 = vpop.f32.mrb[0].mxu0
  %2689 = vdwg.mxu0
  %2690 = vmatprep.subr.mxu0 0.0
  %2691 = vmatpush1.msra.mxu0 %v155
  %2692 = vmatprep.subr.mxu0 0.0
  %2693 = vmatpush1.msra.mxu0 %v156
  %2694 = vmatprep.subr.mxu0 0.0
  %2695 = vmatpush1.msra.mxu0 %v157
  %2696 = vmatprep.subr.mxu0 0.0
  %2697 = vmatpush1.msra.mxu0 %v158
  %2698 = vmatprep.subr.mxu0 0.0
  %2699 = vmatpush1.msra.mxu0 0.0
  %2700 = vmatprep.subr.mxu0 0.0
  %2701 = vmatpush1.msra.mxu0 0.0
  %2702 = vmatprep.subr.mxu0 0.0
  %2703 = vmatpush1.msra.mxu0 0.0
  %2704 = vmatprep.subr.mxu0 0.0
  %2705 = vmatpush1.msra.mxu0 0.0
  %2706 = vmatprep.subr.mxu0 0.0
  %2707 = vmatpush1.msra.mxu0 0.0
  %2708 = vmatprep.subr.mxu0 0.0
  %2709 = vmatpush1.msra.mxu0 0.0
  %2710 = vmatprep.subr.mxu0 0.0
  %2711 = vmatpush1.msra.mxu0 0.0
  %2712 = vmatprep.subr.mxu0 0.0
  %2713 = vmatpush1.msra.mxu0 0.0
  %2714 = vmatprep.subr.mxu0 0.0
  %2715 = vmatpush1.msra.mxu0 0.0
  %2716 = vmatprep.subr.mxu0 0.0
  %2717 = vmatpush1.msra.mxu0 0.0
  %2718 = vmatprep.subr.mxu0 0.0
  %2719 = vmatpush1.msra.mxu0 0.0
  %2720 = vmatprep.subr.mxu0 0.0
  %2721 = vmatpush1.msra.mxu0 0.0
  %2722 = vmatprep.subr.mxu0 0.0
  %2723 = vmatpush1.msra.mxu0 0.0
  %2724 = vmatprep.subr.mxu0 0.0
  %2725 = vmatpush1.msra.mxu0 0.0
  %2726 = vmatprep.subr.mxu0 0.0
  %2727 = vmatpush1.msra.mxu0 0.0
  %2728 = vmatprep.subr.mxu0 0.0
  %2729 = vmatpush1.msra.mxu0 0.0
  %2730 = vmatprep.subr.mxu0 0.0
  %2731 = vmatpush1.msra.mxu0 0.0
  %2732 = vmatprep.subr.mxu0 0.0
  %2733 = vmatpush1.msra.mxu0 0.0
  %2734 = vmatprep.subr.mxu0 0.0
  %2735 = vmatpush1.msra.mxu0 0.0
  %2736 = vmatprep.subr.mxu0 0.0
  %2737 = vmatpush1.msra.mxu0 0.0
  %2738 = vmatprep.subr.mxu0 0.0
  %2739 = vmatpush1.msra.mxu0 0.0
  %2740 = vmatprep.subr.mxu0 0.0
  %2741 = vmatpush1.msra.mxu0 0.0
  %2742 = vmatprep.subr.mxu0 0.0
  %2743 = vmatpush1.msra.mxu0 0.0
  %2744 = vmatprep.subr.mxu0 0.0
  %2745 = vmatpush1.msra.mxu0 0.0
  %2746 = vmatprep.subr.mxu0 0.0
  %2747 = vmatpush1.msra.mxu0 0.0
  %2748 = vmatprep.subr.mxu0 0.0
  %2749 = vmatpush1.msra.mxu0 0.0
  %2750 = vmatprep.subr.mxu0 0.0
  %2751 = vmatpush1.msra.mxu0 0.0
  %2752 = vmatprep.subr.mxu0 0.0
  %2753 = vmatpush1.msra.mxu0 0.0
  %2754 = vmatprep.mubr.f32.mxu0 0.0
  %2755 = vmatmul.mubr.f32.gmra.mrb[0].mxu0 %v2058
  %v2756 = vpop.f32.mrb[0].mxu0
  %v2757 = vadd.f32 %v806, %v2756
  %v2758 = vpop.f32.mrb[0].mxu0
  %2759 = vdwg.mxu0
  %2760 = vmatprep.subr.mxu0 0.0
  %2761 = vmatpush1.msra.mxu0 %v159
  %2762 = vmatprep.subr.mxu0 0.0
  %2763 = vmatpush1.msra.mxu0 %v160
  %2764 = vmatprep.subr.mxu0 0.0
  %2765 = vmatpush1.msra.mxu0 %v161
  %2766 = vmatprep.subr.mxu0 0.0
  %2767 = vmatpush1.msra.mxu0 %v162
  %2768 = vmatprep.subr.mxu0 0.0
  %2769 = vmatpush1.msra.mxu0 0.0
  %2770 = vmatprep.subr.mxu0 0.0
  %2771 = vmatpush1.msra.mxu0 0.0
  %2772 = vmatprep.subr.mxu0 0.0
  %2773 = vmatpush1.msra.mxu0 0.0
  %2774 = vmatprep.subr.mxu0 0.0
  %2775 = vmatpush1.msra.mxu0 0.0
  %2776 = vmatprep.subr.mxu0 0.0
  %2777 = vmatpush1.msra.mxu0 0.0
  %2778 = vmatprep.subr.mxu0 0.0
  %2779 = vmatpush1.msra.mxu0 0.0
  %2780 = vmatprep.subr.mxu0 0.0
  %2781 = vmatpush1.msra.mxu0 0.0
  %2782 = vmatprep.subr.mxu0 0.0
  %2783 = vmatpush1.msra.mxu0 0.0
  %2784 = vmatprep.subr.mxu0 0.0
  %2785 = vmatpush1.msra.mxu0 0.0
  %2786 = vmatprep.subr.mxu0 0.0
  %2787 = vmatpush1.msra.mxu0 0.0
  %2788 = vmatprep.subr.mxu0 0.0
  %2789 = vmatpush1.msra.mxu0 0.0
  %2790 = vmatprep.subr.mxu0 0.0
  %2791 = vmatpush1.msra.mxu0 0.0
  %2792 = vmatprep.subr.mxu0 0.0
  %2793 = vmatpush1.msra.mxu0 0.0
  %2794 = vmatprep.subr.mxu0 0.0
  %2795 = vmatpush1.msra.mxu0 0.0
  %2796 = vmatprep.subr.mxu0 0.0
  %2797 = vmatpush1.msra.mxu0 0.0
  %2798 = vmatprep.subr.mxu0 0.0
  %2799 = vmatpush1.msra.mxu0 0.0
  %2800 = vmatprep.subr.mxu0 0.0
  %2801 = vmatpush1.msra.mxu0 0.0
  %2802 = vmatprep.subr.mxu0 0.0
  %2803 = vmatpush1.msra.mxu0 0.0
  %2804 = vmatprep.subr.mxu0 0.0
  %2805 = vmatpush1.msra.mxu0 0.0
  %2806 = vmatprep.subr.mxu0 0.0
  %2807 = vmatpush1.msra.mxu0 0.0
  %2808 = vmatprep.subr.mxu0 0.0
  %2809 = vmatpush1.msra.mxu0 0.0
  %2810 = vmatprep.subr.mxu0 0.0
  %2811 = vmatpush1.msra.mxu0 0.0
  %2812 = vmatprep.subr.mxu0 0.0
  %2813 = vmatpush1.msra.mxu0 0.0
  %2814 = vmatprep.subr.mxu0 0.0
  %2815 = vmatpush1.msra.mxu0 0.0
  %2816 = vmatprep.subr.mxu0 0.0
  %2817 = vmatpush1.msra.mxu0 0.0
  %2818 = vmatprep.subr.mxu0 0.0
  %2819 = vmatpush1.msra.mxu0 0.0
  %2820 = vmatprep.subr.mxu0 0.0
  %2821 = vmatpush1.msra.mxu0 0.0
  %2822 = vmatprep.subr.mxu0 0.0
  %2823 = vmatpush1.msra.mxu0 0.0
  %2824 = vmatprep.mubr.f32.mxu0 0.0
  %2825 = vmatmul.mubr.f32.gmra.mrb[0].mxu0 %v2058
  %v2826 = vpop.f32.mrb[0].mxu0
  %v2827 = vadd.f32 %v810, %v2826
  %v2828 = vpop.f32.mrb[0].mxu0
  %2829 = vdwg.mxu0
  %2830 = vmatprep.subr.mxu0 0.0
  %2831 = vmatpush1.msra.mxu0 %v163
  %2832 = vmatprep.subr.mxu0 0.0
  %2833 = vmatpush1.msra.mxu0 %v164
  %2834 = vmatprep.subr.mxu0 0.0
  %2835 = vmatpush1.msra.mxu0 %v165
  %2836 = vmatprep.subr.mxu0 0.0
  %2837 = vmatpush1.msra.mxu0 %v166
  %2838 = vmatprep.subr.mxu0 0.0
  %2839 = vmatpush1.msra.mxu0 0.0
  %2840 = vmatprep.subr.mxu0 0.0
  %2841 = vmatpush1.msra.mxu0 0.0
  %2842 = vmatprep.subr.mxu0 0.0
  %2843 = vmatpush1.msra.mxu0 0.0
  %2844 = vmatprep.subr.mxu0 0.0
  %2845 = vmatpush1.msra.mxu0 0.0
  %2846 = vmatprep.subr.mxu0 0.0
  %2847 = vmatpush1.msra.mxu0 0.0
  %2848 = vmatprep.subr.mxu0 0.0
  %2849 = vmatpush1.msra.mxu0 0.0
  %2850 = vmatprep.subr.mxu0 0.0
  %2851 = vmatpush1.msra.mxu0 0.0
  %2852 = vmatprep.subr.mxu0 0.0
  %2853 = vmatpush1.msra.mxu0 0.0
  %2854 = vmatprep.subr.mxu0 0.0
  %2855 = vmatpush1.msra.mxu0 0.0
  %2856 = vmatprep.subr.mxu0 0.0
  %2857 = vmatpush1.msra.mxu0 0.0
  %2858 = vmatprep.subr.mxu0 0.0
  %2859 = vmatpush1.msra.mxu0 0.0
  %2860 = vmatprep.subr.mxu0 0.0
  %2861 = vmatpush1.msra.mxu0 0.0
  %2862 = vmatprep.subr.mxu0 0.0
  %2863 = vmatpush1.msra.mxu0 0.0
  %2864 = vmatprep.subr.mxu0 0.0
  %2865 = vmatpush1.msra.mxu0 0.0
  %2866 = vmatprep.subr.mxu0 0.0
  %2867 = vmatpush1.msra.mxu0 0.0
  %2868 = vmatprep.subr.mxu0 0.0
  %2869 = vmatpush1.msra.mxu0 0.0
  %2870 = vmatprep.subr.mxu0 0.0
  %2871 = vmatpush1.msra.mxu0 0.0
  %2872 = vmatprep.subr.mxu0 0.0
  %2873 = vmatpush1.msra.mxu0 0.0
  %2874 = vmatprep.subr.mxu0 0.0
  %2875 = vmatpush1.msra.mxu0 0.0
  %2876 = vmatprep.subr.mxu0 0.0
  %2877 = vmatpush1.msra.mxu0 0.0
  %2878 = vmatprep.subr.mxu0 0.0
  %2879 = vmatpush1.msra.mxu0 0.0
  %2880 = vmatprep.subr.mxu0 0.0
  %2881 = vmatpush1.msra.mxu0 0.0
  %2882 = vmatprep.subr.mxu0 0.0
  %2883 = vmatpush1.msra.mxu0 0.0
  %2884 = vmatprep.subr.mxu0 0.0
  %2885 = vmatpush1.msra.mxu0 0.0
  %2886 = vmatprep.subr.mxu0 0.0
  %2887 = vmatpush1.msra.mxu0 0.0
  %2888 = vmatprep.subr.mxu0 0.0
  %2889 = vmatpush1.msra.mxu0 0.0
  %2890 = vmatprep.subr.mxu0 0.0
  %2891 = vmatpush1.msra.mxu0 0.0
  %2892 = vmatprep.subr.mxu0 0.0
  %2893 = vmatpush1.msra.mxu0 0.0
  %2894 = vmatprep.mubr.f32.mxu0 0.0
  %2895 = vmatmul.mubr.f32.gmra.mrb[0].mxu0 %v2058
  %v2896 = vpop.f32.mrb[0].mxu0
  %v2897 = vadd.f32 %v814, %v2896
  %v2898 = vpop.f32.mrb[0].mxu0
  %2899 = vdwg.mxu0
  %v2901 = vsel %vm1099, %v2127, 0
  %v2904 = vsel %vm1099, %v2407, 0
  %2906 = vmatprep.subr.mxu0 0.0
  %2907 = vmatpush1.xpose.msra.mxu0 %v2904
  %2908 = vmatprep.subr.mxu0 0.0
  %2909 = vmatpush1.xpose.msra.mxu0 0.0
  %2910 = vmatprep.subr.mxu0 0.0
  %2911 = vmatpush1.xpose.msra.mxu0 0.0
  %2912 = vmatprep.subr.mxu0 0.0
  %2913 = vmatpush1.xpose.msra.mxu0 0.0
  %2914 = vmatprep.subr.mxu0 0.0
  %2915 = vmatpush1.xpose.msra.mxu0 0.0
  %2916 = vmatprep.subr.mxu0 0.0
  %2917 = vmatpush1.xpose.msra.mxu0 0.0
  %2918 = vmatprep.subr.mxu0 0.0
  %2919 = vmatpush1.xpose.msra.mxu0 0.0
  %2920 = vmatprep.subr.mxu0 0.0
  %2921 = vmatpush1.xpose.msra.mxu0 0.0
  %2922 = vmatprep.subr.mxu0 0.0
  %2923 = vmatpush1.xpose.msra.mxu0 0.0
  %2924 = vmatprep.subr.mxu0 0.0
  %2925 = vmatpush1.xpose.msra.mxu0 0.0
  %2926 = vmatprep.subr.mxu0 0.0
  %2927 = vmatpush1.xpose.msra.mxu0 0.0
  %2928 = vmatprep.subr.mxu0 0.0
  %2929 = vmatpush1.xpose.msra.mxu0 0.0
  %2930 = vmatprep.subr.mxu0 0.0
  %2931 = vmatpush1.xpose.msra.mxu0 0.0
  %2932 = vmatprep.subr.mxu0 0.0
  %2933 = vmatpush1.xpose.msra.mxu0 0.0
  %2934 = vmatprep.subr.mxu0 0.0
  %2935 = vmatpush1.xpose.msra.mxu0 0.0
  %2936 = vmatprep.subr.mxu0 0.0
  %2937 = vmatpush1.xpose.msra.mxu0 0.0
  %2938 = vmatprep.subr.mxu0 0.0
  %2939 = vmatpush1.xpose.msra.mxu0 0.0
  %2940 = vmatprep.subr.mxu0 0.0
  %2941 = vmatpush1.xpose.msra.mxu0 0.0
  %2942 = vmatprep.subr.mxu0 0.0
  %2943 = vmatpush1.xpose.msra.mxu0 0.0
  %2944 = vmatprep.subr.mxu0 0.0
  %2945 = vmatpush1.xpose.msra.mxu0 0.0
  %2946 = vmatprep.subr.mxu0 0.0
  %2947 = vmatpush1.xpose.msra.mxu0 0.0
  %2948 = vmatprep.subr.mxu0 0.0
  %2949 = vmatpush1.xpose.msra.mxu0 0.0
  %2950 = vmatprep.subr.mxu0 0.0
  %2951 = vmatpush1.xpose.msra.mxu0 0.0
  %2952 = vmatprep.subr.mxu0 0.0
  %2953 = vmatpush1.xpose.msra.mxu0 0.0
  %2954 = vmatprep.subr.mxu0 0.0
  %2955 = vmatpush1.xpose.msra.mxu0 0.0
  %2956 = vmatprep.subr.mxu0 0.0
  %2957 = vmatpush1.xpose.msra.mxu0 0.0
  %2958 = vmatprep.subr.mxu0 0.0
  %2959 = vmatpush1.xpose.msra.mxu0 0.0
  %2960 = vmatprep.subr.mxu0 0.0
  %2961 = vmatpush1.xpose.msra.mxu0 0.0
  %2962 = vmatprep.subr.mxu0 0.0
  %2963 = vmatpush1.xpose.msra.mxu0 0.0
  %2964 = vmatprep.subr.mxu0 0.0
  %2965 = vmatpush1.xpose.msra.mxu0 0.0
  %2966 = vmatprep.subr.mxu0 0.0
  %2967 = vmatpush1.xpose.msra.mxu0 0.0
  %2968 = vmatprep.subr.mxu0 0.0
  %2969 = vmatpush1.xpose.msra.mxu0 0.0
  %2970 = vmatprep.mubr.f32.mxu0 0.0
  %2971 = vmatmul.mubr.f32.gmra.mrb[0].mxu0 %v2901
  %v2972 = vpop.f32.mrb[0].mxu0
  %v2973 = vadd.f32 0.0, %v2972
  %v2974 = vpop.f32.mrb[0].mxu0
  %2975 = vdwg.mxu0
  %v2977 = vsel %vm1099, %v2197, 0
  %v2980 = vsel %vm1099, %v2477, 0
  %2982 = vmatprep.subr.mxu0 0.0
  %2983 = vmatpush1.xpose.msra.mxu0 %v2980
  %2984 = vmatprep.subr.mxu0 0.0
  %2985 = vmatpush1.xpose.msra.mxu0 0.0
  %2986 = vmatprep.subr.mxu0 0.0
  %2987 = vmatpush1.xpose.msra.mxu0 0.0
  %2988 = vmatprep.subr.mxu0 0.0
  %2989 = vmatpush1.xpose.msra.mxu0 0.0
  %2990 = vmatprep.subr.mxu0 0.0
  %2991 = vmatpush1.xpose.msra.mxu0 0.0
  %2992 = vmatprep.subr.mxu0 0.0
  %2993 = vmatpush1.xpose.msra.mxu0 0.0
  %2994 = vmatprep.subr.mxu0 0.0
  %2995 = vmatpush1.xpose.msra.mxu0 0.0
  %2996 = vmatprep.subr.mxu0 0.0
  %2997 = vmatpush1.xpose.msra.mxu0 0.0
  %2998 = vmatprep.subr.mxu0 0.0
  %2999 = vmatpush1.xpose.msra.mxu0 0.0
  %3000 = vmatprep.subr.mxu0 0.0
  %3001 = vmatpush1.xpose.msra.mxu0 0.0
  %3002 = vmatprep.subr.mxu0 0.0
  %3003 = vmatpush1.xpose.msra.mxu0 0.0
  %3004 = vmatprep.subr.mxu0 0.0
  %3005 = vmatpush1.xpose.msra.mxu0 0.0
  %3006 = vmatprep.subr.mxu0 0.0
  %3007 = vmatpush1.xpose.msra.mxu0 0.0
  %3008 = vmatprep.subr.mxu0 0.0
  %3009 = vmatpush1.xpose.msra.mxu0 0.0
  %3010 = vmatprep.subr.mxu0 0.0
  %3011 = vmatpush1.xpose.msra.mxu0 0.0
  %3012 = vmatprep.subr.mxu0 0.0
  %3013 = vmatpush1.xpose.msra.mxu0 0.0
  %3014 = vmatprep.subr.mxu0 0.0
  %3015 = vmatpush1.xpose.msra.mxu0 0.0
  %3016 = vmatprep.subr.mxu0 0.0
  %3017 = vmatpush1.xpose.msra.mxu0 0.0
  %3018 = vmatprep.subr.mxu0 0.0
  %3019 = vmatpush1.xpose.msra.mxu0 0.0
  %3020 = vmatprep.subr.mxu0 0.0
  %3021 = vmatpush1.xpose.msra.mxu0 0.0
  %3022 = vmatprep.subr.mxu0 0.0
  %3023 = vmatpush1.xpose.msra.mxu0 0.0
  %3024 = vmatprep.subr.mxu0 0.0
  %3025 = vmatpush1.xpose.msra.mxu0 0.0
  %3026 = vmatprep.subr.mxu0 0.0
  %3027 = vmatpush1.xpose.msra.mxu0 0.0
  %3028 = vmatprep.subr.mxu0 0.0
  %3029 = vmatpush1.xpose.msra.mxu0 0.0
  %3030 = vmatprep.subr.mxu0 0.0
  %3031 = vmatpush1.xpose.msra.mxu0 0.0
  %3032 = vmatprep.subr.mxu0 0.0
  %3033 = vmatpush1.xpose.msra.mxu0 0.0
  %3034 = vmatprep.subr.mxu0 0.0
  %3035 = vmatpush1.xpose.msra.mxu0 0.0
  %3036 = vmatprep.subr.mxu0 0.0
  %3037 = vmatpush1.xpose.msra.mxu0 0.0
  %3038 = vmatprep.subr.mxu0 0.0
  %3039 = vmatpush1.xpose.msra.mxu0 0.0
  %3040 = vmatprep.subr.mxu0 0.0
  %3041 = vmatpush1.xpose.msra.mxu0 0.0
  %3042 = vmatprep.subr.mxu0 0.0
  %3043 = vmatpush1.xpose.msra.mxu0 0.0
  %3044 = vmatprep.subr.mxu0 0.0
  %3045 = vmatpush1.xpose.msra.mxu0 0.0
  %3046 = vmatprep.mubr.f32.mxu0 0.0
  %3047 = vmatmul.mubr.f32.gmra.mrb[0].mxu0 %v2977
  %v3048 = vpop.f32.mrb[0].mxu0
  %v3049 = vadd.f32 0.0, %v3048
  %v3050 = vpop.f32.mrb[0].mxu0
  %3051 = vdwg.mxu0
  %v3053 = vsel %vm1099, %v2267, 0
  %v3056 = vsel %vm1099, %v2547, 0
  %3058 = vmatprep.subr.mxu0 0.0
  %3059 = vmatpush1.xpose.msra.mxu0 %v3056
  %3060 = vmatprep.subr.mxu0 0.0
  %3061 = vmatpush1.xpose.msra.mxu0 0.0
  %3062 = vmatprep.subr.mxu0 0.0
  %3063 = vmatpush1.xpose.msra.mxu0 0.0
  %3064 = vmatprep.subr.mxu0 0.0
  %3065 = vmatpush1.xpose.msra.mxu0 0.0
  %3066 = vmatprep.subr.mxu0 0.0
  %3067 = vmatpush1.xpose.msra.mxu0 0.0
  %3068 = vmatprep.subr.mxu0 0.0
  %3069 = vmatpush1.xpose.msra.mxu0 0.0
  %3070 = vmatprep.subr.mxu0 0.0
  %3071 = vmatpush1.xpose.msra.mxu0 0.0
  %3072 = vmatprep.subr.mxu0 0.0
  %3073 = vmatpush1.xpose.msra.mxu0 0.0
  %3074 = vmatprep.subr.mxu0 0.0
  %3075 = vmatpush1.xpose.msra.mxu0 0.0
  %3076 = vmatprep.subr.mxu0 0.0
  %3077 = vmatpush1.xpose.msra.mxu0 0.0
  %3078 = vmatprep.subr.mxu0 0.0
  %3079 = vmatpush1.xpose.msra.mxu0 0.0
  %3080 = vmatprep.subr.mxu0 0.0
  %3081 = vmatpush1.xpose.msra.mxu0 0.0
  %3082 = vmatprep.subr.mxu0 0.0
  %3083 = vmatpush1.xpose.msra.mxu0 0.0
  %3084 = vmatprep.subr.mxu0 0.0
  %3085 = vmatpush1.xpose.msra.mxu0 0.0
  %3086 = vmatprep.subr.mxu0 0.0
  %3087 = vmatpush1.xpose.msra.mxu0 0.0
  %3088 = vmatprep.subr.mxu0 0.0
  %3089 = vmatpush1.xpose.msra.mxu0 0.0
  %3090 = vmatprep.subr.mxu0 0.0
  %3091 = vmatpush1.xpose.msra.mxu0 0.0
  %3092 = vmatprep.subr.mxu0 0.0
  %3093 = vmatpush1.xpose.msra.mxu0 0.0
  %3094 = vmatprep.subr.mxu0 0.0
  %3095 = vmatpush1.xpose.msra.mxu0 0.0
  %3096 = vmatprep.subr.mxu0 0.0
  %3097 = vmatpush1.xpose.msra.mxu0 0.0
  %3098 = vmatprep.subr.mxu0 0.0
  %3099 = vmatpush1.xpose.msra.mxu0 0.0
  %3100 = vmatprep.subr.mxu0 0.0
  %3101 = vmatpush1.xpose.msra.mxu0 0.0
  %3102 = vmatprep.subr.mxu0 0.0
  %3103 = vmatpush1.xpose.msra.mxu0 0.0
  %3104 = vmatprep.subr.mxu0 0.0
  %3105 = vmatpush1.xpose.msra.mxu0 0.0
  %3106 = vmatprep.subr.mxu0 0.0
  %3107 = vmatpush1.xpose.msra.mxu0 0.0
  %3108 = vmatprep.subr.mxu0 0.0
  %3109 = vmatpush1.xpose.msra.mxu0 0.0
  %3110 = vmatprep.subr.mxu0 0.0
  %3111 = vmatpush1.xpose.msra.mxu0 0.0
  %3112 = vmatprep.subr.mxu0 0.0
  %3113 = vmatpush1.xpose.msra.mxu0 0.0
  %3114 = vmatprep.subr.mxu0 0.0
  %3115 = vmatpush1.xpose.msra.mxu0 0.0
  %3116 = vmatprep.subr.mxu0 0.0
  %3117 = vmatpush1.xpose.msra.mxu0 0.0
  %3118 = vmatprep.subr.mxu0 0.0
  %3119 = vmatpush1.xpose.msra.mxu0 0.0
  %3120 = vmatprep.subr.mxu0 0.0
  %3121 = vmatpush1.xpose.msra.mxu0 0.0
  %3122 = vmatprep.mubr.f32.mxu0 0.0
  %3123 = vmatmul.mubr.f32.gmra.mrb[0].mxu0 %v3053
  %v3124 = vpop.f32.mrb[0].mxu0
  %v3125 = vadd.f32 0.0, %v3124
  %v3126 = vpop.f32.mrb[0].mxu0
  %3127 = vdwg.mxu0
  %v3129 = vsel %vm1099, %v2337, 0
  %v3132 = vsel %vm1099, %v2617, 0
  %3134 = vmatprep.subr.mxu0 0.0
  %3135 = vmatpush1.xpose.msra.mxu0 %v3132
  %3136 = vmatprep.subr.mxu0 0.0
  %3137 = vmatpush1.xpose.msra.mxu0 0.0
  %3138 = vmatprep.subr.mxu0 0.0
  %3139 = vmatpush1.xpose.msra.mxu0 0.0
  %3140 = vmatprep.subr.mxu0 0.0
  %3141 = vmatpush1.xpose.msra.mxu0 0.0
  %3142 = vmatprep.subr.mxu0 0.0
  %3143 = vmatpush1.xpose.msra.mxu0 0.0
  %3144 = vmatprep.subr.mxu0 0.0
  %3145 = vmatpush1.xpose.msra.mxu0 0.0
  %3146 = vmatprep.subr.mxu0 0.0
  %3147 = vmatpush1.xpose.msra.mxu0 0.0
  %3148 = vmatprep.subr.mxu0 0.0
  %3149 = vmatpush1.xpose.msra.mxu0 0.0
  %3150 = vmatprep.subr.mxu0 0.0
  %3151 = vmatpush1.xpose.msra.mxu0 0.0
  %3152 = vmatprep.subr.mxu0 0.0
  %3153 = vmatpush1.xpose.msra.mxu0 0.0
  %3154 = vmatprep.subr.mxu0 0.0
  %3155 = vmatpush1.xpose.msra.mxu0 0.0
  %3156 = vmatprep.subr.mxu0 0.0
  %3157 = vmatpush1.xpose.msra.mxu0 0.0
  %3158 = vmatprep.subr.mxu0 0.0
  %3159 = vmatpush1.xpose.msra.mxu0 0.0
  %3160 = vmatprep.subr.mxu0 0.0
  %3161 = vmatpush1.xpose.msra.mxu0 0.0
  %3162 = vmatprep.subr.mxu0 0.0
  %3163 = vmatpush1.xpose.msra.mxu0 0.0
  %3164 = vmatprep.subr.mxu0 0.0
  %3165 = vmatpush1.xpose.msra.mxu0 0.0
  %3166 = vmatprep.subr.mxu0 0.0
  %3167 = vmatpush1.xpose.msra.mxu0 0.0
  %3168 = vmatprep.subr.mxu0 0.0
  %3169 = vmatpush1.xpose.msra.mxu0 0.0
  %3170 = vmatprep.subr.mxu0 0.0
  %3171 = vmatpush1.xpose.msra.mxu0 0.0
  %3172 = vmatprep.subr.mxu0 0.0
  %3173 = vmatpush1.xpose.msra.mxu0 0.0
  %3174 = vmatprep.subr.mxu0 0.0
  %3175 = vmatpush1.xpose.msra.mxu0 0.0
  %3176 = vmatprep.subr.mxu0 0.0
  %3177 = vmatpush1.xpose.msra.mxu0 0.0
  %3178 = vmatprep.subr.mxu0 0.0
  %3179 = vmatpush1.xpose.msra.mxu0 0.0
  %3180 = vmatprep.subr.mxu0 0.0
  %3181 = vmatpush1.xpose.msra.mxu0 0.0
  %3182 = vmatprep.subr.mxu0 0.0
  %3183 = vmatpush1.xpose.msra.mxu0 0.0
  %3184 = vmatprep.subr.mxu0 0.0
  %3185 = vmatpush1.xpose.msra.mxu0 0.0
  %3186 = vmatprep.subr.mxu0 0.0
  %3187 = vmatpush1.xpose.msra.mxu0 0.0
  %3188 = vmatprep.subr.mxu0 0.0
  %3189 = vmatpush1.xpose.msra.mxu0 0.0
  %3190 = vmatprep.subr.mxu0 0.0
  %3191 = vmatpush1.xpose.msra.mxu0 0.0
  %3192 = vmatprep.subr.mxu0 0.0
  %3193 = vmatpush1.xpose.msra.mxu0 0.0
  %3194 = vmatprep.subr.mxu0 0.0
  %3195 = vmatpush1.xpose.msra.mxu0 0.0
  %3196 = vmatprep.subr.mxu0 0.0
  %3197 = vmatpush1.xpose.msra.mxu0 0.0
  %3198 = vmatprep.mubr.f32.mxu0 0.0
  %3199 = vmatmul.mubr.f32.gmra.mrb[0].mxu0 %v3129
  %v3200 = vpop.f32.mrb[0].mxu0
  %v3201 = vadd.f32 0.0, %v3200
  %v3202 = vpop.f32.mrb[0].mxu0
  %3203 = vdwg.mxu0
  %v3204 = vmul.f32 %v2973, 0.35355338
  %v3205 = vmul.f32 %v3049, 0.35355338
  %v3206 = vmul.f32 %v3125, 0.35355338
  %v3207 = vmul.f32 %v3201, 0.35355338
  %s3208 = scalar_lea.vmem %s1, 1
  %v3209 = vld [vmem:[%s3208] sm:$0x1]
  %v3211 = vlaneseq
  %v3212 = vshrl.u32 %v3211, 7
  %v3213 = vsub.s32 0, %v3212
  %v3214 = vrot.slane %v3209, %v3213
  %v3216 = vadd.f32 %v3204, %v3214
  %v3217 = vadd.f32 %v3205, %v3214
  %v3218 = vadd.f32 %v3206, %v3214
  %v3219 = vadd.f32 %v3207, %v3214
  %v3220 = vsel %vm1099, %v3216, -inf
  %3221 = vmax.xlane.f32.xlu0 %v3220
  %v3222 = vpop.xlane.xlu0 %3221
  %v3223 = vsel %vm1099, %v3217, -inf
  %3224 = vmax.xlane.f32.xlu0 %v3223
  %v3225 = vpop.xlane.xlu0 %3224
  %v3226 = vsel %vm1099, %v3218, -inf
  %3227 = vmax.xlane.f32.xlu0 %v3226
  %v3228 = vpop.xlane.xlu0 %3227
  %v3229 = vsel %vm1099, %v3219, -inf
  %3230 = vmax.xlane.f32.xlu0 %v3229
  %v3231 = vpop.xlane.xlu0 %3230
  %v3232 = vsub.f32 %v3216, %v3222
  %v3233 = vsub.f32 %v3217, %v3225
  %v3234 = vsub.f32 %v3218, %v3228
  %v3235 = vsub.f32 %v3219, %v3231
  %v3236 = vmul.f32 %v3232, 1.442695
  %v3237 = vpow.pop %v3236
  %v3238 = vmul.f32 %v3233, 1.442695
  %v3239 = vpow.pop %v3238
  %v3240 = vmul.f32 %v3234, 1.442695
  %v3241 = vpow.pop %v3240
  %v3242 = vmul.f32 %v3235, 1.442695
  %v3243 = vpow.pop %v3242
  %v3244 = vsel %vm1099, %v3237, 0.0
  %3245 = vadd.xlane.f32.xlu0 %v3244
  %v3246 = vpop.xlane.xlu0 %3245
  %v3247 = vsel %vm1099, %v3239, 0.0
  %3248 = vadd.xlane.f32.xlu0 %v3247
  %v3249 = vpop.xlane.xlu0 %3248
  %v3250 = vsel %vm1099, %v3241, 0.0
  %3251 = vadd.xlane.f32.xlu0 %v3250
  %v3252 = vpop.xlane.xlu0 %3251
  %v3253 = vsel %vm1099, %v3243, 0.0
  %3254 = vadd.xlane.f32.xlu0 %v3253
  %v3255 = vpop.xlane.xlu0 %3254
  %v3256 = vrcp.pop %v3246
  %v3257 = vrcp.pop %v3249
  %v3258 = vrcp.pop %v3252
  %v3259 = vrcp.pop %v3255
  %v3260 = vmul.f32 %v3237, %v3256
  %v3261 = vmul.f32 %v3239, %v3257
  %v3262 = vmul.f32 %v3241, %v3258
  %v3263 = vmul.f32 %v3243, %v3259
  %v3265 = vsel %vm1099, %v3260, 0
  %3267 = vmatprep.subr.mxu0 0.0
  %3268 = vmatpush1.msra.mxu0 %v2687
  %3269 = vmatprep.subr.mxu0 0.0
  %3270 = vmatpush1.msra.mxu0 0.0
  %3271 = vmatprep.subr.mxu0 0.0
  %3272 = vmatpush1.msra.mxu0 0.0
  %3273 = vmatprep.subr.mxu0 0.0
  %3274 = vmatpush1.msra.mxu0 0.0
  %3275 = vmatprep.subr.mxu0 0.0
  %3276 = vmatpush1.msra.mxu0 0.0
  %3277 = vmatprep.subr.mxu0 0.0
  %3278 = vmatpush1.msra.mxu0 0.0
  %3279 = vmatprep.subr.mxu0 0.0
  %3280 = vmatpush1.msra.mxu0 0.0
  %3281 = vmatprep.subr.mxu0 0.0
  %3282 = vmatpush1.msra.mxu0 0.0
  %3283 = vmatprep.subr.mxu0 0.0
  %3284 = vmatpush1.msra.mxu0 0.0
  %3285 = vmatprep.subr.mxu0 0.0
  %3286 = vmatpush1.msra.mxu0 0.0
  %3287 = vmatprep.subr.mxu0 0.0
  %3288 = vmatpush1.msra.mxu0 0.0
  %3289 = vmatprep.subr.mxu0 0.0
  %3290 = vmatpush1.msra.mxu0 0.0
  %3291 = vmatprep.subr.mxu0 0.0
  %3292 = vmatpush1.msra.mxu0 0.0
  %3293 = vmatprep.subr.mxu0 0.0
  %3294 = vmatpush1.msra.mxu0 0.0
  %3295 = vmatprep.subr.mxu0 0.0
  %3296 = vmatpush1.msra.mxu0 0.0
  %3297 = vmatprep.subr.mxu0 0.0
  %3298 = vmatpush1.msra.mxu0 0.0
  %3299 = vmatprep.subr.mxu0 0.0
  %3300 = vmatpush1.msra.mxu0 0.0
  %3301 = vmatprep.subr.mxu0 0.0
  %3302 = vmatpush1.msra.mxu0 0.0
  %3303 = vmatprep.subr.mxu0 0.0
  %3304 = vmatpush1.msra.mxu0 0.0
  %3305 = vmatprep.subr.mxu0 0.0
  %3306 = vmatpush1.msra.mxu0 0.0
  %3307 = vmatprep.subr.mxu0 0.0
  %3308 = vmatpush1.msra.mxu0 0.0
  %3309 = vmatprep.subr.mxu0 0.0
  %3310 = vmatpush1.msra.mxu0 0.0
  %3311 = vmatprep.subr.mxu0 0.0
  %3312 = vmatpush1.msra.mxu0 0.0
  %3313 = vmatprep.subr.mxu0 0.0
  %3314 = vmatpush1.msra.mxu0 0.0
  %3315 = vmatprep.subr.mxu0 0.0
  %3316 = vmatpush1.msra.mxu0 0.0
  %3317 = vmatprep.subr.mxu0 0.0
  %3318 = vmatpush1.msra.mxu0 0.0
  %3319 = vmatprep.subr.mxu0 0.0
  %3320 = vmatpush1.msra.mxu0 0.0
  %3321 = vmatprep.subr.mxu0 0.0
  %3322 = vmatpush1.msra.mxu0 0.0
  %3323 = vmatprep.subr.mxu0 0.0
  %3324 = vmatpush1.msra.mxu0 0.0
  %3325 = vmatprep.subr.mxu0 0.0
  %3326 = vmatpush1.msra.mxu0 0.0
  %3327 = vmatprep.subr.mxu0 0.0
  %3328 = vmatpush1.msra.mxu0 0.0
  %3329 = vmatprep.subr.mxu0 0.0
  %3330 = vmatpush1.msra.mxu0 0.0
  %3331 = vmatprep.mubr.f32.mxu0 0.0
  %3332 = vmatmul.mubr.f32.gmra.mrb[0].mxu0 %v3265
  %v3333 = vpop.f32.mrb[0].mxu0
  %v3334 = vadd.f32 0.0, %v3333
  %v3335 = vpop.f32.mrb[0].mxu0
  %3336 = vdwg.mxu0
  %v3338 = vsel %vm1099, %v3261, 0
  %3340 = vmatprep.subr.mxu0 0.0
  %3341 = vmatpush1.msra.mxu0 %v2757
  %3342 = vmatprep.subr.mxu0 0.0
  %3343 = vmatpush1.msra.mxu0 0.0
  %3344 = vmatprep.subr.mxu0 0.0
  %3345 = vmatpush1.msra.mxu0 0.0
  %3346 = vmatprep.subr.mxu0 0.0
  %3347 = vmatpush1.msra.mxu0 0.0
  %3348 = vmatprep.subr.mxu0 0.0
  %3349 = vmatpush1.msra.mxu0 0.0
  %3350 = vmatprep.subr.mxu0 0.0
  %3351 = vmatpush1.msra.mxu0 0.0
  %3352 = vmatprep.subr.mxu0 0.0
  %3353 = vmatpush1.msra.mxu0 0.0
  %3354 = vmatprep.subr.mxu0 0.0
  %3355 = vmatpush1.msra.mxu0 0.0
  %3356 = vmatprep.subr.mxu0 0.0
  %3357 = vmatpush1.msra.mxu0 0.0
  %3358 = vmatprep.subr.mxu0 0.0
  %3359 = vmatpush1.msra.mxu0 0.0
  %3360 = vmatprep.subr.mxu0 0.0
  %3361 = vmatpush1.msra.mxu0 0.0
  %3362 = vmatprep.subr.mxu0 0.0
  %3363 = vmatpush1.msra.mxu0 0.0
  %3364 = vmatprep.subr.mxu0 0.0
  %3365 = vmatpush1.msra.mxu0 0.0
  %3366 = vmatprep.subr.mxu0 0.0
  %3367 = vmatpush1.msra.mxu0 0.0
  %3368 = vmatprep.subr.mxu0 0.0
  %3369 = vmatpush1.msra.mxu0 0.0
  %3370 = vmatprep.subr.mxu0 0.0
  %3371 = vmatpush1.msra.mxu0 0.0
  %3372 = vmatprep.subr.mxu0 0.0
  %3373 = vmatpush1.msra.mxu0 0.0
  %3374 = vmatprep.subr.mxu0 0.0
  %3375 = vmatpush1.msra.mxu0 0.0
  %3376 = vmatprep.subr.mxu0 0.0
  %3377 = vmatpush1.msra.mxu0 0.0
  %3378 = vmatprep.subr.mxu0 0.0
  %3379 = vmatpush1.msra.mxu0 0.0
  %3380 = vmatprep.subr.mxu0 0.0
  %3381 = vmatpush1.msra.mxu0 0.0
  %3382 = vmatprep.subr.mxu0 0.0
  %3383 = vmatpush1.msra.mxu0 0.0
  %3384 = vmatprep.subr.mxu0 0.0
  %3385 = vmatpush1.msra.mxu0 0.0
  %3386 = vmatprep.subr.mxu0 0.0
  %3387 = vmatpush1.msra.mxu0 0.0
  %3388 = vmatprep.subr.mxu0 0.0
  %3389 = vmatpush1.msra.mxu0 0.0
  %3390 = vmatprep.subr.mxu0 0.0
  %3391 = vmatpush1.msra.mxu0 0.0
  %3392 = vmatprep.subr.mxu0 0.0
  %3393 = vmatpush1.msra.mxu0 0.0
  %3394 = vmatprep.subr.mxu0 0.0
  %3395 = vmatpush1.msra.mxu0 0.0
  %3396 = vmatprep.subr.mxu0 0.0
  %3397 = vmatpush1.msra.mxu0 0.0
  %3398 = vmatprep.subr.mxu0 0.0
  %3399 = vmatpush1.msra.mxu0 0.0
  %3400 = vmatprep.subr.mxu0 0.0
  %3401 = vmatpush1.msra.mxu0 0.0
  %3402 = vmatprep.subr.mxu0 0.0
  %3403 = vmatpush1.msra.mxu0 0.0
  %3404 = vmatprep.mubr.f32.mxu0 0.0
  %3405 = vmatmul.mubr.f32.gmra.mrb[0].mxu0 %v3338
  %v3406 = vpop.f32.mrb[0].mxu0
  %v3407 = vadd.f32 0.0, %v3406
  %v3408 = vpop.f32.mrb[0].mxu0
  %3409 = vdwg.mxu0
  %v3411 = vsel %vm1099, %v3262, 0
  %3413 = vmatprep.subr.mxu0 0.0
  %3414 = vmatpush1.msra.mxu0 %v2827
  %3415 = vmatprep.subr.mxu0 0.0
  %3416 = vmatpush1.msra.mxu0 0.0
  %3417 = vmatprep.subr.mxu0 0.0
  %3418 = vmatpush1.msra.mxu0 0.0
  %3419 = vmatprep.subr.mxu0 0.0
  %3420 = vmatpush1.msra.mxu0 0.0
  %3421 = vmatprep.subr.mxu0 0.0
  %3422 = vmatpush1.msra.mxu0 0.0
  %3423 = vmatprep.subr.mxu0 0.0
  %3424 = vmatpush1.msra.mxu0 0.0
  %3425 = vmatprep.subr.mxu0 0.0
  %3426 = vmatpush1.msra.mxu0 0.0
  %3427 = vmatprep.subr.mxu0 0.0
  %3428 = vmatpush1.msra.mxu0 0.0
  %3429 = vmatprep.subr.mxu0 0.0
  %3430 = vmatpush1.msra.mxu0 0.0
  %3431 = vmatprep.subr.mxu0 0.0
  %3432 = vmatpush1.msra.mxu0 0.0
  %3433 = vmatprep.subr.mxu0 0.0
  %3434 = vmatpush1.msra.mxu0 0.0
  %3435 = vmatprep.subr.mxu0 0.0
  %3436 = vmatpush1.msra.mxu0 0.0
  %3437 = vmatprep.subr.mxu0 0.0
  %3438 = vmatpush1.msra.mxu0 0.0
  %3439 = vmatprep.subr.mxu0 0.0
  %3440 = vmatpush1.msra.mxu0 0.0
  %3441 = vmatprep.subr.mxu0 0.0
  %3442 = vmatpush1.msra.mxu0 0.0
  %3443 = vmatprep.subr.mxu0 0.0
  %3444 = vmatpush1.msra.mxu0 0.0
  %3445 = vmatprep.subr.mxu0 0.0
  %3446 = vmatpush1.msra.mxu0 0.0
  %3447 = vmatprep.subr.mxu0 0.0
  %3448 = vmatpush1.msra.mxu0 0.0
  %3449 = vmatprep.subr.mxu0 0.0
  %3450 = vmatpush1.msra.mxu0 0.0
  %3451 = vmatprep.subr.mxu0 0.0
  %3452 = vmatpush1.msra.mxu0 0.0
  %3453 = vmatprep.subr.mxu0 0.0
  %3454 = vmatpush1.msra.mxu0 0.0
  %3455 = vmatprep.subr.mxu0 0.0
  %3456 = vmatpush1.msra.mxu0 0.0
  %3457 = vmatprep.subr.mxu0 0.0
  %3458 = vmatpush1.msra.mxu0 0.0
  %3459 = vmatprep.subr.mxu0 0.0
  %3460 = vmatpush1.msra.mxu0 0.0
  %3461 = vmatprep.subr.mxu0 0.0
  %3462 = vmatpush1.msra.mxu0 0.0
  %3463 = vmatprep.subr.mxu0 0.0
  %3464 = vmatpush1.msra.mxu0 0.0
  %3465 = vmatprep.subr.mxu0 0.0
  %3466 = vmatpush1.msra.mxu0 0.0
  %3467 = vmatprep.subr.mxu0 0.0
  %3468 = vmatpush1.msra.mxu0 0.0
  %3469 = vmatprep.subr.mxu0 0.0
  %3470 = vmatpush1.msra.mxu0 0.0
  %3471 = vmatprep.subr.mxu0 0.0
  %3472 = vmatpush1.msra.mxu0 0.0
  %3473 = vmatprep.subr.mxu0 0.0
  %3474 = vmatpush1.msra.mxu0 0.0
  %3475 = vmatprep.subr.mxu0 0.0
  %3476 = vmatpush1.msra.mxu0 0.0
  %3477 = vmatprep.mubr.f32.mxu0 0.0
  %3478 = vmatmul.mubr.f32.gmra.mrb[0].mxu0 %v3411
  %v3479 = vpop.f32.mrb[0].mxu0
  %v3480 = vadd.f32 0.0, %v3479
  %v3481 = vpop.f32.mrb[0].mxu0
  %3482 = vdwg.mxu0
  %v3484 = vsel %vm1099, %v3263, 0
  %3486 = vmatprep.subr.mxu0 0.0
  %3487 = vmatpush1.msra.mxu0 %v2897
  %3488 = vmatprep.subr.mxu0 0.0
  %3489 = vmatpush1.msra.mxu0 0.0
  %3490 = vmatprep.subr.mxu0 0.0
  %3491 = vmatpush1.msra.mxu0 0.0
  %3492 = vmatprep.subr.mxu0 0.0
  %3493 = vmatpush1.msra.mxu0 0.0
  %3494 = vmatprep.subr.mxu0 0.0
  %3495 = vmatpush1.msra.mxu0 0.0
  %3496 = vmatprep.subr.mxu0 0.0
  %3497 = vmatpush1.msra.mxu0 0.0
  %3498 = vmatprep.subr.mxu0 0.0
  %3499 = vmatpush1.msra.mxu0 0.0
  %3500 = vmatprep.subr.mxu0 0.0
  %3501 = vmatpush1.msra.mxu0 0.0
  %3502 = vmatprep.subr.mxu0 0.0
  %3503 = vmatpush1.msra.mxu0 0.0
  %3504 = vmatprep.subr.mxu0 0.0
  %3505 = vmatpush1.msra.mxu0 0.0
  %3506 = vmatprep.subr.mxu0 0.0
  %3507 = vmatpush1.msra.mxu0 0.0
  %3508 = vmatprep.subr.mxu0 0.0
  %3509 = vmatpush1.msra.mxu0 0.0
  %3510 = vmatprep.subr.mxu0 0.0
  %3511 = vmatpush1.msra.mxu0 0.0
  %3512 = vmatprep.subr.mxu0 0.0
  %3513 = vmatpush1.msra.mxu0 0.0
  %3514 = vmatprep.subr.mxu0 0.0
  %3515 = vmatpush1.msra.mxu0 0.0
  %3516 = vmatprep.subr.mxu0 0.0
  %3517 = vmatpush1.msra.mxu0 0.0
  %3518 = vmatprep.subr.mxu0 0.0
  %3519 = vmatpush1.msra.mxu0 0.0
  %3520 = vmatprep.subr.mxu0 0.0
  %3521 = vmatpush1.msra.mxu0 0.0
  %3522 = vmatprep.subr.mxu0 0.0
  %3523 = vmatpush1.msra.mxu0 0.0
  %3524 = vmatprep.subr.mxu0 0.0
  %3525 = vmatpush1.msra.mxu0 0.0
  %3526 = vmatprep.subr.mxu0 0.0
  %3527 = vmatpush1.msra.mxu0 0.0
  %3528 = vmatprep.subr.mxu0 0.0
  %3529 = vmatpush1.msra.mxu0 0.0
  %3530 = vmatprep.subr.mxu0 0.0
  %3531 = vmatpush1.msra.mxu0 0.0
  %3532 = vmatprep.subr.mxu0 0.0
  %3533 = vmatpush1.msra.mxu0 0.0
  %3534 = vmatprep.subr.mxu0 0.0
  %3535 = vmatpush1.msra.mxu0 0.0
  %3536 = vmatprep.subr.mxu0 0.0
  %3537 = vmatpush1.msra.mxu0 0.0
  %3538 = vmatprep.subr.mxu0 0.0
  %3539 = vmatpush1.msra.mxu0 0.0
  %3540 = vmatprep.subr.mxu0 0.0
  %3541 = vmatpush1.msra.mxu0 0.0
  %3542 = vmatprep.subr.mxu0 0.0
  %3543 = vmatpush1.msra.mxu0 0.0
  %3544 = vmatprep.subr.mxu0 0.0
  %3545 = vmatpush1.msra.mxu0 0.0
  %3546 = vmatprep.subr.mxu0 0.0
  %3547 = vmatpush1.msra.mxu0 0.0
  %3548 = vmatprep.subr.mxu0 0.0
  %3549 = vmatpush1.msra.mxu0 0.0
  %3550 = vmatprep.mubr.f32.mxu0 0.0
  %3551 = vmatmul.mubr.f32.gmra.mrb[0].mxu0 %v3484
  %v3552 = vpop.f32.mrb[0].mxu0
  %v3553 = vadd.f32 0.0, %v3552
  %v3554 = vpop.f32.mrb[0].mxu0
  %3555 = vdwg.mxu0
  %v3557 = vsel %vm1099, %v3407, 0
  %3559 = vmatprep.subr.mxu0 0.0
  %3560 = vmatpush1.msra.mxu0 %v180
  %3561 = vmatprep.subr.mxu0 0.0
  %3562 = vmatpush1.msra.mxu0 0.0
  %3563 = vmatprep.subr.mxu0 0.0
  %3564 = vmatpush1.msra.mxu0 0.0
  %3565 = vmatprep.subr.mxu0 0.0
  %3566 = vmatpush1.msra.mxu0 0.0
  %3567 = vmatprep.subr.mxu0 0.0
  %3568 = vmatpush1.msra.mxu0 0.0
  %3569 = vmatprep.subr.mxu0 0.0
  %3570 = vmatpush1.msra.mxu0 0.0
  %3571 = vmatprep.subr.mxu0 0.0
  %3572 = vmatpush1.msra.mxu0 0.0
  %3573 = vmatprep.subr.mxu0 0.0
  %3574 = vmatpush1.msra.mxu0 0.0
  %3575 = vmatprep.subr.mxu0 0.0
  %3576 = vmatpush1.msra.mxu0 0.0
  %3577 = vmatprep.subr.mxu0 0.0
  %3578 = vmatpush1.msra.mxu0 0.0
  %3579 = vmatprep.subr.mxu0 0.0
  %3580 = vmatpush1.msra.mxu0 0.0
  %3581 = vmatprep.subr.mxu0 0.0
  %3582 = vmatpush1.msra.mxu0 0.0
  %3583 = vmatprep.subr.mxu0 0.0
  %3584 = vmatpush1.msra.mxu0 0.0
  %3585 = vmatprep.subr.mxu0 0.0
  %3586 = vmatpush1.msra.mxu0 0.0
  %3587 = vmatprep.subr.mxu0 0.0
  %3588 = vmatpush1.msra.mxu0 0.0
  %3589 = vmatprep.subr.mxu0 0.0
  %3590 = vmatpush1.msra.mxu0 0.0
  %3591 = vmatprep.subr.mxu0 0.0
  %3592 = vmatpush1.msra.mxu0 0.0
  %3593 = vmatprep.subr.mxu0 0.0
  %3594 = vmatpush1.msra.mxu0 0.0
  %3595 = vmatprep.subr.mxu0 0.0
  %3596 = vmatpush1.msra.mxu0 0.0
  %3597 = vmatprep.subr.mxu0 0.0
  %3598 = vmatpush1.msra.mxu0 0.0
  %3599 = vmatprep.subr.mxu0 0.0
  %3600 = vmatpush1.msra.mxu0 0.0
  %3601 = vmatprep.subr.mxu0 0.0
  %3602 = vmatpush1.msra.mxu0 0.0
  %3603 = vmatprep.subr.mxu0 0.0
  %3604 = vmatpush1.msra.mxu0 0.0
  %3605 = vmatprep.subr.mxu0 0.0
  %3606 = vmatpush1.msra.mxu0 0.0
  %3607 = vmatprep.subr.mxu0 0.0
  %3608 = vmatpush1.msra.mxu0 0.0
  %3609 = vmatprep.subr.mxu0 0.0
  %3610 = vmatpush1.msra.mxu0 0.0
  %3611 = vmatprep.subr.mxu0 0.0
  %3612 = vmatpush1.msra.mxu0 0.0
  %3613 = vmatprep.subr.mxu0 0.0
  %3614 = vmatpush1.msra.mxu0 0.0
  %3615 = vmatprep.subr.mxu0 0.0
  %3616 = vmatpush1.msra.mxu0 0.0
  %3617 = vmatprep.subr.mxu0 0.0
  %3618 = vmatpush1.msra.mxu0 0.0
  %3619 = vmatprep.subr.mxu0 0.0
  %3620 = vmatpush1.msra.mxu0 0.0
  %3621 = vmatprep.subr.mxu0 0.0
  %3622 = vmatpush1.msra.mxu0 0.0
  %3623 = vmatprep.mubr.f32.mxu0 0.0
  %3624 = vmatmul.mubr.f32.gmra.mrb[0].mxu0 %v3557
  %v3625 = vpop.f32.mrb[0].mxu0
  %v3626 = vadd.f32 0.0, %v3625
  %v3627 = vpop.f32.mrb[0].mxu0
  %3628 = vdwg.mxu0
  %v3630 = vsel %vm1099, %v3334, 0
  %3632 = vmatprep.subr.mxu0 0.0
  %3633 = vmatpush1.msra.mxu0 %v179
  %3634 = vmatprep.subr.mxu0 0.0
  %3635 = vmatpush1.msra.mxu0 0.0
  %3636 = vmatprep.subr.mxu0 0.0
  %3637 = vmatpush1.msra.mxu0 0.0
  %3638 = vmatprep.subr.mxu0 0.0
  %3639 = vmatpush1.msra.mxu0 0.0
  %3640 = vmatprep.subr.mxu0 0.0
  %3641 = vmatpush1.msra.mxu0 0.0
  %3642 = vmatprep.subr.mxu0 0.0
  %3643 = vmatpush1.msra.mxu0 0.0
  %3644 = vmatprep.subr.mxu0 0.0
  %3645 = vmatpush1.msra.mxu0 0.0
  %3646 = vmatprep.subr.mxu0 0.0
  %3647 = vmatpush1.msra.mxu0 0.0
  %3648 = vmatprep.subr.mxu0 0.0
  %3649 = vmatpush1.msra.mxu0 0.0
  %3650 = vmatprep.subr.mxu0 0.0
  %3651 = vmatpush1.msra.mxu0 0.0
  %3652 = vmatprep.subr.mxu0 0.0
  %3653 = vmatpush1.msra.mxu0 0.0
  %3654 = vmatprep.subr.mxu0 0.0
  %3655 = vmatpush1.msra.mxu0 0.0
  %3656 = vmatprep.subr.mxu0 0.0
  %3657 = vmatpush1.msra.mxu0 0.0
  %3658 = vmatprep.subr.mxu0 0.0
  %3659 = vmatpush1.msra.mxu0 0.0
  %3660 = vmatprep.subr.mxu0 0.0
  %3661 = vmatpush1.msra.mxu0 0.0
  %3662 = vmatprep.subr.mxu0 0.0
  %3663 = vmatpush1.msra.mxu0 0.0
  %3664 = vmatprep.subr.mxu0 0.0
  %3665 = vmatpush1.msra.mxu0 0.0
  %3666 = vmatprep.subr.mxu0 0.0
  %3667 = vmatpush1.msra.mxu0 0.0
  %3668 = vmatprep.subr.mxu0 0.0
  %3669 = vmatpush1.msra.mxu0 0.0
  %3670 = vmatprep.subr.mxu0 0.0
  %3671 = vmatpush1.msra.mxu0 0.0
  %3672 = vmatprep.subr.mxu0 0.0
  %3673 = vmatpush1.msra.mxu0 0.0
  %3674 = vmatprep.subr.mxu0 0.0
  %3675 = vmatpush1.msra.mxu0 0.0
  %3676 = vmatprep.subr.mxu0 0.0
  %3677 = vmatpush1.msra.mxu0 0.0
  %3678 = vmatprep.subr.mxu0 0.0
  %3679 = vmatpush1.msra.mxu0 0.0
  %3680 = vmatprep.subr.mxu0 0.0
  %3681 = vmatpush1.msra.mxu0 0.0
  %3682 = vmatprep.subr.mxu0 0.0
  %3683 = vmatpush1.msra.mxu0 0.0
  %3684 = vmatprep.subr.mxu0 0.0
  %3685 = vmatpush1.msra.mxu0 0.0
  %3686 = vmatprep.subr.mxu0 0.0
  %3687 = vmatpush1.msra.mxu0 0.0
  %3688 = vmatprep.subr.mxu0 0.0
  %3689 = vmatpush1.msra.mxu0 0.0
  %3690 = vmatprep.subr.mxu0 0.0
  %3691 = vmatpush1.msra.mxu0 0.0
  %3692 = vmatprep.subr.mxu0 0.0
  %3693 = vmatpush1.msra.mxu0 0.0
  %3694 = vmatprep.subr.mxu0 0.0
  %3695 = vmatpush1.msra.mxu0 0.0
  %3696 = vmatprep.mubr.f32.mxu0 0.0
  %3697 = vmatmul.mubr.f32.gmra.mrb[0].mxu0 %v3630
  %v3698 = vpop.f32.mrb[0].mxu0
  %v3699 = vadd.f32 %v3626, %v3698
  %v3700 = vpop.f32.mrb[0].mxu0
  %3701 = vdwg.mxu0
  %v3703 = vsel %vm1099, %v3480, 0
  %3705 = vmatprep.subr.mxu0 0.0
  %3706 = vmatpush1.msra.mxu0 %v181
  %3707 = vmatprep.subr.mxu0 0.0
  %3708 = vmatpush1.msra.mxu0 0.0
  %3709 = vmatprep.subr.mxu0 0.0
  %3710 = vmatpush1.msra.mxu0 0.0
  %3711 = vmatprep.subr.mxu0 0.0
  %3712 = vmatpush1.msra.mxu0 0.0
  %3713 = vmatprep.subr.mxu0 0.0
  %3714 = vmatpush1.msra.mxu0 0.0
  %3715 = vmatprep.subr.mxu0 0.0
  %3716 = vmatpush1.msra.mxu0 0.0
  %3717 = vmatprep.subr.mxu0 0.0
  %3718 = vmatpush1.msra.mxu0 0.0
  %3719 = vmatprep.subr.mxu0 0.0
  %3720 = vmatpush1.msra.mxu0 0.0
  %3721 = vmatprep.subr.mxu0 0.0
  %3722 = vmatpush1.msra.mxu0 0.0
  %3723 = vmatprep.subr.mxu0 0.0
  %3724 = vmatpush1.msra.mxu0 0.0
  %3725 = vmatprep.subr.mxu0 0.0
  %3726 = vmatpush1.msra.mxu0 0.0
  %3727 = vmatprep.subr.mxu0 0.0
  %3728 = vmatpush1.msra.mxu0 0.0
  %3729 = vmatprep.subr.mxu0 0.0
  %3730 = vmatpush1.msra.mxu0 0.0
  %3731 = vmatprep.subr.mxu0 0.0
  %3732 = vmatpush1.msra.mxu0 0.0
  %3733 = vmatprep.subr.mxu0 0.0
  %3734 = vmatpush1.msra.mxu0 0.0
  %3735 = vmatprep.subr.mxu0 0.0
  %3736 = vmatpush1.msra.mxu0 0.0
  %3737 = vmatprep.subr.mxu0 0.0
  %3738 = vmatpush1.msra.mxu0 0.0
  %3739 = vmatprep.subr.mxu0 0.0
  %3740 = vmatpush1.msra.mxu0 0.0
  %3741 = vmatprep.subr.mxu0 0.0
  %3742 = vmatpush1.msra.mxu0 0.0
  %3743 = vmatprep.subr.mxu0 0.0
  %3744 = vmatpush1.msra.mxu0 0.0
  %3745 = vmatprep.subr.mxu0 0.0
  %3746 = vmatpush1.msra.mxu0 0.0
  %3747 = vmatprep.subr.mxu0 0.0
  %3748 = vmatpush1.msra.mxu0 0.0
  %3749 = vmatprep.subr.mxu0 0.0
  %3750 = vmatpush1.msra.mxu0 0.0
  %3751 = vmatprep.subr.mxu0 0.0
  %3752 = vmatpush1.msra.mxu0 0.0
  %3753 = vmatprep.subr.mxu0 0.0
  %3754 = vmatpush1.msra.mxu0 0.0
  %3755 = vmatprep.subr.mxu0 0.0
  %3756 = vmatpush1.msra.mxu0 0.0
  %3757 = vmatprep.subr.mxu0 0.0
  %3758 = vmatpush1.msra.mxu0 0.0
  %3759 = vmatprep.subr.mxu0 0.0
  %3760 = vmatpush1.msra.mxu0 0.0
  %3761 = vmatprep.subr.mxu0 0.0
  %3762 = vmatpush1.msra.mxu0 0.0
  %3763 = vmatprep.subr.mxu0 0.0
  %3764 = vmatpush1.msra.mxu0 0.0
  %3765 = vmatprep.subr.mxu0 0.0
  %3766 = vmatpush1.msra.mxu0 0.0
  %3767 = vmatprep.subr.mxu0 0.0
  %3768 = vmatpush1.msra.mxu0 0.0
  %3769 = vmatprep.mubr.f32.mxu0 0.0
  %3770 = vmatmul.mubr.f32.gmra.mrb[0].mxu0 %v3703
  %v3771 = vpop.f32.mrb[0].mxu0
  %v3772 = vadd.f32 0.0, %v3771
  %v3773 = vpop.f32.mrb[0].mxu0
  %3774 = vdwg.mxu0
  %v3775 = vadd.f32 %v3699, %v3772
  %v3777 = vsel %vm1099, %v3553, 0
  %3779 = vmatprep.subr.mxu0 0.0
  %3780 = vmatpush1.msra.mxu0 %v182
  %3781 = vmatprep.subr.mxu0 0.0
  %3782 = vmatpush1.msra.mxu0 0.0
  %3783 = vmatprep.subr.mxu0 0.0
  %3784 = vmatpush1.msra.mxu0 0.0
  %3785 = vmatprep.subr.mxu0 0.0
  %3786 = vmatpush1.msra.mxu0 0.0
  %3787 = vmatprep.subr.mxu0 0.0
  %3788 = vmatpush1.msra.mxu0 0.0
  %3789 = vmatprep.subr.mxu0 0.0
  %3790 = vmatpush1.msra.mxu0 0.0
  %3791 = vmatprep.subr.mxu0 0.0
  %3792 = vmatpush1.msra.mxu0 0.0
  %3793 = vmatprep.subr.mxu0 0.0
  %3794 = vmatpush1.msra.mxu0 0.0
  %3795 = vmatprep.subr.mxu0 0.0
  %3796 = vmatpush1.msra.mxu0 0.0
  %3797 = vmatprep.subr.mxu0 0.0
  %3798 = vmatpush1.msra.mxu0 0.0
  %3799 = vmatprep.subr.mxu0 0.0
  %3800 = vmatpush1.msra.mxu0 0.0
  %3801 = vmatprep.subr.mxu0 0.0
  %3802 = vmatpush1.msra.mxu0 0.0
  %3803 = vmatprep.subr.mxu0 0.0
  %3804 = vmatpush1.msra.mxu0 0.0
  %3805 = vmatprep.subr.mxu0 0.0
  %3806 = vmatpush1.msra.mxu0 0.0
  %3807 = vmatprep.subr.mxu0 0.0
  %3808 = vmatpush1.msra.mxu0 0.0
  %3809 = vmatprep.subr.mxu0 0.0
  %3810 = vmatpush1.msra.mxu0 0.0
  %3811 = vmatprep.subr.mxu0 0.0
  %3812 = vmatpush1.msra.mxu0 0.0
  %3813 = vmatprep.subr.mxu0 0.0
  %3814 = vmatpush1.msra.mxu0 0.0
  %3815 = vmatprep.subr.mxu0 0.0
  %3816 = vmatpush1.msra.mxu0 0.0
  %3817 = vmatprep.subr.mxu0 0.0
  %3818 = vmatpush1.msra.mxu0 0.0
  %3819 = vmatprep.subr.mxu0 0.0
  %3820 = vmatpush1.msra.mxu0 0.0
  %3821 = vmatprep.subr.mxu0 0.0
  %3822 = vmatpush1.msra.mxu0 0.0
  %3823 = vmatprep.subr.mxu0 0.0
  %3824 = vmatpush1.msra.mxu0 0.0
  %3825 = vmatprep.subr.mxu0 0.0
  %3826 = vmatpush1.msra.mxu0 0.0
  %3827 = vmatprep.subr.mxu0 0.0
  %3828 = vmatpush1.msra.mxu0 0.0
  %3829 = vmatprep.subr.mxu0 0.0
  %3830 = vmatpush1.msra.mxu0 0.0
  %3831 = vmatprep.subr.mxu0 0.0
  %3832 = vmatpush1.msra.mxu0 0.0
  %3833 = vmatprep.subr.mxu0 0.0
  %3834 = vmatpush1.msra.mxu0 0.0
  %3835 = vmatprep.subr.mxu0 0.0
  %3836 = vmatpush1.msra.mxu0 0.0
  %3837 = vmatprep.subr.mxu0 0.0
  %3838 = vmatpush1.msra.mxu0 0.0
  %3839 = vmatprep.subr.mxu0 0.0
  %3840 = vmatpush1.msra.mxu0 0.0
  %3841 = vmatprep.subr.mxu0 0.0
  %3842 = vmatpush1.msra.mxu0 0.0
  %3843 = vmatprep.mubr.f32.mxu0 0.0
  %3844 = vmatmul.mubr.f32.gmra.mrb[0].mxu0 %v3777
  %v3845 = vpop.f32.mrb[0].mxu0
  %v3846 = vadd.f32 0.0, %v3845
  %v3847 = vpop.f32.mrb[0].mxu0
  %3848 = vdwg.mxu0
  %v3849 = vadd.f32 %v3775, %v3846
  %v3850 = vadd.f32 %v3849, %v2053
  %3851 = vst.msk [vmem:[#allocation2 + $0x8] sm:$0xff] %vm75, %v3850
  %v3852 = vld [vmem:[#allocation2] sm:$0xff]
  %v3853 = vld [vmem:[#allocation2 + $0x8] sm:$0xff]
  %v3854 = vadd.f32 %v117, %v3852
  %v3855 = vadd.f32 %v118, %v3853
  %v3856 = vld [vmem:[%s12] sm:$0x1]
  %v3857 = vld [vmem:[%s13] sm:$0x1]
  %v3858 = vsel %vm75, %v3854, 0.0
  %3859 = vadd.xlane.f32.xlu0 %v3858
  %v3860 = vpop.xlane.xlu0 %3859
  %v3861 = vsel %vm75, %v3855, 0.0
  %3862 = vadd.xlane.f32.xlu0 %v3861
  %v3863 = vpop.xlane.xlu0 %3862
  %v3864 = vmul.f32 %v3860, %v82
  %v3865 = vmul.f32 %v3863, %v82
  %v3866 = vsub.f32 %v3854, %v3864
  %v3867 = vsub.f32 %v3855, %v3865
  %v3868 = vmul.f32 %v3866, %v3866
  %v3869 = vmul.f32 %v3867, %v3867
  %v3870 = vsel %vm75, %v3868, 0.0
  %3871 = vadd.xlane.f32.xlu0 %v3870
  %v3872 = vpop.xlane.xlu0 %3871
  %v3873 = vsel %vm75, %v3869, 0.0
  %3874 = vadd.xlane.f32.xlu0 %v3873
  %v3875 = vpop.xlane.xlu0 %3874
  %v3876 = vmul.f32 %v3872, %v82
  %v3877 = vmul.f32 %v3875, %v82
  %v3878 = vadd.f32 %v3876, 1e-12
  %v3879 = vadd.f32 %v3877, 1e-12
  %v3880 = vrsqrt.pop %v3878
  %v3881 = vrsqrt.pop %v3879
  %v3882 = vmul.f32 %v3866, %v3880
  %v3883 = vmul.f32 %v3867, %v3881
  %v3885 = vlaneseq
  %v3886 = vshrl.u32 %v3885, 7
  %v3887 = vsub.s32 0, %v3886
  %v3888 = vrot.slane %v3856, %v3887
  %v3890 = vmul.f32 %v3882, %v3888
  %v3891 = vmul.f32 %v3883, %v3888
  %v3893 = vlaneseq
  %v3894 = vshrl.u32 %v3893, 7
  %v3895 = vsub.s32 0, %v3894
  %v3896 = vrot.slane %v3857, %v3895
  %v3898 = vadd.f32 %v3890, %v3896
  %v3899 = vadd.f32 %v3891, %v3896
  %v3900 = vld [vmem:[%s14] sm:$0xff]
  %v3901 = vld [vmem:[%s14 + $0x8] sm:$0xff]
  %v3902 = vld [vmem:[%s14 + $0x10] sm:$0xff]
  %v3903 = vld [vmem:[%s14 + $0x18] sm:$0xff]
  %v3904 = vld [vmem:[%s15] sm:$0x1]
  %v3906 = vlaneseq
  %v3907 = vshrl.u32 %v3906, 7
  %v3908 = vsub.s32 0, %v3907
  %v3909 = vrot.slane %v3904, %v3908
  %v3912 = vsel %vm75, %v3898, 0
  %v3915 = vsel %vm75, %v3899, 0
  %3917 = vmatprep.subr.mxu0 0.0
  %3918 = vmatpush1.msra.mxu0 %v3900
  %3919 = vmatprep.subr.mxu0 0.0
  %3920 = vmatpush1.msra.mxu0 %v3901
  %3921 = vmatprep.subr.mxu0 0.0
  %3922 = vmatpush1.msra.mxu0 %v3902
  %3923 = vmatprep.subr.mxu0 0.0
  %3924 = vmatpush1.msra.mxu0 %v3903
  %3925 = vmatprep.subr.mxu0 0.0
  %3926 = vmatpush1.msra.mxu0 0.0
  %3927 = vmatprep.subr.mxu0 0.0
  %3928 = vmatpush1.msra.mxu0 0.0
  %3929 = vmatprep.subr.mxu0 0.0
  %3930 = vmatpush1.msra.mxu0 0.0
  %3931 = vmatprep.subr.mxu0 0.0
  %3932 = vmatpush1.msra.mxu0 0.0
  %3933 = vmatprep.subr.mxu0 0.0
  %3934 = vmatpush1.msra.mxu0 0.0
  %3935 = vmatprep.subr.mxu0 0.0
  %3936 = vmatpush1.msra.mxu0 0.0
  %3937 = vmatprep.subr.mxu0 0.0
  %3938 = vmatpush1.msra.mxu0 0.0
  %3939 = vmatprep.subr.mxu0 0.0
  %3940 = vmatpush1.msra.mxu0 0.0
  %3941 = vmatprep.subr.mxu0 0.0
  %3942 = vmatpush1.msra.mxu0 0.0
  %3943 = vmatprep.subr.mxu0 0.0
  %3944 = vmatpush1.msra.mxu0 0.0
  %3945 = vmatprep.subr.mxu0 0.0
  %3946 = vmatpush1.msra.mxu0 0.0
  %3947 = vmatprep.subr.mxu0 0.0
  %3948 = vmatpush1.msra.mxu0 0.0
  %3949 = vmatprep.subr.mxu0 0.0
  %3950 = vmatpush1.msra.mxu0 0.0
  %3951 = vmatprep.subr.mxu0 0.0
  %3952 = vmatpush1.msra.mxu0 0.0
  %3953 = vmatprep.subr.mxu0 0.0
  %3954 = vmatpush1.msra.mxu0 0.0
  %3955 = vmatprep.subr.mxu0 0.0
  %3956 = vmatpush1.msra.mxu0 0.0
  %3957 = vmatprep.subr.mxu0 0.0
  %3958 = vmatpush1.msra.mxu0 0.0
  %3959 = vmatprep.subr.mxu0 0.0
  %3960 = vmatpush1.msra.mxu0 0.0
  %3961 = vmatprep.subr.mxu0 0.0
  %3962 = vmatpush1.msra.mxu0 0.0
  %3963 = vmatprep.subr.mxu0 0.0
  %3964 = vmatpush1.msra.mxu0 0.0
  %3965 = vmatprep.subr.mxu0 0.0
  %3966 = vmatpush1.msra.mxu0 0.0
  %3967 = vmatprep.subr.mxu0 0.0
  %3968 = vmatpush1.msra.mxu0 0.0
  %3969 = vmatprep.subr.mxu0 0.0
  %3970 = vmatpush1.msra.mxu0 0.0
  %3971 = vmatprep.subr.mxu0 0.0
  %3972 = vmatpush1.msra.mxu0 0.0
  %3973 = vmatprep.subr.mxu0 0.0
  %3974 = vmatpush1.msra.mxu0 0.0
  %3975 = vmatprep.subr.mxu0 0.0
  %3976 = vmatpush1.msra.mxu0 0.0
  %3977 = vmatprep.subr.mxu0 0.0
  %3978 = vmatpush1.msra.mxu0 0.0
  %3979 = vmatprep.subr.mxu0 0.0
  %3980 = vmatpush1.msra.mxu0 0.0
  %3981 = vmatprep.mubr.f32.mxu0 0.0
  %3982 = vmatmul.mubr.f32.gmra.mrb[0].mxu0 %v3912
  %v3983 = vpop.f32.mrb[0].mxu0
  %v3984 = vadd.f32 %v3909, %v3983
  %v3985 = vpop.f32.mrb[0].mxu0
  %3986 = vmatprep.mubr.f32.mxu0 0.0
  %3987 = vmatmul.mubr.f32.gmra.mrb[0].mxu0 %v3915
  %v3988 = vpop.f32.mrb[0].mxu0
  %v3989 = vadd.f32 %v3909, %v3988
  %v3990 = vpop.f32.mrb[0].mxu0
  %3991 = vdwg.mxu0
  %v3992 = vmul.f32 %v3984, 0.5
  %v3993 = vmul.f32 %v3989, 0.5
  %v3994 = vmul.f32 %v3984, 0.70710677
  %v3995 = vmul.f32 %v3989, 0.70710677
  %v3996 = vand.u32 2147483647, %v3994
  %v3997 = vand.u32 2147483647, %v3995
  %v3998 = vmul.f32 %v3996, 0.3275911
  %v3999 = vmul.f32 %v3997, 0.3275911
  %v4000 = vadd.f32 %v3998, 1.0
  %v4001 = vadd.f32 %v3999, 1.0
  %v4002 = vrcp.pop %v4000
  %v4003 = vmul.f32 1.0, %v4002
  %v4004 = vrcp.pop %v4001
  %v4005 = vmul.f32 1.0, %v4004
  %v4006 = vmul.f32 %v4003, 1.0614054
  %v4007 = vmul.f32 %v4005, 1.0614054
  %v4008 = vadd.f32 %v4006, -1.4531521
  %v4009 = vadd.f32 %v4007, -1.4531521
  %v4010 = vmul.f32 %v4008, %v4003
  %v4011 = vmul.f32 %v4009, %v4005
  %v4012 = vadd.f32 %v4010, 1.4214138
  %v4013 = vadd.f32 %v4011, 1.4214138
  %v4014 = vmul.f32 %v4012, %v4003
  %v4015 = vmul.f32 %v4013, %v4005
  %v4016 = vadd.f32 %v4014, -0.28449672
  %v4017 = vadd.f32 %v4015, -0.28449672
  %v4018 = vmul.f32 %v4016, %v4003
  %v4019 = vmul.f32 %v4017, %v4005
  %v4020 = vadd.f32 %v4018, 0.2548296
  %v4021 = vadd.f32 %v4019, 0.2548296
  %v4022 = vmul.f32 %v4020, %v4003
  %v4023 = vmul.f32 %v4021, %v4005
  %v4024 = vsub.f32 0.0, %v3996
  %v4025 = vsub.f32 0.0, %v3997
  %v4026 = vmul.f32 %v4024, %v3996
  %v4027 = vmul.f32 %v4025, %v3997
  %v4028 = vmul.f32 %v4026, 1.442695
  %v4029 = vpow.pop %v4028
  %v4030 = vmul.f32 %v4027, 1.442695
  %v4031 = vpow.pop %v4030
  %v4032 = vmul.f32 %v4022, %v4029
  %v4033 = vmul.f32 %v4023, %v4031
  %v4034 = vsub.f32 1.0, %v4032
  %v4035 = vsub.f32 1.0, %v4033
  %vm4036 = vcmp.ge.f32.partialorder %v3994, 0.0
  %vm4037 = vcmp.ge.f32.partialorder %v3995, 0.0
  %v4038 = vsub.f32 0.0, %v4034
  %v4039 = vsub.f32 0.0, %v4035
  %v4040 = vsel %vm4036, %v4034, %v4038
  %v4041 = vsel %vm4037, %v4035, %v4039
  %v4042 = vadd.f32 %v4040, 1.0
  %v4043 = vadd.f32 %v4041, 1.0
  %v4044 = vmul.f32 %v3992, %v4042
  %v4045 = vmul.f32 %v3993, %v4043
  %v4046 = vld [vmem:[%s16] sm:$0xff]
  %v4047 = vld [vmem:[%s16 + $0x8] sm:$0xff]
  %v4048 = vld [vmem:[%s16 + $0x10] sm:$0xff]
  %v4049 = vld [vmem:[%s16 + $0x18] sm:$0xff]
  %v4050 = vld [vmem:[%s16 + $0x20] sm:$0xff]
  %v4051 = vld [vmem:[%s16 + $0x28] sm:$0xff]
  %v4052 = vld [vmem:[%s16 + $0x30] sm:$0xff]
  %v4053 = vld [vmem:[%s16 + $0x38] sm:$0xff]
  %v4054 = vld [vmem:[%s17] sm:$0x1]
  %v4056 = vlaneseq
  %v4057 = vshrl.u32 %v4056, 7
  %v4058 = vsub.s32 0, %v4057
  %v4059 = vrot.slane %v4054, %v4058
  %vm4061 = vcmask 523264
  %v4063 = vsel %vm4061, %v4044, 0
  %v4066 = vsel %vm4061, %v4045, 0
  %4068 = vmatprep.subr.mxu0 0.0
  %4069 = vmatpush1.msra.mxu0 %v4046
  %4070 = vmatprep.subr.mxu0 0.0
  %4071 = vmatpush1.msra.mxu0 %v4047
  %4072 = vmatprep.subr.mxu0 0.0
  %4073 = vmatpush1.msra.mxu0 %v4048
  %4074 = vmatprep.subr.mxu0 0.0
  %4075 = vmatpush1.msra.mxu0 %v4049
  %4076 = vmatprep.subr.mxu0 0.0
  %4077 = vmatpush1.msra.mxu0 %v4050
  %4078 = vmatprep.subr.mxu0 0.0
  %4079 = vmatpush1.msra.mxu0 %v4051
  %4080 = vmatprep.subr.mxu0 0.0
  %4081 = vmatpush1.msra.mxu0 %v4052
  %4082 = vmatprep.subr.mxu0 0.0
  %4083 = vmatpush1.msra.mxu0 %v4053
  %4084 = vmatprep.subr.mxu0 0.0
  %4085 = vmatpush1.msra.mxu0 0.0
  %4086 = vmatprep.subr.mxu0 0.0
  %4087 = vmatpush1.msra.mxu0 0.0
  %4088 = vmatprep.subr.mxu0 0.0
  %4089 = vmatpush1.msra.mxu0 0.0
  %4090 = vmatprep.subr.mxu0 0.0
  %4091 = vmatpush1.msra.mxu0 0.0
  %4092 = vmatprep.subr.mxu0 0.0
  %4093 = vmatpush1.msra.mxu0 0.0
  %4094 = vmatprep.subr.mxu0 0.0
  %4095 = vmatpush1.msra.mxu0 0.0
  %4096 = vmatprep.subr.mxu0 0.0
  %4097 = vmatpush1.msra.mxu0 0.0
  %4098 = vmatprep.subr.mxu0 0.0
  %4099 = vmatpush1.msra.mxu0 0.0
  %4100 = vmatprep.subr.mxu0 0.0
  %4101 = vmatpush1.msra.mxu0 0.0
  %4102 = vmatprep.subr.mxu0 0.0
  %4103 = vmatpush1.msra.mxu0 0.0
  %4104 = vmatprep.subr.mxu0 0.0
  %4105 = vmatpush1.msra.mxu0 0.0
  %4106 = vmatprep.subr.mxu0 0.0
  %4107 = vmatpush1.msra.mxu0 0.0
  %4108 = vmatprep.subr.mxu0 0.0
  %4109 = vmatpush1.msra.mxu0 0.0
  %4110 = vmatprep.subr.mxu0 0.0
  %4111 = vmatpush1.msra.mxu0 0.0
  %4112 = vmatprep.subr.mxu0 0.0
  %4113 = vmatpush1.msra.mxu0 0.0
  %4114 = vmatprep.subr.mxu0 0.0
  %4115 = vmatpush1.msra.mxu0 0.0
  %4116 = vmatprep.subr.mxu0 0.0
  %4117 = vmatpush1.msra.mxu0 0.0
  %4118 = vmatprep.subr.mxu0 0.0
  %4119 = vmatpush1.msra.mxu0 0.0
  %4120 = vmatprep.subr.mxu0 0.0
  %4121 = vmatpush1.msra.mxu0 0.0
  %4122 = vmatprep.subr.mxu0 0.0
  %4123 = vmatpush1.msra.mxu0 0.0
  %4124 = vmatprep.subr.mxu0 0.0
  %4125 = vmatpush1.msra.mxu0 0.0
  %4126 = vmatprep.subr.mxu0 0.0
  %4127 = vmatpush1.msra.mxu0 0.0
  %4128 = vmatprep.subr.mxu0 0.0
  %4129 = vmatpush1.msra.mxu0 0.0
  %4130 = vmatprep.subr.mxu0 0.0
  %4131 = vmatpush1.msra.mxu0 0.0
  %4132 = vmatprep.mubr.f32.mxu0 0.0
  %4133 = vmatmul.mubr.f32.gmra.mrb[0].mxu0 %v4063
  %v4134 = vpop.f32.mrb[0].mxu0
  %v4135 = vadd.f32 %v4059, %v4134
  %v4136 = vpop.f32.mrb[0].mxu0
  %4137 = vmatprep.mubr.f32.mxu0 0.0
  %4138 = vmatmul.mubr.f32.gmra.mrb[0].mxu0 %v4066
  %v4139 = vpop.f32.mrb[0].mxu0
  %v4140 = vadd.f32 %v4059, %v4139
  %v4141 = vpop.f32.mrb[0].mxu0
  %4142 = vdwg.mxu0
  %v4143 = vadd.f32 %v3898, %v4135
  %v4144 = vadd.f32 %v3899, %v4140
  %v4145 = vld [vmem:[%s18] sm:$0x1]
  %v4146 = vld [vmem:[%s19] sm:$0x1]
  %v4147 = vsel %vm75, %v4143, 0.0
  %4148 = vadd.xlane.f32.xlu0 %v4147
  %v4149 = vpop.xlane.xlu0 %4148
  %v4150 = vsel %vm75, %v4144, 0.0
  %4151 = vadd.xlane.f32.xlu0 %v4150
  %v4152 = vpop.xlane.xlu0 %4151
  %v4153 = vmul.f32 %v4149, %v82
  %v4154 = vmul.f32 %v4152, %v82
  %v4155 = vsub.f32 %v4143, %v4153
  %v4156 = vsub.f32 %v4144, %v4154
  %v4157 = vmul.f32 %v4155, %v4155
  %v4158 = vmul.f32 %v4156, %v4156
  %v4159 = vsel %vm75, %v4157, 0.0
  %4160 = vadd.xlane.f32.xlu0 %v4159
  %v4161 = vpop.xlane.xlu0 %4160
  %v4162 = vsel %vm75, %v4158, 0.0
  %4163 = vadd.xlane.f32.xlu0 %v4162
  %v4164 = vpop.xlane.xlu0 %4163
  %v4165 = vmul.f32 %v4161, %v82
  %v4166 = vmul.f32 %v4164, %v82
  %v4167 = vadd.f32 %v4165, 1e-12
  %v4168 = vadd.f32 %v4166, 1e-12
  %v4169 = vrsqrt.pop %v4167
  %v4170 = vrsqrt.pop %v4168
  %v4171 = vmul.f32 %v4155, %v4169
  %v4172 = vmul.f32 %v4156, %v4170
  %v4174 = vlaneseq
  %v4175 = vshrl.u32 %v4174, 7
  %v4176 = vsub.s32 0, %v4175
  %v4177 = vrot.slane %v4145, %v4176
  %v4179 = vmul.f32 %v4171, %v4177
  %v4180 = vmul.f32 %v4172, %v4177
  %v4182 = vlaneseq
  %v4183 = vshrl.u32 %v4182, 7
  %v4184 = vsub.s32 0, %v4183
  %v4185 = vrot.slane %v4146, %v4184
  %v4187 = vadd.f32 %v4179, %v4185
  %v4188 = vadd.f32 %v4180, %v4185
  %s4189 = scalar_lea.vmem %s4, 128
  %v4190 = vld [vmem:[%s4189] sm:$0xff]
  %v4191 = vld [vmem:[%s4189 + $0x8] sm:$0xff]
  %v4192 = vld [vmem:[%s4189 + $0x10] sm:$0xff]
  %v4193 = vld [vmem:[%s4189 + $0x18] sm:$0xff]
  %v4194 = vld [vmem:[%s4189 + $0x20] sm:$0xff]
  %v4195 = vld [vmem:[%s4189 + $0x28] sm:$0xff]
  %v4196 = vld [vmem:[%s4189 + $0x30] sm:$0xff]
  %v4197 = vld [vmem:[%s4189 + $0x38] sm:$0xff]
  %v4198 = vld [vmem:[%s4189 + $0x40] sm:$0xff]
  %v4199 = vld [vmem:[%s4189 + $0x48] sm:$0xff]
  %v4200 = vld [vmem:[%s4189 + $0x50] sm:$0xff]
  %v4201 = vld [vmem:[%s4189 + $0x58] sm:$0xff]
  %v4202 = vld [vmem:[%s4189 + $0x60] sm:$0xff]
  %v4203 = vld [vmem:[%s4189 + $0x68] sm:$0xff]
  %v4204 = vld [vmem:[%s4189 + $0x70] sm:$0xff]
  %v4205 = vld [vmem:[%s4189 + $0x78] sm:$0xff]
  %s4206 = scalar_lea.vmem %s6, 128
  %v4207 = vld [vmem:[%s4206] sm:$0xff]
  %v4208 = vld [vmem:[%s4206 + $0x8] sm:$0xff]
  %v4209 = vld [vmem:[%s4206 + $0x10] sm:$0xff]
  %v4210 = vld [vmem:[%s4206 + $0x18] sm:$0xff]
  %v4211 = vld [vmem:[%s4206 + $0x20] sm:$0xff]
  %v4212 = vld [vmem:[%s4206 + $0x28] sm:$0xff]
  %v4213 = vld [vmem:[%s4206 + $0x30] sm:$0xff]
  %v4214 = vld [vmem:[%s4206 + $0x38] sm:$0xff]
  %v4215 = vld [vmem:[%s4206 + $0x40] sm:$0xff]
  %v4216 = vld [vmem:[%s4206 + $0x48] sm:$0xff]
  %v4217 = vld [vmem:[%s4206 + $0x50] sm:$0xff]
  %v4218 = vld [vmem:[%s4206 + $0x58] sm:$0xff]
  %v4219 = vld [vmem:[%s4206 + $0x60] sm:$0xff]
  %v4220 = vld [vmem:[%s4206 + $0x68] sm:$0xff]
  %v4221 = vld [vmem:[%s4206 + $0x70] sm:$0xff]
  %v4222 = vld [vmem:[%s4206 + $0x78] sm:$0xff]
  %s4223 = scalar_lea.vmem %s8, 128
  %v4224 = vld [vmem:[%s4223] sm:$0xff]
  %v4225 = vld [vmem:[%s4223 + $0x8] sm:$0xff]
  %v4226 = vld [vmem:[%s4223 + $0x10] sm:$0xff]
  %v4227 = vld [vmem:[%s4223 + $0x18] sm:$0xff]
  %v4228 = vld [vmem:[%s4223 + $0x20] sm:$0xff]
  %v4229 = vld [vmem:[%s4223 + $0x28] sm:$0xff]
  %v4230 = vld [vmem:[%s4223 + $0x30] sm:$0xff]
  %v4231 = vld [vmem:[%s4223 + $0x38] sm:$0xff]
  %v4232 = vld [vmem:[%s4223 + $0x40] sm:$0xff]
  %v4233 = vld [vmem:[%s4223 + $0x48] sm:$0xff]
  %v4234 = vld [vmem:[%s4223 + $0x50] sm:$0xff]
  %v4235 = vld [vmem:[%s4223 + $0x58] sm:$0xff]
  %v4236 = vld [vmem:[%s4223 + $0x60] sm:$0xff]
  %v4237 = vld [vmem:[%s4223 + $0x68] sm:$0xff]
  %v4238 = vld [vmem:[%s4223 + $0x70] sm:$0xff]
  %v4239 = vld [vmem:[%s4223 + $0x78] sm:$0xff]
  %s4240 = scalar_lea.vmem %s5, 4
  %v4241 = vld [vmem:[%s4240] sm:$0x1]
  %v4242 = vld [vmem:[%s4240 + $0x1] sm:$0x1]
  %v4243 = vld [vmem:[%s4240 + $0x2] sm:$0x1]
  %v4244 = vld [vmem:[%s4240 + $0x3] sm:$0x1]
  %s4245 = scalar_lea.vmem %s7, 4
  %v4246 = vld [vmem:[%s4245] sm:$0x1]
  %v4247 = vld [vmem:[%s4245 + $0x1] sm:$0x1]
  %v4248 = vld [vmem:[%s4245 + $0x2] sm:$0x1]
  %v4249 = vld [vmem:[%s4245 + $0x3] sm:$0x1]
  %s4250 = scalar_lea.vmem %s9, 4
  %v4251 = vld [vmem:[%s4250] sm:$0x1]
  %v4252 = vld [vmem:[%s4250 + $0x1] sm:$0x1]
  %v4253 = vld [vmem:[%s4250 + $0x2] sm:$0x1]
  %v4254 = vld [vmem:[%s4250 + $0x3] sm:$0x1]
  %s4255 = scalar_lea.vmem %s10, 32
  %v4256 = vld [vmem:[%s4255] sm:$0xff]
  %v4257 = vld [vmem:[%s4255 + $0x8] sm:$0xff]
  %v4258 = vld [vmem:[%s4255 + $0x10] sm:$0xff]
  %v4259 = vld [vmem:[%s4255 + $0x18] sm:$0xff]
  %s4260 = scalar_lea.vmem %s11, 1
  %v4261 = vld [vmem:[%s4260] sm:$0x1]
  %v4266 = vlaneseq
  %v4267 = vshrl.u32 %v4266, 7
  %v4268 = vsub.s32 0, %v4267
  %v4269 = vrot.slane %v4241, %v4268
  %v4270 = vlaneseq
  %v4271 = vshrl.u32 %v4270, 7
  %v4272 = vsub.s32 0, %v4271
  %v4273 = vrot.slane %v4242, %v4272
  %v4274 = vlaneseq
  %v4275 = vshrl.u32 %v4274, 7
  %v4276 = vsub.s32 0, %v4275
  %v4277 = vrot.slane %v4243, %v4276
  %v4278 = vlaneseq
  %v4279 = vshrl.u32 %v4278, 7
  %v4280 = vsub.s32 0, %v4279
  %v4281 = vrot.slane %v4244, %v4280
  %v4287 = vsel %vm75, %v4187, 0
  %4289 = vmatprep.subr.mxu0 0.0
  %4290 = vmatpush1.msra.mxu0 %v4190
  %4291 = vmatprep.subr.mxu0 0.0
  %4292 = vmatpush1.msra.mxu0 %v4191
  %4293 = vmatprep.subr.mxu0 0.0
  %4294 = vmatpush1.msra.mxu0 %v4192
  %4295 = vmatprep.subr.mxu0 0.0
  %4296 = vmatpush1.msra.mxu0 %v4193
  %4297 = vmatprep.subr.mxu0 0.0
  %4298 = vmatpush1.msra.mxu0 0.0
  %4299 = vmatprep.subr.mxu0 0.0
  %4300 = vmatpush1.msra.mxu0 0.0
  %4301 = vmatprep.subr.mxu0 0.0
  %4302 = vmatpush1.msra.mxu0 0.0
  %4303 = vmatprep.subr.mxu0 0.0
  %4304 = vmatpush1.msra.mxu0 0.0
  %4305 = vmatprep.subr.mxu0 0.0
  %4306 = vmatpush1.msra.mxu0 0.0
  %4307 = vmatprep.subr.mxu0 0.0
  %4308 = vmatpush1.msra.mxu0 0.0
  %4309 = vmatprep.subr.mxu0 0.0
  %4310 = vmatpush1.msra.mxu0 0.0
  %4311 = vmatprep.subr.mxu0 0.0
  %4312 = vmatpush1.msra.mxu0 0.0
  %4313 = vmatprep.subr.mxu0 0.0
  %4314 = vmatpush1.msra.mxu0 0.0
  %4315 = vmatprep.subr.mxu0 0.0
  %4316 = vmatpush1.msra.mxu0 0.0
  %4317 = vmatprep.subr.mxu0 0.0
  %4318 = vmatpush1.msra.mxu0 0.0
  %4319 = vmatprep.subr.mxu0 0.0
  %4320 = vmatpush1.msra.mxu0 0.0
  %4321 = vmatprep.subr.mxu0 0.0
  %4322 = vmatpush1.msra.mxu0 0.0
  %4323 = vmatprep.subr.mxu0 0.0
  %4324 = vmatpush1.msra.mxu0 0.0
  %4325 = vmatprep.subr.mxu0 0.0
  %4326 = vmatpush1.msra.mxu0 0.0
  %4327 = vmatprep.subr.mxu0 0.0
  %4328 = vmatpush1.msra.mxu0 0.0
  %4329 = vmatprep.subr.mxu0 0.0
  %4330 = vmatpush1.msra.mxu0 0.0
  %4331 = vmatprep.subr.mxu0 0.0
  %4332 = vmatpush1.msra.mxu0 0.0
  %4333 = vmatprep.subr.mxu0 0.0
  %4334 = vmatpush1.msra.mxu0 0.0
  %4335 = vmatprep.subr.mxu0 0.0
  %4336 = vmatpush1.msra.mxu0 0.0
  %4337 = vmatprep.subr.mxu0 0.0
  %4338 = vmatpush1.msra.mxu0 0.0
  %4339 = vmatprep.subr.mxu0 0.0
  %4340 = vmatpush1.msra.mxu0 0.0
  %4341 = vmatprep.subr.mxu0 0.0
  %4342 = vmatpush1.msra.mxu0 0.0
  %4343 = vmatprep.subr.mxu0 0.0
  %4344 = vmatpush1.msra.mxu0 0.0
  %4345 = vmatprep.subr.mxu0 0.0
  %4346 = vmatpush1.msra.mxu0 0.0
  %4347 = vmatprep.subr.mxu0 0.0
  %4348 = vmatpush1.msra.mxu0 0.0
  %4349 = vmatprep.subr.mxu0 0.0
  %4350 = vmatpush1.msra.mxu0 0.0
  %4351 = vmatprep.subr.mxu0 0.0
  %4352 = vmatpush1.msra.mxu0 0.0
  %4353 = vmatprep.mubr.f32.mxu0 0.0
  %4354 = vmatmul.mubr.f32.gmra.mrb[0].mxu0 %v4287
  %v4355 = vpop.f32.mrb[0].mxu0
  %v4356 = vadd.f32 %v4269, %v4355
  %v4357 = vpop.f32.mrb[0].mxu0
  %4358 = vdwg.mxu0
  %4359 = vmatprep.subr.mxu0 0.0
  %4360 = vmatpush1.msra.mxu0 %v4194
  %4361 = vmatprep.subr.mxu0 0.0
  %4362 = vmatpush1.msra.mxu0 %v4195
  %4363 = vmatprep.subr.mxu0 0.0
  %4364 = vmatpush1.msra.mxu0 %v4196
  %4365 = vmatprep.subr.mxu0 0.0
  %4366 = vmatpush1.msra.mxu0 %v4197
  %4367 = vmatprep.subr.mxu0 0.0
  %4368 = vmatpush1.msra.mxu0 0.0
  %4369 = vmatprep.subr.mxu0 0.0
  %4370 = vmatpush1.msra.mxu0 0.0
  %4371 = vmatprep.subr.mxu0 0.0
  %4372 = vmatpush1.msra.mxu0 0.0
  %4373 = vmatprep.subr.mxu0 0.0
  %4374 = vmatpush1.msra.mxu0 0.0
  %4375 = vmatprep.subr.mxu0 0.0
  %4376 = vmatpush1.msra.mxu0 0.0
  %4377 = vmatprep.subr.mxu0 0.0
  %4378 = vmatpush1.msra.mxu0 0.0
  %4379 = vmatprep.subr.mxu0 0.0
  %4380 = vmatpush1.msra.mxu0 0.0
  %4381 = vmatprep.subr.mxu0 0.0
  %4382 = vmatpush1.msra.mxu0 0.0
  %4383 = vmatprep.subr.mxu0 0.0
  %4384 = vmatpush1.msra.mxu0 0.0
  %4385 = vmatprep.subr.mxu0 0.0
  %4386 = vmatpush1.msra.mxu0 0.0
  %4387 = vmatprep.subr.mxu0 0.0
  %4388 = vmatpush1.msra.mxu0 0.0
  %4389 = vmatprep.subr.mxu0 0.0
  %4390 = vmatpush1.msra.mxu0 0.0
  %4391 = vmatprep.subr.mxu0 0.0
  %4392 = vmatpush1.msra.mxu0 0.0
  %4393 = vmatprep.subr.mxu0 0.0
  %4394 = vmatpush1.msra.mxu0 0.0
  %4395 = vmatprep.subr.mxu0 0.0
  %4396 = vmatpush1.msra.mxu0 0.0
  %4397 = vmatprep.subr.mxu0 0.0
  %4398 = vmatpush1.msra.mxu0 0.0
  %4399 = vmatprep.subr.mxu0 0.0
  %4400 = vmatpush1.msra.mxu0 0.0
  %4401 = vmatprep.subr.mxu0 0.0
  %4402 = vmatpush1.msra.mxu0 0.0
  %4403 = vmatprep.subr.mxu0 0.0
  %4404 = vmatpush1.msra.mxu0 0.0
  %4405 = vmatprep.subr.mxu0 0.0
  %4406 = vmatpush1.msra.mxu0 0.0
  %4407 = vmatprep.subr.mxu0 0.0
  %4408 = vmatpush1.msra.mxu0 0.0
  %4409 = vmatprep.subr.mxu0 0.0
  %4410 = vmatpush1.msra.mxu0 0.0
  %4411 = vmatprep.subr.mxu0 0.0
  %4412 = vmatpush1.msra.mxu0 0.0
  %4413 = vmatprep.subr.mxu0 0.0
  %4414 = vmatpush1.msra.mxu0 0.0
  %4415 = vmatprep.subr.mxu0 0.0
  %4416 = vmatpush1.msra.mxu0 0.0
  %4417 = vmatprep.subr.mxu0 0.0
  %4418 = vmatpush1.msra.mxu0 0.0
  %4419 = vmatprep.subr.mxu0 0.0
  %4420 = vmatpush1.msra.mxu0 0.0
  %4421 = vmatprep.subr.mxu0 0.0
  %4422 = vmatpush1.msra.mxu0 0.0
  %4423 = vmatprep.mubr.f32.mxu0 0.0
  %4424 = vmatmul.mubr.f32.gmra.mrb[0].mxu0 %v4287
  %v4425 = vpop.f32.mrb[0].mxu0
  %v4426 = vadd.f32 %v4273, %v4425
  %v4427 = vpop.f32.mrb[0].mxu0
  %4428 = vdwg.mxu0
  %4429 = vmatprep.subr.mxu0 0.0
  %4430 = vmatpush1.msra.mxu0 %v4198
  %4431 = vmatprep.subr.mxu0 0.0
  %4432 = vmatpush1.msra.mxu0 %v4199
  %4433 = vmatprep.subr.mxu0 0.0
  %4434 = vmatpush1.msra.mxu0 %v4200
  %4435 = vmatprep.subr.mxu0 0.0
  %4436 = vmatpush1.msra.mxu0 %v4201
  %4437 = vmatprep.subr.mxu0 0.0
  %4438 = vmatpush1.msra.mxu0 0.0
  %4439 = vmatprep.subr.mxu0 0.0
  %4440 = vmatpush1.msra.mxu0 0.0
  %4441 = vmatprep.subr.mxu0 0.0
  %4442 = vmatpush1.msra.mxu0 0.0
  %4443 = vmatprep.subr.mxu0 0.0
  %4444 = vmatpush1.msra.mxu0 0.0
  %4445 = vmatprep.subr.mxu0 0.0
  %4446 = vmatpush1.msra.mxu0 0.0
  %4447 = vmatprep.subr.mxu0 0.0
  %4448 = vmatpush1.msra.mxu0 0.0
  %4449 = vmatprep.subr.mxu0 0.0
  %4450 = vmatpush1.msra.mxu0 0.0
  %4451 = vmatprep.subr.mxu0 0.0
  %4452 = vmatpush1.msra.mxu0 0.0
  %4453 = vmatprep.subr.mxu0 0.0
  %4454 = vmatpush1.msra.mxu0 0.0
  %4455 = vmatprep.subr.mxu0 0.0
  %4456 = vmatpush1.msra.mxu0 0.0
  %4457 = vmatprep.subr.mxu0 0.0
  %4458 = vmatpush1.msra.mxu0 0.0
  %4459 = vmatprep.subr.mxu0 0.0
  %4460 = vmatpush1.msra.mxu0 0.0
  %4461 = vmatprep.subr.mxu0 0.0
  %4462 = vmatpush1.msra.mxu0 0.0
  %4463 = vmatprep.subr.mxu0 0.0
  %4464 = vmatpush1.msra.mxu0 0.0
  %4465 = vmatprep.subr.mxu0 0.0
  %4466 = vmatpush1.msra.mxu0 0.0
  %4467 = vmatprep.subr.mxu0 0.0
  %4468 = vmatpush1.msra.mxu0 0.0
  %4469 = vmatprep.subr.mxu0 0.0
  %4470 = vmatpush1.msra.mxu0 0.0
  %4471 = vmatprep.subr.mxu0 0.0
  %4472 = vmatpush1.msra.mxu0 0.0
  %4473 = vmatprep.subr.mxu0 0.0
  %4474 = vmatpush1.msra.mxu0 0.0
  %4475 = vmatprep.subr.mxu0 0.0
  %4476 = vmatpush1.msra.mxu0 0.0
  %4477 = vmatprep.subr.mxu0 0.0
  %4478 = vmatpush1.msra.mxu0 0.0
  %4479 = vmatprep.subr.mxu0 0.0
  %4480 = vmatpush1.msra.mxu0 0.0
  %4481 = vmatprep.subr.mxu0 0.0
  %4482 = vmatpush1.msra.mxu0 0.0
  %4483 = vmatprep.subr.mxu0 0.0
  %4484 = vmatpush1.msra.mxu0 0.0
  %4485 = vmatprep.subr.mxu0 0.0
  %4486 = vmatpush1.msra.mxu0 0.0
  %4487 = vmatprep.subr.mxu0 0.0
  %4488 = vmatpush1.msra.mxu0 0.0
  %4489 = vmatprep.subr.mxu0 0.0
  %4490 = vmatpush1.msra.mxu0 0.0
  %4491 = vmatprep.subr.mxu0 0.0
  %4492 = vmatpush1.msra.mxu0 0.0
  %4493 = vmatprep.mubr.f32.mxu0 0.0
  %4494 = vmatmul.mubr.f32.gmra.mrb[0].mxu0 %v4287
  %v4495 = vpop.f32.mrb[0].mxu0
  %v4496 = vadd.f32 %v4277, %v4495
  %v4497 = vpop.f32.mrb[0].mxu0
  %4498 = vdwg.mxu0
  %4499 = vmatprep.subr.mxu0 0.0
  %4500 = vmatpush1.msra.mxu0 %v4202
  %4501 = vmatprep.subr.mxu0 0.0
  %4502 = vmatpush1.msra.mxu0 %v4203
  %4503 = vmatprep.subr.mxu0 0.0
  %4504 = vmatpush1.msra.mxu0 %v4204
  %4505 = vmatprep.subr.mxu0 0.0
  %4506 = vmatpush1.msra.mxu0 %v4205
  %4507 = vmatprep.subr.mxu0 0.0
  %4508 = vmatpush1.msra.mxu0 0.0
  %4509 = vmatprep.subr.mxu0 0.0
  %4510 = vmatpush1.msra.mxu0 0.0
  %4511 = vmatprep.subr.mxu0 0.0
  %4512 = vmatpush1.msra.mxu0 0.0
  %4513 = vmatprep.subr.mxu0 0.0
  %4514 = vmatpush1.msra.mxu0 0.0
  %4515 = vmatprep.subr.mxu0 0.0
  %4516 = vmatpush1.msra.mxu0 0.0
  %4517 = vmatprep.subr.mxu0 0.0
  %4518 = vmatpush1.msra.mxu0 0.0
  %4519 = vmatprep.subr.mxu0 0.0
  %4520 = vmatpush1.msra.mxu0 0.0
  %4521 = vmatprep.subr.mxu0 0.0
  %4522 = vmatpush1.msra.mxu0 0.0
  %4523 = vmatprep.subr.mxu0 0.0
  %4524 = vmatpush1.msra.mxu0 0.0
  %4525 = vmatprep.subr.mxu0 0.0
  %4526 = vmatpush1.msra.mxu0 0.0
  %4527 = vmatprep.subr.mxu0 0.0
  %4528 = vmatpush1.msra.mxu0 0.0
  %4529 = vmatprep.subr.mxu0 0.0
  %4530 = vmatpush1.msra.mxu0 0.0
  %4531 = vmatprep.subr.mxu0 0.0
  %4532 = vmatpush1.msra.mxu0 0.0
  %4533 = vmatprep.subr.mxu0 0.0
  %4534 = vmatpush1.msra.mxu0 0.0
  %4535 = vmatprep.subr.mxu0 0.0
  %4536 = vmatpush1.msra.mxu0 0.0
  %4537 = vmatprep.subr.mxu0 0.0
  %4538 = vmatpush1.msra.mxu0 0.0
  %4539 = vmatprep.subr.mxu0 0.0
  %4540 = vmatpush1.msra.mxu0 0.0
  %4541 = vmatprep.subr.mxu0 0.0
  %4542 = vmatpush1.msra.mxu0 0.0
  %4543 = vmatprep.subr.mxu0 0.0
  %4544 = vmatpush1.msra.mxu0 0.0
  %4545 = vmatprep.subr.mxu0 0.0
  %4546 = vmatpush1.msra.mxu0 0.0
  %4547 = vmatprep.subr.mxu0 0.0
  %4548 = vmatpush1.msra.mxu0 0.0
  %4549 = vmatprep.subr.mxu0 0.0
  %4550 = vmatpush1.msra.mxu0 0.0
  %4551 = vmatprep.subr.mxu0 0.0
  %4552 = vmatpush1.msra.mxu0 0.0
  %4553 = vmatprep.subr.mxu0 0.0
  %4554 = vmatpush1.msra.mxu0 0.0
  %4555 = vmatprep.subr.mxu0 0.0
  %4556 = vmatpush1.msra.mxu0 0.0
  %4557 = vmatprep.subr.mxu0 0.0
  %4558 = vmatpush1.msra.mxu0 0.0
  %4559 = vmatprep.subr.mxu0 0.0
  %4560 = vmatpush1.msra.mxu0 0.0
  %4561 = vmatprep.subr.mxu0 0.0
  %4562 = vmatpush1.msra.mxu0 0.0
  %4563 = vmatprep.mubr.f32.mxu0 0.0
  %4564 = vmatmul.mubr.f32.gmra.mrb[0].mxu0 %v4287
  %v4565 = vpop.f32.mrb[0].mxu0
  %v4566 = vadd.f32 %v4281, %v4565
  %v4567 = vpop.f32.mrb[0].mxu0
  %4568 = vdwg.mxu0
  %v4573 = vlaneseq
  %v4574 = vshrl.u32 %v4573, 7
  %v4575 = vsub.s32 0, %v4574
  %v4576 = vrot.slane %v4246, %v4575
  %v4577 = vlaneseq
  %v4578 = vshrl.u32 %v4577, 7
  %v4579 = vsub.s32 0, %v4578
  %v4580 = vrot.slane %v4247, %v4579
  %v4581 = vlaneseq
  %v4582 = vshrl.u32 %v4581, 7
  %v4583 = vsub.s32 0, %v4582
  %v4584 = vrot.slane %v4248, %v4583
  %v4585 = vlaneseq
  %v4586 = vshrl.u32 %v4585, 7
  %v4587 = vsub.s32 0, %v4586
  %v4588 = vrot.slane %v4249, %v4587
  %4593 = vmatprep.subr.mxu0 0.0
  %4594 = vmatpush1.msra.mxu0 %v4207
  %4595 = vmatprep.subr.mxu0 0.0
  %4596 = vmatpush1.msra.mxu0 %v4208
  %4597 = vmatprep.subr.mxu0 0.0
  %4598 = vmatpush1.msra.mxu0 %v4209
  %4599 = vmatprep.subr.mxu0 0.0
  %4600 = vmatpush1.msra.mxu0 %v4210
  %4601 = vmatprep.subr.mxu0 0.0
  %4602 = vmatpush1.msra.mxu0 0.0
  %4603 = vmatprep.subr.mxu0 0.0
  %4604 = vmatpush1.msra.mxu0 0.0
  %4605 = vmatprep.subr.mxu0 0.0
  %4606 = vmatpush1.msra.mxu0 0.0
  %4607 = vmatprep.subr.mxu0 0.0
  %4608 = vmatpush1.msra.mxu0 0.0
  %4609 = vmatprep.subr.mxu0 0.0
  %4610 = vmatpush1.msra.mxu0 0.0
  %4611 = vmatprep.subr.mxu0 0.0
  %4612 = vmatpush1.msra.mxu0 0.0
  %4613 = vmatprep.subr.mxu0 0.0
  %4614 = vmatpush1.msra.mxu0 0.0
  %4615 = vmatprep.subr.mxu0 0.0
  %4616 = vmatpush1.msra.mxu0 0.0
  %4617 = vmatprep.subr.mxu0 0.0
  %4618 = vmatpush1.msra.mxu0 0.0
  %4619 = vmatprep.subr.mxu0 0.0
  %4620 = vmatpush1.msra.mxu0 0.0
  %4621 = vmatprep.subr.mxu0 0.0
  %4622 = vmatpush1.msra.mxu0 0.0
  %4623 = vmatprep.subr.mxu0 0.0
  %4624 = vmatpush1.msra.mxu0 0.0
  %4625 = vmatprep.subr.mxu0 0.0
  %4626 = vmatpush1.msra.mxu0 0.0
  %4627 = vmatprep.subr.mxu0 0.0
  %4628 = vmatpush1.msra.mxu0 0.0
  %4629 = vmatprep.subr.mxu0 0.0
  %4630 = vmatpush1.msra.mxu0 0.0
  %4631 = vmatprep.subr.mxu0 0.0
  %4632 = vmatpush1.msra.mxu0 0.0
  %4633 = vmatprep.subr.mxu0 0.0
  %4634 = vmatpush1.msra.mxu0 0.0
  %4635 = vmatprep.subr.mxu0 0.0
  %4636 = vmatpush1.msra.mxu0 0.0
  %4637 = vmatprep.subr.mxu0 0.0
  %4638 = vmatpush1.msra.mxu0 0.0
  %4639 = vmatprep.subr.mxu0 0.0
  %4640 = vmatpush1.msra.mxu0 0.0
  %4641 = vmatprep.subr.mxu0 0.0
  %4642 = vmatpush1.msra.mxu0 0.0
  %4643 = vmatprep.subr.mxu0 0.0
  %4644 = vmatpush1.msra.mxu0 0.0
  %4645 = vmatprep.subr.mxu0 0.0
  %4646 = vmatpush1.msra.mxu0 0.0
  %4647 = vmatprep.subr.mxu0 0.0
  %4648 = vmatpush1.msra.mxu0 0.0
  %4649 = vmatprep.subr.mxu0 0.0
  %4650 = vmatpush1.msra.mxu0 0.0
  %4651 = vmatprep.subr.mxu0 0.0
  %4652 = vmatpush1.msra.mxu0 0.0
  %4653 = vmatprep.subr.mxu0 0.0
  %4654 = vmatpush1.msra.mxu0 0.0
  %4655 = vmatprep.subr.mxu0 0.0
  %4656 = vmatpush1.msra.mxu0 0.0
  %4657 = vmatprep.mubr.f32.mxu0 0.0
  %4658 = vmatmul.mubr.f32.gmra.mrb[0].mxu0 %v4287
  %v4659 = vpop.f32.mrb[0].mxu0
  %v4660 = vadd.f32 %v4576, %v4659
  %v4661 = vpop.f32.mrb[0].mxu0
  %4662 = vdwg.mxu0
  %4663 = vmatprep.subr.mxu0 0.0
  %4664 = vmatpush1.msra.mxu0 %v4211
  %4665 = vmatprep.subr.mxu0 0.0
  %4666 = vmatpush1.msra.mxu0 %v4212
  %4667 = vmatprep.subr.mxu0 0.0
  %4668 = vmatpush1.msra.mxu0 %v4213
  %4669 = vmatprep.subr.mxu0 0.0
  %4670 = vmatpush1.msra.mxu0 %v4214
  %4671 = vmatprep.subr.mxu0 0.0
  %4672 = vmatpush1.msra.mxu0 0.0
  %4673 = vmatprep.subr.mxu0 0.0
  %4674 = vmatpush1.msra.mxu0 0.0
  %4675 = vmatprep.subr.mxu0 0.0
  %4676 = vmatpush1.msra.mxu0 0.0
  %4677 = vmatprep.subr.mxu0 0.0
  %4678 = vmatpush1.msra.mxu0 0.0
  %4679 = vmatprep.subr.mxu0 0.0
  %4680 = vmatpush1.msra.mxu0 0.0
  %4681 = vmatprep.subr.mxu0 0.0
  %4682 = vmatpush1.msra.mxu0 0.0
  %4683 = vmatprep.subr.mxu0 0.0
  %4684 = vmatpush1.msra.mxu0 0.0
  %4685 = vmatprep.subr.mxu0 0.0
  %4686 = vmatpush1.msra.mxu0 0.0
  %4687 = vmatprep.subr.mxu0 0.0
  %4688 = vmatpush1.msra.mxu0 0.0
  %4689 = vmatprep.subr.mxu0 0.0
  %4690 = vmatpush1.msra.mxu0 0.0
  %4691 = vmatprep.subr.mxu0 0.0
  %4692 = vmatpush1.msra.mxu0 0.0
  %4693 = vmatprep.subr.mxu0 0.0
  %4694 = vmatpush1.msra.mxu0 0.0
  %4695 = vmatprep.subr.mxu0 0.0
  %4696 = vmatpush1.msra.mxu0 0.0
  %4697 = vmatprep.subr.mxu0 0.0
  %4698 = vmatpush1.msra.mxu0 0.0
  %4699 = vmatprep.subr.mxu0 0.0
  %4700 = vmatpush1.msra.mxu0 0.0
  %4701 = vmatprep.subr.mxu0 0.0
  %4702 = vmatpush1.msra.mxu0 0.0
  %4703 = vmatprep.subr.mxu0 0.0
  %4704 = vmatpush1.msra.mxu0 0.0
  %4705 = vmatprep.subr.mxu0 0.0
  %4706 = vmatpush1.msra.mxu0 0.0
  %4707 = vmatprep.subr.mxu0 0.0
  %4708 = vmatpush1.msra.mxu0 0.0
  %4709 = vmatprep.subr.mxu0 0.0
  %4710 = vmatpush1.msra.mxu0 0.0
  %4711 = vmatprep.subr.mxu0 0.0
  %4712 = vmatpush1.msra.mxu0 0.0
  %4713 = vmatprep.subr.mxu0 0.0
  %4714 = vmatpush1.msra.mxu0 0.0
  %4715 = vmatprep.subr.mxu0 0.0
  %4716 = vmatpush1.msra.mxu0 0.0
  %4717 = vmatprep.subr.mxu0 0.0
  %4718 = vmatpush1.msra.mxu0 0.0
  %4719 = vmatprep.subr.mxu0 0.0
  %4720 = vmatpush1.msra.mxu0 0.0
  %4721 = vmatprep.subr.mxu0 0.0
  %4722 = vmatpush1.msra.mxu0 0.0
  %4723 = vmatprep.subr.mxu0 0.0
  %4724 = vmatpush1.msra.mxu0 0.0
  %4725 = vmatprep.subr.mxu0 0.0
  %4726 = vmatpush1.msra.mxu0 0.0
  %4727 = vmatprep.mubr.f32.mxu0 0.0
  %4728 = vmatmul.mubr.f32.gmra.mrb[0].mxu0 %v4287
  %v4729 = vpop.f32.mrb[0].mxu0
  %v4730 = vadd.f32 %v4580, %v4729
  %v4731 = vpop.f32.mrb[0].mxu0
  %4732 = vdwg.mxu0
  %4733 = vmatprep.subr.mxu0 0.0
  %4734 = vmatpush1.msra.mxu0 %v4215
  %4735 = vmatprep.subr.mxu0 0.0
  %4736 = vmatpush1.msra.mxu0 %v4216
  %4737 = vmatprep.subr.mxu0 0.0
  %4738 = vmatpush1.msra.mxu0 %v4217
  %4739 = vmatprep.subr.mxu0 0.0
  %4740 = vmatpush1.msra.mxu0 %v4218
  %4741 = vmatprep.subr.mxu0 0.0
  %4742 = vmatpush1.msra.mxu0 0.0
  %4743 = vmatprep.subr.mxu0 0.0
  %4744 = vmatpush1.msra.mxu0 0.0
  %4745 = vmatprep.subr.mxu0 0.0
  %4746 = vmatpush1.msra.mxu0 0.0
  %4747 = vmatprep.subr.mxu0 0.0
  %4748 = vmatpush1.msra.mxu0 0.0
  %4749 = vmatprep.subr.mxu0 0.0
  %4750 = vmatpush1.msra.mxu0 0.0
  %4751 = vmatprep.subr.mxu0 0.0
  %4752 = vmatpush1.msra.mxu0 0.0
  %4753 = vmatprep.subr.mxu0 0.0
  %4754 = vmatpush1.msra.mxu0 0.0
  %4755 = vmatprep.subr.mxu0 0.0
  %4756 = vmatpush1.msra.mxu0 0.0
  %4757 = vmatprep.subr.mxu0 0.0
  %4758 = vmatpush1.msra.mxu0 0.0
  %4759 = vmatprep.subr.mxu0 0.0
  %4760 = vmatpush1.msra.mxu0 0.0
  %4761 = vmatprep.subr.mxu0 0.0
  %4762 = vmatpush1.msra.mxu0 0.0
  %4763 = vmatprep.subr.mxu0 0.0
  %4764 = vmatpush1.msra.mxu0 0.0
  %4765 = vmatprep.subr.mxu0 0.0
  %4766 = vmatpush1.msra.mxu0 0.0
  %4767 = vmatprep.subr.mxu0 0.0
  %4768 = vmatpush1.msra.mxu0 0.0
  %4769 = vmatprep.subr.mxu0 0.0
  %4770 = vmatpush1.msra.mxu0 0.0
  %4771 = vmatprep.subr.mxu0 0.0
  %4772 = vmatpush1.msra.mxu0 0.0
  %4773 = vmatprep.subr.mxu0 0.0
  %4774 = vmatpush1.msra.mxu0 0.0
  %4775 = vmatprep.subr.mxu0 0.0
  %4776 = vmatpush1.msra.mxu0 0.0
  %4777 = vmatprep.subr.mxu0 0.0
  %4778 = vmatpush1.msra.mxu0 0.0
  %4779 = vmatprep.subr.mxu0 0.0
  %4780 = vmatpush1.msra.mxu0 0.0
  %4781 = vmatprep.subr.mxu0 0.0
  %4782 = vmatpush1.msra.mxu0 0.0
  %4783 = vmatprep.subr.mxu0 0.0
  %4784 = vmatpush1.msra.mxu0 0.0
  %4785 = vmatprep.subr.mxu0 0.0
  %4786 = vmatpush1.msra.mxu0 0.0
  %4787 = vmatprep.subr.mxu0 0.0
  %4788 = vmatpush1.msra.mxu0 0.0
  %4789 = vmatprep.subr.mxu0 0.0
  %4790 = vmatpush1.msra.mxu0 0.0
  %4791 = vmatprep.subr.mxu0 0.0
  %4792 = vmatpush1.msra.mxu0 0.0
  %4793 = vmatprep.subr.mxu0 0.0
  %4794 = vmatpush1.msra.mxu0 0.0
  %4795 = vmatprep.subr.mxu0 0.0
  %4796 = vmatpush1.msra.mxu0 0.0
  %4797 = vmatprep.mubr.f32.mxu0 0.0
  %4798 = vmatmul.mubr.f32.gmra.mrb[0].mxu0 %v4287
  %v4799 = vpop.f32.mrb[0].mxu0
  %v4800 = vadd.f32 %v4584, %v4799
  %v4801 = vpop.f32.mrb[0].mxu0
  %4802 = vdwg.mxu0
  %4803 = vmatprep.subr.mxu0 0.0
  %4804 = vmatpush1.msra.mxu0 %v4219
  %4805 = vmatprep.subr.mxu0 0.0
  %4806 = vmatpush1.msra.mxu0 %v4220
  %4807 = vmatprep.subr.mxu0 0.0
  %4808 = vmatpush1.msra.mxu0 %v4221
  %4809 = vmatprep.subr.mxu0 0.0
  %4810 = vmatpush1.msra.mxu0 %v4222
  %4811 = vmatprep.subr.mxu0 0.0
  %4812 = vmatpush1.msra.mxu0 0.0
  %4813 = vmatprep.subr.mxu0 0.0
  %4814 = vmatpush1.msra.mxu0 0.0
  %4815 = vmatprep.subr.mxu0 0.0
  %4816 = vmatpush1.msra.mxu0 0.0
  %4817 = vmatprep.subr.mxu0 0.0
  %4818 = vmatpush1.msra.mxu0 0.0
  %4819 = vmatprep.subr.mxu0 0.0
  %4820 = vmatpush1.msra.mxu0 0.0
  %4821 = vmatprep.subr.mxu0 0.0
  %4822 = vmatpush1.msra.mxu0 0.0
  %4823 = vmatprep.subr.mxu0 0.0
  %4824 = vmatpush1.msra.mxu0 0.0
  %4825 = vmatprep.subr.mxu0 0.0
  %4826 = vmatpush1.msra.mxu0 0.0
  %4827 = vmatprep.subr.mxu0 0.0
  %4828 = vmatpush1.msra.mxu0 0.0
  %4829 = vmatprep.subr.mxu0 0.0
  %4830 = vmatpush1.msra.mxu0 0.0
  %4831 = vmatprep.subr.mxu0 0.0
  %4832 = vmatpush1.msra.mxu0 0.0
  %4833 = vmatprep.subr.mxu0 0.0
  %4834 = vmatpush1.msra.mxu0 0.0
  %4835 = vmatprep.subr.mxu0 0.0
  %4836 = vmatpush1.msra.mxu0 0.0
  %4837 = vmatprep.subr.mxu0 0.0
  %4838 = vmatpush1.msra.mxu0 0.0
  %4839 = vmatprep.subr.mxu0 0.0
  %4840 = vmatpush1.msra.mxu0 0.0
  %4841 = vmatprep.subr.mxu0 0.0
  %4842 = vmatpush1.msra.mxu0 0.0
  %4843 = vmatprep.subr.mxu0 0.0
  %4844 = vmatpush1.msra.mxu0 0.0
  %4845 = vmatprep.subr.mxu0 0.0
  %4846 = vmatpush1.msra.mxu0 0.0
  %4847 = vmatprep.subr.mxu0 0.0
  %4848 = vmatpush1.msra.mxu0 0.0
  %4849 = vmatprep.subr.mxu0 0.0
  %4850 = vmatpush1.msra.mxu0 0.0
  %4851 = vmatprep.subr.mxu0 0.0
  %4852 = vmatpush1.msra.mxu0 0.0
  %4853 = vmatprep.subr.mxu0 0.0
  %4854 = vmatpush1.msra.mxu0 0.0
  %4855 = vmatprep.subr.mxu0 0.0
  %4856 = vmatpush1.msra.mxu0 0.0
  %4857 = vmatprep.subr.mxu0 0.0
  %4858 = vmatpush1.msra.mxu0 0.0
  %4859 = vmatprep.subr.mxu0 0.0
  %4860 = vmatpush1.msra.mxu0 0.0
  %4861 = vmatprep.subr.mxu0 0.0
  %4862 = vmatpush1.msra.mxu0 0.0
  %4863 = vmatprep.subr.mxu0 0.0
  %4864 = vmatpush1.msra.mxu0 0.0
  %4865 = vmatprep.subr.mxu0 0.0
  %4866 = vmatpush1.msra.mxu0 0.0
  %4867 = vmatprep.mubr.f32.mxu0 0.0
  %4868 = vmatmul.mubr.f32.gmra.mrb[0].mxu0 %v4287
  %v4869 = vpop.f32.mrb[0].mxu0
  %v4870 = vadd.f32 %v4588, %v4869
  %v4871 = vpop.f32.mrb[0].mxu0
  %4872 = vdwg.mxu0
  %v4877 = vlaneseq
  %v4878 = vshrl.u32 %v4877, 7
  %v4879 = vsub.s32 0, %v4878
  %v4880 = vrot.slane %v4251, %v4879
  %v4881 = vlaneseq
  %v4882 = vshrl.u32 %v4881, 7
  %v4883 = vsub.s32 0, %v4882
  %v4884 = vrot.slane %v4252, %v4883
  %v4885 = vlaneseq
  %v4886 = vshrl.u32 %v4885, 7
  %v4887 = vsub.s32 0, %v4886
  %v4888 = vrot.slane %v4253, %v4887
  %v4889 = vlaneseq
  %v4890 = vshrl.u32 %v4889, 7
  %v4891 = vsub.s32 0, %v4890
  %v4892 = vrot.slane %v4254, %v4891
  %4897 = vmatprep.subr.mxu0 0.0
  %4898 = vmatpush1.msra.mxu0 %v4224
  %4899 = vmatprep.subr.mxu0 0.0
  %4900 = vmatpush1.msra.mxu0 %v4225
  %4901 = vmatprep.subr.mxu0 0.0
  %4902 = vmatpush1.msra.mxu0 %v4226
  %4903 = vmatprep.subr.mxu0 0.0
  %4904 = vmatpush1.msra.mxu0 %v4227
  %4905 = vmatprep.subr.mxu0 0.0
  %4906 = vmatpush1.msra.mxu0 0.0
  %4907 = vmatprep.subr.mxu0 0.0
  %4908 = vmatpush1.msra.mxu0 0.0
  %4909 = vmatprep.subr.mxu0 0.0
  %4910 = vmatpush1.msra.mxu0 0.0
  %4911 = vmatprep.subr.mxu0 0.0
  %4912 = vmatpush1.msra.mxu0 0.0
  %4913 = vmatprep.subr.mxu0 0.0
  %4914 = vmatpush1.msra.mxu0 0.0
  %4915 = vmatprep.subr.mxu0 0.0
  %4916 = vmatpush1.msra.mxu0 0.0
  %4917 = vmatprep.subr.mxu0 0.0
  %4918 = vmatpush1.msra.mxu0 0.0
  %4919 = vmatprep.subr.mxu0 0.0
  %4920 = vmatpush1.msra.mxu0 0.0
  %4921 = vmatprep.subr.mxu0 0.0
  %4922 = vmatpush1.msra.mxu0 0.0
  %4923 = vmatprep.subr.mxu0 0.0
  %4924 = vmatpush1.msra.mxu0 0.0
  %4925 = vmatprep.subr.mxu0 0.0
  %4926 = vmatpush1.msra.mxu0 0.0
  %4927 = vmatprep.subr.mxu0 0.0
  %4928 = vmatpush1.msra.mxu0 0.0
  %4929 = vmatprep.subr.mxu0 0.0
  %4930 = vmatpush1.msra.mxu0 0.0
  %4931 = vmatprep.subr.mxu0 0.0
  %4932 = vmatpush1.msra.mxu0 0.0
  %4933 = vmatprep.subr.mxu0 0.0
  %4934 = vmatpush1.msra.mxu0 0.0
  %4935 = vmatprep.subr.mxu0 0.0
  %4936 = vmatpush1.msra.mxu0 0.0
  %4937 = vmatprep.subr.mxu0 0.0
  %4938 = vmatpush1.msra.mxu0 0.0
  %4939 = vmatprep.subr.mxu0 0.0
  %4940 = vmatpush1.msra.mxu0 0.0
  %4941 = vmatprep.subr.mxu0 0.0
  %4942 = vmatpush1.msra.mxu0 0.0
  %4943 = vmatprep.subr.mxu0 0.0
  %4944 = vmatpush1.msra.mxu0 0.0
  %4945 = vmatprep.subr.mxu0 0.0
  %4946 = vmatpush1.msra.mxu0 0.0
  %4947 = vmatprep.subr.mxu0 0.0
  %4948 = vmatpush1.msra.mxu0 0.0
  %4949 = vmatprep.subr.mxu0 0.0
  %4950 = vmatpush1.msra.mxu0 0.0
  %4951 = vmatprep.subr.mxu0 0.0
  %4952 = vmatpush1.msra.mxu0 0.0
  %4953 = vmatprep.subr.mxu0 0.0
  %4954 = vmatpush1.msra.mxu0 0.0
  %4955 = vmatprep.subr.mxu0 0.0
  %4956 = vmatpush1.msra.mxu0 0.0
  %4957 = vmatprep.subr.mxu0 0.0
  %4958 = vmatpush1.msra.mxu0 0.0
  %4959 = vmatprep.subr.mxu0 0.0
  %4960 = vmatpush1.msra.mxu0 0.0
  %4961 = vmatprep.mubr.f32.mxu0 0.0
  %4962 = vmatmul.mubr.f32.gmra.mrb[0].mxu0 %v4287
  %v4963 = vpop.f32.mrb[0].mxu0
  %v4964 = vadd.f32 %v4880, %v4963
  %v4965 = vpop.f32.mrb[0].mxu0
  %4966 = vdwg.mxu0
  %4967 = vmatprep.subr.mxu0 0.0
  %4968 = vmatpush1.msra.mxu0 %v4228
  %4969 = vmatprep.subr.mxu0 0.0
  %4970 = vmatpush1.msra.mxu0 %v4229
  %4971 = vmatprep.subr.mxu0 0.0
  %4972 = vmatpush1.msra.mxu0 %v4230
  %4973 = vmatprep.subr.mxu0 0.0
  %4974 = vmatpush1.msra.mxu0 %v4231
  %4975 = vmatprep.subr.mxu0 0.0
  %4976 = vmatpush1.msra.mxu0 0.0
  %4977 = vmatprep.subr.mxu0 0.0
  %4978 = vmatpush1.msra.mxu0 0.0
  %4979 = vmatprep.subr.mxu0 0.0
  %4980 = vmatpush1.msra.mxu0 0.0
  %4981 = vmatprep.subr.mxu0 0.0
  %4982 = vmatpush1.msra.mxu0 0.0
  %4983 = vmatprep.subr.mxu0 0.0
  %4984 = vmatpush1.msra.mxu0 0.0
  %4985 = vmatprep.subr.mxu0 0.0
  %4986 = vmatpush1.msra.mxu0 0.0
  %4987 = vmatprep.subr.mxu0 0.0
  %4988 = vmatpush1.msra.mxu0 0.0
  %4989 = vmatprep.subr.mxu0 0.0
  %4990 = vmatpush1.msra.mxu0 0.0
  %4991 = vmatprep.subr.mxu0 0.0
  %4992 = vmatpush1.msra.mxu0 0.0
  %4993 = vmatprep.subr.mxu0 0.0
  %4994 = vmatpush1.msra.mxu0 0.0
  %4995 = vmatprep.subr.mxu0 0.0
  %4996 = vmatpush1.msra.mxu0 0.0
  %4997 = vmatprep.subr.mxu0 0.0
  %4998 = vmatpush1.msra.mxu0 0.0
  %4999 = vmatprep.subr.mxu0 0.0
  %5000 = vmatpush1.msra.mxu0 0.0
  %5001 = vmatprep.subr.mxu0 0.0
  %5002 = vmatpush1.msra.mxu0 0.0
  %5003 = vmatprep.subr.mxu0 0.0
  %5004 = vmatpush1.msra.mxu0 0.0
  %5005 = vmatprep.subr.mxu0 0.0
  %5006 = vmatpush1.msra.mxu0 0.0
  %5007 = vmatprep.subr.mxu0 0.0
  %5008 = vmatpush1.msra.mxu0 0.0
  %5009 = vmatprep.subr.mxu0 0.0
  %5010 = vmatpush1.msra.mxu0 0.0
  %5011 = vmatprep.subr.mxu0 0.0
  %5012 = vmatpush1.msra.mxu0 0.0
  %5013 = vmatprep.subr.mxu0 0.0
  %5014 = vmatpush1.msra.mxu0 0.0
  %5015 = vmatprep.subr.mxu0 0.0
  %5016 = vmatpush1.msra.mxu0 0.0
  %5017 = vmatprep.subr.mxu0 0.0
  %5018 = vmatpush1.msra.mxu0 0.0
  %5019 = vmatprep.subr.mxu0 0.0
  %5020 = vmatpush1.msra.mxu0 0.0
  %5021 = vmatprep.subr.mxu0 0.0
  %5022 = vmatpush1.msra.mxu0 0.0
  %5023 = vmatprep.subr.mxu0 0.0
  %5024 = vmatpush1.msra.mxu0 0.0
  %5025 = vmatprep.subr.mxu0 0.0
  %5026 = vmatpush1.msra.mxu0 0.0
  %5027 = vmatprep.subr.mxu0 0.0
  %5028 = vmatpush1.msra.mxu0 0.0
  %5029 = vmatprep.subr.mxu0 0.0
  %5030 = vmatpush1.msra.mxu0 0.0
  %5031 = vmatprep.mubr.f32.mxu0 0.0
  %5032 = vmatmul.mubr.f32.gmra.mrb[0].mxu0 %v4287
  %v5033 = vpop.f32.mrb[0].mxu0
  %v5034 = vadd.f32 %v4884, %v5033
  %v5035 = vpop.f32.mrb[0].mxu0
  %5036 = vdwg.mxu0
  %5037 = vmatprep.subr.mxu0 0.0
  %5038 = vmatpush1.msra.mxu0 %v4232
  %5039 = vmatprep.subr.mxu0 0.0
  %5040 = vmatpush1.msra.mxu0 %v4233
  %5041 = vmatprep.subr.mxu0 0.0
  %5042 = vmatpush1.msra.mxu0 %v4234
  %5043 = vmatprep.subr.mxu0 0.0
  %5044 = vmatpush1.msra.mxu0 %v4235
  %5045 = vmatprep.subr.mxu0 0.0
  %5046 = vmatpush1.msra.mxu0 0.0
  %5047 = vmatprep.subr.mxu0 0.0
  %5048 = vmatpush1.msra.mxu0 0.0
  %5049 = vmatprep.subr.mxu0 0.0
  %5050 = vmatpush1.msra.mxu0 0.0
  %5051 = vmatprep.subr.mxu0 0.0
  %5052 = vmatpush1.msra.mxu0 0.0
  %5053 = vmatprep.subr.mxu0 0.0
  %5054 = vmatpush1.msra.mxu0 0.0
  %5055 = vmatprep.subr.mxu0 0.0
  %5056 = vmatpush1.msra.mxu0 0.0
  %5057 = vmatprep.subr.mxu0 0.0
  %5058 = vmatpush1.msra.mxu0 0.0
  %5059 = vmatprep.subr.mxu0 0.0
  %5060 = vmatpush1.msra.mxu0 0.0
  %5061 = vmatprep.subr.mxu0 0.0
  %5062 = vmatpush1.msra.mxu0 0.0
  %5063 = vmatprep.subr.mxu0 0.0
  %5064 = vmatpush1.msra.mxu0 0.0
  %5065 = vmatprep.subr.mxu0 0.0
  %5066 = vmatpush1.msra.mxu0 0.0
  %5067 = vmatprep.subr.mxu0 0.0
  %5068 = vmatpush1.msra.mxu0 0.0
  %5069 = vmatprep.subr.mxu0 0.0
  %5070 = vmatpush1.msra.mxu0 0.0
  %5071 = vmatprep.subr.mxu0 0.0
  %5072 = vmatpush1.msra.mxu0 0.0
  %5073 = vmatprep.subr.mxu0 0.0
  %5074 = vmatpush1.msra.mxu0 0.0
  %5075 = vmatprep.subr.mxu0 0.0
  %5076 = vmatpush1.msra.mxu0 0.0
  %5077 = vmatprep.subr.mxu0 0.0
  %5078 = vmatpush1.msra.mxu0 0.0
  %5079 = vmatprep.subr.mxu0 0.0
  %5080 = vmatpush1.msra.mxu0 0.0
  %5081 = vmatprep.subr.mxu0 0.0
  %5082 = vmatpush1.msra.mxu0 0.0
  %5083 = vmatprep.subr.mxu0 0.0
  %5084 = vmatpush1.msra.mxu0 0.0
  %5085 = vmatprep.subr.mxu0 0.0
  %5086 = vmatpush1.msra.mxu0 0.0
  %5087 = vmatprep.subr.mxu0 0.0
  %5088 = vmatpush1.msra.mxu0 0.0
  %5089 = vmatprep.subr.mxu0 0.0
  %5090 = vmatpush1.msra.mxu0 0.0
  %5091 = vmatprep.subr.mxu0 0.0
  %5092 = vmatpush1.msra.mxu0 0.0
  %5093 = vmatprep.subr.mxu0 0.0
  %5094 = vmatpush1.msra.mxu0 0.0
  %5095 = vmatprep.subr.mxu0 0.0
  %5096 = vmatpush1.msra.mxu0 0.0
  %5097 = vmatprep.subr.mxu0 0.0
  %5098 = vmatpush1.msra.mxu0 0.0
  %5099 = vmatprep.subr.mxu0 0.0
  %5100 = vmatpush1.msra.mxu0 0.0
  %5101 = vmatprep.mubr.f32.mxu0 0.0
  %5102 = vmatmul.mubr.f32.gmra.mrb[0].mxu0 %v4287
  %v5103 = vpop.f32.mrb[0].mxu0
  %v5104 = vadd.f32 %v4888, %v5103
  %v5105 = vpop.f32.mrb[0].mxu0
  %5106 = vdwg.mxu0
  %5107 = vmatprep.subr.mxu0 0.0
  %5108 = vmatpush1.msra.mxu0 %v4236
  %5109 = vmatprep.subr.mxu0 0.0
  %5110 = vmatpush1.msra.mxu0 %v4237
  %5111 = vmatprep.subr.mxu0 0.0
  %5112 = vmatpush1.msra.mxu0 %v4238
  %5113 = vmatprep.subr.mxu0 0.0
  %5114 = vmatpush1.msra.mxu0 %v4239
  %5115 = vmatprep.subr.mxu0 0.0
  %5116 = vmatpush1.msra.mxu0 0.0
  %5117 = vmatprep.subr.mxu0 0.0
  %5118 = vmatpush1.msra.mxu0 0.0
  %5119 = vmatprep.subr.mxu0 0.0
  %5120 = vmatpush1.msra.mxu0 0.0
  %5121 = vmatprep.subr.mxu0 0.0
  %5122 = vmatpush1.msra.mxu0 0.0
  %5123 = vmatprep.subr.mxu0 0.0
  %5124 = vmatpush1.msra.mxu0 0.0
  %5125 = vmatprep.subr.mxu0 0.0
  %5126 = vmatpush1.msra.mxu0 0.0
  %5127 = vmatprep.subr.mxu0 0.0
  %5128 = vmatpush1.msra.mxu0 0.0
  %5129 = vmatprep.subr.mxu0 0.0
  %5130 = vmatpush1.msra.mxu0 0.0
  %5131 = vmatprep.subr.mxu0 0.0
  %5132 = vmatpush1.msra.mxu0 0.0
  %5133 = vmatprep.subr.mxu0 0.0
  %5134 = vmatpush1.msra.mxu0 0.0
  %5135 = vmatprep.subr.mxu0 0.0
  %5136 = vmatpush1.msra.mxu0 0.0
  %5137 = vmatprep.subr.mxu0 0.0
  %5138 = vmatpush1.msra.mxu0 0.0
  %5139 = vmatprep.subr.mxu0 0.0
  %5140 = vmatpush1.msra.mxu0 0.0
  %5141 = vmatprep.subr.mxu0 0.0
  %5142 = vmatpush1.msra.mxu0 0.0
  %5143 = vmatprep.subr.mxu0 0.0
  %5144 = vmatpush1.msra.mxu0 0.0
  %5145 = vmatprep.subr.mxu0 0.0
  %5146 = vmatpush1.msra.mxu0 0.0
  %5147 = vmatprep.subr.mxu0 0.0
  %5148 = vmatpush1.msra.mxu0 0.0
  %5149 = vmatprep.subr.mxu0 0.0
  %5150 = vmatpush1.msra.mxu0 0.0
  %5151 = vmatprep.subr.mxu0 0.0
  %5152 = vmatpush1.msra.mxu0 0.0
  %5153 = vmatprep.subr.mxu0 0.0
  %5154 = vmatpush1.msra.mxu0 0.0
  %5155 = vmatprep.subr.mxu0 0.0
  %5156 = vmatpush1.msra.mxu0 0.0
  %5157 = vmatprep.subr.mxu0 0.0
  %5158 = vmatpush1.msra.mxu0 0.0
  %5159 = vmatprep.subr.mxu0 0.0
  %5160 = vmatpush1.msra.mxu0 0.0
  %5161 = vmatprep.subr.mxu0 0.0
  %5162 = vmatpush1.msra.mxu0 0.0
  %5163 = vmatprep.subr.mxu0 0.0
  %5164 = vmatpush1.msra.mxu0 0.0
  %5165 = vmatprep.subr.mxu0 0.0
  %5166 = vmatpush1.msra.mxu0 0.0
  %5167 = vmatprep.subr.mxu0 0.0
  %5168 = vmatpush1.msra.mxu0 0.0
  %5169 = vmatprep.subr.mxu0 0.0
  %5170 = vmatpush1.msra.mxu0 0.0
  %5171 = vmatprep.mubr.f32.mxu0 0.0
  %5172 = vmatmul.mubr.f32.gmra.mrb[0].mxu0 %v4287
  %v5173 = vpop.f32.mrb[0].mxu0
  %v5174 = vadd.f32 %v4892, %v5173
  %v5175 = vpop.f32.mrb[0].mxu0
  %5176 = vdwg.mxu0
  %v5178 = vsel %vm1099, %v4356, 0
  %v5181 = vsel %vm1099, %v4660, 0
  %5183 = vmatprep.subr.mxu0 0.0
  %5184 = vmatpush1.xpose.msra.mxu0 %v5181
  %5185 = vmatprep.subr.mxu0 0.0
  %5186 = vmatpush1.xpose.msra.mxu0 0.0
  %5187 = vmatprep.subr.mxu0 0.0
  %5188 = vmatpush1.xpose.msra.mxu0 0.0
  %5189 = vmatprep.subr.mxu0 0.0
  %5190 = vmatpush1.xpose.msra.mxu0 0.0
  %5191 = vmatprep.subr.mxu0 0.0
  %5192 = vmatpush1.xpose.msra.mxu0 0.0
  %5193 = vmatprep.subr.mxu0 0.0
  %5194 = vmatpush1.xpose.msra.mxu0 0.0
  %5195 = vmatprep.subr.mxu0 0.0
  %5196 = vmatpush1.xpose.msra.mxu0 0.0
  %5197 = vmatprep.subr.mxu0 0.0
  %5198 = vmatpush1.xpose.msra.mxu0 0.0
  %5199 = vmatprep.subr.mxu0 0.0
  %5200 = vmatpush1.xpose.msra.mxu0 0.0
  %5201 = vmatprep.subr.mxu0 0.0
  %5202 = vmatpush1.xpose.msra.mxu0 0.0
  %5203 = vmatprep.subr.mxu0 0.0
  %5204 = vmatpush1.xpose.msra.mxu0 0.0
  %5205 = vmatprep.subr.mxu0 0.0
  %5206 = vmatpush1.xpose.msra.mxu0 0.0
  %5207 = vmatprep.subr.mxu0 0.0
  %5208 = vmatpush1.xpose.msra.mxu0 0.0
  %5209 = vmatprep.subr.mxu0 0.0
  %5210 = vmatpush1.xpose.msra.mxu0 0.0
  %5211 = vmatprep.subr.mxu0 0.0
  %5212 = vmatpush1.xpose.msra.mxu0 0.0
  %5213 = vmatprep.subr.mxu0 0.0
  %5214 = vmatpush1.xpose.msra.mxu0 0.0
  %5215 = vmatprep.subr.mxu0 0.0
  %5216 = vmatpush1.xpose.msra.mxu0 0.0
  %5217 = vmatprep.subr.mxu0 0.0
  %5218 = vmatpush1.xpose.msra.mxu0 0.0
  %5219 = vmatprep.subr.mxu0 0.0
  %5220 = vmatpush1.xpose.msra.mxu0 0.0
  %5221 = vmatprep.subr.mxu0 0.0
  %5222 = vmatpush1.xpose.msra.mxu0 0.0
  %5223 = vmatprep.subr.mxu0 0.0
  %5224 = vmatpush1.xpose.msra.mxu0 0.0
  %5225 = vmatprep.subr.mxu0 0.0
  %5226 = vmatpush1.xpose.msra.mxu0 0.0
  %5227 = vmatprep.subr.mxu0 0.0
  %5228 = vmatpush1.xpose.msra.mxu0 0.0
  %5229 = vmatprep.subr.mxu0 0.0
  %5230 = vmatpush1.xpose.msra.mxu0 0.0
  %5231 = vmatprep.subr.mxu0 0.0
  %5232 = vmatpush1.xpose.msra.mxu0 0.0
  %5233 = vmatprep.subr.mxu0 0.0
  %5234 = vmatpush1.xpose.msra.mxu0 0.0
  %5235 = vmatprep.subr.mxu0 0.0
  %5236 = vmatpush1.xpose.msra.mxu0 0.0
  %5237 = vmatprep.subr.mxu0 0.0
  %5238 = vmatpush1.xpose.msra.mxu0 0.0
  %5239 = vmatprep.subr.mxu0 0.0
  %5240 = vmatpush1.xpose.msra.mxu0 0.0
  %5241 = vmatprep.subr.mxu0 0.0
  %5242 = vmatpush1.xpose.msra.mxu0 0.0
  %5243 = vmatprep.subr.mxu0 0.0
  %5244 = vmatpush1.xpose.msra.mxu0 0.0
  %5245 = vmatprep.subr.mxu0 0.0
  %5246 = vmatpush1.xpose.msra.mxu0 0.0
  %5247 = vmatprep.mubr.f32.mxu0 0.0
  %5248 = vmatmul.mubr.f32.gmra.mrb[0].mxu0 %v5178
  %v5249 = vpop.f32.mrb[0].mxu0
  %v5250 = vadd.f32 0.0, %v5249
  %v5251 = vpop.f32.mrb[0].mxu0
  %5252 = vdwg.mxu0
  %v5254 = vsel %vm1099, %v4426, 0
  %v5257 = vsel %vm1099, %v4730, 0
  %5259 = vmatprep.subr.mxu0 0.0
  %5260 = vmatpush1.xpose.msra.mxu0 %v5257
  %5261 = vmatprep.subr.mxu0 0.0
  %5262 = vmatpush1.xpose.msra.mxu0 0.0
  %5263 = vmatprep.subr.mxu0 0.0
  %5264 = vmatpush1.xpose.msra.mxu0 0.0
  %5265 = vmatprep.subr.mxu0 0.0
  %5266 = vmatpush1.xpose.msra.mxu0 0.0
  %5267 = vmatprep.subr.mxu0 0.0
  %5268 = vmatpush1.xpose.msra.mxu0 0.0
  %5269 = vmatprep.subr.mxu0 0.0
  %5270 = vmatpush1.xpose.msra.mxu0 0.0
  %5271 = vmatprep.subr.mxu0 0.0
  %5272 = vmatpush1.xpose.msra.mxu0 0.0
  %5273 = vmatprep.subr.mxu0 0.0
  %5274 = vmatpush1.xpose.msra.mxu0 0.0
  %5275 = vmatprep.subr.mxu0 0.0
  %5276 = vmatpush1.xpose.msra.mxu0 0.0
  %5277 = vmatprep.subr.mxu0 0.0
  %5278 = vmatpush1.xpose.msra.mxu0 0.0
  %5279 = vmatprep.subr.mxu0 0.0
  %5280 = vmatpush1.xpose.msra.mxu0 0.0
  %5281 = vmatprep.subr.mxu0 0.0
  %5282 = vmatpush1.xpose.msra.mxu0 0.0
  %5283 = vmatprep.subr.mxu0 0.0
  %5284 = vmatpush1.xpose.msra.mxu0 0.0
  %5285 = vmatprep.subr.mxu0 0.0
  %5286 = vmatpush1.xpose.msra.mxu0 0.0
  %5287 = vmatprep.subr.mxu0 0.0
  %5288 = vmatpush1.xpose.msra.mxu0 0.0
  %5289 = vmatprep.subr.mxu0 0.0
  %5290 = vmatpush1.xpose.msra.mxu0 0.0
  %5291 = vmatprep.subr.mxu0 0.0
  %5292 = vmatpush1.xpose.msra.mxu0 0.0
  %5293 = vmatprep.subr.mxu0 0.0
  %5294 = vmatpush1.xpose.msra.mxu0 0.0
  %5295 = vmatprep.subr.mxu0 0.0
  %5296 = vmatpush1.xpose.msra.mxu0 0.0
  %5297 = vmatprep.subr.mxu0 0.0
  %5298 = vmatpush1.xpose.msra.mxu0 0.0
  %5299 = vmatprep.subr.mxu0 0.0
  %5300 = vmatpush1.xpose.msra.mxu0 0.0
  %5301 = vmatprep.subr.mxu0 0.0
  %5302 = vmatpush1.xpose.msra.mxu0 0.0
  %5303 = vmatprep.subr.mxu0 0.0
  %5304 = vmatpush1.xpose.msra.mxu0 0.0
  %5305 = vmatprep.subr.mxu0 0.0
  %5306 = vmatpush1.xpose.msra.mxu0 0.0
  %5307 = vmatprep.subr.mxu0 0.0
  %5308 = vmatpush1.xpose.msra.mxu0 0.0
  %5309 = vmatprep.subr.mxu0 0.0
  %5310 = vmatpush1.xpose.msra.mxu0 0.0
  %5311 = vmatprep.subr.mxu0 0.0
  %5312 = vmatpush1.xpose.msra.mxu0 0.0
  %5313 = vmatprep.subr.mxu0 0.0
  %5314 = vmatpush1.xpose.msra.mxu0 0.0
  %5315 = vmatprep.subr.mxu0 0.0
  %5316 = vmatpush1.xpose.msra.mxu0 0.0
  %5317 = vmatprep.subr.mxu0 0.0
  %5318 = vmatpush1.xpose.msra.mxu0 0.0
  %5319 = vmatprep.subr.mxu0 0.0
  %5320 = vmatpush1.xpose.msra.mxu0 0.0
  %5321 = vmatprep.subr.mxu0 0.0
  %5322 = vmatpush1.xpose.msra.mxu0 0.0
  %5323 = vmatprep.mubr.f32.mxu0 0.0
  %5324 = vmatmul.mubr.f32.gmra.mrb[0].mxu0 %v5254
  %v5325 = vpop.f32.mrb[0].mxu0
  %v5326 = vadd.f32 0.0, %v5325
  %v5327 = vpop.f32.mrb[0].mxu0
  %5328 = vdwg.mxu0
  %v5330 = vsel %vm1099, %v4496, 0
  %v5333 = vsel %vm1099, %v4800, 0
  %5335 = vmatprep.subr.mxu0 0.0
  %5336 = vmatpush1.xpose.msra.mxu0 %v5333
  %5337 = vmatprep.subr.mxu0 0.0
  %5338 = vmatpush1.xpose.msra.mxu0 0.0
  %5339 = vmatprep.subr.mxu0 0.0
  %5340 = vmatpush1.xpose.msra.mxu0 0.0
  %5341 = vmatprep.subr.mxu0 0.0
  %5342 = vmatpush1.xpose.msra.mxu0 0.0
  %5343 = vmatprep.subr.mxu0 0.0
  %5344 = vmatpush1.xpose.msra.mxu0 0.0
  %5345 = vmatprep.subr.mxu0 0.0
  %5346 = vmatpush1.xpose.msra.mxu0 0.0
  %5347 = vmatprep.subr.mxu0 0.0
  %5348 = vmatpush1.xpose.msra.mxu0 0.0
  %5349 = vmatprep.subr.mxu0 0.0
  %5350 = vmatpush1.xpose.msra.mxu0 0.0
  %5351 = vmatprep.subr.mxu0 0.0
  %5352 = vmatpush1.xpose.msra.mxu0 0.0
  %5353 = vmatprep.subr.mxu0 0.0
  %5354 = vmatpush1.xpose.msra.mxu0 0.0
  %5355 = vmatprep.subr.mxu0 0.0
  %5356 = vmatpush1.xpose.msra.mxu0 0.0
  %5357 = vmatprep.subr.mxu0 0.0
  %5358 = vmatpush1.xpose.msra.mxu0 0.0
  %5359 = vmatprep.subr.mxu0 0.0
  %5360 = vmatpush1.xpose.msra.mxu0 0.0
  %5361 = vmatprep.subr.mxu0 0.0
  %5362 = vmatpush1.xpose.msra.mxu0 0.0
  %5363 = vmatprep.subr.mxu0 0.0
  %5364 = vmatpush1.xpose.msra.mxu0 0.0
  %5365 = vmatprep.subr.mxu0 0.0
  %5366 = vmatpush1.xpose.msra.mxu0 0.0
  %5367 = vmatprep.subr.mxu0 0.0
  %5368 = vmatpush1.xpose.msra.mxu0 0.0
  %5369 = vmatprep.subr.mxu0 0.0
  %5370 = vmatpush1.xpose.msra.mxu0 0.0
  %5371 = vmatprep.subr.mxu0 0.0
  %5372 = vmatpush1.xpose.msra.mxu0 0.0
  %5373 = vmatprep.subr.mxu0 0.0
  %5374 = vmatpush1.xpose.msra.mxu0 0.0
  %5375 = vmatprep.subr.mxu0 0.0
  %5376 = vmatpush1.xpose.msra.mxu0 0.0
  %5377 = vmatprep.subr.mxu0 0.0
  %5378 = vmatpush1.xpose.msra.mxu0 0.0
  %5379 = vmatprep.subr.mxu0 0.0
  %5380 = vmatpush1.xpose.msra.mxu0 0.0
  %5381 = vmatprep.subr.mxu0 0.0
  %5382 = vmatpush1.xpose.msra.mxu0 0.0
  %5383 = vmatprep.subr.mxu0 0.0
  %5384 = vmatpush1.xpose.msra.mxu0 0.0
  %5385 = vmatprep.subr.mxu0 0.0
  %5386 = vmatpush1.xpose.msra.mxu0 0.0
  %5387 = vmatprep.subr.mxu0 0.0
  %5388 = vmatpush1.xpose.msra.mxu0 0.0
  %5389 = vmatprep.subr.mxu0 0.0
  %5390 = vmatpush1.xpose.msra.mxu0 0.0
  %5391 = vmatprep.subr.mxu0 0.0
  %5392 = vmatpush1.xpose.msra.mxu0 0.0
  %5393 = vmatprep.subr.mxu0 0.0
  %5394 = vmatpush1.xpose.msra.mxu0 0.0
  %5395 = vmatprep.subr.mxu0 0.0
  %5396 = vmatpush1.xpose.msra.mxu0 0.0
  %5397 = vmatprep.subr.mxu0 0.0
  %5398 = vmatpush1.xpose.msra.mxu0 0.0
  %5399 = vmatprep.mubr.f32.mxu0 0.0
  %5400 = vmatmul.mubr.f32.gmra.mrb[0].mxu0 %v5330
  %v5401 = vpop.f32.mrb[0].mxu0
  %v5402 = vadd.f32 0.0, %v5401
  %v5403 = vpop.f32.mrb[0].mxu0
  %5404 = vdwg.mxu0
  %v5406 = vsel %vm1099, %v4566, 0
  %v5409 = vsel %vm1099, %v4870, 0
  %5411 = vmatprep.subr.mxu0 0.0
  %5412 = vmatpush1.xpose.msra.mxu0 %v5409
  %5413 = vmatprep.subr.mxu0 0.0
  %5414 = vmatpush1.xpose.msra.mxu0 0.0
  %5415 = vmatprep.subr.mxu0 0.0
  %5416 = vmatpush1.xpose.msra.mxu0 0.0
  %5417 = vmatprep.subr.mxu0 0.0
  %5418 = vmatpush1.xpose.msra.mxu0 0.0
  %5419 = vmatprep.subr.mxu0 0.0
  %5420 = vmatpush1.xpose.msra.mxu0 0.0
  %5421 = vmatprep.subr.mxu0 0.0
  %5422 = vmatpush1.xpose.msra.mxu0 0.0
  %5423 = vmatprep.subr.mxu0 0.0
  %5424 = vmatpush1.xpose.msra.mxu0 0.0
  %5425 = vmatprep.subr.mxu0 0.0
  %5426 = vmatpush1.xpose.msra.mxu0 0.0
  %5427 = vmatprep.subr.mxu0 0.0
  %5428 = vmatpush1.xpose.msra.mxu0 0.0
  %5429 = vmatprep.subr.mxu0 0.0
  %5430 = vmatpush1.xpose.msra.mxu0 0.0
  %5431 = vmatprep.subr.mxu0 0.0
  %5432 = vmatpush1.xpose.msra.mxu0 0.0
  %5433 = vmatprep.subr.mxu0 0.0
  %5434 = vmatpush1.xpose.msra.mxu0 0.0
  %5435 = vmatprep.subr.mxu0 0.0
  %5436 = vmatpush1.xpose.msra.mxu0 0.0
  %5437 = vmatprep.subr.mxu0 0.0
  %5438 = vmatpush1.xpose.msra.mxu0 0.0
  %5439 = vmatprep.subr.mxu0 0.0
  %5440 = vmatpush1.xpose.msra.mxu0 0.0
  %5441 = vmatprep.subr.mxu0 0.0
  %5442 = vmatpush1.xpose.msra.mxu0 0.0
  %5443 = vmatprep.subr.mxu0 0.0
  %5444 = vmatpush1.xpose.msra.mxu0 0.0
  %5445 = vmatprep.subr.mxu0 0.0
  %5446 = vmatpush1.xpose.msra.mxu0 0.0
  %5447 = vmatprep.subr.mxu0 0.0
  %5448 = vmatpush1.xpose.msra.mxu0 0.0
  %5449 = vmatprep.subr.mxu0 0.0
  %5450 = vmatpush1.xpose.msra.mxu0 0.0
  %5451 = vmatprep.subr.mxu0 0.0
  %5452 = vmatpush1.xpose.msra.mxu0 0.0
  %5453 = vmatprep.subr.mxu0 0.0
  %5454 = vmatpush1.xpose.msra.mxu0 0.0
  %5455 = vmatprep.subr.mxu0 0.0
  %5456 = vmatpush1.xpose.msra.mxu0 0.0
  %5457 = vmatprep.subr.mxu0 0.0
  %5458 = vmatpush1.xpose.msra.mxu0 0.0
  %5459 = vmatprep.subr.mxu0 0.0
  %5460 = vmatpush1.xpose.msra.mxu0 0.0
  %5461 = vmatprep.subr.mxu0 0.0
  %5462 = vmatpush1.xpose.msra.mxu0 0.0
  %5463 = vmatprep.subr.mxu0 0.0
  %5464 = vmatpush1.xpose.msra.mxu0 0.0
  %5465 = vmatprep.subr.mxu0 0.0
  %5466 = vmatpush1.xpose.msra.mxu0 0.0
  %5467 = vmatprep.subr.mxu0 0.0
  %5468 = vmatpush1.xpose.msra.mxu0 0.0
  %5469 = vmatprep.subr.mxu0 0.0
  %5470 = vmatpush1.xpose.msra.mxu0 0.0
  %5471 = vmatprep.subr.mxu0 0.0
  %5472 = vmatpush1.xpose.msra.mxu0 0.0
  %5473 = vmatprep.subr.mxu0 0.0
  %5474 = vmatpush1.xpose.msra.mxu0 0.0
  %5475 = vmatprep.mubr.f32.mxu0 0.0
  %5476 = vmatmul.mubr.f32.gmra.mrb[0].mxu0 %v5406
  %v5477 = vpop.f32.mrb[0].mxu0
  %v5478 = vadd.f32 0.0, %v5477
  %v5479 = vpop.f32.mrb[0].mxu0
  %5480 = vdwg.mxu0
  %v5481 = vmul.f32 %v5250, 0.35355338
  %v5482 = vmul.f32 %v5326, 0.35355338
  %v5483 = vmul.f32 %v5402, 0.35355338
  %v5484 = vmul.f32 %v5478, 0.35355338
  %v5485 = vld [vmem:[%s1] sm:$0x1]
  %v5487 = vlaneseq
  %v5488 = vshrl.u32 %v5487, 7
  %v5489 = vsub.s32 0, %v5488
  %v5490 = vrot.slane %v5485, %v5489
  %v5492 = vadd.f32 %v5481, %v5490
  %v5493 = vadd.f32 %v5482, %v5490
  %v5494 = vadd.f32 %v5483, %v5490
  %v5495 = vadd.f32 %v5484, %v5490
  %v5496 = vsel %vm1099, %v5492, -inf
  %5497 = vmax.xlane.f32.xlu0 %v5496
  %v5498 = vpop.xlane.xlu0 %5497
  %v5499 = vsel %vm1099, %v5493, -inf
  %5500 = vmax.xlane.f32.xlu0 %v5499
  %v5501 = vpop.xlane.xlu0 %5500
  %v5502 = vsel %vm1099, %v5494, -inf
  %5503 = vmax.xlane.f32.xlu0 %v5502
  %v5504 = vpop.xlane.xlu0 %5503
  %v5505 = vsel %vm1099, %v5495, -inf
  %5506 = vmax.xlane.f32.xlu0 %v5505
  %v5507 = vpop.xlane.xlu0 %5506
  %v5508 = vsub.f32 %v5492, %v5498
  %v5509 = vsub.f32 %v5493, %v5501
  %v5510 = vsub.f32 %v5494, %v5504
  %v5511 = vsub.f32 %v5495, %v5507
  %v5512 = vmul.f32 %v5508, 1.442695
  %v5513 = vpow.pop %v5512
  %v5514 = vmul.f32 %v5509, 1.442695
  %v5515 = vpow.pop %v5514
  %v5516 = vmul.f32 %v5510, 1.442695
  %v5517 = vpow.pop %v5516
  %v5518 = vmul.f32 %v5511, 1.442695
  %v5519 = vpow.pop %v5518
  %v5520 = vsel %vm1099, %v5513, 0.0
  %5521 = vadd.xlane.f32.xlu0 %v5520
  %v5522 = vpop.xlane.xlu0 %5521
  %v5523 = vsel %vm1099, %v5515, 0.0
  %5524 = vadd.xlane.f32.xlu0 %v5523
  %v5525 = vpop.xlane.xlu0 %5524
  %v5526 = vsel %vm1099, %v5517, 0.0
  %5527 = vadd.xlane.f32.xlu0 %v5526
  %v5528 = vpop.xlane.xlu0 %5527
  %v5529 = vsel %vm1099, %v5519, 0.0
  %5530 = vadd.xlane.f32.xlu0 %v5529
  %v5531 = vpop.xlane.xlu0 %5530
  %v5532 = vrcp.pop %v5522
  %v5533 = vrcp.pop %v5525
  %v5534 = vrcp.pop %v5528
  %v5535 = vrcp.pop %v5531
  %v5536 = vmul.f32 %v5513, %v5532
  %v5537 = vmul.f32 %v5515, %v5533
  %v5538 = vmul.f32 %v5517, %v5534
  %v5539 = vmul.f32 %v5519, %v5535
  %v5541 = vsel %vm1099, %v5536, 0
  %5543 = vmatprep.subr.mxu0 0.0
  %5544 = vmatpush1.msra.mxu0 %v4964
  %5545 = vmatprep.subr.mxu0 0.0
  %5546 = vmatpush1.msra.mxu0 0.0
  %5547 = vmatprep.subr.mxu0 0.0
  %5548 = vmatpush1.msra.mxu0 0.0
  %5549 = vmatprep.subr.mxu0 0.0
  %5550 = vmatpush1.msra.mxu0 0.0
  %5551 = vmatprep.subr.mxu0 0.0
  %5552 = vmatpush1.msra.mxu0 0.0
  %5553 = vmatprep.subr.mxu0 0.0
  %5554 = vmatpush1.msra.mxu0 0.0
  %5555 = vmatprep.subr.mxu0 0.0
  %5556 = vmatpush1.msra.mxu0 0.0
  %5557 = vmatprep.subr.mxu0 0.0
  %5558 = vmatpush1.msra.mxu0 0.0
  %5559 = vmatprep.subr.mxu0 0.0
  %5560 = vmatpush1.msra.mxu0 0.0
  %5561 = vmatprep.subr.mxu0 0.0
  %5562 = vmatpush1.msra.mxu0 0.0
  %5563 = vmatprep.subr.mxu0 0.0
  %5564 = vmatpush1.msra.mxu0 0.0
  %5565 = vmatprep.subr.mxu0 0.0
  %5566 = vmatpush1.msra.mxu0 0.0
  %5567 = vmatprep.subr.mxu0 0.0
  %5568 = vmatpush1.msra.mxu0 0.0
  %5569 = vmatprep.subr.mxu0 0.0
  %5570 = vmatpush1.msra.mxu0 0.0
  %5571 = vmatprep.subr.mxu0 0.0
  %5572 = vmatpush1.msra.mxu0 0.0
  %5573 = vmatprep.subr.mxu0 0.0
  %5574 = vmatpush1.msra.mxu0 0.0
  %5575 = vmatprep.subr.mxu0 0.0
  %5576 = vmatpush1.msra.mxu0 0.0
  %5577 = vmatprep.subr.mxu0 0.0
  %5578 = vmatpush1.msra.mxu0 0.0
  %5579 = vmatprep.subr.mxu0 0.0
  %5580 = vmatpush1.msra.mxu0 0.0
  %5581 = vmatprep.subr.mxu0 0.0
  %5582 = vmatpush1.msra.mxu0 0.0
  %5583 = vmatprep.subr.mxu0 0.0
  %5584 = vmatpush1.msra.mxu0 0.0
  %5585 = vmatprep.subr.mxu0 0.0
  %5586 = vmatpush1.msra.mxu0 0.0
  %5587 = vmatprep.subr.mxu0 0.0
  %5588 = vmatpush1.msra.mxu0 0.0
  %5589 = vmatprep.subr.mxu0 0.0
  %5590 = vmatpush1.msra.mxu0 0.0
  %5591 = vmatprep.subr.mxu0 0.0
  %5592 = vmatpush1.msra.mxu0 0.0
  %5593 = vmatprep.subr.mxu0 0.0
  %5594 = vmatpush1.msra.mxu0 0.0
  %5595 = vmatprep.subr.mxu0 0.0
  %5596 = vmatpush1.msra.mxu0 0.0
  %5597 = vmatprep.subr.mxu0 0.0
  %5598 = vmatpush1.msra.mxu0 0.0
  %5599 = vmatprep.subr.mxu0 0.0
  %5600 = vmatpush1.msra.mxu0 0.0
  %5601 = vmatprep.subr.mxu0 0.0
  %5602 = vmatpush1.msra.mxu0 0.0
  %5603 = vmatprep.subr.mxu0 0.0
  %5604 = vmatpush1.msra.mxu0 0.0
  %5605 = vmatprep.subr.mxu0 0.0
  %5606 = vmatpush1.msra.mxu0 0.0
  %5607 = vmatprep.mubr.f32.mxu0 0.0
  %5608 = vmatmul.mubr.f32.gmra.mrb[0].mxu0 %v5541
  %v5609 = vpop.f32.mrb[0].mxu0
  %v5610 = vadd.f32 0.0, %v5609
  %v5611 = vpop.f32.mrb[0].mxu0
  %5612 = vdwg.mxu0
  %v5614 = vsel %vm1099, %v5537, 0
  %5616 = vmatprep.subr.mxu0 0.0
  %5617 = vmatpush1.msra.mxu0 %v5034
  %5618 = vmatprep.subr.mxu0 0.0
  %5619 = vmatpush1.msra.mxu0 0.0
  %5620 = vmatprep.subr.mxu0 0.0
  %5621 = vmatpush1.msra.mxu0 0.0
  %5622 = vmatprep.subr.mxu0 0.0
  %5623 = vmatpush1.msra.mxu0 0.0
  %5624 = vmatprep.subr.mxu0 0.0
  %5625 = vmatpush1.msra.mxu0 0.0
  %5626 = vmatprep.subr.mxu0 0.0
  %5627 = vmatpush1.msra.mxu0 0.0
  %5628 = vmatprep.subr.mxu0 0.0
  %5629 = vmatpush1.msra.mxu0 0.0
  %5630 = vmatprep.subr.mxu0 0.0
  %5631 = vmatpush1.msra.mxu0 0.0
  %5632 = vmatprep.subr.mxu0 0.0
  %5633 = vmatpush1.msra.mxu0 0.0
  %5634 = vmatprep.subr.mxu0 0.0
  %5635 = vmatpush1.msra.mxu0 0.0
  %5636 = vmatprep.subr.mxu0 0.0
  %5637 = vmatpush1.msra.mxu0 0.0
  %5638 = vmatprep.subr.mxu0 0.0
  %5639 = vmatpush1.msra.mxu0 0.0
  %5640 = vmatprep.subr.mxu0 0.0
  %5641 = vmatpush1.msra.mxu0 0.0
  %5642 = vmatprep.subr.mxu0 0.0
  %5643 = vmatpush1.msra.mxu0 0.0
  %5644 = vmatprep.subr.mxu0 0.0
  %5645 = vmatpush1.msra.mxu0 0.0
  %5646 = vmatprep.subr.mxu0 0.0
  %5647 = vmatpush1.msra.mxu0 0.0
  %5648 = vmatprep.subr.mxu0 0.0
  %5649 = vmatpush1.msra.mxu0 0.0
  %5650 = vmatprep.subr.mxu0 0.0
  %5651 = vmatpush1.msra.mxu0 0.0
  %5652 = vmatprep.subr.mxu0 0.0
  %5653 = vmatpush1.msra.mxu0 0.0
  %5654 = vmatprep.subr.mxu0 0.0
  %5655 = vmatpush1.msra.mxu0 0.0
  %5656 = vmatprep.subr.mxu0 0.0
  %5657 = vmatpush1.msra.mxu0 0.0
  %5658 = vmatprep.subr.mxu0 0.0
  %5659 = vmatpush1.msra.mxu0 0.0
  %5660 = vmatprep.subr.mxu0 0.0
  %5661 = vmatpush1.msra.mxu0 0.0
  %5662 = vmatprep.subr.mxu0 0.0
  %5663 = vmatpush1.msra.mxu0 0.0
  %5664 = vmatprep.subr.mxu0 0.0
  %5665 = vmatpush1.msra.mxu0 0.0
  %5666 = vmatprep.subr.mxu0 0.0
  %5667 = vmatpush1.msra.mxu0 0.0
  %5668 = vmatprep.subr.mxu0 0.0
  %5669 = vmatpush1.msra.mxu0 0.0
  %5670 = vmatprep.subr.mxu0 0.0
  %5671 = vmatpush1.msra.mxu0 0.0
  %5672 = vmatprep.subr.mxu0 0.0
  %5673 = vmatpush1.msra.mxu0 0.0
  %5674 = vmatprep.subr.mxu0 0.0
  %5675 = vmatpush1.msra.mxu0 0.0
  %5676 = vmatprep.subr.mxu0 0.0
  %5677 = vmatpush1.msra.mxu0 0.0
  %5678 = vmatprep.subr.mxu0 0.0
  %5679 = vmatpush1.msra.mxu0 0.0
  %5680 = vmatprep.mubr.f32.mxu0 0.0
  %5681 = vmatmul.mubr.f32.gmra.mrb[0].mxu0 %v5614
  %v5682 = vpop.f32.mrb[0].mxu0
  %v5683 = vadd.f32 0.0, %v5682
  %v5684 = vpop.f32.mrb[0].mxu0
  %5685 = vdwg.mxu0
  %v5687 = vsel %vm1099, %v5538, 0
  %5689 = vmatprep.subr.mxu0 0.0
  %5690 = vmatpush1.msra.mxu0 %v5104
  %5691 = vmatprep.subr.mxu0 0.0
  %5692 = vmatpush1.msra.mxu0 0.0
  %5693 = vmatprep.subr.mxu0 0.0
  %5694 = vmatpush1.msra.mxu0 0.0
  %5695 = vmatprep.subr.mxu0 0.0
  %5696 = vmatpush1.msra.mxu0 0.0
  %5697 = vmatprep.subr.mxu0 0.0
  %5698 = vmatpush1.msra.mxu0 0.0
  %5699 = vmatprep.subr.mxu0 0.0
  %5700 = vmatpush1.msra.mxu0 0.0
  %5701 = vmatprep.subr.mxu0 0.0
  %5702 = vmatpush1.msra.mxu0 0.0
  %5703 = vmatprep.subr.mxu0 0.0
  %5704 = vmatpush1.msra.mxu0 0.0
  %5705 = vmatprep.subr.mxu0 0.0
  %5706 = vmatpush1.msra.mxu0 0.0
  %5707 = vmatprep.subr.mxu0 0.0
  %5708 = vmatpush1.msra.mxu0 0.0
  %5709 = vmatprep.subr.mxu0 0.0
  %5710 = vmatpush1.msra.mxu0 0.0
  %5711 = vmatprep.subr.mxu0 0.0
  %5712 = vmatpush1.msra.mxu0 0.0
  %5713 = vmatprep.subr.mxu0 0.0
  %5714 = vmatpush1.msra.mxu0 0.0
  %5715 = vmatprep.subr.mxu0 0.0
  %5716 = vmatpush1.msra.mxu0 0.0
  %5717 = vmatprep.subr.mxu0 0.0
  %5718 = vmatpush1.msra.mxu0 0.0
  %5719 = vmatprep.subr.mxu0 0.0
  %5720 = vmatpush1.msra.mxu0 0.0
  %5721 = vmatprep.subr.mxu0 0.0
  %5722 = vmatpush1.msra.mxu0 0.0
  %5723 = vmatprep.subr.mxu0 0.0
  %5724 = vmatpush1.msra.mxu0 0.0
  %5725 = vmatprep.subr.mxu0 0.0
  %5726 = vmatpush1.msra.mxu0 0.0
  %5727 = vmatprep.subr.mxu0 0.0
  %5728 = vmatpush1.msra.mxu0 0.0
  %5729 = vmatprep.subr.mxu0 0.0
  %5730 = vmatpush1.msra.mxu0 0.0
  %5731 = vmatprep.subr.mxu0 0.0
  %5732 = vmatpush1.msra.mxu0 0.0
  %5733 = vmatprep.subr.mxu0 0.0
  %5734 = vmatpush1.msra.mxu0 0.0
  %5735 = vmatprep.subr.mxu0 0.0
  %5736 = vmatpush1.msra.mxu0 0.0
  %5737 = vmatprep.subr.mxu0 0.0
  %5738 = vmatpush1.msra.mxu0 0.0
  %5739 = vmatprep.subr.mxu0 0.0
  %5740 = vmatpush1.msra.mxu0 0.0
  %5741 = vmatprep.subr.mxu0 0.0
  %5742 = vmatpush1.msra.mxu0 0.0
  %5743 = vmatprep.subr.mxu0 0.0
  %5744 = vmatpush1.msra.mxu0 0.0
  %5745 = vmatprep.subr.mxu0 0.0
  %5746 = vmatpush1.msra.mxu0 0.0
  %5747 = vmatprep.subr.mxu0 0.0
  %5748 = vmatpush1.msra.mxu0 0.0
  %5749 = vmatprep.subr.mxu0 0.0
  %5750 = vmatpush1.msra.mxu0 0.0
  %5751 = vmatprep.subr.mxu0 0.0
  %5752 = vmatpush1.msra.mxu0 0.0
  %5753 = vmatprep.mubr.f32.mxu0 0.0
  %5754 = vmatmul.mubr.f32.gmra.mrb[0].mxu0 %v5687
  %v5755 = vpop.f32.mrb[0].mxu0
  %v5756 = vadd.f32 0.0, %v5755
  %v5757 = vpop.f32.mrb[0].mxu0
  %5758 = vdwg.mxu0
  %v5760 = vsel %vm1099, %v5539, 0
  %5762 = vmatprep.subr.mxu0 0.0
  %5763 = vmatpush1.msra.mxu0 %v5174
  %5764 = vmatprep.subr.mxu0 0.0
  %5765 = vmatpush1.msra.mxu0 0.0
  %5766 = vmatprep.subr.mxu0 0.0
  %5767 = vmatpush1.msra.mxu0 0.0
  %5768 = vmatprep.subr.mxu0 0.0
  %5769 = vmatpush1.msra.mxu0 0.0
  %5770 = vmatprep.subr.mxu0 0.0
  %5771 = vmatpush1.msra.mxu0 0.0
  %5772 = vmatprep.subr.mxu0 0.0
  %5773 = vmatpush1.msra.mxu0 0.0
  %5774 = vmatprep.subr.mxu0 0.0
  %5775 = vmatpush1.msra.mxu0 0.0
  %5776 = vmatprep.subr.mxu0 0.0
  %5777 = vmatpush1.msra.mxu0 0.0
  %5778 = vmatprep.subr.mxu0 0.0
  %5779 = vmatpush1.msra.mxu0 0.0
  %5780 = vmatprep.subr.mxu0 0.0
  %5781 = vmatpush1.msra.mxu0 0.0
  %5782 = vmatprep.subr.mxu0 0.0
  %5783 = vmatpush1.msra.mxu0 0.0
  %5784 = vmatprep.subr.mxu0 0.0
  %5785 = vmatpush1.msra.mxu0 0.0
  %5786 = vmatprep.subr.mxu0 0.0
  %5787 = vmatpush1.msra.mxu0 0.0
  %5788 = vmatprep.subr.mxu0 0.0
  %5789 = vmatpush1.msra.mxu0 0.0
  %5790 = vmatprep.subr.mxu0 0.0
  %5791 = vmatpush1.msra.mxu0 0.0
  %5792 = vmatprep.subr.mxu0 0.0
  %5793 = vmatpush1.msra.mxu0 0.0
  %5794 = vmatprep.subr.mxu0 0.0
  %5795 = vmatpush1.msra.mxu0 0.0
  %5796 = vmatprep.subr.mxu0 0.0
  %5797 = vmatpush1.msra.mxu0 0.0
  %5798 = vmatprep.subr.mxu0 0.0
  %5799 = vmatpush1.msra.mxu0 0.0
  %5800 = vmatprep.subr.mxu0 0.0
  %5801 = vmatpush1.msra.mxu0 0.0
  %5802 = vmatprep.subr.mxu0 0.0
  %5803 = vmatpush1.msra.mxu0 0.0
  %5804 = vmatprep.subr.mxu0 0.0
  %5805 = vmatpush1.msra.mxu0 0.0
  %5806 = vmatprep.subr.mxu0 0.0
  %5807 = vmatpush1.msra.mxu0 0.0
  %5808 = vmatprep.subr.mxu0 0.0
  %5809 = vmatpush1.msra.mxu0 0.0
  %5810 = vmatprep.subr.mxu0 0.0
  %5811 = vmatpush1.msra.mxu0 0.0
  %5812 = vmatprep.subr.mxu0 0.0
  %5813 = vmatpush1.msra.mxu0 0.0
  %5814 = vmatprep.subr.mxu0 0.0
  %5815 = vmatpush1.msra.mxu0 0.0
  %5816 = vmatprep.subr.mxu0 0.0
  %5817 = vmatpush1.msra.mxu0 0.0
  %5818 = vmatprep.subr.mxu0 0.0
  %5819 = vmatpush1.msra.mxu0 0.0
  %5820 = vmatprep.subr.mxu0 0.0
  %5821 = vmatpush1.msra.mxu0 0.0
  %5822 = vmatprep.subr.mxu0 0.0
  %5823 = vmatpush1.msra.mxu0 0.0
  %5824 = vmatprep.subr.mxu0 0.0
  %5825 = vmatpush1.msra.mxu0 0.0
  %5826 = vmatprep.mubr.f32.mxu0 0.0
  %5827 = vmatmul.mubr.f32.gmra.mrb[0].mxu0 %v5760
  %v5828 = vpop.f32.mrb[0].mxu0
  %v5829 = vadd.f32 0.0, %v5828
  %v5830 = vpop.f32.mrb[0].mxu0
  %5831 = vdwg.mxu0
  %v5833 = vsel %vm1099, %v5683, 0
  %5835 = vmatprep.subr.mxu0 0.0
  %5836 = vmatpush1.msra.mxu0 %v4257
  %5837 = vmatprep.subr.mxu0 0.0
  %5838 = vmatpush1.msra.mxu0 0.0
  %5839 = vmatprep.subr.mxu0 0.0
  %5840 = vmatpush1.msra.mxu0 0.0
  %5841 = vmatprep.subr.mxu0 0.0
  %5842 = vmatpush1.msra.mxu0 0.0
  %5843 = vmatprep.subr.mxu0 0.0
  %5844 = vmatpush1.msra.mxu0 0.0
  %5845 = vmatprep.subr.mxu0 0.0
  %5846 = vmatpush1.msra.mxu0 0.0
  %5847 = vmatprep.subr.mxu0 0.0
  %5848 = vmatpush1.msra.mxu0 0.0
  %5849 = vmatprep.subr.mxu0 0.0
  %5850 = vmatpush1.msra.mxu0 0.0
  %5851 = vmatprep.subr.mxu0 0.0
  %5852 = vmatpush1.msra.mxu0 0.0
  %5853 = vmatprep.subr.mxu0 0.0
  %5854 = vmatpush1.msra.mxu0 0.0
  %5855 = vmatprep.subr.mxu0 0.0
  %5856 = vmatpush1.msra.mxu0 0.0
  %5857 = vmatprep.subr.mxu0 0.0
  %5858 = vmatpush1.msra.mxu0 0.0
  %5859 = vmatprep.subr.mxu0 0.0
  %5860 = vmatpush1.msra.mxu0 0.0
  %5861 = vmatprep.subr.mxu0 0.0
  %5862 = vmatpush1.msra.mxu0 0.0
  %5863 = vmatprep.subr.mxu0 0.0
  %5864 = vmatpush1.msra.mxu0 0.0
  %5865 = vmatprep.subr.mxu0 0.0
  %5866 = vmatpush1.msra.mxu0 0.0
  %5867 = vmatprep.subr.mxu0 0.0
  %5868 = vmatpush1.msra.mxu0 0.0
  %5869 = vmatprep.subr.mxu0 0.0
  %5870 = vmatpush1.msra.mxu0 0.0
  %5871 = vmatprep.subr.mxu0 0.0
  %5872 = vmatpush1.msra.mxu0 0.0
  %5873 = vmatprep.subr.mxu0 0.0
  %5874 = vmatpush1.msra.mxu0 0.0
  %5875 = vmatprep.subr.mxu0 0.0
  %5876 = vmatpush1.msra.mxu0 0.0
  %5877 = vmatprep.subr.mxu0 0.0
  %5878 = vmatpush1.msra.mxu0 0.0
  %5879 = vmatprep.subr.mxu0 0.0
  %5880 = vmatpush1.msra.mxu0 0.0
  %5881 = vmatprep.subr.mxu0 0.0
  %5882 = vmatpush1.msra.mxu0 0.0
  %5883 = vmatprep.subr.mxu0 0.0
  %5884 = vmatpush1.msra.mxu0 0.0
  %5885 = vmatprep.subr.mxu0 0.0
  %5886 = vmatpush1.msra.mxu0 0.0
  %5887 = vmatprep.subr.mxu0 0.0
  %5888 = vmatpush1.msra.mxu0 0.0
  %5889 = vmatprep.subr.mxu0 0.0
  %5890 = vmatpush1.msra.mxu0 0.0
  %5891 = vmatprep.subr.mxu0 0.0
  %5892 = vmatpush1.msra.mxu0 0.0
  %5893 = vmatprep.subr.mxu0 0.0
  %5894 = vmatpush1.msra.mxu0 0.0
  %5895 = vmatprep.subr.mxu0 0.0
  %5896 = vmatpush1.msra.mxu0 0.0
  %5897 = vmatprep.subr.mxu0 0.0
  %5898 = vmatpush1.msra.mxu0 0.0
  %5899 = vmatprep.mubr.f32.mxu0 0.0
  %5900 = vmatmul.mubr.f32.gmra.mrb[0].mxu0 %v5833
  %v5901 = vpop.f32.mrb[0].mxu0
  %v5902 = vadd.f32 0.0, %v5901
  %v5903 = vpop.f32.mrb[0].mxu0
  %5904 = vdwg.mxu0
  %v5906 = vsel %vm1099, %v5610, 0
  %5908 = vmatprep.subr.mxu0 0.0
  %5909 = vmatpush1.msra.mxu0 %v4256
  %5910 = vmatprep.subr.mxu0 0.0
  %5911 = vmatpush1.msra.mxu0 0.0
  %5912 = vmatprep.subr.mxu0 0.0
  %5913 = vmatpush1.msra.mxu0 0.0
  %5914 = vmatprep.subr.mxu0 0.0
  %5915 = vmatpush1.msra.mxu0 0.0
  %5916 = vmatprep.subr.mxu0 0.0
  %5917 = vmatpush1.msra.mxu0 0.0
  %5918 = vmatprep.subr.mxu0 0.0
  %5919 = vmatpush1.msra.mxu0 0.0
  %5920 = vmatprep.subr.mxu0 0.0
  %5921 = vmatpush1.msra.mxu0 0.0
  %5922 = vmatprep.subr.mxu0 0.0
  %5923 = vmatpush1.msra.mxu0 0.0
  %5924 = vmatprep.subr.mxu0 0.0
  %5925 = vmatpush1.msra.mxu0 0.0
  %5926 = vmatprep.subr.mxu0 0.0
  %5927 = vmatpush1.msra.mxu0 0.0
  %5928 = vmatprep.subr.mxu0 0.0
  %5929 = vmatpush1.msra.mxu0 0.0
  %5930 = vmatprep.subr.mxu0 0.0
  %5931 = vmatpush1.msra.mxu0 0.0
  %5932 = vmatprep.subr.mxu0 0.0
  %5933 = vmatpush1.msra.mxu0 0.0
  %5934 = vmatprep.subr.mxu0 0.0
  %5935 = vmatpush1.msra.mxu0 0.0
  %5936 = vmatprep.subr.mxu0 0.0
  %5937 = vmatpush1.msra.mxu0 0.0
  %5938 = vmatprep.subr.mxu0 0.0
  %5939 = vmatpush1.msra.mxu0 0.0
  %5940 = vmatprep.subr.mxu0 0.0
  %5941 = vmatpush1.msra.mxu0 0.0
  %5942 = vmatprep.subr.mxu0 0.0
  %5943 = vmatpush1.msra.mxu0 0.0
  %5944 = vmatprep.subr.mxu0 0.0
  %5945 = vmatpush1.msra.mxu0 0.0
  %5946 = vmatprep.subr.mxu0 0.0
  %5947 = vmatpush1.msra.mxu0 0.0
  %5948 = vmatprep.subr.mxu0 0.0
  %5949 = vmatpush1.msra.mxu0 0.0
  %5950 = vmatprep.subr.mxu0 0.0
  %5951 = vmatpush1.msra.mxu0 0.0
  %5952 = vmatprep.subr.mxu0 0.0
  %5953 = vmatpush1.msra.mxu0 0.0
  %5954 = vmatprep.subr.mxu0 0.0
  %5955 = vmatpush1.msra.mxu0 0.0
  %5956 = vmatprep.subr.mxu0 0.0
  %5957 = vmatpush1.msra.mxu0 0.0
  %5958 = vmatprep.subr.mxu0 0.0
  %5959 = vmatpush1.msra.mxu0 0.0
  %5960 = vmatprep.subr.mxu0 0.0
  %5961 = vmatpush1.msra.mxu0 0.0
  %5962 = vmatprep.subr.mxu0 0.0
  %5963 = vmatpush1.msra.mxu0 0.0
  %5964 = vmatprep.subr.mxu0 0.0
  %5965 = vmatpush1.msra.mxu0 0.0
  %5966 = vmatprep.subr.mxu0 0.0
  %5967 = vmatpush1.msra.mxu0 0.0
  %5968 = vmatprep.subr.mxu0 0.0
  %5969 = vmatpush1.msra.mxu0 0.0
  %5970 = vmatprep.subr.mxu0 0.0
  %5971 = vmatpush1.msra.mxu0 0.0
  %5972 = vmatprep.mubr.f32.mxu0 0.0
  %5973 = vmatmul.mubr.f32.gmra.mrb[0].mxu0 %v5906
  %v5974 = vpop.f32.mrb[0].mxu0
  %v5975 = vadd.f32 %v5902, %v5974
  %v5976 = vpop.f32.mrb[0].mxu0
  %5977 = vdwg.mxu0
  %v5979 = vsel %vm1099, %v5756, 0
  %5981 = vmatprep.subr.mxu0 0.0
  %5982 = vmatpush1.msra.mxu0 %v4258
  %5983 = vmatprep.subr.mxu0 0.0
  %5984 = vmatpush1.msra.mxu0 0.0
  %5985 = vmatprep.subr.mxu0 0.0
  %5986 = vmatpush1.msra.mxu0 0.0
  %5987 = vmatprep.subr.mxu0 0.0
  %5988 = vmatpush1.msra.mxu0 0.0
  %5989 = vmatprep.subr.mxu0 0.0
  %5990 = vmatpush1.msra.mxu0 0.0
  %5991 = vmatprep.subr.mxu0 0.0
  %5992 = vmatpush1.msra.mxu0 0.0
  %5993 = vmatprep.subr.mxu0 0.0
  %5994 = vmatpush1.msra.mxu0 0.0
  %5995 = vmatprep.subr.mxu0 0.0
  %5996 = vmatpush1.msra.mxu0 0.0
  %5997 = vmatprep.subr.mxu0 0.0
  %5998 = vmatpush1.msra.mxu0 0.0
  %5999 = vmatprep.subr.mxu0 0.0
  %6000 = vmatpush1.msra.mxu0 0.0
  %6001 = vmatprep.subr.mxu0 0.0
  %6002 = vmatpush1.msra.mxu0 0.0
  %6003 = vmatprep.subr.mxu0 0.0
  %6004 = vmatpush1.msra.mxu0 0.0
  %6005 = vmatprep.subr.mxu0 0.0
  %6006 = vmatpush1.msra.mxu0 0.0
  %6007 = vmatprep.subr.mxu0 0.0
  %6008 = vmatpush1.msra.mxu0 0.0
  %6009 = vmatprep.subr.mxu0 0.0
  %6010 = vmatpush1.msra.mxu0 0.0
  %6011 = vmatprep.subr.mxu0 0.0
  %6012 = vmatpush1.msra.mxu0 0.0
  %6013 = vmatprep.subr.mxu0 0.0
  %6014 = vmatpush1.msra.mxu0 0.0
  %6015 = vmatprep.subr.mxu0 0.0
  %6016 = vmatpush1.msra.mxu0 0.0
  %6017 = vmatprep.subr.mxu0 0.0
  %6018 = vmatpush1.msra.mxu0 0.0
  %6019 = vmatprep.subr.mxu0 0.0
  %6020 = vmatpush1.msra.mxu0 0.0
  %6021 = vmatprep.subr.mxu0 0.0
  %6022 = vmatpush1.msra.mxu0 0.0
  %6023 = vmatprep.subr.mxu0 0.0
  %6024 = vmatpush1.msra.mxu0 0.0
  %6025 = vmatprep.subr.mxu0 0.0
  %6026 = vmatpush1.msra.mxu0 0.0
  %6027 = vmatprep.subr.mxu0 0.0
  %6028 = vmatpush1.msra.mxu0 0.0
  %6029 = vmatprep.subr.mxu0 0.0
  %6030 = vmatpush1.msra.mxu0 0.0
  %6031 = vmatprep.subr.mxu0 0.0
  %6032 = vmatpush1.msra.mxu0 0.0
  %6033 = vmatprep.subr.mxu0 0.0
  %6034 = vmatpush1.msra.mxu0 0.0
  %6035 = vmatprep.subr.mxu0 0.0
  %6036 = vmatpush1.msra.mxu0 0.0
  %6037 = vmatprep.subr.mxu0 0.0
  %6038 = vmatpush1.msra.mxu0 0.0
  %6039 = vmatprep.subr.mxu0 0.0
  %6040 = vmatpush1.msra.mxu0 0.0
  %6041 = vmatprep.subr.mxu0 0.0
  %6042 = vmatpush1.msra.mxu0 0.0
  %6043 = vmatprep.subr.mxu0 0.0
  %6044 = vmatpush1.msra.mxu0 0.0
  %6045 = vmatprep.mubr.f32.mxu0 0.0
  %6046 = vmatmul.mubr.f32.gmra.mrb[0].mxu0 %v5979
  %v6047 = vpop.f32.mrb[0].mxu0
  %v6048 = vadd.f32 0.0, %v6047
  %v6049 = vpop.f32.mrb[0].mxu0
  %6050 = vdwg.mxu0
  %v6051 = vadd.f32 %v5975, %v6048
  %v6053 = vsel %vm1099, %v5829, 0
  %6055 = vmatprep.subr.mxu0 0.0
  %6056 = vmatpush1.msra.mxu0 %v4259
  %6057 = vmatprep.subr.mxu0 0.0
  %6058 = vmatpush1.msra.mxu0 0.0
  %6059 = vmatprep.subr.mxu0 0.0
  %6060 = vmatpush1.msra.mxu0 0.0
  %6061 = vmatprep.subr.mxu0 0.0
  %6062 = vmatpush1.msra.mxu0 0.0
  %6063 = vmatprep.subr.mxu0 0.0
  %6064 = vmatpush1.msra.mxu0 0.0
  %6065 = vmatprep.subr.mxu0 0.0
  %6066 = vmatpush1.msra.mxu0 0.0
  %6067 = vmatprep.subr.mxu0 0.0
  %6068 = vmatpush1.msra.mxu0 0.0
  %6069 = vmatprep.subr.mxu0 0.0
  %6070 = vmatpush1.msra.mxu0 0.0
  %6071 = vmatprep.subr.mxu0 0.0
  %6072 = vmatpush1.msra.mxu0 0.0
  %6073 = vmatprep.subr.mxu0 0.0
  %6074 = vmatpush1.msra.mxu0 0.0
  %6075 = vmatprep.subr.mxu0 0.0
  %6076 = vmatpush1.msra.mxu0 0.0
  %6077 = vmatprep.subr.mxu0 0.0
  %6078 = vmatpush1.msra.mxu0 0.0
  %6079 = vmatprep.subr.mxu0 0.0
  %6080 = vmatpush1.msra.mxu0 0.0
  %6081 = vmatprep.subr.mxu0 0.0
  %6082 = vmatpush1.msra.mxu0 0.0
  %6083 = vmatprep.subr.mxu0 0.0
  %6084 = vmatpush1.msra.mxu0 0.0
  %6085 = vmatprep.subr.mxu0 0.0
  %6086 = vmatpush1.msra.mxu0 0.0
  %6087 = vmatprep.subr.mxu0 0.0
  %6088 = vmatpush1.msra.mxu0 0.0
  %6089 = vmatprep.subr.mxu0 0.0
  %6090 = vmatpush1.msra.mxu0 0.0
  %6091 = vmatprep.subr.mxu0 0.0
  %6092 = vmatpush1.msra.mxu0 0.0
  %6093 = vmatprep.subr.mxu0 0.0
  %6094 = vmatpush1.msra.mxu0 0.0
  %6095 = vmatprep.subr.mxu0 0.0
  %6096 = vmatpush1.msra.mxu0 0.0
  %6097 = vmatprep.subr.mxu0 0.0
  %6098 = vmatpush1.msra.mxu0 0.0
  %6099 = vmatprep.subr.mxu0 0.0
  %6100 = vmatpush1.msra.mxu0 0.0
  %6101 = vmatprep.subr.mxu0 0.0
  %6102 = vmatpush1.msra.mxu0 0.0
  %6103 = vmatprep.subr.mxu0 0.0
  %6104 = vmatpush1.msra.mxu0 0.0
  %6105 = vmatprep.subr.mxu0 0.0
  %6106 = vmatpush1.msra.mxu0 0.0
  %6107 = vmatprep.subr.mxu0 0.0
  %6108 = vmatpush1.msra.mxu0 0.0
  %6109 = vmatprep.subr.mxu0 0.0
  %6110 = vmatpush1.msra.mxu0 0.0
  %6111 = vmatprep.subr.mxu0 0.0
  %6112 = vmatpush1.msra.mxu0 0.0
  %6113 = vmatprep.subr.mxu0 0.0
  %6114 = vmatpush1.msra.mxu0 0.0
  %6115 = vmatprep.subr.mxu0 0.0
  %6116 = vmatpush1.msra.mxu0 0.0
  %6117 = vmatprep.subr.mxu0 0.0
  %6118 = vmatpush1.msra.mxu0 0.0
  %6119 = vmatprep.mubr.f32.mxu0 0.0
  %6120 = vmatmul.mubr.f32.gmra.mrb[0].mxu0 %v6053
  %v6121 = vpop.f32.mrb[0].mxu0
  %v6122 = vadd.f32 0.0, %v6121
  %v6123 = vpop.f32.mrb[0].mxu0
  %6124 = vdwg.mxu0
  %v6125 = vadd.f32 %v6051, %v6122
  %v6127 = vlaneseq
  %v6128 = vshrl.u32 %v6127, 7
  %v6129 = vsub.s32 0, %v6128
  %v6130 = vrot.slane %v4261, %v6129
  %v6132 = vadd.f32 %v6125, %v6130
  %6133 = vst.msk [vmem:[#allocation2] sm:$0xff] %vm75, %v6132
  %v6135 = vsel %vm75, %v4188, 0
  %6137 = vmatprep.subr.mxu0 0.0
  %6138 = vmatpush1.msra.mxu0 %v4190
  %6139 = vmatprep.subr.mxu0 0.0
  %6140 = vmatpush1.msra.mxu0 %v4191
  %6141 = vmatprep.subr.mxu0 0.0
  %6142 = vmatpush1.msra.mxu0 %v4192
  %6143 = vmatprep.subr.mxu0 0.0
  %6144 = vmatpush1.msra.mxu0 %v4193
  %6145 = vmatprep.subr.mxu0 0.0
  %6146 = vmatpush1.msra.mxu0 0.0
  %6147 = vmatprep.subr.mxu0 0.0
  %6148 = vmatpush1.msra.mxu0 0.0
  %6149 = vmatprep.subr.mxu0 0.0
  %6150 = vmatpush1.msra.mxu0 0.0
  %6151 = vmatprep.subr.mxu0 0.0
  %6152 = vmatpush1.msra.mxu0 0.0
  %6153 = vmatprep.subr.mxu0 0.0
  %6154 = vmatpush1.msra.mxu0 0.0
  %6155 = vmatprep.subr.mxu0 0.0
  %6156 = vmatpush1.msra.mxu0 0.0
  %6157 = vmatprep.subr.mxu0 0.0
  %6158 = vmatpush1.msra.mxu0 0.0
  %6159 = vmatprep.subr.mxu0 0.0
  %6160 = vmatpush1.msra.mxu0 0.0
  %6161 = vmatprep.subr.mxu0 0.0
  %6162 = vmatpush1.msra.mxu0 0.0
  %6163 = vmatprep.subr.mxu0 0.0
  %6164 = vmatpush1.msra.mxu0 0.0
  %6165 = vmatprep.subr.mxu0 0.0
  %6166 = vmatpush1.msra.mxu0 0.0
  %6167 = vmatprep.subr.mxu0 0.0
  %6168 = vmatpush1.msra.mxu0 0.0
  %6169 = vmatprep.subr.mxu0 0.0
  %6170 = vmatpush1.msra.mxu0 0.0
  %6171 = vmatprep.subr.mxu0 0.0
  %6172 = vmatpush1.msra.mxu0 0.0
  %6173 = vmatprep.subr.mxu0 0.0
  %6174 = vmatpush1.msra.mxu0 0.0
  %6175 = vmatprep.subr.mxu0 0.0
  %6176 = vmatpush1.msra.mxu0 0.0
  %6177 = vmatprep.subr.mxu0 0.0
  %6178 = vmatpush1.msra.mxu0 0.0
  %6179 = vmatprep.subr.mxu0 0.0
  %6180 = vmatpush1.msra.mxu0 0.0
  %6181 = vmatprep.subr.mxu0 0.0
  %6182 = vmatpush1.msra.mxu0 0.0
  %6183 = vmatprep.subr.mxu0 0.0
  %6184 = vmatpush1.msra.mxu0 0.0
  %6185 = vmatprep.subr.mxu0 0.0
  %6186 = vmatpush1.msra.mxu0 0.0
  %6187 = vmatprep.subr.mxu0 0.0
  %6188 = vmatpush1.msra.mxu0 0.0
  %6189 = vmatprep.subr.mxu0 0.0
  %6190 = vmatpush1.msra.mxu0 0.0
  %6191 = vmatprep.subr.mxu0 0.0
  %6192 = vmatpush1.msra.mxu0 0.0
  %6193 = vmatprep.subr.mxu0 0.0
  %6194 = vmatpush1.msra.mxu0 0.0
  %6195 = vmatprep.subr.mxu0 0.0
  %6196 = vmatpush1.msra.mxu0 0.0
  %6197 = vmatprep.subr.mxu0 0.0
  %6198 = vmatpush1.msra.mxu0 0.0
  %6199 = vmatprep.subr.mxu0 0.0
  %6200 = vmatpush1.msra.mxu0 0.0
  %6201 = vmatprep.mubr.f32.mxu0 0.0
  %6202 = vmatmul.mubr.f32.gmra.mrb[0].mxu0 %v6135
  %v6203 = vpop.f32.mrb[0].mxu0
  %v6204 = vadd.f32 %v4269, %v6203
  %v6205 = vpop.f32.mrb[0].mxu0
  %6206 = vdwg.mxu0
  %6207 = vmatprep.subr.mxu0 0.0
  %6208 = vmatpush1.msra.mxu0 %v4194
  %6209 = vmatprep.subr.mxu0 0.0
  %6210 = vmatpush1.msra.mxu0 %v4195
  %6211 = vmatprep.subr.mxu0 0.0
  %6212 = vmatpush1.msra.mxu0 %v4196
  %6213 = vmatprep.subr.mxu0 0.0
  %6214 = vmatpush1.msra.mxu0 %v4197
  %6215 = vmatprep.subr.mxu0 0.0
  %6216 = vmatpush1.msra.mxu0 0.0
  %6217 = vmatprep.subr.mxu0 0.0
  %6218 = vmatpush1.msra.mxu0 0.0
  %6219 = vmatprep.subr.mxu0 0.0
  %6220 = vmatpush1.msra.mxu0 0.0
  %6221 = vmatprep.subr.mxu0 0.0
  %6222 = vmatpush1.msra.mxu0 0.0
  %6223 = vmatprep.subr.mxu0 0.0
  %6224 = vmatpush1.msra.mxu0 0.0
  %6225 = vmatprep.subr.mxu0 0.0
  %6226 = vmatpush1.msra.mxu0 0.0
  %6227 = vmatprep.subr.mxu0 0.0
  %6228 = vmatpush1.msra.mxu0 0.0
  %6229 = vmatprep.subr.mxu0 0.0
  %6230 = vmatpush1.msra.mxu0 0.0
  %6231 = vmatprep.subr.mxu0 0.0
  %6232 = vmatpush1.msra.mxu0 0.0
  %6233 = vmatprep.subr.mxu0 0.0
  %6234 = vmatpush1.msra.mxu0 0.0
  %6235 = vmatprep.subr.mxu0 0.0
  %6236 = vmatpush1.msra.mxu0 0.0
  %6237 = vmatprep.subr.mxu0 0.0
  %6238 = vmatpush1.msra.mxu0 0.0
  %6239 = vmatprep.subr.mxu0 0.0
  %6240 = vmatpush1.msra.mxu0 0.0
  %6241 = vmatprep.subr.mxu0 0.0
  %6242 = vmatpush1.msra.mxu0 0.0
  %6243 = vmatprep.subr.mxu0 0.0
  %6244 = vmatpush1.msra.mxu0 0.0
  %6245 = vmatprep.subr.mxu0 0.0
  %6246 = vmatpush1.msra.mxu0 0.0
  %6247 = vmatprep.subr.mxu0 0.0
  %6248 = vmatpush1.msra.mxu0 0.0
  %6249 = vmatprep.subr.mxu0 0.0
  %6250 = vmatpush1.msra.mxu0 0.0
  %6251 = vmatprep.subr.mxu0 0.0
  %6252 = vmatpush1.msra.mxu0 0.0
  %6253 = vmatprep.subr.mxu0 0.0
  %6254 = vmatpush1.msra.mxu0 0.0
  %6255 = vmatprep.subr.mxu0 0.0
  %6256 = vmatpush1.msra.mxu0 0.0
  %6257 = vmatprep.subr.mxu0 0.0
  %6258 = vmatpush1.msra.mxu0 0.0
  %6259 = vmatprep.subr.mxu0 0.0
  %6260 = vmatpush1.msra.mxu0 0.0
  %6261 = vmatprep.subr.mxu0 0.0
  %6262 = vmatpush1.msra.mxu0 0.0
  %6263 = vmatprep.subr.mxu0 0.0
  %6264 = vmatpush1.msra.mxu0 0.0
  %6265 = vmatprep.subr.mxu0 0.0
  %6266 = vmatpush1.msra.mxu0 0.0
  %6267 = vmatprep.subr.mxu0 0.0
  %6268 = vmatpush1.msra.mxu0 0.0
  %6269 = vmatprep.subr.mxu0 0.0
  %6270 = vmatpush1.msra.mxu0 0.0
  %6271 = vmatprep.mubr.f32.mxu0 0.0
  %6272 = vmatmul.mubr.f32.gmra.mrb[0].mxu0 %v6135
  %v6273 = vpop.f32.mrb[0].mxu0
  %v6274 = vadd.f32 %v4273, %v6273
  %v6275 = vpop.f32.mrb[0].mxu0
  %6276 = vdwg.mxu0
  %6277 = vmatprep.subr.mxu0 0.0
  %6278 = vmatpush1.msra.mxu0 %v4198
  %6279 = vmatprep.subr.mxu0 0.0
  %6280 = vmatpush1.msra.mxu0 %v4199
  %6281 = vmatprep.subr.mxu0 0.0
  %6282 = vmatpush1.msra.mxu0 %v4200
  %6283 = vmatprep.subr.mxu0 0.0
  %6284 = vmatpush1.msra.mxu0 %v4201
  %6285 = vmatprep.subr.mxu0 0.0
  %6286 = vmatpush1.msra.mxu0 0.0
  %6287 = vmatprep.subr.mxu0 0.0
  %6288 = vmatpush1.msra.mxu0 0.0
  %6289 = vmatprep.subr.mxu0 0.0
  %6290 = vmatpush1.msra.mxu0 0.0
  %6291 = vmatprep.subr.mxu0 0.0
  %6292 = vmatpush1.msra.mxu0 0.0
  %6293 = vmatprep.subr.mxu0 0.0
  %6294 = vmatpush1.msra.mxu0 0.0
  %6295 = vmatprep.subr.mxu0 0.0
  %6296 = vmatpush1.msra.mxu0 0.0
  %6297 = vmatprep.subr.mxu0 0.0
  %6298 = vmatpush1.msra.mxu0 0.0
  %6299 = vmatprep.subr.mxu0 0.0
  %6300 = vmatpush1.msra.mxu0 0.0
  %6301 = vmatprep.subr.mxu0 0.0
  %6302 = vmatpush1.msra.mxu0 0.0
  %6303 = vmatprep.subr.mxu0 0.0
  %6304 = vmatpush1.msra.mxu0 0.0
  %6305 = vmatprep.subr.mxu0 0.0
  %6306 = vmatpush1.msra.mxu0 0.0
  %6307 = vmatprep.subr.mxu0 0.0
  %6308 = vmatpush1.msra.mxu0 0.0
  %6309 = vmatprep.subr.mxu0 0.0
  %6310 = vmatpush1.msra.mxu0 0.0
  %6311 = vmatprep.subr.mxu0 0.0
  %6312 = vmatpush1.msra.mxu0 0.0
  %6313 = vmatprep.subr.mxu0 0.0
  %6314 = vmatpush1.msra.mxu0 0.0
  %6315 = vmatprep.subr.mxu0 0.0
  %6316 = vmatpush1.msra.mxu0 0.0
  %6317 = vmatprep.subr.mxu0 0.0
  %6318 = vmatpush1.msra.mxu0 0.0
  %6319 = vmatprep.subr.mxu0 0.0
  %6320 = vmatpush1.msra.mxu0 0.0
  %6321 = vmatprep.subr.mxu0 0.0
  %6322 = vmatpush1.msra.mxu0 0.0
  %6323 = vmatprep.subr.mxu0 0.0
  %6324 = vmatpush1.msra.mxu0 0.0
  %6325 = vmatprep.subr.mxu0 0.0
  %6326 = vmatpush1.msra.mxu0 0.0
  %6327 = vmatprep.subr.mxu0 0.0
  %6328 = vmatpush1.msra.mxu0 0.0
  %6329 = vmatprep.subr.mxu0 0.0
  %6330 = vmatpush1.msra.mxu0 0.0
  %6331 = vmatprep.subr.mxu0 0.0
  %6332 = vmatpush1.msra.mxu0 0.0
  %6333 = vmatprep.subr.mxu0 0.0
  %6334 = vmatpush1.msra.mxu0 0.0
  %6335 = vmatprep.subr.mxu0 0.0
  %6336 = vmatpush1.msra.mxu0 0.0
  %6337 = vmatprep.subr.mxu0 0.0
  %6338 = vmatpush1.msra.mxu0 0.0
  %6339 = vmatprep.subr.mxu0 0.0
  %6340 = vmatpush1.msra.mxu0 0.0
  %6341 = vmatprep.mubr.f32.mxu0 0.0
  %6342 = vmatmul.mubr.f32.gmra.mrb[0].mxu0 %v6135
  %v6343 = vpop.f32.mrb[0].mxu0
  %v6344 = vadd.f32 %v4277, %v6343
  %v6345 = vpop.f32.mrb[0].mxu0
  %6346 = vdwg.mxu0
  %6347 = vmatprep.subr.mxu0 0.0
  %6348 = vmatpush1.msra.mxu0 %v4202
  %6349 = vmatprep.subr.mxu0 0.0
  %6350 = vmatpush1.msra.mxu0 %v4203
  %6351 = vmatprep.subr.mxu0 0.0
  %6352 = vmatpush1.msra.mxu0 %v4204
  %6353 = vmatprep.subr.mxu0 0.0
  %6354 = vmatpush1.msra.mxu0 %v4205
  %6355 = vmatprep.subr.mxu0 0.0
  %6356 = vmatpush1.msra.mxu0 0.0
  %6357 = vmatprep.subr.mxu0 0.0
  %6358 = vmatpush1.msra.mxu0 0.0
  %6359 = vmatprep.subr.mxu0 0.0
  %6360 = vmatpush1.msra.mxu0 0.0
  %6361 = vmatprep.subr.mxu0 0.0
  %6362 = vmatpush1.msra.mxu0 0.0
  %6363 = vmatprep.subr.mxu0 0.0
  %6364 = vmatpush1.msra.mxu0 0.0
  %6365 = vmatprep.subr.mxu0 0.0
  %6366 = vmatpush1.msra.mxu0 0.0
  %6367 = vmatprep.subr.mxu0 0.0
  %6368 = vmatpush1.msra.mxu0 0.0
  %6369 = vmatprep.subr.mxu0 0.0
  %6370 = vmatpush1.msra.mxu0 0.0
  %6371 = vmatprep.subr.mxu0 0.0
  %6372 = vmatpush1.msra.mxu0 0.0
  %6373 = vmatprep.subr.mxu0 0.0
  %6374 = vmatpush1.msra.mxu0 0.0
  %6375 = vmatprep.subr.mxu0 0.0
  %6376 = vmatpush1.msra.mxu0 0.0
  %6377 = vmatprep.subr.mxu0 0.0
  %6378 = vmatpush1.msra.mxu0 0.0
  %6379 = vmatprep.subr.mxu0 0.0
  %6380 = vmatpush1.msra.mxu0 0.0
  %6381 = vmatprep.subr.mxu0 0.0
  %6382 = vmatpush1.msra.mxu0 0.0
  %6383 = vmatprep.subr.mxu0 0.0
  %6384 = vmatpush1.msra.mxu0 0.0
  %6385 = vmatprep.subr.mxu0 0.0
  %6386 = vmatpush1.msra.mxu0 0.0
  %6387 = vmatprep.subr.mxu0 0.0
  %6388 = vmatpush1.msra.mxu0 0.0
  %6389 = vmatprep.subr.mxu0 0.0
  %6390 = vmatpush1.msra.mxu0 0.0
  %6391 = vmatprep.subr.mxu0 0.0
  %6392 = vmatpush1.msra.mxu0 0.0
  %6393 = vmatprep.subr.mxu0 0.0
  %6394 = vmatpush1.msra.mxu0 0.0
  %6395 = vmatprep.subr.mxu0 0.0
  %6396 = vmatpush1.msra.mxu0 0.0
  %6397 = vmatprep.subr.mxu0 0.0
  %6398 = vmatpush1.msra.mxu0 0.0
  %6399 = vmatprep.subr.mxu0 0.0
  %6400 = vmatpush1.msra.mxu0 0.0
  %6401 = vmatprep.subr.mxu0 0.0
  %6402 = vmatpush1.msra.mxu0 0.0
  %6403 = vmatprep.subr.mxu0 0.0
  %6404 = vmatpush1.msra.mxu0 0.0
  %6405 = vmatprep.subr.mxu0 0.0
  %6406 = vmatpush1.msra.mxu0 0.0
  %6407 = vmatprep.subr.mxu0 0.0
  %6408 = vmatpush1.msra.mxu0 0.0
  %6409 = vmatprep.subr.mxu0 0.0
  %6410 = vmatpush1.msra.mxu0 0.0
  %6411 = vmatprep.mubr.f32.mxu0 0.0
  %6412 = vmatmul.mubr.f32.gmra.mrb[0].mxu0 %v6135
  %v6413 = vpop.f32.mrb[0].mxu0
  %v6414 = vadd.f32 %v4281, %v6413
  %v6415 = vpop.f32.mrb[0].mxu0
  %6416 = vdwg.mxu0
  %6417 = vmatprep.subr.mxu0 0.0
  %6418 = vmatpush1.msra.mxu0 %v4207
  %6419 = vmatprep.subr.mxu0 0.0
  %6420 = vmatpush1.msra.mxu0 %v4208
  %6421 = vmatprep.subr.mxu0 0.0
  %6422 = vmatpush1.msra.mxu0 %v4209
  %6423 = vmatprep.subr.mxu0 0.0
  %6424 = vmatpush1.msra.mxu0 %v4210
  %6425 = vmatprep.subr.mxu0 0.0
  %6426 = vmatpush1.msra.mxu0 0.0
  %6427 = vmatprep.subr.mxu0 0.0
  %6428 = vmatpush1.msra.mxu0 0.0
  %6429 = vmatprep.subr.mxu0 0.0
  %6430 = vmatpush1.msra.mxu0 0.0
  %6431 = vmatprep.subr.mxu0 0.0
  %6432 = vmatpush1.msra.mxu0 0.0
  %6433 = vmatprep.subr.mxu0 0.0
  %6434 = vmatpush1.msra.mxu0 0.0
  %6435 = vmatprep.subr.mxu0 0.0
  %6436 = vmatpush1.msra.mxu0 0.0
  %6437 = vmatprep.subr.mxu0 0.0
  %6438 = vmatpush1.msra.mxu0 0.0
  %6439 = vmatprep.subr.mxu0 0.0
  %6440 = vmatpush1.msra.mxu0 0.0
  %6441 = vmatprep.subr.mxu0 0.0
  %6442 = vmatpush1.msra.mxu0 0.0
  %6443 = vmatprep.subr.mxu0 0.0
  %6444 = vmatpush1.msra.mxu0 0.0
  %6445 = vmatprep.subr.mxu0 0.0
  %6446 = vmatpush1.msra.mxu0 0.0
  %6447 = vmatprep.subr.mxu0 0.0
  %6448 = vmatpush1.msra.mxu0 0.0
  %6449 = vmatprep.subr.mxu0 0.0
  %6450 = vmatpush1.msra.mxu0 0.0
  %6451 = vmatprep.subr.mxu0 0.0
  %6452 = vmatpush1.msra.mxu0 0.0
  %6453 = vmatprep.subr.mxu0 0.0
  %6454 = vmatpush1.msra.mxu0 0.0
  %6455 = vmatprep.subr.mxu0 0.0
  %6456 = vmatpush1.msra.mxu0 0.0
  %6457 = vmatprep.subr.mxu0 0.0
  %6458 = vmatpush1.msra.mxu0 0.0
  %6459 = vmatprep.subr.mxu0 0.0
  %6460 = vmatpush1.msra.mxu0 0.0
  %6461 = vmatprep.subr.mxu0 0.0
  %6462 = vmatpush1.msra.mxu0 0.0
  %6463 = vmatprep.subr.mxu0 0.0
  %6464 = vmatpush1.msra.mxu0 0.0
  %6465 = vmatprep.subr.mxu0 0.0
  %6466 = vmatpush1.msra.mxu0 0.0
  %6467 = vmatprep.subr.mxu0 0.0
  %6468 = vmatpush1.msra.mxu0 0.0
  %6469 = vmatprep.subr.mxu0 0.0
  %6470 = vmatpush1.msra.mxu0 0.0
  %6471 = vmatprep.subr.mxu0 0.0
  %6472 = vmatpush1.msra.mxu0 0.0
  %6473 = vmatprep.subr.mxu0 0.0
  %6474 = vmatpush1.msra.mxu0 0.0
  %6475 = vmatprep.subr.mxu0 0.0
  %6476 = vmatpush1.msra.mxu0 0.0
  %6477 = vmatprep.subr.mxu0 0.0
  %6478 = vmatpush1.msra.mxu0 0.0
  %6479 = vmatprep.subr.mxu0 0.0
  %6480 = vmatpush1.msra.mxu0 0.0
  %6481 = vmatprep.mubr.f32.mxu0 0.0
  %6482 = vmatmul.mubr.f32.gmra.mrb[0].mxu0 %v6135
  %v6483 = vpop.f32.mrb[0].mxu0
  %v6484 = vadd.f32 %v4576, %v6483
  %v6485 = vpop.f32.mrb[0].mxu0
  %6486 = vdwg.mxu0
  %6487 = vmatprep.subr.mxu0 0.0
  %6488 = vmatpush1.msra.mxu0 %v4211
  %6489 = vmatprep.subr.mxu0 0.0
  %6490 = vmatpush1.msra.mxu0 %v4212
  %6491 = vmatprep.subr.mxu0 0.0
  %6492 = vmatpush1.msra.mxu0 %v4213
  %6493 = vmatprep.subr.mxu0 0.0
  %6494 = vmatpush1.msra.mxu0 %v4214
  %6495 = vmatprep.subr.mxu0 0.0
  %6496 = vmatpush1.msra.mxu0 0.0
  %6497 = vmatprep.subr.mxu0 0.0
  %6498 = vmatpush1.msra.mxu0 0.0
  %6499 = vmatprep.subr.mxu0 0.0
  %6500 = vmatpush1.msra.mxu0 0.0
  %6501 = vmatprep.subr.mxu0 0.0
  %6502 = vmatpush1.msra.mxu0 0.0
  %6503 = vmatprep.subr.mxu0 0.0
  %6504 = vmatpush1.msra.mxu0 0.0
  %6505 = vmatprep.subr.mxu0 0.0
  %6506 = vmatpush1.msra.mxu0 0.0
  %6507 = vmatprep.subr.mxu0 0.0
  %6508 = vmatpush1.msra.mxu0 0.0
  %6509 = vmatprep.subr.mxu0 0.0
  %6510 = vmatpush1.msra.mxu0 0.0
  %6511 = vmatprep.subr.mxu0 0.0
  %6512 = vmatpush1.msra.mxu0 0.0
  %6513 = vmatprep.subr.mxu0 0.0
  %6514 = vmatpush1.msra.mxu0 0.0
  %6515 = vmatprep.subr.mxu0 0.0
  %6516 = vmatpush1.msra.mxu0 0.0
  %6517 = vmatprep.subr.mxu0 0.0
  %6518 = vmatpush1.msra.mxu0 0.0
  %6519 = vmatprep.subr.mxu0 0.0
  %6520 = vmatpush1.msra.mxu0 0.0
  %6521 = vmatprep.subr.mxu0 0.0
  %6522 = vmatpush1.msra.mxu0 0.0
  %6523 = vmatprep.subr.mxu0 0.0
  %6524 = vmatpush1.msra.mxu0 0.0
  %6525 = vmatprep.subr.mxu0 0.0
  %6526 = vmatpush1.msra.mxu0 0.0
  %6527 = vmatprep.subr.mxu0 0.0
  %6528 = vmatpush1.msra.mxu0 0.0
  %6529 = vmatprep.subr.mxu0 0.0
  %6530 = vmatpush1.msra.mxu0 0.0
  %6531 = vmatprep.subr.mxu0 0.0
  %6532 = vmatpush1.msra.mxu0 0.0
  %6533 = vmatprep.subr.mxu0 0.0
  %6534 = vmatpush1.msra.mxu0 0.0
  %6535 = vmatprep.subr.mxu0 0.0
  %6536 = vmatpush1.msra.mxu0 0.0
  %6537 = vmatprep.subr.mxu0 0.0
  %6538 = vmatpush1.msra.mxu0 0.0
  %6539 = vmatprep.subr.mxu0 0.0
  %6540 = vmatpush1.msra.mxu0 0.0
  %6541 = vmatprep.subr.mxu0 0.0
  %6542 = vmatpush1.msra.mxu0 0.0
  %6543 = vmatprep.subr.mxu0 0.0
  %6544 = vmatpush1.msra.mxu0 0.0
  %6545 = vmatprep.subr.mxu0 0.0
  %6546 = vmatpush1.msra.mxu0 0.0
  %6547 = vmatprep.subr.mxu0 0.0
  %6548 = vmatpush1.msra.mxu0 0.0
  %6549 = vmatprep.subr.mxu0 0.0
  %6550 = vmatpush1.msra.mxu0 0.0
  %6551 = vmatprep.mubr.f32.mxu0 0.0
  %6552 = vmatmul.mubr.f32.gmra.mrb[0].mxu0 %v6135
  %v6553 = vpop.f32.mrb[0].mxu0
  %v6554 = vadd.f32 %v4580, %v6553
  %v6555 = vpop.f32.mrb[0].mxu0
  %6556 = vdwg.mxu0
  %6557 = vmatprep.subr.mxu0 0.0
  %6558 = vmatpush1.msra.mxu0 %v4215
  %6559 = vmatprep.subr.mxu0 0.0
  %6560 = vmatpush1.msra.mxu0 %v4216
  %6561 = vmatprep.subr.mxu0 0.0
  %6562 = vmatpush1.msra.mxu0 %v4217
  %6563 = vmatprep.subr.mxu0 0.0
  %6564 = vmatpush1.msra.mxu0 %v4218
  %6565 = vmatprep.subr.mxu0 0.0
  %6566 = vmatpush1.msra.mxu0 0.0
  %6567 = vmatprep.subr.mxu0 0.0
  %6568 = vmatpush1.msra.mxu0 0.0
  %6569 = vmatprep.subr.mxu0 0.0
  %6570 = vmatpush1.msra.mxu0 0.0
  %6571 = vmatprep.subr.mxu0 0.0
  %6572 = vmatpush1.msra.mxu0 0.0
  %6573 = vmatprep.subr.mxu0 0.0
  %6574 = vmatpush1.msra.mxu0 0.0
  %6575 = vmatprep.subr.mxu0 0.0
  %6576 = vmatpush1.msra.mxu0 0.0
  %6577 = vmatprep.subr.mxu0 0.0
  %6578 = vmatpush1.msra.mxu0 0.0
  %6579 = vmatprep.subr.mxu0 0.0
  %6580 = vmatpush1.msra.mxu0 0.0
  %6581 = vmatprep.subr.mxu0 0.0
  %6582 = vmatpush1.msra.mxu0 0.0
  %6583 = vmatprep.subr.mxu0 0.0
  %6584 = vmatpush1.msra.mxu0 0.0
  %6585 = vmatprep.subr.mxu0 0.0
  %6586 = vmatpush1.msra.mxu0 0.0
  %6587 = vmatprep.subr.mxu0 0.0
  %6588 = vmatpush1.msra.mxu0 0.0
  %6589 = vmatprep.subr.mxu0 0.0
  %6590 = vmatpush1.msra.mxu0 0.0
  %6591 = vmatprep.subr.mxu0 0.0
  %6592 = vmatpush1.msra.mxu0 0.0
  %6593 = vmatprep.subr.mxu0 0.0
  %6594 = vmatpush1.msra.mxu0 0.0
  %6595 = vmatprep.subr.mxu0 0.0
  %6596 = vmatpush1.msra.mxu0 0.0
  %6597 = vmatprep.subr.mxu0 0.0
  %6598 = vmatpush1.msra.mxu0 0.0
  %6599 = vmatprep.subr.mxu0 0.0
  %6600 = vmatpush1.msra.mxu0 0.0
  %6601 = vmatprep.subr.mxu0 0.0
  %6602 = vmatpush1.msra.mxu0 0.0
  %6603 = vmatprep.subr.mxu0 0.0
  %6604 = vmatpush1.msra.mxu0 0.0
  %6605 = vmatprep.subr.mxu0 0.0
  %6606 = vmatpush1.msra.mxu0 0.0
  %6607 = vmatprep.subr.mxu0 0.0
  %6608 = vmatpush1.msra.mxu0 0.0
  %6609 = vmatprep.subr.mxu0 0.0
  %6610 = vmatpush1.msra.mxu0 0.0
  %6611 = vmatprep.subr.mxu0 0.0
  %6612 = vmatpush1.msra.mxu0 0.0
  %6613 = vmatprep.subr.mxu0 0.0
  %6614 = vmatpush1.msra.mxu0 0.0
  %6615 = vmatprep.subr.mxu0 0.0
  %6616 = vmatpush1.msra.mxu0 0.0
  %6617 = vmatprep.subr.mxu0 0.0
  %6618 = vmatpush1.msra.mxu0 0.0
  %6619 = vmatprep.subr.mxu0 0.0
  %6620 = vmatpush1.msra.mxu0 0.0
  %6621 = vmatprep.mubr.f32.mxu0 0.0
  %6622 = vmatmul.mubr.f32.gmra.mrb[0].mxu0 %v6135
  %v6623 = vpop.f32.mrb[0].mxu0
  %v6624 = vadd.f32 %v4584, %v6623
  %v6625 = vpop.f32.mrb[0].mxu0
  %6626 = vdwg.mxu0
  %6627 = vmatprep.subr.mxu0 0.0
  %6628 = vmatpush1.msra.mxu0 %v4219
  %6629 = vmatprep.subr.mxu0 0.0
  %6630 = vmatpush1.msra.mxu0 %v4220
  %6631 = vmatprep.subr.mxu0 0.0
  %6632 = vmatpush1.msra.mxu0 %v4221
  %6633 = vmatprep.subr.mxu0 0.0
  %6634 = vmatpush1.msra.mxu0 %v4222
  %6635 = vmatprep.subr.mxu0 0.0
  %6636 = vmatpush1.msra.mxu0 0.0
  %6637 = vmatprep.subr.mxu0 0.0
  %6638 = vmatpush1.msra.mxu0 0.0
  %6639 = vmatprep.subr.mxu0 0.0
  %6640 = vmatpush1.msra.mxu0 0.0
  %6641 = vmatprep.subr.mxu0 0.0
  %6642 = vmatpush1.msra.mxu0 0.0
  %6643 = vmatprep.subr.mxu0 0.0
  %6644 = vmatpush1.msra.mxu0 0.0
  %6645 = vmatprep.subr.mxu0 0.0
  %6646 = vmatpush1.msra.mxu0 0.0
  %6647 = vmatprep.subr.mxu0 0.0
  %6648 = vmatpush1.msra.mxu0 0.0
  %6649 = vmatprep.subr.mxu0 0.0
  %6650 = vmatpush1.msra.mxu0 0.0
  %6651 = vmatprep.subr.mxu0 0.0
  %6652 = vmatpush1.msra.mxu0 0.0
  %6653 = vmatprep.subr.mxu0 0.0
  %6654 = vmatpush1.msra.mxu0 0.0
  %6655 = vmatprep.subr.mxu0 0.0
  %6656 = vmatpush1.msra.mxu0 0.0
  %6657 = vmatprep.subr.mxu0 0.0
  %6658 = vmatpush1.msra.mxu0 0.0
  %6659 = vmatprep.subr.mxu0 0.0
  %6660 = vmatpush1.msra.mxu0 0.0
  %6661 = vmatprep.subr.mxu0 0.0
  %6662 = vmatpush1.msra.mxu0 0.0
  %6663 = vmatprep.subr.mxu0 0.0
  %6664 = vmatpush1.msra.mxu0 0.0
  %6665 = vmatprep.subr.mxu0 0.0
  %6666 = vmatpush1.msra.mxu0 0.0
  %6667 = vmatprep.subr.mxu0 0.0
  %6668 = vmatpush1.msra.mxu0 0.0
  %6669 = vmatprep.subr.mxu0 0.0
  %6670 = vmatpush1.msra.mxu0 0.0
  %6671 = vmatprep.subr.mxu0 0.0
  %6672 = vmatpush1.msra.mxu0 0.0
  %6673 = vmatprep.subr.mxu0 0.0
  %6674 = vmatpush1.msra.mxu0 0.0
  %6675 = vmatprep.subr.mxu0 0.0
  %6676 = vmatpush1.msra.mxu0 0.0
  %6677 = vmatprep.subr.mxu0 0.0
  %6678 = vmatpush1.msra.mxu0 0.0
  %6679 = vmatprep.subr.mxu0 0.0
  %6680 = vmatpush1.msra.mxu0 0.0
  %6681 = vmatprep.subr.mxu0 0.0
  %6682 = vmatpush1.msra.mxu0 0.0
  %6683 = vmatprep.subr.mxu0 0.0
  %6684 = vmatpush1.msra.mxu0 0.0
  %6685 = vmatprep.subr.mxu0 0.0
  %6686 = vmatpush1.msra.mxu0 0.0
  %6687 = vmatprep.subr.mxu0 0.0
  %6688 = vmatpush1.msra.mxu0 0.0
  %6689 = vmatprep.subr.mxu0 0.0
  %6690 = vmatpush1.msra.mxu0 0.0
  %6691 = vmatprep.mubr.f32.mxu0 0.0
  %6692 = vmatmul.mubr.f32.gmra.mrb[0].mxu0 %v6135
  %v6693 = vpop.f32.mrb[0].mxu0
  %v6694 = vadd.f32 %v4588, %v6693
  %v6695 = vpop.f32.mrb[0].mxu0
  %6696 = vdwg.mxu0
  %6697 = vmatprep.subr.mxu0 0.0
  %6698 = vmatpush1.msra.mxu0 %v4224
  %6699 = vmatprep.subr.mxu0 0.0
  %6700 = vmatpush1.msra.mxu0 %v4225
  %6701 = vmatprep.subr.mxu0 0.0
  %6702 = vmatpush1.msra.mxu0 %v4226
  %6703 = vmatprep.subr.mxu0 0.0
  %6704 = vmatpush1.msra.mxu0 %v4227
  %6705 = vmatprep.subr.mxu0 0.0
  %6706 = vmatpush1.msra.mxu0 0.0
  %6707 = vmatprep.subr.mxu0 0.0
  %6708 = vmatpush1.msra.mxu0 0.0
  %6709 = vmatprep.subr.mxu0 0.0
  %6710 = vmatpush1.msra.mxu0 0.0
  %6711 = vmatprep.subr.mxu0 0.0
  %6712 = vmatpush1.msra.mxu0 0.0
  %6713 = vmatprep.subr.mxu0 0.0
  %6714 = vmatpush1.msra.mxu0 0.0
  %6715 = vmatprep.subr.mxu0 0.0
  %6716 = vmatpush1.msra.mxu0 0.0
  %6717 = vmatprep.subr.mxu0 0.0
  %6718 = vmatpush1.msra.mxu0 0.0
  %6719 = vmatprep.subr.mxu0 0.0
  %6720 = vmatpush1.msra.mxu0 0.0
  %6721 = vmatprep.subr.mxu0 0.0
  %6722 = vmatpush1.msra.mxu0 0.0
  %6723 = vmatprep.subr.mxu0 0.0
  %6724 = vmatpush1.msra.mxu0 0.0
  %6725 = vmatprep.subr.mxu0 0.0
  %6726 = vmatpush1.msra.mxu0 0.0
  %6727 = vmatprep.subr.mxu0 0.0
  %6728 = vmatpush1.msra.mxu0 0.0
  %6729 = vmatprep.subr.mxu0 0.0
  %6730 = vmatpush1.msra.mxu0 0.0
  %6731 = vmatprep.subr.mxu0 0.0
  %6732 = vmatpush1.msra.mxu0 0.0
  %6733 = vmatprep.subr.mxu0 0.0
  %6734 = vmatpush1.msra.mxu0 0.0
  %6735 = vmatprep.subr.mxu0 0.0
  %6736 = vmatpush1.msra.mxu0 0.0
  %6737 = vmatprep.subr.mxu0 0.0
  %6738 = vmatpush1.msra.mxu0 0.0
  %6739 = vmatprep.subr.mxu0 0.0
  %6740 = vmatpush1.msra.mxu0 0.0
  %6741 = vmatprep.subr.mxu0 0.0
  %6742 = vmatpush1.msra.mxu0 0.0
  %6743 = vmatprep.subr.mxu0 0.0
  %6744 = vmatpush1.msra.mxu0 0.0
  %6745 = vmatprep.subr.mxu0 0.0
  %6746 = vmatpush1.msra.mxu0 0.0
  %6747 = vmatprep.subr.mxu0 0.0
  %6748 = vmatpush1.msra.mxu0 0.0
  %6749 = vmatprep.subr.mxu0 0.0
  %6750 = vmatpush1.msra.mxu0 0.0
  %6751 = vmatprep.subr.mxu0 0.0
  %6752 = vmatpush1.msra.mxu0 0.0
  %6753 = vmatprep.subr.mxu0 0.0
  %6754 = vmatpush1.msra.mxu0 0.0
  %6755 = vmatprep.subr.mxu0 0.0
  %6756 = vmatpush1.msra.mxu0 0.0
  %6757 = vmatprep.subr.mxu0 0.0
  %6758 = vmatpush1.msra.mxu0 0.0
  %6759 = vmatprep.subr.mxu0 0.0
  %6760 = vmatpush1.msra.mxu0 0.0
  %6761 = vmatprep.mubr.f32.mxu0 0.0
  %6762 = vmatmul.mubr.f32.gmra.mrb[0].mxu0 %v6135
  %v6763 = vpop.f32.mrb[0].mxu0
  %v6764 = vadd.f32 %v4880, %v6763
  %v6765 = vpop.f32.mrb[0].mxu0
  %6766 = vdwg.mxu0
  %6767 = vmatprep.subr.mxu0 0.0
  %6768 = vmatpush1.msra.mxu0 %v4228
  %6769 = vmatprep.subr.mxu0 0.0
  %6770 = vmatpush1.msra.mxu0 %v4229
  %6771 = vmatprep.subr.mxu0 0.0
  %6772 = vmatpush1.msra.mxu0 %v4230
  %6773 = vmatprep.subr.mxu0 0.0
  %6774 = vmatpush1.msra.mxu0 %v4231
  %6775 = vmatprep.subr.mxu0 0.0
  %6776 = vmatpush1.msra.mxu0 0.0
  %6777 = vmatprep.subr.mxu0 0.0
  %6778 = vmatpush1.msra.mxu0 0.0
  %6779 = vmatprep.subr.mxu0 0.0
  %6780 = vmatpush1.msra.mxu0 0.0
  %6781 = vmatprep.subr.mxu0 0.0
  %6782 = vmatpush1.msra.mxu0 0.0
  %6783 = vmatprep.subr.mxu0 0.0
  %6784 = vmatpush1.msra.mxu0 0.0
  %6785 = vmatprep.subr.mxu0 0.0
  %6786 = vmatpush1.msra.mxu0 0.0
  %6787 = vmatprep.subr.mxu0 0.0
  %6788 = vmatpush1.msra.mxu0 0.0
  %6789 = vmatprep.subr.mxu0 0.0
  %6790 = vmatpush1.msra.mxu0 0.0
  %6791 = vmatprep.subr.mxu0 0.0
  %6792 = vmatpush1.msra.mxu0 0.0
  %6793 = vmatprep.subr.mxu0 0.0
  %6794 = vmatpush1.msra.mxu0 0.0
  %6795 = vmatprep.subr.mxu0 0.0
  %6796 = vmatpush1.msra.mxu0 0.0
  %6797 = vmatprep.subr.mxu0 0.0
  %6798 = vmatpush1.msra.mxu0 0.0
  %6799 = vmatprep.subr.mxu0 0.0
  %6800 = vmatpush1.msra.mxu0 0.0
  %6801 = vmatprep.subr.mxu0 0.0
  %6802 = vmatpush1.msra.mxu0 0.0
  %6803 = vmatprep.subr.mxu0 0.0
  %6804 = vmatpush1.msra.mxu0 0.0
  %6805 = vmatprep.subr.mxu0 0.0
  %6806 = vmatpush1.msra.mxu0 0.0
  %6807 = vmatprep.subr.mxu0 0.0
  %6808 = vmatpush1.msra.mxu0 0.0
  %6809 = vmatprep.subr.mxu0 0.0
  %6810 = vmatpush1.msra.mxu0 0.0
  %6811 = vmatprep.subr.mxu0 0.0
  %6812 = vmatpush1.msra.mxu0 0.0
  %6813 = vmatprep.subr.mxu0 0.0
  %6814 = vmatpush1.msra.mxu0 0.0
  %6815 = vmatprep.subr.mxu0 0.0
  %6816 = vmatpush1.msra.mxu0 0.0
  %6817 = vmatprep.subr.mxu0 0.0
  %6818 = vmatpush1.msra.mxu0 0.0
  %6819 = vmatprep.subr.mxu0 0.0
  %6820 = vmatpush1.msra.mxu0 0.0
  %6821 = vmatprep.subr.mxu0 0.0
  %6822 = vmatpush1.msra.mxu0 0.0
  %6823 = vmatprep.subr.mxu0 0.0
  %6824 = vmatpush1.msra.mxu0 0.0
  %6825 = vmatprep.subr.mxu0 0.0
  %6826 = vmatpush1.msra.mxu0 0.0
  %6827 = vmatprep.subr.mxu0 0.0
  %6828 = vmatpush1.msra.mxu0 0.0
  %6829 = vmatprep.subr.mxu0 0.0
  %6830 = vmatpush1.msra.mxu0 0.0
  %6831 = vmatprep.mubr.f32.mxu0 0.0
  %6832 = vmatmul.mubr.f32.gmra.mrb[0].mxu0 %v6135
  %v6833 = vpop.f32.mrb[0].mxu0
  %v6834 = vadd.f32 %v4884, %v6833
  %v6835 = vpop.f32.mrb[0].mxu0
  %6836 = vdwg.mxu0
  %6837 = vmatprep.subr.mxu0 0.0
  %6838 = vmatpush1.msra.mxu0 %v4232
  %6839 = vmatprep.subr.mxu0 0.0
  %6840 = vmatpush1.msra.mxu0 %v4233
  %6841 = vmatprep.subr.mxu0 0.0
  %6842 = vmatpush1.msra.mxu0 %v4234
  %6843 = vmatprep.subr.mxu0 0.0
  %6844 = vmatpush1.msra.mxu0 %v4235
  %6845 = vmatprep.subr.mxu0 0.0
  %6846 = vmatpush1.msra.mxu0 0.0
  %6847 = vmatprep.subr.mxu0 0.0
  %6848 = vmatpush1.msra.mxu0 0.0
  %6849 = vmatprep.subr.mxu0 0.0
  %6850 = vmatpush1.msra.mxu0 0.0
  %6851 = vmatprep.subr.mxu0 0.0
  %6852 = vmatpush1.msra.mxu0 0.0
  %6853 = vmatprep.subr.mxu0 0.0
  %6854 = vmatpush1.msra.mxu0 0.0
  %6855 = vmatprep.subr.mxu0 0.0
  %6856 = vmatpush1.msra.mxu0 0.0
  %6857 = vmatprep.subr.mxu0 0.0
  %6858 = vmatpush1.msra.mxu0 0.0
  %6859 = vmatprep.subr.mxu0 0.0
  %6860 = vmatpush1.msra.mxu0 0.0
  %6861 = vmatprep.subr.mxu0 0.0
  %6862 = vmatpush1.msra.mxu0 0.0
  %6863 = vmatprep.subr.mxu0 0.0
  %6864 = vmatpush1.msra.mxu0 0.0
  %6865 = vmatprep.subr.mxu0 0.0
  %6866 = vmatpush1.msra.mxu0 0.0
  %6867 = vmatprep.subr.mxu0 0.0
  %6868 = vmatpush1.msra.mxu0 0.0
  %6869 = vmatprep.subr.mxu0 0.0
  %6870 = vmatpush1.msra.mxu0 0.0
  %6871 = vmatprep.subr.mxu0 0.0
  %6872 = vmatpush1.msra.mxu0 0.0
  %6873 = vmatprep.subr.mxu0 0.0
  %6874 = vmatpush1.msra.mxu0 0.0
  %6875 = vmatprep.subr.mxu0 0.0
  %6876 = vmatpush1.msra.mxu0 0.0
  %6877 = vmatprep.subr.mxu0 0.0
  %6878 = vmatpush1.msra.mxu0 0.0
  %6879 = vmatprep.subr.mxu0 0.0
  %6880 = vmatpush1.msra.mxu0 0.0
  %6881 = vmatprep.subr.mxu0 0.0
  %6882 = vmatpush1.msra.mxu0 0.0
  %6883 = vmatprep.subr.mxu0 0.0
  %6884 = vmatpush1.msra.mxu0 0.0
  %6885 = vmatprep.subr.mxu0 0.0
  %6886 = vmatpush1.msra.mxu0 0.0
  %6887 = vmatprep.subr.mxu0 0.0
  %6888 = vmatpush1.msra.mxu0 0.0
  %6889 = vmatprep.subr.mxu0 0.0
  %6890 = vmatpush1.msra.mxu0 0.0
  %6891 = vmatprep.subr.mxu0 0.0
  %6892 = vmatpush1.msra.mxu0 0.0
  %6893 = vmatprep.subr.mxu0 0.0
  %6894 = vmatpush1.msra.mxu0 0.0
  %6895 = vmatprep.subr.mxu0 0.0
  %6896 = vmatpush1.msra.mxu0 0.0
  %6897 = vmatprep.subr.mxu0 0.0
  %6898 = vmatpush1.msra.mxu0 0.0
  %6899 = vmatprep.subr.mxu0 0.0
  %6900 = vmatpush1.msra.mxu0 0.0
  %6901 = vmatprep.mubr.f32.mxu0 0.0
  %6902 = vmatmul.mubr.f32.gmra.mrb[0].mxu0 %v6135
  %v6903 = vpop.f32.mrb[0].mxu0
  %v6904 = vadd.f32 %v4888, %v6903
  %v6905 = vpop.f32.mrb[0].mxu0
  %6906 = vdwg.mxu0
  %6907 = vmatprep.subr.mxu0 0.0
  %6908 = vmatpush1.msra.mxu0 %v4236
  %6909 = vmatprep.subr.mxu0 0.0
  %6910 = vmatpush1.msra.mxu0 %v4237
  %6911 = vmatprep.subr.mxu0 0.0
  %6912 = vmatpush1.msra.mxu0 %v4238
  %6913 = vmatprep.subr.mxu0 0.0
  %6914 = vmatpush1.msra.mxu0 %v4239
  %6915 = vmatprep.subr.mxu0 0.0
  %6916 = vmatpush1.msra.mxu0 0.0
  %6917 = vmatprep.subr.mxu0 0.0
  %6918 = vmatpush1.msra.mxu0 0.0
  %6919 = vmatprep.subr.mxu0 0.0
  %6920 = vmatpush1.msra.mxu0 0.0
  %6921 = vmatprep.subr.mxu0 0.0
  %6922 = vmatpush1.msra.mxu0 0.0
  %6923 = vmatprep.subr.mxu0 0.0
  %6924 = vmatpush1.msra.mxu0 0.0
  %6925 = vmatprep.subr.mxu0 0.0
  %6926 = vmatpush1.msra.mxu0 0.0
  %6927 = vmatprep.subr.mxu0 0.0
  %6928 = vmatpush1.msra.mxu0 0.0
  %6929 = vmatprep.subr.mxu0 0.0
  %6930 = vmatpush1.msra.mxu0 0.0
  %6931 = vmatprep.subr.mxu0 0.0
  %6932 = vmatpush1.msra.mxu0 0.0
  %6933 = vmatprep.subr.mxu0 0.0
  %6934 = vmatpush1.msra.mxu0 0.0
  %6935 = vmatprep.subr.mxu0 0.0
  %6936 = vmatpush1.msra.mxu0 0.0
  %6937 = vmatprep.subr.mxu0 0.0
  %6938 = vmatpush1.msra.mxu0 0.0
  %6939 = vmatprep.subr.mxu0 0.0
  %6940 = vmatpush1.msra.mxu0 0.0
  %6941 = vmatprep.subr.mxu0 0.0
  %6942 = vmatpush1.msra.mxu0 0.0
  %6943 = vmatprep.subr.mxu0 0.0
  %6944 = vmatpush1.msra.mxu0 0.0
  %6945 = vmatprep.subr.mxu0 0.0
  %6946 = vmatpush1.msra.mxu0 0.0
  %6947 = vmatprep.subr.mxu0 0.0
  %6948 = vmatpush1.msra.mxu0 0.0
  %6949 = vmatprep.subr.mxu0 0.0
  %6950 = vmatpush1.msra.mxu0 0.0
  %6951 = vmatprep.subr.mxu0 0.0
  %6952 = vmatpush1.msra.mxu0 0.0
  %6953 = vmatprep.subr.mxu0 0.0
  %6954 = vmatpush1.msra.mxu0 0.0
  %6955 = vmatprep.subr.mxu0 0.0
  %6956 = vmatpush1.msra.mxu0 0.0
  %6957 = vmatprep.subr.mxu0 0.0
  %6958 = vmatpush1.msra.mxu0 0.0
  %6959 = vmatprep.subr.mxu0 0.0
  %6960 = vmatpush1.msra.mxu0 0.0
  %6961 = vmatprep.subr.mxu0 0.0
  %6962 = vmatpush1.msra.mxu0 0.0
  %6963 = vmatprep.subr.mxu0 0.0
  %6964 = vmatpush1.msra.mxu0 0.0
  %6965 = vmatprep.subr.mxu0 0.0
  %6966 = vmatpush1.msra.mxu0 0.0
  %6967 = vmatprep.subr.mxu0 0.0
  %6968 = vmatpush1.msra.mxu0 0.0
  %6969 = vmatprep.subr.mxu0 0.0
  %6970 = vmatpush1.msra.mxu0 0.0
  %6971 = vmatprep.mubr.f32.mxu0 0.0
  %6972 = vmatmul.mubr.f32.gmra.mrb[0].mxu0 %v6135
  %v6973 = vpop.f32.mrb[0].mxu0
  %v6974 = vadd.f32 %v4892, %v6973
  %v6975 = vpop.f32.mrb[0].mxu0
  %6976 = vdwg.mxu0
  %v6978 = vsel %vm1099, %v6204, 0
  %v6981 = vsel %vm1099, %v6484, 0
  %6983 = vmatprep.subr.mxu0 0.0
  %6984 = vmatpush1.xpose.msra.mxu0 %v6981
  %6985 = vmatprep.subr.mxu0 0.0
  %6986 = vmatpush1.xpose.msra.mxu0 0.0
  %6987 = vmatprep.subr.mxu0 0.0
  %6988 = vmatpush1.xpose.msra.mxu0 0.0
  %6989 = vmatprep.subr.mxu0 0.0
  %6990 = vmatpush1.xpose.msra.mxu0 0.0
  %6991 = vmatprep.subr.mxu0 0.0
  %6992 = vmatpush1.xpose.msra.mxu0 0.0
  %6993 = vmatprep.subr.mxu0 0.0
  %6994 = vmatpush1.xpose.msra.mxu0 0.0
  %6995 = vmatprep.subr.mxu0 0.0
  %6996 = vmatpush1.xpose.msra.mxu0 0.0
  %6997 = vmatprep.subr.mxu0 0.0
  %6998 = vmatpush1.xpose.msra.mxu0 0.0
  %6999 = vmatprep.subr.mxu0 0.0
  %7000 = vmatpush1.xpose.msra.mxu0 0.0
  %7001 = vmatprep.subr.mxu0 0.0
  %7002 = vmatpush1.xpose.msra.mxu0 0.0
  %7003 = vmatprep.subr.mxu0 0.0
  %7004 = vmatpush1.xpose.msra.mxu0 0.0
  %7005 = vmatprep.subr.mxu0 0.0
  %7006 = vmatpush1.xpose.msra.mxu0 0.0
  %7007 = vmatprep.subr.mxu0 0.0
  %7008 = vmatpush1.xpose.msra.mxu0 0.0
  %7009 = vmatprep.subr.mxu0 0.0
  %7010 = vmatpush1.xpose.msra.mxu0 0.0
  %7011 = vmatprep.subr.mxu0 0.0
  %7012 = vmatpush1.xpose.msra.mxu0 0.0
  %7013 = vmatprep.subr.mxu0 0.0
  %7014 = vmatpush1.xpose.msra.mxu0 0.0
  %7015 = vmatprep.subr.mxu0 0.0
  %7016 = vmatpush1.xpose.msra.mxu0 0.0
  %7017 = vmatprep.subr.mxu0 0.0
  %7018 = vmatpush1.xpose.msra.mxu0 0.0
  %7019 = vmatprep.subr.mxu0 0.0
  %7020 = vmatpush1.xpose.msra.mxu0 0.0
  %7021 = vmatprep.subr.mxu0 0.0
  %7022 = vmatpush1.xpose.msra.mxu0 0.0
  %7023 = vmatprep.subr.mxu0 0.0
  %7024 = vmatpush1.xpose.msra.mxu0 0.0
  %7025 = vmatprep.subr.mxu0 0.0
  %7026 = vmatpush1.xpose.msra.mxu0 0.0
  %7027 = vmatprep.subr.mxu0 0.0
  %7028 = vmatpush1.xpose.msra.mxu0 0.0
  %7029 = vmatprep.subr.mxu0 0.0
  %7030 = vmatpush1.xpose.msra.mxu0 0.0
  %7031 = vmatprep.subr.mxu0 0.0
  %7032 = vmatpush1.xpose.msra.mxu0 0.0
  %7033 = vmatprep.subr.mxu0 0.0
  %7034 = vmatpush1.xpose.msra.mxu0 0.0
  %7035 = vmatprep.subr.mxu0 0.0
  %7036 = vmatpush1.xpose.msra.mxu0 0.0
  %7037 = vmatprep.subr.mxu0 0.0
  %7038 = vmatpush1.xpose.msra.mxu0 0.0
  %7039 = vmatprep.subr.mxu0 0.0
  %7040 = vmatpush1.xpose.msra.mxu0 0.0
  %7041 = vmatprep.subr.mxu0 0.0
  %7042 = vmatpush1.xpose.msra.mxu0 0.0
  %7043 = vmatprep.subr.mxu0 0.0
  %7044 = vmatpush1.xpose.msra.mxu0 0.0
  %7045 = vmatprep.subr.mxu0 0.0
  %7046 = vmatpush1.xpose.msra.mxu0 0.0
  %7047 = vmatprep.mubr.f32.mxu0 0.0
  %7048 = vmatmul.mubr.f32.gmra.mrb[0].mxu0 %v6978
  %v7049 = vpop.f32.mrb[0].mxu0
  %v7050 = vadd.f32 0.0, %v7049
  %v7051 = vpop.f32.mrb[0].mxu0
  %7052 = vdwg.mxu0
  %v7054 = vsel %vm1099, %v6274, 0
  %v7057 = vsel %vm1099, %v6554, 0
  %7059 = vmatprep.subr.mxu0 0.0
  %7060 = vmatpush1.xpose.msra.mxu0 %v7057
  %7061 = vmatprep.subr.mxu0 0.0
  %7062 = vmatpush1.xpose.msra.mxu0 0.0
  %7063 = vmatprep.subr.mxu0 0.0
  %7064 = vmatpush1.xpose.msra.mxu0 0.0
  %7065 = vmatprep.subr.mxu0 0.0
  %7066 = vmatpush1.xpose.msra.mxu0 0.0
  %7067 = vmatprep.subr.mxu0 0.0
  %7068 = vmatpush1.xpose.msra.mxu0 0.0
  %7069 = vmatprep.subr.mxu0 0.0
  %7070 = vmatpush1.xpose.msra.mxu0 0.0
  %7071 = vmatprep.subr.mxu0 0.0
  %7072 = vmatpush1.xpose.msra.mxu0 0.0
  %7073 = vmatprep.subr.mxu0 0.0
  %7074 = vmatpush1.xpose.msra.mxu0 0.0
  %7075 = vmatprep.subr.mxu0 0.0
  %7076 = vmatpush1.xpose.msra.mxu0 0.0
  %7077 = vmatprep.subr.mxu0 0.0
  %7078 = vmatpush1.xpose.msra.mxu0 0.0
  %7079 = vmatprep.subr.mxu0 0.0
  %7080 = vmatpush1.xpose.msra.mxu0 0.0
  %7081 = vmatprep.subr.mxu0 0.0
  %7082 = vmatpush1.xpose.msra.mxu0 0.0
  %7083 = vmatprep.subr.mxu0 0.0
  %7084 = vmatpush1.xpose.msra.mxu0 0.0
  %7085 = vmatprep.subr.mxu0 0.0
  %7086 = vmatpush1.xpose.msra.mxu0 0.0
  %7087 = vmatprep.subr.mxu0 0.0
  %7088 = vmatpush1.xpose.msra.mxu0 0.0
  %7089 = vmatprep.subr.mxu0 0.0
  %7090 = vmatpush1.xpose.msra.mxu0 0.0
  %7091 = vmatprep.subr.mxu0 0.0
  %7092 = vmatpush1.xpose.msra.mxu0 0.0
  %7093 = vmatprep.subr.mxu0 0.0
  %7094 = vmatpush1.xpose.msra.mxu0 0.0
  %7095 = vmatprep.subr.mxu0 0.0
  %7096 = vmatpush1.xpose.msra.mxu0 0.0
  %7097 = vmatprep.subr.mxu0 0.0
  %7098 = vmatpush1.xpose.msra.mxu0 0.0
  %7099 = vmatprep.subr.mxu0 0.0
  %7100 = vmatpush1.xpose.msra.mxu0 0.0
  %7101 = vmatprep.subr.mxu0 0.0
  %7102 = vmatpush1.xpose.msra.mxu0 0.0
  %7103 = vmatprep.subr.mxu0 0.0
  %7104 = vmatpush1.xpose.msra.mxu0 0.0
  %7105 = vmatprep.subr.mxu0 0.0
  %7106 = vmatpush1.xpose.msra.mxu0 0.0
  %7107 = vmatprep.subr.mxu0 0.0
  %7108 = vmatpush1.xpose.msra.mxu0 0.0
  %7109 = vmatprep.subr.mxu0 0.0
  %7110 = vmatpush1.xpose.msra.mxu0 0.0
  %7111 = vmatprep.subr.mxu0 0.0
  %7112 = vmatpush1.xpose.msra.mxu0 0.0
  %7113 = vmatprep.subr.mxu0 0.0
  %7114 = vmatpush1.xpose.msra.mxu0 0.0
  %7115 = vmatprep.subr.mxu0 0.0
  %7116 = vmatpush1.xpose.msra.mxu0 0.0
  %7117 = vmatprep.subr.mxu0 0.0
  %7118 = vmatpush1.xpose.msra.mxu0 0.0
  %7119 = vmatprep.subr.mxu0 0.0
  %7120 = vmatpush1.xpose.msra.mxu0 0.0
  %7121 = vmatprep.subr.mxu0 0.0
  %7122 = vmatpush1.xpose.msra.mxu0 0.0
  %7123 = vmatprep.mubr.f32.mxu0 0.0
  %7124 = vmatmul.mubr.f32.gmra.mrb[0].mxu0 %v7054
  %v7125 = vpop.f32.mrb[0].mxu0
  %v7126 = vadd.f32 0.0, %v7125
  %v7127 = vpop.f32.mrb[0].mxu0
  %7128 = vdwg.mxu0
  %v7130 = vsel %vm1099, %v6344, 0
  %v7133 = vsel %vm1099, %v6624, 0
  %7135 = vmatprep.subr.mxu0 0.0
  %7136 = vmatpush1.xpose.msra.mxu0 %v7133
  %7137 = vmatprep.subr.mxu0 0.0
  %7138 = vmatpush1.xpose.msra.mxu0 0.0
  %7139 = vmatprep.subr.mxu0 0.0
  %7140 = vmatpush1.xpose.msra.mxu0 0.0
  %7141 = vmatprep.subr.mxu0 0.0
  %7142 = vmatpush1.xpose.msra.mxu0 0.0
  %7143 = vmatprep.subr.mxu0 0.0
  %7144 = vmatpush1.xpose.msra.mxu0 0.0
  %7145 = vmatprep.subr.mxu0 0.0
  %7146 = vmatpush1.xpose.msra.mxu0 0.0
  %7147 = vmatprep.subr.mxu0 0.0
  %7148 = vmatpush1.xpose.msra.mxu0 0.0
  %7149 = vmatprep.subr.mxu0 0.0
  %7150 = vmatpush1.xpose.msra.mxu0 0.0
  %7151 = vmatprep.subr.mxu0 0.0
  %7152 = vmatpush1.xpose.msra.mxu0 0.0
  %7153 = vmatprep.subr.mxu0 0.0
  %7154 = vmatpush1.xpose.msra.mxu0 0.0
  %7155 = vmatprep.subr.mxu0 0.0
  %7156 = vmatpush1.xpose.msra.mxu0 0.0
  %7157 = vmatprep.subr.mxu0 0.0
  %7158 = vmatpush1.xpose.msra.mxu0 0.0
  %7159 = vmatprep.subr.mxu0 0.0
  %7160 = vmatpush1.xpose.msra.mxu0 0.0
  %7161 = vmatprep.subr.mxu0 0.0
  %7162 = vmatpush1.xpose.msra.mxu0 0.0
  %7163 = vmatprep.subr.mxu0 0.0
  %7164 = vmatpush1.xpose.msra.mxu0 0.0
  %7165 = vmatprep.subr.mxu0 0.0
  %7166 = vmatpush1.xpose.msra.mxu0 0.0
  %7167 = vmatprep.subr.mxu0 0.0
  %7168 = vmatpush1.xpose.msra.mxu0 0.0
  %7169 = vmatprep.subr.mxu0 0.0
  %7170 = vmatpush1.xpose.msra.mxu0 0.0
  %7171 = vmatprep.subr.mxu0 0.0
  %7172 = vmatpush1.xpose.msra.mxu0 0.0
  %7173 = vmatprep.subr.mxu0 0.0
  %7174 = vmatpush1.xpose.msra.mxu0 0.0
  %7175 = vmatprep.subr.mxu0 0.0
  %7176 = vmatpush1.xpose.msra.mxu0 0.0
  %7177 = vmatprep.subr.mxu0 0.0
  %7178 = vmatpush1.xpose.msra.mxu0 0.0
  %7179 = vmatprep.subr.mxu0 0.0
  %7180 = vmatpush1.xpose.msra.mxu0 0.0
  %7181 = vmatprep.subr.mxu0 0.0
  %7182 = vmatpush1.xpose.msra.mxu0 0.0
  %7183 = vmatprep.subr.mxu0 0.0
  %7184 = vmatpush1.xpose.msra.mxu0 0.0
  %7185 = vmatprep.subr.mxu0 0.0
  %7186 = vmatpush1.xpose.msra.mxu0 0.0
  %7187 = vmatprep.subr.mxu0 0.0
  %7188 = vmatpush1.xpose.msra.mxu0 0.0
  %7189 = vmatprep.subr.mxu0 0.0
  %7190 = vmatpush1.xpose.msra.mxu0 0.0
  %7191 = vmatprep.subr.mxu0 0.0
  %7192 = vmatpush1.xpose.msra.mxu0 0.0
  %7193 = vmatprep.subr.mxu0 0.0
  %7194 = vmatpush1.xpose.msra.mxu0 0.0
  %7195 = vmatprep.subr.mxu0 0.0
  %7196 = vmatpush1.xpose.msra.mxu0 0.0
  %7197 = vmatprep.subr.mxu0 0.0
  %7198 = vmatpush1.xpose.msra.mxu0 0.0
  %7199 = vmatprep.mubr.f32.mxu0 0.0
  %7200 = vmatmul.mubr.f32.gmra.mrb[0].mxu0 %v7130
  %v7201 = vpop.f32.mrb[0].mxu0
  %v7202 = vadd.f32 0.0, %v7201
  %v7203 = vpop.f32.mrb[0].mxu0
  %7204 = vdwg.mxu0
  %v7206 = vsel %vm1099, %v6414, 0
  %v7209 = vsel %vm1099, %v6694, 0
  %7211 = vmatprep.subr.mxu0 0.0
  %7212 = vmatpush1.xpose.msra.mxu0 %v7209
  %7213 = vmatprep.subr.mxu0 0.0
  %7214 = vmatpush1.xpose.msra.mxu0 0.0
  %7215 = vmatprep.subr.mxu0 0.0
  %7216 = vmatpush1.xpose.msra.mxu0 0.0
  %7217 = vmatprep.subr.mxu0 0.0
  %7218 = vmatpush1.xpose.msra.mxu0 0.0
  %7219 = vmatprep.subr.mxu0 0.0
  %7220 = vmatpush1.xpose.msra.mxu0 0.0
  %7221 = vmatprep.subr.mxu0 0.0
  %7222 = vmatpush1.xpose.msra.mxu0 0.0
  %7223 = vmatprep.subr.mxu0 0.0
  %7224 = vmatpush1.xpose.msra.mxu0 0.0
  %7225 = vmatprep.subr.mxu0 0.0
  %7226 = vmatpush1.xpose.msra.mxu0 0.0
  %7227 = vmatprep.subr.mxu0 0.0
  %7228 = vmatpush1.xpose.msra.mxu0 0.0
  %7229 = vmatprep.subr.mxu0 0.0
  %7230 = vmatpush1.xpose.msra.mxu0 0.0
  %7231 = vmatprep.subr.mxu0 0.0
  %7232 = vmatpush1.xpose.msra.mxu0 0.0
  %7233 = vmatprep.subr.mxu0 0.0
  %7234 = vmatpush1.xpose.msra.mxu0 0.0
  %7235 = vmatprep.subr.mxu0 0.0
  %7236 = vmatpush1.xpose.msra.mxu0 0.0
  %7237 = vmatprep.subr.mxu0 0.0
  %7238 = vmatpush1.xpose.msra.mxu0 0.0
  %7239 = vmatprep.subr.mxu0 0.0
  %7240 = vmatpush1.xpose.msra.mxu0 0.0
  %7241 = vmatprep.subr.mxu0 0.0
  %7242 = vmatpush1.xpose.msra.mxu0 0.0
  %7243 = vmatprep.subr.mxu0 0.0
  %7244 = vmatpush1.xpose.msra.mxu0 0.0
  %7245 = vmatprep.subr.mxu0 0.0
  %7246 = vmatpush1.xpose.msra.mxu0 0.0
  %7247 = vmatprep.subr.mxu0 0.0
  %7248 = vmatpush1.xpose.msra.mxu0 0.0
  %7249 = vmatprep.subr.mxu0 0.0
  %7250 = vmatpush1.xpose.msra.mxu0 0.0
  %7251 = vmatprep.subr.mxu0 0.0
  %7252 = vmatpush1.xpose.msra.mxu0 0.0
  %7253 = vmatprep.subr.mxu0 0.0
  %7254 = vmatpush1.xpose.msra.mxu0 0.0
  %7255 = vmatprep.subr.mxu0 0.0
  %7256 = vmatpush1.xpose.msra.mxu0 0.0
  %7257 = vmatprep.subr.mxu0 0.0
  %7258 = vmatpush1.xpose.msra.mxu0 0.0
  %7259 = vmatprep.subr.mxu0 0.0
  %7260 = vmatpush1.xpose.msra.mxu0 0.0
  %7261 = vmatprep.subr.mxu0 0.0
  %7262 = vmatpush1.xpose.msra.mxu0 0.0
  %7263 = vmatprep.subr.mxu0 0.0
  %7264 = vmatpush1.xpose.msra.mxu0 0.0
  %7265 = vmatprep.subr.mxu0 0.0
  %7266 = vmatpush1.xpose.msra.mxu0 0.0
  %7267 = vmatprep.subr.mxu0 0.0
  %7268 = vmatpush1.xpose.msra.mxu0 0.0
  %7269 = vmatprep.subr.mxu0 0.0
  %7270 = vmatpush1.xpose.msra.mxu0 0.0
  %7271 = vmatprep.subr.mxu0 0.0
  %7272 = vmatpush1.xpose.msra.mxu0 0.0
  %7273 = vmatprep.subr.mxu0 0.0
  %7274 = vmatpush1.xpose.msra.mxu0 0.0
  %7275 = vmatprep.mubr.f32.mxu0 0.0
  %7276 = vmatmul.mubr.f32.gmra.mrb[0].mxu0 %v7206
  %v7277 = vpop.f32.mrb[0].mxu0
  %v7278 = vadd.f32 0.0, %v7277
  %v7279 = vpop.f32.mrb[0].mxu0
  %7280 = vdwg.mxu0
  %v7281 = vmul.f32 %v7050, 0.35355338
  %v7282 = vmul.f32 %v7126, 0.35355338
  %v7283 = vmul.f32 %v7202, 0.35355338
  %v7284 = vmul.f32 %v7278, 0.35355338
  %v7285 = vld [vmem:[%s3208] sm:$0x1]
  %v7287 = vlaneseq
  %v7288 = vshrl.u32 %v7287, 7
  %v7289 = vsub.s32 0, %v7288
  %v7290 = vrot.slane %v7285, %v7289
  %v7292 = vadd.f32 %v7281, %v7290
  %v7293 = vadd.f32 %v7282, %v7290
  %v7294 = vadd.f32 %v7283, %v7290
  %v7295 = vadd.f32 %v7284, %v7290
  %v7296 = vsel %vm1099, %v7292, -inf
  %7297 = vmax.xlane.f32.xlu0 %v7296
  %v7298 = vpop.xlane.xlu0 %7297
  %v7299 = vsel %vm1099, %v7293, -inf
  %7300 = vmax.xlane.f32.xlu0 %v7299
  %v7301 = vpop.xlane.xlu0 %7300
  %v7302 = vsel %vm1099, %v7294, -inf
  %7303 = vmax.xlane.f32.xlu0 %v7302
  %v7304 = vpop.xlane.xlu0 %7303
  %v7305 = vsel %vm1099, %v7295, -inf
  %7306 = vmax.xlane.f32.xlu0 %v7305
  %v7307 = vpop.xlane.xlu0 %7306
  %v7308 = vsub.f32 %v7292, %v7298
  %v7309 = vsub.f32 %v7293, %v7301
  %v7310 = vsub.f32 %v7294, %v7304
  %v7311 = vsub.f32 %v7295, %v7307
  %v7312 = vmul.f32 %v7308, 1.442695
  %v7313 = vpow.pop %v7312
  %v7314 = vmul.f32 %v7309, 1.442695
  %v7315 = vpow.pop %v7314
  %v7316 = vmul.f32 %v7310, 1.442695
  %v7317 = vpow.pop %v7316
  %v7318 = vmul.f32 %v7311, 1.442695
  %v7319 = vpow.pop %v7318
  %v7320 = vsel %vm1099, %v7313, 0.0
  %7321 = vadd.xlane.f32.xlu0 %v7320
  %v7322 = vpop.xlane.xlu0 %7321
  %v7323 = vsel %vm1099, %v7315, 0.0
  %7324 = vadd.xlane.f32.xlu0 %v7323
  %v7325 = vpop.xlane.xlu0 %7324
  %v7326 = vsel %vm1099, %v7317, 0.0
  %7327 = vadd.xlane.f32.xlu0 %v7326
  %v7328 = vpop.xlane.xlu0 %7327
  %v7329 = vsel %vm1099, %v7319, 0.0
  %7330 = vadd.xlane.f32.xlu0 %v7329
  %v7331 = vpop.xlane.xlu0 %7330
  %v7332 = vrcp.pop %v7322
  %v7333 = vrcp.pop %v7325
  %v7334 = vrcp.pop %v7328
  %v7335 = vrcp.pop %v7331
  %v7336 = vmul.f32 %v7313, %v7332
  %v7337 = vmul.f32 %v7315, %v7333
  %v7338 = vmul.f32 %v7317, %v7334
  %v7339 = vmul.f32 %v7319, %v7335
  %v7341 = vsel %vm1099, %v7336, 0
  %7343 = vmatprep.subr.mxu0 0.0
  %7344 = vmatpush1.msra.mxu0 %v6764
  %7345 = vmatprep.subr.mxu0 0.0
  %7346 = vmatpush1.msra.mxu0 0.0
  %7347 = vmatprep.subr.mxu0 0.0
  %7348 = vmatpush1.msra.mxu0 0.0
  %7349 = vmatprep.subr.mxu0 0.0
  %7350 = vmatpush1.msra.mxu0 0.0
  %7351 = vmatprep.subr.mxu0 0.0
  %7352 = vmatpush1.msra.mxu0 0.0
  %7353 = vmatprep.subr.mxu0 0.0
  %7354 = vmatpush1.msra.mxu0 0.0
  %7355 = vmatprep.subr.mxu0 0.0
  %7356 = vmatpush1.msra.mxu0 0.0
  %7357 = vmatprep.subr.mxu0 0.0
  %7358 = vmatpush1.msra.mxu0 0.0
  %7359 = vmatprep.subr.mxu0 0.0
  %7360 = vmatpush1.msra.mxu0 0.0
  %7361 = vmatprep.subr.mxu0 0.0
  %7362 = vmatpush1.msra.mxu0 0.0
  %7363 = vmatprep.subr.mxu0 0.0
  %7364 = vmatpush1.msra.mxu0 0.0
  %7365 = vmatprep.subr.mxu0 0.0
  %7366 = vmatpush1.msra.mxu0 0.0
  %7367 = vmatprep.subr.mxu0 0.0
  %7368 = vmatpush1.msra.mxu0 0.0
  %7369 = vmatprep.subr.mxu0 0.0
  %7370 = vmatpush1.msra.mxu0 0.0
  %7371 = vmatprep.subr.mxu0 0.0
  %7372 = vmatpush1.msra.mxu0 0.0
  %7373 = vmatprep.subr.mxu0 0.0
  %7374 = vmatpush1.msra.mxu0 0.0
  %7375 = vmatprep.subr.mxu0 0.0
  %7376 = vmatpush1.msra.mxu0 0.0
  %7377 = vmatprep.subr.mxu0 0.0
  %7378 = vmatpush1.msra.mxu0 0.0
  %7379 = vmatprep.subr.mxu0 0.0
  %7380 = vmatpush1.msra.mxu0 0.0
  %7381 = vmatprep.subr.mxu0 0.0
  %7382 = vmatpush1.msra.mxu0 0.0
  %7383 = vmatprep.subr.mxu0 0.0
  %7384 = vmatpush1.msra.mxu0 0.0
  %7385 = vmatprep.subr.mxu0 0.0
  %7386 = vmatpush1.msra.mxu0 0.0
  %7387 = vmatprep.subr.mxu0 0.0
  %7388 = vmatpush1.msra.mxu0 0.0
  %7389 = vmatprep.subr.mxu0 0.0
  %7390 = vmatpush1.msra.mxu0 0.0
  %7391 = vmatprep.subr.mxu0 0.0
  %7392 = vmatpush1.msra.mxu0 0.0
  %7393 = vmatprep.subr.mxu0 0.0
  %7394 = vmatpush1.msra.mxu0 0.0
  %7395 = vmatprep.subr.mxu0 0.0
  %7396 = vmatpush1.msra.mxu0 0.0
  %7397 = vmatprep.subr.mxu0 0.0
  %7398 = vmatpush1.msra.mxu0 0.0
  %7399 = vmatprep.subr.mxu0 0.0
  %7400 = vmatpush1.msra.mxu0 0.0
  %7401 = vmatprep.subr.mxu0 0.0
  %7402 = vmatpush1.msra.mxu0 0.0
  %7403 = vmatprep.subr.mxu0 0.0
  %7404 = vmatpush1.msra.mxu0 0.0
  %7405 = vmatprep.subr.mxu0 0.0
  %7406 = vmatpush1.msra.mxu0 0.0
  %7407 = vmatprep.mubr.f32.mxu0 0.0
  %7408 = vmatmul.mubr.f32.gmra.mrb[0].mxu0 %v7341
  %v7409 = vpop.f32.mrb[0].mxu0
  %v7410 = vadd.f32 0.0, %v7409
  %v7411 = vpop.f32.mrb[0].mxu0
  %7412 = vdwg.mxu0
  %v7414 = vsel %vm1099, %v7337, 0
  %7416 = vmatprep.subr.mxu0 0.0
  %7417 = vmatpush1.msra.mxu0 %v6834
  %7418 = vmatprep.subr.mxu0 0.0
  %7419 = vmatpush1.msra.mxu0 0.0
  %7420 = vmatprep.subr.mxu0 0.0
  %7421 = vmatpush1.msra.mxu0 0.0
  %7422 = vmatprep.subr.mxu0 0.0
  %7423 = vmatpush1.msra.mxu0 0.0
  %7424 = vmatprep.subr.mxu0 0.0
  %7425 = vmatpush1.msra.mxu0 0.0
  %7426 = vmatprep.subr.mxu0 0.0
  %7427 = vmatpush1.msra.mxu0 0.0
  %7428 = vmatprep.subr.mxu0 0.0
  %7429 = vmatpush1.msra.mxu0 0.0
  %7430 = vmatprep.subr.mxu0 0.0
  %7431 = vmatpush1.msra.mxu0 0.0
  %7432 = vmatprep.subr.mxu0 0.0
  %7433 = vmatpush1.msra.mxu0 0.0
  %7434 = vmatprep.subr.mxu0 0.0
  %7435 = vmatpush1.msra.mxu0 0.0
  %7436 = vmatprep.subr.mxu0 0.0
  %7437 = vmatpush1.msra.mxu0 0.0
  %7438 = vmatprep.subr.mxu0 0.0
  %7439 = vmatpush1.msra.mxu0 0.0
  %7440 = vmatprep.subr.mxu0 0.0
  %7441 = vmatpush1.msra.mxu0 0.0
  %7442 = vmatprep.subr.mxu0 0.0
  %7443 = vmatpush1.msra.mxu0 0.0
  %7444 = vmatprep.subr.mxu0 0.0
  %7445 = vmatpush1.msra.mxu0 0.0
  %7446 = vmatprep.subr.mxu0 0.0
  %7447 = vmatpush1.msra.mxu0 0.0
  %7448 = vmatprep.subr.mxu0 0.0
  %7449 = vmatpush1.msra.mxu0 0.0
  %7450 = vmatprep.subr.mxu0 0.0
  %7451 = vmatpush1.msra.mxu0 0.0
  %7452 = vmatprep.subr.mxu0 0.0
  %7453 = vmatpush1.msra.mxu0 0.0
  %7454 = vmatprep.subr.mxu0 0.0
  %7455 = vmatpush1.msra.mxu0 0.0
  %7456 = vmatprep.subr.mxu0 0.0
  %7457 = vmatpush1.msra.mxu0 0.0
  %7458 = vmatprep.subr.mxu0 0.0
  %7459 = vmatpush1.msra.mxu0 0.0
  %7460 = vmatprep.subr.mxu0 0.0
  %7461 = vmatpush1.msra.mxu0 0.0
  %7462 = vmatprep.subr.mxu0 0.0
  %7463 = vmatpush1.msra.mxu0 0.0
  %7464 = vmatprep.subr.mxu0 0.0
  %7465 = vmatpush1.msra.mxu0 0.0
  %7466 = vmatprep.subr.mxu0 0.0
  %7467 = vmatpush1.msra.mxu0 0.0
  %7468 = vmatprep.subr.mxu0 0.0
  %7469 = vmatpush1.msra.mxu0 0.0
  %7470 = vmatprep.subr.mxu0 0.0
  %7471 = vmatpush1.msra.mxu0 0.0
  %7472 = vmatprep.subr.mxu0 0.0
  %7473 = vmatpush1.msra.mxu0 0.0
  %7474 = vmatprep.subr.mxu0 0.0
  %7475 = vmatpush1.msra.mxu0 0.0
  %7476 = vmatprep.subr.mxu0 0.0
  %7477 = vmatpush1.msra.mxu0 0.0
  %7478 = vmatprep.subr.mxu0 0.0
  %7479 = vmatpush1.msra.mxu0 0.0
  %7480 = vmatprep.mubr.f32.mxu0 0.0
  %7481 = vmatmul.mubr.f32.gmra.mrb[0].mxu0 %v7414
  %v7482 = vpop.f32.mrb[0].mxu0
  %v7483 = vadd.f32 0.0, %v7482
  %v7484 = vpop.f32.mrb[0].mxu0
  %7485 = vdwg.mxu0
  %v7487 = vsel %vm1099, %v7338, 0
  %7489 = vmatprep.subr.mxu0 0.0
  %7490 = vmatpush1.msra.mxu0 %v6904
  %7491 = vmatprep.subr.mxu0 0.0
  %7492 = vmatpush1.msra.mxu0 0.0
  %7493 = vmatprep.subr.mxu0 0.0
  %7494 = vmatpush1.msra.mxu0 0.0
  %7495 = vmatprep.subr.mxu0 0.0
  %7496 = vmatpush1.msra.mxu0 0.0
  %7497 = vmatprep.subr.mxu0 0.0
  %7498 = vmatpush1.msra.mxu0 0.0
  %7499 = vmatprep.subr.mxu0 0.0
  %7500 = vmatpush1.msra.mxu0 0.0
  %7501 = vmatprep.subr.mxu0 0.0
  %7502 = vmatpush1.msra.mxu0 0.0
  %7503 = vmatprep.subr.mxu0 0.0
  %7504 = vmatpush1.msra.mxu0 0.0
  %7505 = vmatprep.subr.mxu0 0.0
  %7506 = vmatpush1.msra.mxu0 0.0
  %7507 = vmatprep.subr.mxu0 0.0
  %7508 = vmatpush1.msra.mxu0 0.0
  %7509 = vmatprep.subr.mxu0 0.0
  %7510 = vmatpush1.msra.mxu0 0.0
  %7511 = vmatprep.subr.mxu0 0.0
  %7512 = vmatpush1.msra.mxu0 0.0
  %7513 = vmatprep.subr.mxu0 0.0
  %7514 = vmatpush1.msra.mxu0 0.0
  %7515 = vmatprep.subr.mxu0 0.0
  %7516 = vmatpush1.msra.mxu0 0.0
  %7517 = vmatprep.subr.mxu0 0.0
  %7518 = vmatpush1.msra.mxu0 0.0
  %7519 = vmatprep.subr.mxu0 0.0
  %7520 = vmatpush1.msra.mxu0 0.0
  %7521 = vmatprep.subr.mxu0 0.0
  %7522 = vmatpush1.msra.mxu0 0.0
  %7523 = vmatprep.subr.mxu0 0.0
  %7524 = vmatpush1.msra.mxu0 0.0
  %7525 = vmatprep.subr.mxu0 0.0
  %7526 = vmatpush1.msra.mxu0 0.0
  %7527 = vmatprep.subr.mxu0 0.0
  %7528 = vmatpush1.msra.mxu0 0.0
  %7529 = vmatprep.subr.mxu0 0.0
  %7530 = vmatpush1.msra.mxu0 0.0
  %7531 = vmatprep.subr.mxu0 0.0
  %7532 = vmatpush1.msra.mxu0 0.0
  %7533 = vmatprep.subr.mxu0 0.0
  %7534 = vmatpush1.msra.mxu0 0.0
  %7535 = vmatprep.subr.mxu0 0.0
  %7536 = vmatpush1.msra.mxu0 0.0
  %7537 = vmatprep.subr.mxu0 0.0
  %7538 = vmatpush1.msra.mxu0 0.0
  %7539 = vmatprep.subr.mxu0 0.0
  %7540 = vmatpush1.msra.mxu0 0.0
  %7541 = vmatprep.subr.mxu0 0.0
  %7542 = vmatpush1.msra.mxu0 0.0
  %7543 = vmatprep.subr.mxu0 0.0
  %7544 = vmatpush1.msra.mxu0 0.0
  %7545 = vmatprep.subr.mxu0 0.0
  %7546 = vmatpush1.msra.mxu0 0.0
  %7547 = vmatprep.subr.mxu0 0.0
  %7548 = vmatpush1.msra.mxu0 0.0
  %7549 = vmatprep.subr.mxu0 0.0
  %7550 = vmatpush1.msra.mxu0 0.0
  %7551 = vmatprep.subr.mxu0 0.0
  %7552 = vmatpush1.msra.mxu0 0.0
  %7553 = vmatprep.mubr.f32.mxu0 0.0
  %7554 = vmatmul.mubr.f32.gmra.mrb[0].mxu0 %v7487
  %v7555 = vpop.f32.mrb[0].mxu0
  %v7556 = vadd.f32 0.0, %v7555
  %v7557 = vpop.f32.mrb[0].mxu0
  %7558 = vdwg.mxu0
  %v7560 = vsel %vm1099, %v7339, 0
  %7562 = vmatprep.subr.mxu0 0.0
  %7563 = vmatpush1.msra.mxu0 %v6974
  %7564 = vmatprep.subr.mxu0 0.0
  %7565 = vmatpush1.msra.mxu0 0.0
  %7566 = vmatprep.subr.mxu0 0.0
  %7567 = vmatpush1.msra.mxu0 0.0
  %7568 = vmatprep.subr.mxu0 0.0
  %7569 = vmatpush1.msra.mxu0 0.0
  %7570 = vmatprep.subr.mxu0 0.0
  %7571 = vmatpush1.msra.mxu0 0.0
  %7572 = vmatprep.subr.mxu0 0.0
  %7573 = vmatpush1.msra.mxu0 0.0
  %7574 = vmatprep.subr.mxu0 0.0
  %7575 = vmatpush1.msra.mxu0 0.0
  %7576 = vmatprep.subr.mxu0 0.0
  %7577 = vmatpush1.msra.mxu0 0.0
  %7578 = vmatprep.subr.mxu0 0.0
  %7579 = vmatpush1.msra.mxu0 0.0
  %7580 = vmatprep.subr.mxu0 0.0
  %7581 = vmatpush1.msra.mxu0 0.0
  %7582 = vmatprep.subr.mxu0 0.0
  %7583 = vmatpush1.msra.mxu0 0.0
  %7584 = vmatprep.subr.mxu0 0.0
  %7585 = vmatpush1.msra.mxu0 0.0
  %7586 = vmatprep.subr.mxu0 0.0
  %7587 = vmatpush1.msra.mxu0 0.0
  %7588 = vmatprep.subr.mxu0 0.0
  %7589 = vmatpush1.msra.mxu0 0.0
  %7590 = vmatprep.subr.mxu0 0.0
  %7591 = vmatpush1.msra.mxu0 0.0
  %7592 = vmatprep.subr.mxu0 0.0
  %7593 = vmatpush1.msra.mxu0 0.0
  %7594 = vmatprep.subr.mxu0 0.0
  %7595 = vmatpush1.msra.mxu0 0.0
  %7596 = vmatprep.subr.mxu0 0.0
  %7597 = vmatpush1.msra.mxu0 0.0
  %7598 = vmatprep.subr.mxu0 0.0
  %7599 = vmatpush1.msra.mxu0 0.0
  %7600 = vmatprep.subr.mxu0 0.0
  %7601 = vmatpush1.msra.mxu0 0.0
  %7602 = vmatprep.subr.mxu0 0.0
  %7603 = vmatpush1.msra.mxu0 0.0
  %7604 = vmatprep.subr.mxu0 0.0
  %7605 = vmatpush1.msra.mxu0 0.0
  %7606 = vmatprep.subr.mxu0 0.0
  %7607 = vmatpush1.msra.mxu0 0.0
  %7608 = vmatprep.subr.mxu0 0.0
  %7609 = vmatpush1.msra.mxu0 0.0
  %7610 = vmatprep.subr.mxu0 0.0
  %7611 = vmatpush1.msra.mxu0 0.0
  %7612 = vmatprep.subr.mxu0 0.0
  %7613 = vmatpush1.msra.mxu0 0.0
  %7614 = vmatprep.subr.mxu0 0.0
  %7615 = vmatpush1.msra.mxu0 0.0
  %7616 = vmatprep.subr.mxu0 0.0
  %7617 = vmatpush1.msra.mxu0 0.0
  %7618 = vmatprep.subr.mxu0 0.0
  %7619 = vmatpush1.msra.mxu0 0.0
  %7620 = vmatprep.subr.mxu0 0.0
  %7621 = vmatpush1.msra.mxu0 0.0
  %7622 = vmatprep.subr.mxu0 0.0
  %7623 = vmatpush1.msra.mxu0 0.0
  %7624 = vmatprep.subr.mxu0 0.0
  %7625 = vmatpush1.msra.mxu0 0.0
  %7626 = vmatprep.mubr.f32.mxu0 0.0
  %7627 = vmatmul.mubr.f32.gmra.mrb[0].mxu0 %v7560
  %v7628 = vpop.f32.mrb[0].mxu0
  %v7629 = vadd.f32 0.0, %v7628
  %v7630 = vpop.f32.mrb[0].mxu0
  %7631 = vdwg.mxu0
  %v7633 = vsel %vm1099, %v7483, 0
  %7635 = vmatprep.subr.mxu0 0.0
  %7636 = vmatpush1.msra.mxu0 %v4257
  %7637 = vmatprep.subr.mxu0 0.0
  %7638 = vmatpush1.msra.mxu0 0.0
  %7639 = vmatprep.subr.mxu0 0.0
  %7640 = vmatpush1.msra.mxu0 0.0
  %7641 = vmatprep.subr.mxu0 0.0
  %7642 = vmatpush1.msra.mxu0 0.0
  %7643 = vmatprep.subr.mxu0 0.0
  %7644 = vmatpush1.msra.mxu0 0.0
  %7645 = vmatprep.subr.mxu0 0.0
  %7646 = vmatpush1.msra.mxu0 0.0
  %7647 = vmatprep.subr.mxu0 0.0
  %7648 = vmatpush1.msra.mxu0 0.0
  %7649 = vmatprep.subr.mxu0 0.0
  %7650 = vmatpush1.msra.mxu0 0.0
  %7651 = vmatprep.subr.mxu0 0.0
  %7652 = vmatpush1.msra.mxu0 0.0
  %7653 = vmatprep.subr.mxu0 0.0
  %7654 = vmatpush1.msra.mxu0 0.0
  %7655 = vmatprep.subr.mxu0 0.0
  %7656 = vmatpush1.msra.mxu0 0.0
  %7657 = vmatprep.subr.mxu0 0.0
  %7658 = vmatpush1.msra.mxu0 0.0
  %7659 = vmatprep.subr.mxu0 0.0
  %7660 = vmatpush1.msra.mxu0 0.0
  %7661 = vmatprep.subr.mxu0 0.0
  %7662 = vmatpush1.msra.mxu0 0.0
  %7663 = vmatprep.subr.mxu0 0.0
  %7664 = vmatpush1.msra.mxu0 0.0
  %7665 = vmatprep.subr.mxu0 0.0
  %7666 = vmatpush1.msra.mxu0 0.0
  %7667 = vmatprep.subr.mxu0 0.0
  %7668 = vmatpush1.msra.mxu0 0.0
  %7669 = vmatprep.subr.mxu0 0.0
  %7670 = vmatpush1.msra.mxu0 0.0
  %7671 = vmatprep.subr.mxu0 0.0
  %7672 = vmatpush1.msra.mxu0 0.0
  %7673 = vmatprep.subr.mxu0 0.0
  %7674 = vmatpush1.msra.mxu0 0.0
  %7675 = vmatprep.subr.mxu0 0.0
  %7676 = vmatpush1.msra.mxu0 0.0
  %7677 = vmatprep.subr.mxu0 0.0
  %7678 = vmatpush1.msra.mxu0 0.0
  %7679 = vmatprep.subr.mxu0 0.0
  %7680 = vmatpush1.msra.mxu0 0.0
  %7681 = vmatprep.subr.mxu0 0.0
  %7682 = vmatpush1.msra.mxu0 0.0
  %7683 = vmatprep.subr.mxu0 0.0
  %7684 = vmatpush1.msra.mxu0 0.0
  %7685 = vmatprep.subr.mxu0 0.0
  %7686 = vmatpush1.msra.mxu0 0.0
  %7687 = vmatprep.subr.mxu0 0.0
  %7688 = vmatpush1.msra.mxu0 0.0
  %7689 = vmatprep.subr.mxu0 0.0
  %7690 = vmatpush1.msra.mxu0 0.0
  %7691 = vmatprep.subr.mxu0 0.0
  %7692 = vmatpush1.msra.mxu0 0.0
  %7693 = vmatprep.subr.mxu0 0.0
  %7694 = vmatpush1.msra.mxu0 0.0
  %7695 = vmatprep.subr.mxu0 0.0
  %7696 = vmatpush1.msra.mxu0 0.0
  %7697 = vmatprep.subr.mxu0 0.0
  %7698 = vmatpush1.msra.mxu0 0.0
  %7699 = vmatprep.mubr.f32.mxu0 0.0
  %7700 = vmatmul.mubr.f32.gmra.mrb[0].mxu0 %v7633
  %v7701 = vpop.f32.mrb[0].mxu0
  %v7702 = vadd.f32 0.0, %v7701
  %v7703 = vpop.f32.mrb[0].mxu0
  %7704 = vdwg.mxu0
  %v7706 = vsel %vm1099, %v7410, 0
  %7708 = vmatprep.subr.mxu0 0.0
  %7709 = vmatpush1.msra.mxu0 %v4256
  %7710 = vmatprep.subr.mxu0 0.0
  %7711 = vmatpush1.msra.mxu0 0.0
  %7712 = vmatprep.subr.mxu0 0.0
  %7713 = vmatpush1.msra.mxu0 0.0
  %7714 = vmatprep.subr.mxu0 0.0
  %7715 = vmatpush1.msra.mxu0 0.0
  %7716 = vmatprep.subr.mxu0 0.0
  %7717 = vmatpush1.msra.mxu0 0.0
  %7718 = vmatprep.subr.mxu0 0.0
  %7719 = vmatpush1.msra.mxu0 0.0
  %7720 = vmatprep.subr.mxu0 0.0
  %7721 = vmatpush1.msra.mxu0 0.0
  %7722 = vmatprep.subr.mxu0 0.0
  %7723 = vmatpush1.msra.mxu0 0.0
  %7724 = vmatprep.subr.mxu0 0.0
  %7725 = vmatpush1.msra.mxu0 0.0
  %7726 = vmatprep.subr.mxu0 0.0
  %7727 = vmatpush1.msra.mxu0 0.0
  %7728 = vmatprep.subr.mxu0 0.0
  %7729 = vmatpush1.msra.mxu0 0.0
  %7730 = vmatprep.subr.mxu0 0.0
  %7731 = vmatpush1.msra.mxu0 0.0
  %7732 = vmatprep.subr.mxu0 0.0
  %7733 = vmatpush1.msra.mxu0 0.0
  %7734 = vmatprep.subr.mxu0 0.0
  %7735 = vmatpush1.msra.mxu0 0.0
  %7736 = vmatprep.subr.mxu0 0.0
  %7737 = vmatpush1.msra.mxu0 0.0
  %7738 = vmatprep.subr.mxu0 0.0
  %7739 = vmatpush1.msra.mxu0 0.0
  %7740 = vmatprep.subr.mxu0 0.0
  %7741 = vmatpush1.msra.mxu0 0.0
  %7742 = vmatprep.subr.mxu0 0.0
  %7743 = vmatpush1.msra.mxu0 0.0
  %7744 = vmatprep.subr.mxu0 0.0
  %7745 = vmatpush1.msra.mxu0 0.0
  %7746 = vmatprep.subr.mxu0 0.0
  %7747 = vmatpush1.msra.mxu0 0.0
  %7748 = vmatprep.subr.mxu0 0.0
  %7749 = vmatpush1.msra.mxu0 0.0
  %7750 = vmatprep.subr.mxu0 0.0
  %7751 = vmatpush1.msra.mxu0 0.0
  %7752 = vmatprep.subr.mxu0 0.0
  %7753 = vmatpush1.msra.mxu0 0.0
  %7754 = vmatprep.subr.mxu0 0.0
  %7755 = vmatpush1.msra.mxu0 0.0
  %7756 = vmatprep.subr.mxu0 0.0
  %7757 = vmatpush1.msra.mxu0 0.0
  %7758 = vmatprep.subr.mxu0 0.0
  %7759 = vmatpush1.msra.mxu0 0.0
  %7760 = vmatprep.subr.mxu0 0.0
  %7761 = vmatpush1.msra.mxu0 0.0
  %7762 = vmatprep.subr.mxu0 0.0
  %7763 = vmatpush1.msra.mxu0 0.0
  %7764 = vmatprep.subr.mxu0 0.0
  %7765 = vmatpush1.msra.mxu0 0.0
  %7766 = vmatprep.subr.mxu0 0.0
  %7767 = vmatpush1.msra.mxu0 0.0
  %7768 = vmatprep.subr.mxu0 0.0
  %7769 = vmatpush1.msra.mxu0 0.0
  %7770 = vmatprep.subr.mxu0 0.0
  %7771 = vmatpush1.msra.mxu0 0.0
  %7772 = vmatprep.mubr.f32.mxu0 0.0
  %7773 = vmatmul.mubr.f32.gmra.mrb[0].mxu0 %v7706
  %v7774 = vpop.f32.mrb[0].mxu0
  %v7775 = vadd.f32 %v7702, %v7774
  %v7776 = vpop.f32.mrb[0].mxu0
  %7777 = vdwg.mxu0
  %v7779 = vsel %vm1099, %v7556, 0
  %7781 = vmatprep.subr.mxu0 0.0
  %7782 = vmatpush1.msra.mxu0 %v4258
  %7783 = vmatprep.subr.mxu0 0.0
  %7784 = vmatpush1.msra.mxu0 0.0
  %7785 = vmatprep.subr.mxu0 0.0
  %7786 = vmatpush1.msra.mxu0 0.0
  %7787 = vmatprep.subr.mxu0 0.0
  %7788 = vmatpush1.msra.mxu0 0.0
  %7789 = vmatprep.subr.mxu0 0.0
  %7790 = vmatpush1.msra.mxu0 0.0
  %7791 = vmatprep.subr.mxu0 0.0
  %7792 = vmatpush1.msra.mxu0 0.0
  %7793 = vmatprep.subr.mxu0 0.0
  %7794 = vmatpush1.msra.mxu0 0.0
  %7795 = vmatprep.subr.mxu0 0.0
  %7796 = vmatpush1.msra.mxu0 0.0
  %7797 = vmatprep.subr.mxu0 0.0
  %7798 = vmatpush1.msra.mxu0 0.0
  %7799 = vmatprep.subr.mxu0 0.0
  %7800 = vmatpush1.msra.mxu0 0.0
  %7801 = vmatprep.subr.mxu0 0.0
  %7802 = vmatpush1.msra.mxu0 0.0
  %7803 = vmatprep.subr.mxu0 0.0
  %7804 = vmatpush1.msra.mxu0 0.0
  %7805 = vmatprep.subr.mxu0 0.0
  %7806 = vmatpush1.msra.mxu0 0.0
  %7807 = vmatprep.subr.mxu0 0.0
  %7808 = vmatpush1.msra.mxu0 0.0
  %7809 = vmatprep.subr.mxu0 0.0
  %7810 = vmatpush1.msra.mxu0 0.0
  %7811 = vmatprep.subr.mxu0 0.0
  %7812 = vmatpush1.msra.mxu0 0.0
  %7813 = vmatprep.subr.mxu0 0.0
  %7814 = vmatpush1.msra.mxu0 0.0
  %7815 = vmatprep.subr.mxu0 0.0
  %7816 = vmatpush1.msra.mxu0 0.0
  %7817 = vmatprep.subr.mxu0 0.0
  %7818 = vmatpush1.msra.mxu0 0.0
  %7819 = vmatprep.subr.mxu0 0.0
  %7820 = vmatpush1.msra.mxu0 0.0
  %7821 = vmatprep.subr.mxu0 0.0
  %7822 = vmatpush1.msra.mxu0 0.0
  %7823 = vmatprep.subr.mxu0 0.0
  %7824 = vmatpush1.msra.mxu0 0.0
  %7825 = vmatprep.subr.mxu0 0.0
  %7826 = vmatpush1.msra.mxu0 0.0
  %7827 = vmatprep.subr.mxu0 0.0
  %7828 = vmatpush1.msra.mxu0 0.0
  %7829 = vmatprep.subr.mxu0 0.0
  %7830 = vmatpush1.msra.mxu0 0.0
  %7831 = vmatprep.subr.mxu0 0.0
  %7832 = vmatpush1.msra.mxu0 0.0
  %7833 = vmatprep.subr.mxu0 0.0
  %7834 = vmatpush1.msra.mxu0 0.0
  %7835 = vmatprep.subr.mxu0 0.0
  %7836 = vmatpush1.msra.mxu0 0.0
  %7837 = vmatprep.subr.mxu0 0.0
  %7838 = vmatpush1.msra.mxu0 0.0
  %7839 = vmatprep.subr.mxu0 0.0
  %7840 = vmatpush1.msra.mxu0 0.0
  %7841 = vmatprep.subr.mxu0 0.0
  %7842 = vmatpush1.msra.mxu0 0.0
  %7843 = vmatprep.subr.mxu0 0.0
  %7844 = vmatpush1.msra.mxu0 0.0
  %7845 = vmatprep.mubr.f32.mxu0 0.0
  %7846 = vmatmul.mubr.f32.gmra.mrb[0].mxu0 %v7779
  %v7847 = vpop.f32.mrb[0].mxu0
  %v7848 = vadd.f32 0.0, %v7847
  %v7849 = vpop.f32.mrb[0].mxu0
  %7850 = vdwg.mxu0
  %v7851 = vadd.f32 %v7775, %v7848
  %v7853 = vsel %vm1099, %v7629, 0
  %7855 = vmatprep.subr.mxu0 0.0
  %7856 = vmatpush1.msra.mxu0 %v4259
  %7857 = vmatprep.subr.mxu0 0.0
  %7858 = vmatpush1.msra.mxu0 0.0
  %7859 = vmatprep.subr.mxu0 0.0
  %7860 = vmatpush1.msra.mxu0 0.0
  %7861 = vmatprep.subr.mxu0 0.0
  %7862 = vmatpush1.msra.mxu0 0.0
  %7863 = vmatprep.subr.mxu0 0.0
  %7864 = vmatpush1.msra.mxu0 0.0
  %7865 = vmatprep.subr.mxu0 0.0
  %7866 = vmatpush1.msra.mxu0 0.0
  %7867 = vmatprep.subr.mxu0 0.0
  %7868 = vmatpush1.msra.mxu0 0.0
  %7869 = vmatprep.subr.mxu0 0.0
  %7870 = vmatpush1.msra.mxu0 0.0
  %7871 = vmatprep.subr.mxu0 0.0
  %7872 = vmatpush1.msra.mxu0 0.0
  %7873 = vmatprep.subr.mxu0 0.0
  %7874 = vmatpush1.msra.mxu0 0.0
  %7875 = vmatprep.subr.mxu0 0.0
  %7876 = vmatpush1.msra.mxu0 0.0
  %7877 = vmatprep.subr.mxu0 0.0
  %7878 = vmatpush1.msra.mxu0 0.0
  %7879 = vmatprep.subr.mxu0 0.0
  %7880 = vmatpush1.msra.mxu0 0.0
  %7881 = vmatprep.subr.mxu0 0.0
  %7882 = vmatpush1.msra.mxu0 0.0
  %7883 = vmatprep.subr.mxu0 0.0
  %7884 = vmatpush1.msra.mxu0 0.0
  %7885 = vmatprep.subr.mxu0 0.0
  %7886 = vmatpush1.msra.mxu0 0.0
  %7887 = vmatprep.subr.mxu0 0.0
  %7888 = vmatpush1.msra.mxu0 0.0
  %7889 = vmatprep.subr.mxu0 0.0
  %7890 = vmatpush1.msra.mxu0 0.0
  %7891 = vmatprep.subr.mxu0 0.0
  %7892 = vmatpush1.msra.mxu0 0.0
  %7893 = vmatprep.subr.mxu0 0.0
  %7894 = vmatpush1.msra.mxu0 0.0
  %7895 = vmatprep.subr.mxu0 0.0
  %7896 = vmatpush1.msra.mxu0 0.0
  %7897 = vmatprep.subr.mxu0 0.0
  %7898 = vmatpush1.msra.mxu0 0.0
  %7899 = vmatprep.subr.mxu0 0.0
  %7900 = vmatpush1.msra.mxu0 0.0
  %7901 = vmatprep.subr.mxu0 0.0
  %7902 = vmatpush1.msra.mxu0 0.0
  %7903 = vmatprep.subr.mxu0 0.0
  %7904 = vmatpush1.msra.mxu0 0.0
  %7905 = vmatprep.subr.mxu0 0.0
  %7906 = vmatpush1.msra.mxu0 0.0
  %7907 = vmatprep.subr.mxu0 0.0
  %7908 = vmatpush1.msra.mxu0 0.0
  %7909 = vmatprep.subr.mxu0 0.0
  %7910 = vmatpush1.msra.mxu0 0.0
  %7911 = vmatprep.subr.mxu0 0.0
  %7912 = vmatpush1.msra.mxu0 0.0
  %7913 = vmatprep.subr.mxu0 0.0
  %7914 = vmatpush1.msra.mxu0 0.0
  %7915 = vmatprep.subr.mxu0 0.0
  %7916 = vmatpush1.msra.mxu0 0.0
  %7917 = vmatprep.subr.mxu0 0.0
  %7918 = vmatpush1.msra.mxu0 0.0
  %7919 = vmatprep.mubr.f32.mxu0 0.0
  %7920 = vmatmul.mubr.f32.gmra.mrb[0].mxu0 %v7853
  %v7921 = vpop.f32.mrb[0].mxu0
  %v7922 = vadd.f32 0.0, %v7921
  %v7923 = vpop.f32.mrb[0].mxu0
  %7924 = vdwg.mxu0
  %v7925 = vadd.f32 %v7851, %v7922
  %v7926 = vadd.f32 %v7925, %v6130
  %7927 = vst.msk [vmem:[#allocation2 + $0x8] sm:$0xff] %vm75, %v7926
  %v7928 = vld [vmem:[#allocation2] sm:$0xff]
  %v7929 = vld [vmem:[#allocation2 + $0x8] sm:$0xff]
  %v7930 = vadd.f32 %v4187, %v7928
  %v7931 = vadd.f32 %v4188, %v7929
  %s7932 = scalar_lea.vmem %s12, 1
  %v7933 = vld [vmem:[%s7932] sm:$0x1]
  %s7934 = scalar_lea.vmem %s13, 1
  %v7935 = vld [vmem:[%s7934] sm:$0x1]
  %v7936 = vsel %vm75, %v7930, 0.0
  %7937 = vadd.xlane.f32.xlu0 %v7936
  %v7938 = vpop.xlane.xlu0 %7937
  %v7939 = vsel %vm75, %v7931, 0.0
  %7940 = vadd.xlane.f32.xlu0 %v7939
  %v7941 = vpop.xlane.xlu0 %7940
  %v7942 = vmul.f32 %v7938, %v82
  %v7943 = vmul.f32 %v7941, %v82
  %v7944 = vsub.f32 %v7930, %v7942
  %v7945 = vsub.f32 %v7931, %v7943
  %v7946 = vmul.f32 %v7944, %v7944
  %v7947 = vmul.f32 %v7945, %v7945
  %v7948 = vsel %vm75, %v7946, 0.0
  %7949 = vadd.xlane.f32.xlu0 %v7948
  %v7950 = vpop.xlane.xlu0 %7949
  %v7951 = vsel %vm75, %v7947, 0.0
  %7952 = vadd.xlane.f32.xlu0 %v7951
  %v7953 = vpop.xlane.xlu0 %7952
  %v7954 = vmul.f32 %v7950, %v82
  %v7955 = vmul.f32 %v7953, %v82
  %v7956 = vadd.f32 %v7954, 1e-12
  %v7957 = vadd.f32 %v7955, 1e-12
  %v7958 = vrsqrt.pop %v7956
  %v7959 = vrsqrt.pop %v7957
  %v7960 = vmul.f32 %v7944, %v7958
  %v7961 = vmul.f32 %v7945, %v7959
  %v7963 = vlaneseq
  %v7964 = vshrl.u32 %v7963, 7
  %v7965 = vsub.s32 0, %v7964
  %v7966 = vrot.slane %v7933, %v7965
  %v7968 = vmul.f32 %v7960, %v7966
  %v7969 = vmul.f32 %v7961, %v7966
  %v7971 = vlaneseq
  %v7972 = vshrl.u32 %v7971, 7
  %v7973 = vsub.s32 0, %v7972
  %v7974 = vrot.slane %v7935, %v7973
  %v7976 = vadd.f32 %v7968, %v7974
  %v7977 = vadd.f32 %v7969, %v7974
  %s7978 = scalar_lea.vmem %s14, 32
  %v7979 = vld [vmem:[%s7978] sm:$0xff]
  %v7980 = vld [vmem:[%s7978 + $0x8] sm:$0xff]
  %v7981 = vld [vmem:[%s7978 + $0x10] sm:$0xff]
  %v7982 = vld [vmem:[%s7978 + $0x18] sm:$0xff]
  %s7983 = scalar_lea.vmem %s15, 1
  %v7984 = vld [vmem:[%s7983] sm:$0x1]
  %v7986 = vlaneseq
  %v7987 = vshrl.u32 %v7986, 7
  %v7988 = vsub.s32 0, %v7987
  %v7989 = vrot.slane %v7984, %v7988
  %v7992 = vsel %vm75, %v7976, 0
  %v7995 = vsel %vm75, %v7977, 0
  %7997 = vmatprep.subr.mxu0 0.0
  %7998 = vmatpush1.msra.mxu0 %v7979
  %7999 = vmatprep.subr.mxu0 0.0
  %8000 = vmatpush1.msra.mxu0 %v7980
  %8001 = vmatprep.subr.mxu0 0.0
  %8002 = vmatpush1.msra.mxu0 %v7981
  %8003 = vmatprep.subr.mxu0 0.0
  %8004 = vmatpush1.msra.mxu0 %v7982
  %8005 = vmatprep.subr.mxu0 0.0
  %8006 = vmatpush1.msra.mxu0 0.0
  %8007 = vmatprep.subr.mxu0 0.0
  %8008 = vmatpush1.msra.mxu0 0.0
  %8009 = vmatprep.subr.mxu0 0.0
  %8010 = vmatpush1.msra.mxu0 0.0
  %8011 = vmatprep.subr.mxu0 0.0
  %8012 = vmatpush1.msra.mxu0 0.0
  %8013 = vmatprep.subr.mxu0 0.0
  %8014 = vmatpush1.msra.mxu0 0.0
  %8015 = vmatprep.subr.mxu0 0.0
  %8016 = vmatpush1.msra.mxu0 0.0
  %8017 = vmatprep.subr.mxu0 0.0
  %8018 = vmatpush1.msra.mxu0 0.0
  %8019 = vmatprep.subr.mxu0 0.0
  %8020 = vmatpush1.msra.mxu0 0.0
  %8021 = vmatprep.subr.mxu0 0.0
  %8022 = vmatpush1.msra.mxu0 0.0
  %8023 = vmatprep.subr.mxu0 0.0
  %8024 = vmatpush1.msra.mxu0 0.0
  %8025 = vmatprep.subr.mxu0 0.0
  %8026 = vmatpush1.msra.mxu0 0.0
  %8027 = vmatprep.subr.mxu0 0.0
  %8028 = vmatpush1.msra.mxu0 0.0
  %8029 = vmatprep.subr.mxu0 0.0
  %8030 = vmatpush1.msra.mxu0 0.0
  %8031 = vmatprep.subr.mxu0 0.0
  %8032 = vmatpush1.msra.mxu0 0.0
  %8033 = vmatprep.subr.mxu0 0.0
  %8034 = vmatpush1.msra.mxu0 0.0
  %8035 = vmatprep.subr.mxu0 0.0
  %8036 = vmatpush1.msra.mxu0 0.0
  %8037 = vmatprep.subr.mxu0 0.0
  %8038 = vmatpush1.msra.mxu0 0.0
  %8039 = vmatprep.subr.mxu0 0.0
  %8040 = vmatpush1.msra.mxu0 0.0
  %8041 = vmatprep.subr.mxu0 0.0
  %8042 = vmatpush1.msra.mxu0 0.0
  %8043 = vmatprep.subr.mxu0 0.0
  %8044 = vmatpush1.msra.mxu0 0.0
  %8045 = vmatprep.subr.mxu0 0.0
  %8046 = vmatpush1.msra.mxu0 0.0
  %8047 = vmatprep.subr.mxu0 0.0
  %8048 = vmatpush1.msra.mxu0 0.0
  %8049 = vmatprep.subr.mxu0 0.0
  %8050 = vmatpush1.msra.mxu0 0.0
  %8051 = vmatprep.subr.mxu0 0.0
  %8052 = vmatpush1.msra.mxu0 0.0
  %8053 = vmatprep.subr.mxu0 0.0
  %8054 = vmatpush1.msra.mxu0 0.0
  %8055 = vmatprep.subr.mxu0 0.0
  %8056 = vmatpush1.msra.mxu0 0.0
  %8057 = vmatprep.subr.mxu0 0.0
  %8058 = vmatpush1.msra.mxu0 0.0
  %8059 = vmatprep.subr.mxu0 0.0
  %8060 = vmatpush1.msra.mxu0 0.0
  %8061 = vmatprep.mubr.f32.mxu0 0.0
  %8062 = vmatmul.mubr.f32.gmra.mrb[0].mxu0 %v7992
  %v8063 = vpop.f32.mrb[0].mxu0
  %v8064 = vadd.f32 %v7989, %v8063
  %v8065 = vpop.f32.mrb[0].mxu0
  %8066 = vmatprep.mubr.f32.mxu0 0.0
  %8067 = vmatmul.mubr.f32.gmra.mrb[0].mxu0 %v7995
  %v8068 = vpop.f32.mrb[0].mxu0
  %v8069 = vadd.f32 %v7989, %v8068
  %v8070 = vpop.f32.mrb[0].mxu0
  %8071 = vdwg.mxu0
  %v8072 = vmul.f32 %v8064, 0.5
  %v8073 = vmul.f32 %v8069, 0.5
  %v8074 = vmul.f32 %v8064, 0.70710677
  %v8075 = vmul.f32 %v8069, 0.70710677
  %v8076 = vand.u32 2147483647, %v8074
  %v8077 = vand.u32 2147483647, %v8075
  %v8078 = vmul.f32 %v8076, 0.3275911
  %v8079 = vmul.f32 %v8077, 0.3275911
  %v8080 = vadd.f32 %v8078, 1.0
  %v8081 = vadd.f32 %v8079, 1.0
  %v8082 = vrcp.pop %v8080
  %v8083 = vmul.f32 1.0, %v8082
  %v8084 = vrcp.pop %v8081
  %v8085 = vmul.f32 1.0, %v8084
  %v8086 = vmul.f32 %v8083, 1.0614054
  %v8087 = vmul.f32 %v8085, 1.0614054
  %v8088 = vadd.f32 %v8086, -1.4531521
  %v8089 = vadd.f32 %v8087, -1.4531521
  %v8090 = vmul.f32 %v8088, %v8083
  %v8091 = vmul.f32 %v8089, %v8085
  %v8092 = vadd.f32 %v8090, 1.4214138
  %v8093 = vadd.f32 %v8091, 1.4214138
  %v8094 = vmul.f32 %v8092, %v8083
  %v8095 = vmul.f32 %v8093, %v8085
  %v8096 = vadd.f32 %v8094, -0.28449672
  %v8097 = vadd.f32 %v8095, -0.28449672
  %v8098 = vmul.f32 %v8096, %v8083
  %v8099 = vmul.f32 %v8097, %v8085
  %v8100 = vadd.f32 %v8098, 0.2548296
  %v8101 = vadd.f32 %v8099, 0.2548296
  %v8102 = vmul.f32 %v8100, %v8083
  %v8103 = vmul.f32 %v8101, %v8085
  %v8104 = vsub.f32 0.0, %v8076
  %v8105 = vsub.f32 0.0, %v8077
  %v8106 = vmul.f32 %v8104, %v8076
  %v8107 = vmul.f32 %v8105, %v8077
  %v8108 = vmul.f32 %v8106, 1.442695
  %v8109 = vpow.pop %v8108
  %v8110 = vmul.f32 %v8107, 1.442695
  %v8111 = vpow.pop %v8110
  %v8112 = vmul.f32 %v8102, %v8109
  %v8113 = vmul.f32 %v8103, %v8111
  %v8114 = vsub.f32 1.0, %v8112
  %v8115 = vsub.f32 1.0, %v8113
  %vm8116 = vcmp.ge.f32.partialorder %v8074, 0.0
  %vm8117 = vcmp.ge.f32.partialorder %v8075, 0.0
  %v8118 = vsub.f32 0.0, %v8114
  %v8119 = vsub.f32 0.0, %v8115
  %v8120 = vsel %vm8116, %v8114, %v8118
  %v8121 = vsel %vm8117, %v8115, %v8119
  %v8122 = vadd.f32 %v8120, 1.0
  %v8123 = vadd.f32 %v8121, 1.0
  %v8124 = vmul.f32 %v8072, %v8122
  %v8125 = vmul.f32 %v8073, %v8123
  %s8126 = scalar_lea.vmem %s16, 64
  %v8127 = vld [vmem:[%s8126] sm:$0xff]
  %v8128 = vld [vmem:[%s8126 + $0x8] sm:$0xff]
  %v8129 = vld [vmem:[%s8126 + $0x10] sm:$0xff]
  %v8130 = vld [vmem:[%s8126 + $0x18] sm:$0xff]
  %v8131 = vld [vmem:[%s8126 + $0x20] sm:$0xff]
  %v8132 = vld [vmem:[%s8126 + $0x28] sm:$0xff]
  %v8133 = vld [vmem:[%s8126 + $0x30] sm:$0xff]
  %v8134 = vld [vmem:[%s8126 + $0x38] sm:$0xff]
  %s8135 = scalar_lea.vmem %s17, 1
  %v8136 = vld [vmem:[%s8135] sm:$0x1]
  %v8138 = vlaneseq
  %v8139 = vshrl.u32 %v8138, 7
  %v8140 = vsub.s32 0, %v8139
  %v8141 = vrot.slane %v8136, %v8140
  %v8144 = vsel %vm4061, %v8124, 0
  %v8147 = vsel %vm4061, %v8125, 0
  %8149 = vmatprep.subr.mxu0 0.0
  %8150 = vmatpush1.msra.mxu0 %v8127
  %8151 = vmatprep.subr.mxu0 0.0
  %8152 = vmatpush1.msra.mxu0 %v8128
  %8153 = vmatprep.subr.mxu0 0.0
  %8154 = vmatpush1.msra.mxu0 %v8129
  %8155 = vmatprep.subr.mxu0 0.0
  %8156 = vmatpush1.msra.mxu0 %v8130
  %8157 = vmatprep.subr.mxu0 0.0
  %8158 = vmatpush1.msra.mxu0 %v8131
  %8159 = vmatprep.subr.mxu0 0.0
  %8160 = vmatpush1.msra.mxu0 %v8132
  %8161 = vmatprep.subr.mxu0 0.0
  %8162 = vmatpush1.msra.mxu0 %v8133
  %8163 = vmatprep.subr.mxu0 0.0
  %8164 = vmatpush1.msra.mxu0 %v8134
  %8165 = vmatprep.subr.mxu0 0.0
  %8166 = vmatpush1.msra.mxu0 0.0
  %8167 = vmatprep.subr.mxu0 0.0
  %8168 = vmatpush1.msra.mxu0 0.0
  %8169 = vmatprep.subr.mxu0 0.0
  %8170 = vmatpush1.msra.mxu0 0.0
  %8171 = vmatprep.subr.mxu0 0.0
  %8172 = vmatpush1.msra.mxu0 0.0
  %8173 = vmatprep.subr.mxu0 0.0
  %8174 = vmatpush1.msra.mxu0 0.0
  %8175 = vmatprep.subr.mxu0 0.0
  %8176 = vmatpush1.msra.mxu0 0.0
  %8177 = vmatprep.subr.mxu0 0.0
  %8178 = vmatpush1.msra.mxu0 0.0
  %8179 = vmatprep.subr.mxu0 0.0
  %8180 = vmatpush1.msra.mxu0 0.0
  %8181 = vmatprep.subr.mxu0 0.0
  %8182 = vmatpush1.msra.mxu0 0.0
  %8183 = vmatprep.subr.mxu0 0.0
  %8184 = vmatpush1.msra.mxu0 0.0
  %8185 = vmatprep.subr.mxu0 0.0
  %8186 = vmatpush1.msra.mxu0 0.0
  %8187 = vmatprep.subr.mxu0 0.0
  %8188 = vmatpush1.msra.mxu0 0.0
  %8189 = vmatprep.subr.mxu0 0.0
  %8190 = vmatpush1.msra.mxu0 0.0
  %8191 = vmatprep.subr.mxu0 0.0
  %8192 = vmatpush1.msra.mxu0 0.0
  %8193 = vmatprep.subr.mxu0 0.0
  %8194 = vmatpush1.msra.mxu0 0.0
  %8195 = vmatprep.subr.mxu0 0.0
  %8196 = vmatpush1.msra.mxu0 0.0
  %8197 = vmatprep.subr.mxu0 0.0
  %8198 = vmatpush1.msra.mxu0 0.0
  %8199 = vmatprep.subr.mxu0 0.0
  %8200 = vmatpush1.msra.mxu0 0.0
  %8201 = vmatprep.subr.mxu0 0.0
  %8202 = vmatpush1.msra.mxu0 0.0
  %8203 = vmatprep.subr.mxu0 0.0
  %8204 = vmatpush1.msra.mxu0 0.0
  %8205 = vmatprep.subr.mxu0 0.0
  %8206 = vmatpush1.msra.mxu0 0.0
  %8207 = vmatprep.subr.mxu0 0.0
  %8208 = vmatpush1.msra.mxu0 0.0
  %8209 = vmatprep.subr.mxu0 0.0
  %8210 = vmatpush1.msra.mxu0 0.0
  %8211 = vmatprep.subr.mxu0 0.0
  %8212 = vmatpush1.msra.mxu0 0.0
  %8213 = vmatprep.mubr.f32.mxu0 0.0
  %8214 = vmatmul.mubr.f32.gmra.mrb[0].mxu0 %v8144
  %v8215 = vpop.f32.mrb[0].mxu0
  %v8216 = vadd.f32 %v8141, %v8215
  %v8217 = vpop.f32.mrb[0].mxu0
  %8218 = vmatprep.mubr.f32.mxu0 0.0
  %8219 = vmatmul.mubr.f32.gmra.mrb[0].mxu0 %v8147
  %v8220 = vpop.f32.mrb[0].mxu0
  %v8221 = vadd.f32 %v8141, %v8220
  %v8222 = vpop.f32.mrb[0].mxu0
  %8223 = vdwg.mxu0
  %v8224 = vadd.f32 %v7976, %v8216
  %v8225 = vadd.f32 %v7977, %v8221
  %s8226 = scalar_lea.vmem %s18, 1
  %v8227 = vld [vmem:[%s8226] sm:$0x1]
  %s8228 = scalar_lea.vmem %s19, 1
  %v8229 = vld [vmem:[%s8228] sm:$0x1]
  %v8230 = vsel %vm75, %v8224, 0.0
  %8231 = vadd.xlane.f32.xlu0 %v8230
  %v8232 = vpop.xlane.xlu0 %8231
  %v8233 = vsel %vm75, %v8225, 0.0
  %8234 = vadd.xlane.f32.xlu0 %v8233
  %v8235 = vpop.xlane.xlu0 %8234
  %v8236 = vmul.f32 %v8232, %v82
  %v8237 = vmul.f32 %v8235, %v82
  %v8238 = vsub.f32 %v8224, %v8236
  %v8239 = vsub.f32 %v8225, %v8237
  %v8240 = vmul.f32 %v8238, %v8238
  %v8241 = vmul.f32 %v8239, %v8239
  %v8242 = vsel %vm75, %v8240, 0.0
  %8243 = vadd.xlane.f32.xlu0 %v8242
  %v8244 = vpop.xlane.xlu0 %8243
  %v8245 = vsel %vm75, %v8241, 0.0
  %8246 = vadd.xlane.f32.xlu0 %v8245
  %v8247 = vpop.xlane.xlu0 %8246
  %v8248 = vmul.f32 %v8244, %v82
  %v8249 = vmul.f32 %v8247, %v82
  %v8250 = vadd.f32 %v8248, 1e-12
  %v8251 = vadd.f32 %v8249, 1e-12
  %v8252 = vrsqrt.pop %v8250
  %v8253 = vrsqrt.pop %v8251
  %v8254 = vmul.f32 %v8238, %v8252
  %v8255 = vmul.f32 %v8239, %v8253
  %v8257 = vlaneseq
  %v8258 = vshrl.u32 %v8257, 7
  %v8259 = vsub.s32 0, %v8258
  %v8260 = vrot.slane %v8227, %v8259
  %v8262 = vmul.f32 %v8254, %v8260
  %v8263 = vmul.f32 %v8255, %v8260
  %v8265 = vlaneseq
  %v8266 = vshrl.u32 %v8265, 7
  %v8267 = vsub.s32 0, %v8266
  %v8268 = vrot.slane %v8229, %v8267
  %v8270 = vadd.f32 %v8262, %v8268
  %v8271 = vadd.f32 %v8263, %v8268
  %v8272 = vld [vmem:[%s20] sm:$0xff]
  %v8273 = vld [vmem:[%s20 + $0x8] sm:$0xff]
  %v8274 = vld [vmem:[%s20 + $0x10] sm:$0xff]
  %v8275 = vld [vmem:[%s20 + $0x18] sm:$0xff]
  %v8276 = vld [vmem:[%s21] sm:$0x1]
  %v8278 = vlaneseq
  %v8279 = vshrl.u32 %v8278, 7
  %v8280 = vsub.s32 0, %v8279
  %v8281 = vrot.slane %v8276, %v8280
  %v8284 = vsel %vm75, %v8270, 0
  %v8287 = vsel %vm75, %v8271, 0
  %8289 = vmatprep.subr.mxu0 0.0
  %8290 = vmatpush1.msra.mxu0 %v8272
  %8291 = vmatprep.subr.mxu0 0.0
  %8292 = vmatpush1.msra.mxu0 %v8273
  %8293 = vmatprep.subr.mxu0 0.0
  %8294 = vmatpush1.msra.mxu0 %v8274
  %8295 = vmatprep.subr.mxu0 0.0
  %8296 = vmatpush1.msra.mxu0 %v8275
  %8297 = vmatprep.subr.mxu0 0.0
  %8298 = vmatpush1.msra.mxu0 0.0
  %8299 = vmatprep.subr.mxu0 0.0
  %8300 = vmatpush1.msra.mxu0 0.0
  %8301 = vmatprep.subr.mxu0 0.0
  %8302 = vmatpush1.msra.mxu0 0.0
  %8303 = vmatprep.subr.mxu0 0.0
  %8304 = vmatpush1.msra.mxu0 0.0
  %8305 = vmatprep.subr.mxu0 0.0
  %8306 = vmatpush1.msra.mxu0 0.0
  %8307 = vmatprep.subr.mxu0 0.0
  %8308 = vmatpush1.msra.mxu0 0.0
  %8309 = vmatprep.subr.mxu0 0.0
  %8310 = vmatpush1.msra.mxu0 0.0
  %8311 = vmatprep.subr.mxu0 0.0
  %8312 = vmatpush1.msra.mxu0 0.0
  %8313 = vmatprep.subr.mxu0 0.0
  %8314 = vmatpush1.msra.mxu0 0.0
  %8315 = vmatprep.subr.mxu0 0.0
  %8316 = vmatpush1.msra.mxu0 0.0
  %8317 = vmatprep.subr.mxu0 0.0
  %8318 = vmatpush1.msra.mxu0 0.0
  %8319 = vmatprep.subr.mxu0 0.0
  %8320 = vmatpush1.msra.mxu0 0.0
  %8321 = vmatprep.subr.mxu0 0.0
  %8322 = vmatpush1.msra.mxu0 0.0
  %8323 = vmatprep.subr.mxu0 0.0
  %8324 = vmatpush1.msra.mxu0 0.0
  %8325 = vmatprep.subr.mxu0 0.0
  %8326 = vmatpush1.msra.mxu0 0.0
  %8327 = vmatprep.subr.mxu0 0.0
  %8328 = vmatpush1.msra.mxu0 0.0
  %8329 = vmatprep.subr.mxu0 0.0
  %8330 = vmatpush1.msra.mxu0 0.0
  %8331 = vmatprep.subr.mxu0 0.0
  %8332 = vmatpush1.msra.mxu0 0.0
  %8333 = vmatprep.subr.mxu0 0.0
  %8334 = vmatpush1.msra.mxu0 0.0
  %8335 = vmatprep.subr.mxu0 0.0
  %8336 = vmatpush1.msra.mxu0 0.0
  %8337 = vmatprep.subr.mxu0 0.0
  %8338 = vmatpush1.msra.mxu0 0.0
  %8339 = vmatprep.subr.mxu0 0.0
  %8340 = vmatpush1.msra.mxu0 0.0
  %8341 = vmatprep.subr.mxu0 0.0
  %8342 = vmatpush1.msra.mxu0 0.0
  %8343 = vmatprep.subr.mxu0 0.0
  %8344 = vmatpush1.msra.mxu0 0.0
  %8345 = vmatprep.subr.mxu0 0.0
  %8346 = vmatpush1.msra.mxu0 0.0
  %8347 = vmatprep.subr.mxu0 0.0
  %8348 = vmatpush1.msra.mxu0 0.0
  %8349 = vmatprep.subr.mxu0 0.0
  %8350 = vmatpush1.msra.mxu0 0.0
  %8351 = vmatprep.subr.mxu0 0.0
  %8352 = vmatpush1.msra.mxu0 0.0
  %8353 = vmatprep.mubr.f32.mxu0 0.0
  %8354 = vmatmul.mubr.f32.gmra.mrb[0].mxu0 %v8284
  %v8355 = vpop.f32.mrb[0].mxu0
  %v8356 = vadd.f32 %v8281, %v8355
  %v8357 = vpop.f32.mrb[0].mxu0
  %8358 = vmatprep.mubr.f32.mxu0 0.0
  %8359 = vmatmul.mubr.f32.gmra.mrb[0].mxu0 %v8287
  %v8360 = vpop.f32.mrb[0].mxu0
  %v8361 = vadd.f32 %v8281, %v8360
  %v8362 = vpop.f32.mrb[0].mxu0
  %8363 = vdwg.mxu0
  %8364 = vst [vmem:[%s22] sm:$0xff] %v8356
  %8365 = vst [vmem:[%s22 + $0x8] sm:$0xff] %v8361
  // Predicated region
  $region90: #{distilbert_class_forward.1} parent=0 // pred_check
    _
  $region91: #{distilbert_class_forward.1} parent=0 // pred_check_branch
    %8367 = sbr.rel (0) target = $region93
  $region92: #{distilbert_class_forward.1} parent=0 // pred_region
    _
  $region93: #{distilbert_class_forward.1} parent=0 // pred_fallthru
    _
  // Predicated region
  $region94: #{distilbert_class_forward.1} parent=0 // pred_check
    _
  $region95: #{distilbert_class_forward.1} parent=0 // pred_check_branch
    %8369 = sbr.rel (0) target = $region97
  $region96: #{distilbert_class_forward.1} parent=0 // pred_region
    _
  $region97: #{distilbert_class_forward.1} parent=0 // pred_fallthru
    _

</llo_original>
